<compile_context>
chip_gen: v5e
topology: v5e:2x2
jax: 0.10.0
libtpu: 0.0.40
codegen_flags: <defaults>
</compile_context>

<pallas_src>
import jax
import jax.numpy as jnp
import numpy as np
from jax.experimental import pallas as pl
from jax.experimental.pallas import tpu as pltpu

# ----------------------- configuration (module hyperparams) -----------------
NUM_TPS = 2              # K
K5 = NUM_TPS * 5         # number of keypoints = K*5 = 10
TEMPERATURE = 0.1
C_IN = 16                # predictor.out_channels[-1]
H = 16
W = 16
B = 2
KH = KW = 7              # self.kp = nn.Conv2d(C_IN, K*5, 7, padding=3)
PAD = 3

WP = W + 2 * PAD         # 22: padded row stride (output positions keep it)
NW = 384                 # lane-dense working width (3 x 128 >= H*WP = 352)
HP_TOTAL = H + PAD + (PAD + 2)   # 24 padded rows (2 slack rows for tap slices)
L_IN = HP_TOTAL * WP     # 528 >= (KH-1)*WP + (KW-1) + NW = 138 + 384 = 522
NTAPS = KH * KW          # 49


# ----------------------------- Pallas kernel --------------------------------
def kp_detector_kernel(x_ref, w_ref, addmask_ref, grid_ref, out_ref):
    """One grid step handles `nb` batch elements (nb = block batch extent).

    x_ref       : (nb, C, L_IN)   zero-padded feature map, flattened at stride Wp
    w_ref       : (49, K5, C)     conv weight / temperature, one (K5, C) tile per tap
    addmask_ref : (K5, NW)        bias/temperature + (-1e30 on invalid lanes)
    grid_ref    : (2, NW)         rows [grid_x, grid_y] in [-1, 1], 0 on invalid lanes
    out_ref     : (nb, K5, 2)     keypoints
    """
    nb = x_ref.shape[0]
    add = addmask_ref[...]          # (K5, NW)
    gx = grid_ref[0:1, :]           # (1, NW)
    gy = grid_ref[1:2, :]           # (1, NW)

    for bb in range(nb):
        # conv-as-tap-accumulate: 49 small MXU matmuls, accumulator in vregs,
        # no im2col scratch and no masked VMEM stores.
        acc = jnp.dot(w_ref[0], x_ref[bb, :, pl.ds(0, NW)],
                      preferred_element_type=jnp.float32)          # (K5, NW)
        for t in range(1, NTAPS):
            kh, kw = divmod(t, KW)
            d = kh * WP + kw
            acc = acc + jnp.dot(w_ref[t], x_ref[bb, :, pl.ds(d, NW)],
                                preferred_element_type=jnp.float32)

        # logits already include 1/temperature (folded into weights/bias).
        logits = acc + add                                          # (K5, NW)

        # softmax over spatial positions; invalid lanes underflow to exact 0.
        m = jnp.max(logits, axis=-1, keepdims=True)                 # (K5, 1)
        e = jnp.exp(logits - m)                                     # (K5, NW)
        denom = jnp.sum(e, axis=-1, keepdims=True)                  # (K5, 1)

        # gaussian2kp: expected coordinate; normalize AFTER the reduction.
        ux = jnp.sum(e * gx, axis=-1, keepdims=True)                # (K5, 1)
        uy = jnp.sum(e * gy, axis=-1, keepdims=True)                # (K5, 1)
        kp = jnp.concatenate([ux, uy], axis=-1) / denom             # (K5, 2)
        out_ref[bb] = kp.astype(out_ref.dtype)


# ------------------------------- wrapper -------------------------------------
def make_coordinate_grid(h, w):
    """Equivalent of tpsmm make_coordinate_grid: (H, W, 2), last dim (x, y)."""
    x = jnp.arange(w, dtype=jnp.float32)
    y = jnp.arange(h, dtype=jnp.float32)
    x = 2.0 * (x / (w - 1)) - 1.0
    y = 2.0 * (y / (h - 1)) - 1.0
    xx = jnp.tile(x[None, :], (h, 1))
    yy = jnp.tile(y[:, None], (1, w))
    return jnp.stack([xx, yy], axis=-1)            # (H, W, 2)


def _build_mask_and_grid(h, w, wp, nw):
    """(nw,) additive mask and (2, nw) coordinate rows at padded row stride."""
    j = np.arange(nw)
    y = j // wp
    x = j % wp
    valid = (x < w) & (y < h)
    neg = np.where(valid, 0.0, -1e30).astype(np.float32)
    gx = np.where(valid, 2.0 * (x / (w - 1)) - 1.0, 0.0).astype(np.float32)
    gy = np.where(valid, 2.0 * (y / (h - 1)) - 1.0, 0.0).astype(np.float32)
    return neg, np.stack([gx, gy], axis=0)


def _use_per_batch_grid():
    """True on v7x (2 TensorCores/chip): map the B axis onto the cores."""
    try:
        kind = jax.devices()[0].device_kind.lower()
    except Exception:
        return False
    return "7" in kind


def kp_detector_forward(fmap, kp_weight, kp_bias):
    """unet_forward of KPDetector, with the Hourglass treated as identity.

    fmap      : (B, C_IN, H, W) float32   (NCHW, PyTorch convention)
    kp_weight : (K5, C_IN, 7, 7) float32  (OIHW)
    kp_bias   : (K5,) float32
    returns   : {'fg_kp': (B, K5, 2)}
    """
    b, c, h, w = fmap.shape

    # Single halo pad (+2 slack rows so every tap slice d..d+NW stays in
    # bounds) followed by a free reshape -> one XLA fusion, no second pad.
    xpad = jnp.pad(fmap.astype(jnp.float32),
                   ((0, 0), (0, 0), (PAD, PAD + 2), (PAD, PAD)))   # (B,C,24,22)
    xf = xpad.reshape(b, c, L_IN)                                   # (B,C,528)

    # Fold 1/temperature into the parameters (one-time transform).
    wtaps = (jnp.transpose(kp_weight.astype(jnp.float32), (2, 3, 0, 1))
             * (1.0 / TEMPERATURE)).reshape(NTAPS, K5, C_IN)        # (49,K5,C)
    neg, grid2_np = _build_mask_and_grid(h, w, WP, NW)
    addmask = (kp_bias.astype(jnp.float32).reshape(K5, 1) * (1.0 / TEMPERATURE)
               + jnp.asarray(neg)[None, :])                         # (K5, NW)
    grid2 = jnp.asarray(grid2_np)                                   # (2, NW)

    # v7x: one batch element per TensorCore.  v5e/v6e: fold B into one step.
    nb = 1 if _use_per_batch_grid() else b
    num_steps = b // nb

    cost = pl.CostEstimate(
        flops=2 * b * K5 * C_IN * NTAPS * NW,
        transcendentals=b * K5 * NW,
        bytes_accessed=int(4 * (xf.size + wtaps.size + addmask.size
                                + grid2.size + b * K5 * 2)))

    fg_kp = pl.pallas_call(
        kp_detector_kernel,
        out_shape=jax.ShapeDtypeStruct((b, K5, 2), jnp.float32),
        grid=(num_steps,),
        in_specs=[
            pl.BlockSpec((nb, c, L_IN), lambda i: (i, 0, 0)),
            pl.BlockSpec((NTAPS, K5, C_IN), lambda i: (0, 0, 0)),
            pl.BlockSpec((K5, NW), lambda i: (0, 0)),
            pl.BlockSpec((2, NW), lambda i: (0, 0)),
        ],
        out_specs=pl.BlockSpec((nb, K5, 2), lambda i: (i, 0, 0)),
        compiler_params=pltpu.CompilerParams(
            dimension_semantics=("parallel",)),
        cost_estimate=cost,
    )(xf, wtaps, addmask, grid2)

    return {'fg_kp': fg_kp}


# ------------------------------ pure-JAX reference ---------------------------
def kp_detector_reference(fmap, kp_weight, kp_bias):
    pred = jax.lax.conv_general_dilated(
        fmap.astype(jnp.float32), kp_weight.astype(jnp.float32),
        window_strides=(1, 1), padding=[(PAD, PAD), (PAD, PAD)],
        dimension_numbers=('NCHW', 'OIHW', 'NCHW'))
    pred = pred + kp_bias.reshape(1, K5, 1, 1)
    b, k, h, w = pred.shape
    heat = jax.nn.softmax(pred.reshape(b, k, h * w) / TEMPERATURE, axis=-1)
    grid = make_coordinate_grid(h, w).reshape(h * w, 2)
    kp = jnp.einsum('bkp,pc->bkc', heat, grid)
    return {'fg_kp': kp}


# ---------------------------------- main --------------------------------------
if __name__ == "__main__":
    key = jax.random.PRNGKey(0)
    k_fmap, k_w, k_b = jax.random.split(key, 3)

    # Deterministic synthetic inputs / parameters.
    fmap = jax.random.normal(k_fmap, (B, C_IN, H, W), dtype=jnp.float32)
    kp_weight = 0.1 * jax.random.normal(k_w, (K5, C_IN, KH, KW),
                                        dtype=jnp.float32)
    kp_bias = 0.05 * jax.random.normal(k_b, (K5,), dtype=jnp.float32)

    out = kp_detector_forward(fmap, kp_weight, kp_bias)
    fg_kp = jax.block_until_ready(out['fg_kp'])

    ref = kp_detector_reference(fmap, kp_weight, kp_bias)['fg_kp']
    np.testing.assert_allclose(np.asarray(fg_kp), np.asarray(ref),
                               rtol=1e-3, atol=1e-3)
    assert fg_kp.shape == (B, K5, 2)

    print("KERNEL_OK")
</pallas_src>

<mosaic_0001>
module attributes {stable_mosaic.version = 11 : i64} {
  func.func @kp_detector_kernel(%arg0: i32, %arg1: memref<2x16x528xf32, #tpu.memory_space<vmem>>, %arg2: memref<49x10x16xf32, #tpu.memory_space<vmem>>, %arg3: memref<10x384xf32, #tpu.memory_space<vmem>>, %arg4: memref<2x384xf32, #tpu.memory_space<vmem>>, %arg5: memref<2x10x2xf32, #tpu.memory_space<vmem>>) attributes {dimension_semantics = [#tpu.dimension_semantics<parallel>], iteration_bounds = array<i64: 1>, scalar_prefetch = 0 : i64, scratch_operands = 0 : i64, tpu.core_type = #tpu.core_type<tc>, window_params = [{transform_indices = @transform_0, window_bounds = array<i64: 2, 16, 528>}, {pipeline_mode = #tpu.pipeline_mode<synchronous>, transform_indices = @transform_1, window_bounds = array<i64: 49, 10, 16>}, {pipeline_mode = #tpu.pipeline_mode<synchronous>, transform_indices = @transform_2, window_bounds = array<i64: 10, 384>}, {pipeline_mode = #tpu.pipeline_mode<synchronous>, transform_indices = @transform_3, window_bounds = array<i64: 2, 384>}, {transform_indices = @transform_4, window_bounds = array<i64: 2, 10, 2>}]} {
    %c0 = arith.constant 0 : index
    %c0_0 = arith.constant 0 : index
    %0 = vector.load %arg3[%c0, %c0_0] : memref<10x384xf32, #tpu.memory_space<vmem>>, vector<10x384xf32>
    %c0_1 = arith.constant 0 : index
    %c0_2 = arith.constant 0 : index
    %1 = vector.load %arg4[%c0_1, %c0_2] : memref<2x384xf32, #tpu.memory_space<vmem>>, vector<1x384xf32>
    %c1 = arith.constant 1 : index
    %c0_3 = arith.constant 0 : index
    %2 = vector.load %arg4[%c1, %c0_3] : memref<2x384xf32, #tpu.memory_space<vmem>>, vector<1x384xf32>
    %c0_4 = arith.constant 0 : index
    %c0_5 = arith.constant 0 : index
    %c0_6 = arith.constant 0 : index
    %3 = vector.load %arg2[%c0_4, %c0_5, %c0_6] : memref<49x10x16xf32, #tpu.memory_space<vmem>>, vector<1x10x16xf32>
    %4 = vector.shape_cast %3 : vector<1x10x16xf32> to vector<10x16xf32>
    %c0_7 = arith.constant 0 : index
    %c0_8 = arith.constant 0 : index
    %c0_9 = arith.constant 0 : index
    %5 = vector.load %arg1[%c0_7, %c0_8, %c0_9] : memref<2x16x528xf32, #tpu.memory_space<vmem>>, vector<1x16x384xf32>
    %6 = vector.shape_cast %5 : vector<1x16x384xf32> to vector<16x384xf32>
    %cst = arith.constant dense<0.000000e+00> : vector<10x384xf32>
    %7 = tpu.matmul %4, %6, %cst {dimension_numbers = #tpu.dot_dimension_numbers<[1], [0], [0], [1], [0, 0, 1, 1], [], []>} : vector<10x16xf32>, vector<16x384xf32>, vector<10x384xf32> -> vector<10x384xf32>
    %c1_10 = arith.constant 1 : index
    %c0_11 = arith.constant 0 : index
    %c0_12 = arith.constant 0 : index
    %8 = vector.load %arg2[%c1_10, %c0_11, %c0_12] : memref<49x10x16xf32, #tpu.memory_space<vmem>>, vector<1x10x16xf32>
    %9 = vector.shape_cast %8 : vector<1x10x16xf32> to vector<10x16xf32>
    %c0_13 = arith.constant 0 : index
    %c0_14 = arith.constant 0 : index
    %c1_15 = arith.constant 1 : index
    %10 = vector.load %arg1[%c0_13, %c0_14, %c1_15] : memref<2x16x528xf32, #tpu.memory_space<vmem>>, vector<1x16x384xf32>
    %11 = vector.shape_cast %10 : vector<1x16x384xf32> to vector<16x384xf32>
    %cst_16 = arith.constant dense<0.000000e+00> : vector<10x384xf32>
    %12 = tpu.matmul %9, %11, %cst_16 {dimension_numbers = #tpu.dot_dimension_numbers<[1], [0], [0], [1], [0, 0, 1, 1], [], []>} : vector<10x16xf32>, vector<16x384xf32>, vector<10x384xf32> -> vector<10x384xf32>
    %13 = arith.addf %7, %12 : vector<10x384xf32>
    %c2 = arith.constant 2 : index
    %c0_17 = arith.constant 0 : index
    %c0_18 = arith.constant 0 : index
    %14 = vector.load %arg2[%c2, %c0_17, %c0_18] : memref<49x10x16xf32, #tpu.memory_space<vmem>>, vector<1x10x16xf32>
    %15 = vector.shape_cast %14 : vector<1x10x16xf32> to vector<10x16xf32>
    %c0_19 = arith.constant 0 : index
    %c0_20 = arith.constant 0 : index
    %c2_21 = arith.constant 2 : index
    %16 = vector.load %arg1[%c0_19, %c0_20, %c2_21] : memref<2x16x528xf32, #tpu.memory_space<vmem>>, vector<1x16x384xf32>
    %17 = vector.shape_cast %16 : vector<1x16x384xf32> to vector<16x384xf32>
    %cst_22 = arith.constant dense<0.000000e+00> : vector<10x384xf32>
    %18 = tpu.matmul %15, %17, %cst_22 {dimension_numbers = #tpu.dot_dimension_numbers<[1], [0], [0], [1], [0, 0, 1, 1], [], []>} : vector<10x16xf32>, vector<16x384xf32>, vector<10x384xf32> -> vector<10x384xf32>
    %19 = arith.addf %13, %18 : vector<10x384xf32>
    %c3 = arith.constant 3 : index
    %c0_23 = arith.constant 0 : index
    %c0_24 = arith.constant 0 : index
    %20 = vector.load %arg2[%c3, %c0_23, %c0_24] : memref<49x10x16xf32, #tpu.memory_space<vmem>>, vector<1x10x16xf32>
    %21 = vector.shape_cast %20 : vector<1x10x16xf32> to vector<10x16xf32>
    %c0_25 = arith.constant 0 : index
    %c0_26 = arith.constant 0 : index
    %c3_27 = arith.constant 3 : index
    %22 = vector.load %arg1[%c0_25, %c0_26, %c3_27] : memref<2x16x528xf32, #tpu.memory_space<vmem>>, vector<1x16x384xf32>
    %23 = vector.shape_cast %22 : vector<1x16x384xf32> to vector<16x384xf32>
    %cst_28 = arith.constant dense<0.000000e+00> : vector<10x384xf32>
    %24 = tpu.matmul %21, %23, %cst_28 {dimension_numbers = #tpu.dot_dimension_numbers<[1], [0], [0], [1], [0, 0, 1, 1], [], []>} : vector<10x16xf32>, vector<16x384xf32>, vector<10x384xf32> -> vector<10x384xf32>
    %25 = arith.addf %19, %24 : vector<10x384xf32>
    %c4 = arith.constant 4 : index
    %c0_29 = arith.constant 0 : index
    %c0_30 = arith.constant 0 : index
    %26 = vector.load %arg2[%c4, %c0_29, %c0_30] : memref<49x10x16xf32, #tpu.memory_space<vmem>>, vector<1x10x16xf32>
    %27 = vector.shape_cast %26 : vector<1x10x16xf32> to vector<10x16xf32>
    %c0_31 = arith.constant 0 : index
    %c0_32 = arith.constant 0 : index
    %c4_33 = arith.constant 4 : index
    %28 = vector.load %arg1[%c0_31, %c0_32, %c4_33] : memref<2x16x528xf32, #tpu.memory_space<vmem>>, vector<1x16x384xf32>
    %29 = vector.shape_cast %28 : vector<1x16x384xf32> to vector<16x384xf32>
    %cst_34 = arith.constant dense<0.000000e+00> : vector<10x384xf32>
    %30 = tpu.matmul %27, %29, %cst_34 {dimension_numbers = #tpu.dot_dimension_numbers<[1], [0], [0], [1], [0, 0, 1, 1], [], []>} : vector<10x16xf32>, vector<16x384xf32>, vector<10x384xf32> -> vector<10x384xf32>
    %31 = arith.addf %25, %30 : vector<10x384xf32>
    %c5 = arith.constant 5 : index
    %c0_35 = arith.constant 0 : index
    %c0_36 = arith.constant 0 : index
    %32 = vector.load %arg2[%c5, %c0_35, %c0_36] : memref<49x10x16xf32, #tpu.memory_space<vmem>>, vector<1x10x16xf32>
    %33 = vector.shape_cast %32 : vector<1x10x16xf32> to vector<10x16xf32>
    %c0_37 = arith.constant 0 : index
    %c0_38 = arith.constant 0 : index
    %c5_39 = arith.constant 5 : index
    %34 = vector.load %arg1[%c0_37, %c0_38, %c5_39] : memref<2x16x528xf32, #tpu.memory_space<vmem>>, vector<1x16x384xf32>
    %35 = vector.shape_cast %34 : vector<1x16x384xf32> to vector<16x384xf32>
    %cst_40 = arith.constant dense<0.000000e+00> : vector<10x384xf32>
    %36 = tpu.matmul %33, %35, %cst_40 {dimension_numbers = #tpu.dot_dimension_numbers<[1], [0], [0], [1], [0, 0, 1, 1], [], []>} : vector<10x16xf32>, vector<16x384xf32>, vector<10x384xf32> -> vector<10x384xf32>
    %37 = arith.addf %31, %36 : vector<10x384xf32>
    %c6 = arith.constant 6 : index
    %c0_41 = arith.constant 0 : index
    %c0_42 = arith.constant 0 : index
    %38 = vector.load %arg2[%c6, %c0_41, %c0_42] : memref<49x10x16xf32, #tpu.memory_space<vmem>>, vector<1x10x16xf32>
    %39 = vector.shape_cast %38 : vector<1x10x16xf32> to vector<10x16xf32>
    %c0_43 = arith.constant 0 : index
    %c0_44 = arith.constant 0 : index
    %c6_45 = arith.constant 6 : index
    %40 = vector.load %arg1[%c0_43, %c0_44, %c6_45] : memref<2x16x528xf32, #tpu.memory_space<vmem>>, vector<1x16x384xf32>
    %41 = vector.shape_cast %40 : vector<1x16x384xf32> to vector<16x384xf32>
    %cst_46 = arith.constant dense<0.000000e+00> : vector<10x384xf32>
    %42 = tpu.matmul %39, %41, %cst_46 {dimension_numbers = #tpu.dot_dimension_numbers<[1], [0], [0], [1], [0, 0, 1, 1], [], []>} : vector<10x16xf32>, vector<16x384xf32>, vector<10x384xf32> -> vector<10x384xf32>
    %43 = arith.addf %37, %42 : vector<10x384xf32>
    %c7 = arith.constant 7 : index
    %c0_47 = arith.constant 0 : index
    %c0_48 = arith.constant 0 : index
    %44 = vector.load %arg2[%c7, %c0_47, %c0_48] : memref<49x10x16xf32, #tpu.memory_space<vmem>>, vector<1x10x16xf32>
    %45 = vector.shape_cast %44 : vector<1x10x16xf32> to vector<10x16xf32>
    %c0_49 = arith.constant 0 : index
    %c0_50 = arith.constant 0 : index
    %c22 = arith.constant 22 : index
    %46 = vector.load %arg1[%c0_49, %c0_50, %c22] : memref<2x16x528xf32, #tpu.memory_space<vmem>>, vector<1x16x384xf32>
    %47 = vector.shape_cast %46 : vector<1x16x384xf32> to vector<16x384xf32>
    %cst_51 = arith.constant dense<0.000000e+00> : vector<10x384xf32>
    %48 = tpu.matmul %45, %47, %cst_51 {dimension_numbers = #tpu.dot_dimension_numbers<[1], [0], [0], [1], [0, 0, 1, 1], [], []>} : vector<10x16xf32>, vector<16x384xf32>, vector<10x384xf32> -> vector<10x384xf32>
    %49 = arith.addf %43, %48 : vector<10x384xf32>
    %c8 = arith.constant 8 : index
    %c0_52 = arith.constant 0 : index
    %c0_53 = arith.constant 0 : index
    %50 = vector.load %arg2[%c8, %c0_52, %c0_53] : memref<49x10x16xf32, #tpu.memory_space<vmem>>, vector<1x10x16xf32>
    %51 = vector.shape_cast %50 : vector<1x10x16xf32> to vector<10x16xf32>
    %c0_54 = arith.constant 0 : index
    %c0_55 = arith.constant 0 : index
    %c23 = arith.constant 23 : index
    %52 = vector.load %arg1[%c0_54, %c0_55, %c23] : memref<2x16x528xf32, #tpu.memory_space<vmem>>, vector<1x16x384xf32>
    %53 = vector.shape_cast %52 : vector<1x16x384xf32> to vector<16x384xf32>
    %cst_56 = arith.constant dense<0.000000e+00> : vector<10x384xf32>
    %54 = tpu.matmul %51, %53, %cst_56 {dimension_numbers = #tpu.dot_dimension_numbers<[1], [0], [0], [1], [0, 0, 1, 1], [], []>} : vector<10x16xf32>, vector<16x384xf32>, vector<10x384xf32> -> vector<10x384xf32>
    %55 = arith.addf %49, %54 : vector<10x384xf32>
    %c9 = arith.constant 9 : index
    %c0_57 = arith.constant 0 : index
    %c0_58 = arith.constant 0 : index
    %56 = vector.load %arg2[%c9, %c0_57, %c0_58] : memref<49x10x16xf32, #tpu.memory_space<vmem>>, vector<1x10x16xf32>
    %57 = vector.shape_cast %56 : vector<1x10x16xf32> to vector<10x16xf32>
    %c0_59 = arith.constant 0 : index
    %c0_60 = arith.constant 0 : index
    %c24 = arith.constant 24 : index
    %58 = vector.load %arg1[%c0_59, %c0_60, %c24] : memref<2x16x528xf32, #tpu.memory_space<vmem>>, vector<1x16x384xf32>
    %59 = vector.shape_cast %58 : vector<1x16x384xf32> to vector<16x384xf32>
    %cst_61 = arith.constant dense<0.000000e+00> : vector<10x384xf32>
    %60 = tpu.matmul %57, %59, %cst_61 {dimension_numbers = #tpu.dot_dimension_numbers<[1], [0], [0], [1], [0, 0, 1, 1], [], []>} : vector<10x16xf32>, vector<16x384xf32>, vector<10x384xf32> -> vector<10x384xf32>
    %61 = arith.addf %55, %60 : vector<10x384xf32>
    %c10 = arith.constant 10 : index
    %c0_62 = arith.constant 0 : index
    %c0_63 = arith.constant 0 : index
    %62 = vector.load %arg2[%c10, %c0_62, %c0_63] : memref<49x10x16xf32, #tpu.memory_space<vmem>>, vector<1x10x16xf32>
    %63 = vector.shape_cast %62 : vector<1x10x16xf32> to vector<10x16xf32>
    %c0_64 = arith.constant 0 : index
    %c0_65 = arith.constant 0 : index
    %c25 = arith.constant 25 : index
    %64 = vector.load %arg1[%c0_64, %c0_65, %c25] : memref<2x16x528xf32, #tpu.memory_space<vmem>>, vector<1x16x384xf32>
    %65 = vector.shape_cast %64 : vector<1x16x384xf32> to vector<16x384xf32>
    %cst_66 = arith.constant dense<0.000000e+00> : vector<10x384xf32>
    %66 = tpu.matmul %63, %65, %cst_66 {dimension_numbers = #tpu.dot_dimension_numbers<[1], [0], [0], [1], [0, 0, 1, 1], [], []>} : vector<10x16xf32>, vector<16x384xf32>, vector<10x384xf32> -> vector<10x384xf32>
    %67 = arith.addf %61, %66 : vector<10x384xf32>
    %c11 = arith.constant 11 : index
    %c0_67 = arith.constant 0 : index
    %c0_68 = arith.constant 0 : index
    %68 = vector.load %arg2[%c11, %c0_67, %c0_68] : memref<49x10x16xf32, #tpu.memory_space<vmem>>, vector<1x10x16xf32>
    %69 = vector.shape_cast %68 : vector<1x10x16xf32> to vector<10x16xf32>
    %c0_69 = arith.constant 0 : index
    %c0_70 = arith.constant 0 : index
    %c26 = arith.constant 26 : index
    %70 = vector.load %arg1[%c0_69, %c0_70, %c26] : memref<2x16x528xf32, #tpu.memory_space<vmem>>, vector<1x16x384xf32>
    %71 = vector.shape_cast %70 : vector<1x16x384xf32> to vector<16x384xf32>
    %cst_71 = arith.constant dense<0.000000e+00> : vector<10x384xf32>
    %72 = tpu.matmul %69, %71, %cst_71 {dimension_numbers = #tpu.dot_dimension_numbers<[1], [0], [0], [1], [0, 0, 1, 1], [], []>} : vector<10x16xf32>, vector<16x384xf32>, vector<10x384xf32> -> vector<10x384xf32>
    %73 = arith.addf %67, %72 : vector<10x384xf32>
    %c12 = arith.constant 12 : index
    %c0_72 = arith.constant 0 : index
    %c0_73 = arith.constant 0 : index
    %74 = vector.load %arg2[%c12, %c0_72, %c0_73] : memref<49x10x16xf32, #tpu.memory_space<vmem>>, vector<1x10x16xf32>
    %75 = vector.shape_cast %74 : vector<1x10x16xf32> to vector<10x16xf32>
    %c0_74 = arith.constant 0 : index
    %c0_75 = arith.constant 0 : index
    %c27 = arith.constant 27 : index
    %76 = vector.load %arg1[%c0_74, %c0_75, %c27] : memref<2x16x528xf32, #tpu.memory_space<vmem>>, vector<1x16x384xf32>
    %77 = vector.shape_cast %76 : vector<1x16x384xf32> to vector<16x384xf32>
    %cst_76 = arith.constant dense<0.000000e+00> : vector<10x384xf32>
    %78 = tpu.matmul %75, %77, %cst_76 {dimension_numbers = #tpu.dot_dimension_numbers<[1], [0], [0], [1], [0, 0, 1, 1], [], []>} : vector<10x16xf32>, vector<16x384xf32>, vector<10x384xf32> -> vector<10x384xf32>
    %79 = arith.addf %73, %78 : vector<10x384xf32>
    %c13 = arith.constant 13 : index
    %c0_77 = arith.constant 0 : index
    %c0_78 = arith.constant 0 : index
    %80 = vector.load %arg2[%c13, %c0_77, %c0_78] : memref<49x10x16xf32, #tpu.memory_space<vmem>>, vector<1x10x16xf32>
    %81 = vector.shape_cast %80 : vector<1x10x16xf32> to vector<10x16xf32>
    %c0_79 = arith.constant 0 : index
    %c0_80 = arith.constant 0 : index
    %c28 = arith.constant 28 : index
    %82 = vector.load %arg1[%c0_79, %c0_80, %c28] : memref<2x16x528xf32, #tpu.memory_space<vmem>>, vector<1x16x384xf32>
    %83 = vector.shape_cast %82 : vector<1x16x384xf32> to vector<16x384xf32>
    %cst_81 = arith.constant dense<0.000000e+00> : vector<10x384xf32>
    %84 = tpu.matmul %81, %83, %cst_81 {dimension_numbers = #tpu.dot_dimension_numbers<[1], [0], [0], [1], [0, 0, 1, 1], [], []>} : vector<10x16xf32>, vector<16x384xf32>, vector<10x384xf32> -> vector<10x384xf32>
    %85 = arith.addf %79, %84 : vector<10x384xf32>
    %c14 = arith.constant 14 : index
    %c0_82 = arith.constant 0 : index
    %c0_83 = arith.constant 0 : index
    %86 = vector.load %arg2[%c14, %c0_82, %c0_83] : memref<49x10x16xf32, #tpu.memory_space<vmem>>, vector<1x10x16xf32>
    %87 = vector.shape_cast %86 : vector<1x10x16xf32> to vector<10x16xf32>
    %c0_84 = arith.constant 0 : index
    %c0_85 = arith.constant 0 : index
    %c44 = arith.constant 44 : index
    %88 = vector.load %arg1[%c0_84, %c0_85, %c44] : memref<2x16x528xf32, #tpu.memory_space<vmem>>, vector<1x16x384xf32>
    %89 = vector.shape_cast %88 : vector<1x16x384xf32> to vector<16x384xf32>
    %cst_86 = arith.constant dense<0.000000e+00> : vector<10x384xf32>
    %90 = tpu.matmul %87, %89, %cst_86 {dimension_numbers = #tpu.dot_dimension_numbers<[1], [0], [0], [1], [0, 0, 1, 1], [], []>} : vector<10x16xf32>, vector<16x384xf32>, vector<10x384xf32> -> vector<10x384xf32>
    %91 = arith.addf %85, %90 : vector<10x384xf32>
    %c15 = arith.constant 15 : index
    %c0_87 = arith.constant 0 : index
    %c0_88 = arith.constant 0 : index
    %92 = vector.load %arg2[%c15, %c0_87, %c0_88] : memref<49x10x16xf32, #tpu.memory_space<vmem>>, vector<1x10x16xf32>
    %93 = vector.shape_cast %92 : vector<1x10x16xf32> to vector<10x16xf32>
    %c0_89 = arith.constant 0 : index
    %c0_90 = arith.constant 0 : index
    %c45 = arith.constant 45 : index
    %94 = vector.load %arg1[%c0_89, %c0_90, %c45] : memref<2x16x528xf32, #tpu.memory_space<vmem>>, vector<1x16x384xf32>
    %95 = vector.shape_cast %94 : vector<1x16x384xf32> to vector<16x384xf32>
    %cst_91 = arith.constant dense<0.000000e+00> : vector<10x384xf32>
    %96 = tpu.matmul %93, %95, %cst_91 {dimension_numbers = #tpu.dot_dimension_numbers<[1], [0], [0], [1], [0, 0, 1, 1], [], []>} : vector<10x16xf32>, vector<16x384xf32>, vector<10x384xf32> -> vector<10x384xf32>
    %97 = arith.addf %91, %96 : vector<10x384xf32>
    %c16 = arith.constant 16 : index
    %c0_92 = arith.constant 0 : index
    %c0_93 = arith.constant 0 : index
    %98 = vector.load %arg2[%c16, %c0_92, %c0_93] : memref<49x10x16xf32, #tpu.memory_space<vmem>>, vector<1x10x16xf32>
    %99 = vector.shape_cast %98 : vector<1x10x16xf32> to vector<10x16xf32>
    %c0_94 = arith.constant 0 : index
    %c0_95 = arith.constant 0 : index
    %c46 = arith.constant 46 : index
    %100 = vector.load %arg1[%c0_94, %c0_95, %c46] : memref<2x16x528xf32, #tpu.memory_space<vmem>>, vector<1x16x384xf32>
    %101 = vector.shape_cast %100 : vector<1x16x384xf32> to vector<16x384xf32>
    %cst_96 = arith.constant dense<0.000000e+00> : vector<10x384xf32>
    %102 = tpu.matmul %99, %101, %cst_96 {dimension_numbers = #tpu.dot_dimension_numbers<[1], [0], [0], [1], [0, 0, 1, 1], [], []>} : vector<10x16xf32>, vector<16x384xf32>, vector<10x384xf32> -> vector<10x384xf32>
    %103 = arith.addf %97, %102 : vector<10x384xf32>
    %c17 = arith.constant 17 : index
    %c0_97 = arith.constant 0 : index
    %c0_98 = arith.constant 0 : index
    %104 = vector.load %arg2[%c17, %c0_97, %c0_98] : memref<49x10x16xf32, #tpu.memory_space<vmem>>, vector<1x10x16xf32>
    %105 = vector.shape_cast %104 : vector<1x10x16xf32> to vector<10x16xf32>
    %c0_99 = arith.constant 0 : index
    %c0_100 = arith.constant 0 : index
    %c47 = arith.constant 47 : index
    %106 = vector.load %arg1[%c0_99, %c0_100, %c47] : memref<2x16x528xf32, #tpu.memory_space<vmem>>, vector<1x16x384xf32>
    %107 = vector.shape_cast %106 : vector<1x16x384xf32> to vector<16x384xf32>
    %cst_101 = arith.constant dense<0.000000e+00> : vector<10x384xf32>
    %108 = tpu.matmul %105, %107, %cst_101 {dimension_numbers = #tpu.dot_dimension_numbers<[1], [0], [0], [1], [0, 0, 1, 1], [], []>} : vector<10x16xf32>, vector<16x384xf32>, vector<10x384xf32> -> vector<10x384xf32>
    %109 = arith.addf %103, %108 : vector<10x384xf32>
    %c18 = arith.constant 18 : index
    %c0_102 = arith.constant 0 : index
    %c0_103 = arith.constant 0 : index
    %110 = vector.load %arg2[%c18, %c0_102, %c0_103] : memref<49x10x16xf32, #tpu.memory_space<vmem>>, vector<1x10x16xf32>
    %111 = vector.shape_cast %110 : vector<1x10x16xf32> to vector<10x16xf32>
    %c0_104 = arith.constant 0 : index
    %c0_105 = arith.constant 0 : index
    %c48 = arith.constant 48 : index
    %112 = vector.load %arg1[%c0_104, %c0_105, %c48] : memref<2x16x528xf32, #tpu.memory_space<vmem>>, vector<1x16x384xf32>
    %113 = vector.shape_cast %112 : vector<1x16x384xf32> to vector<16x384xf32>
    %cst_106 = arith.constant dense<0.000000e+00> : vector<10x384xf32>
    %114 = tpu.matmul %111, %113, %cst_106 {dimension_numbers = #tpu.dot_dimension_numbers<[1], [0], [0], [1], [0, 0, 1, 1], [], []>} : vector<10x16xf32>, vector<16x384xf32>, vector<10x384xf32> -> vector<10x384xf32>
    %115 = arith.addf %109, %114 : vector<10x384xf32>
    %c19 = arith.constant 19 : index
    %c0_107 = arith.constant 0 : index
    %c0_108 = arith.constant 0 : index
    %116 = vector.load %arg2[%c19, %c0_107, %c0_108] : memref<49x10x16xf32, #tpu.memory_space<vmem>>, vector<1x10x16xf32>
    %117 = vector.shape_cast %116 : vector<1x10x16xf32> to vector<10x16xf32>
    %c0_109 = arith.constant 0 : index
    %c0_110 = arith.constant 0 : index
    %c49 = arith.constant 49 : index
    %118 = vector.load %arg1[%c0_109, %c0_110, %c49] : memref<2x16x528xf32, #tpu.memory_space<vmem>>, vector<1x16x384xf32>
    %119 = vector.shape_cast %118 : vector<1x16x384xf32> to vector<16x384xf32>
    %cst_111 = arith.constant dense<0.000000e+00> : vector<10x384xf32>
    %120 = tpu.matmul %117, %119, %cst_111 {dimension_numbers = #tpu.dot_dimension_numbers<[1], [0], [0], [1], [0, 0, 1, 1], [], []>} : vector<10x16xf32>, vector<16x384xf32>, vector<10x384xf32> -> vector<10x384xf32>
    %121 = arith.addf %115, %120 : vector<10x384xf32>
    %c20 = arith.constant 20 : index
    %c0_112 = arith.constant 0 : index
    %c0_113 = arith.constant 0 : index
    %122 = vector.load %arg2[%c20, %c0_112, %c0_113] : memref<49x10x16xf32, #tpu.memory_space<vmem>>, vector<1x10x16xf32>
    %123 = vector.shape_cast %122 : vector<1x10x16xf32> to vector<10x16xf32>
    %c0_114 = arith.constant 0 : index
    %c0_115 = arith.constant 0 : index
    %c50 = arith.constant 50 : index
    %124 = vector.load %arg1[%c0_114, %c0_115, %c50] : memref<2x16x528xf32, #tpu.memory_space<vmem>>, vector<1x16x384xf32>
    %125 = vector.shape_cast %124 : vector<1x16x384xf32> to vector<16x384xf32>
    %cst_116 = arith.constant dense<0.000000e+00> : vector<10x384xf32>
    %126 = tpu.matmul %123, %125, %cst_116 {dimension_numbers = #tpu.dot_dimension_numbers<[1], [0], [0], [1], [0, 0, 1, 1], [], []>} : vector<10x16xf32>, vector<16x384xf32>, vector<10x384xf32> -> vector<10x384xf32>
    %127 = arith.addf %121, %126 : vector<10x384xf32>
    %c21 = arith.constant 21 : index
    %c0_117 = arith.constant 0 : index
    %c0_118 = arith.constant 0 : index
    %128 = vector.load %arg2[%c21, %c0_117, %c0_118] : memref<49x10x16xf32, #tpu.memory_space<vmem>>, vector<1x10x16xf32>
    %129 = vector.shape_cast %128 : vector<1x10x16xf32> to vector<10x16xf32>
    %c0_119 = arith.constant 0 : index
    %c0_120 = arith.constant 0 : index
    %c66 = arith.constant 66 : index
    %130 = vector.load %arg1[%c0_119, %c0_120, %c66] : memref<2x16x528xf32, #tpu.memory_space<vmem>>, vector<1x16x384xf32>
    %131 = vector.shape_cast %130 : vector<1x16x384xf32> to vector<16x384xf32>
    %cst_121 = arith.constant dense<0.000000e+00> : vector<10x384xf32>
    %132 = tpu.matmul %129, %131, %cst_121 {dimension_numbers = #tpu.dot_dimension_numbers<[1], [0], [0], [1], [0, 0, 1, 1], [], []>} : vector<10x16xf32>, vector<16x384xf32>, vector<10x384xf32> -> vector<10x384xf32>
    %133 = arith.addf %127, %132 : vector<10x384xf32>
    %c22_122 = arith.constant 22 : index
    %c0_123 = arith.constant 0 : index
    %c0_124 = arith.constant 0 : index
    %134 = vector.load %arg2[%c22_122, %c0_123, %c0_124] : memref<49x10x16xf32, #tpu.memory_space<vmem>>, vector<1x10x16xf32>
    %135 = vector.shape_cast %134 : vector<1x10x16xf32> to vector<10x16xf32>
    %c0_125 = arith.constant 0 : index
    %c0_126 = arith.constant 0 : index
    %c67 = arith.constant 67 : index
    %136 = vector.load %arg1[%c0_125, %c0_126, %c67] : memref<2x16x528xf32, #tpu.memory_space<vmem>>, vector<1x16x384xf32>
    %137 = vector.shape_cast %136 : vector<1x16x384xf32> to vector<16x384xf32>
    %cst_127 = arith.constant dense<0.000000e+00> : vector<10x384xf32>
    %138 = tpu.matmul %135, %137, %cst_127 {dimension_numbers = #tpu.dot_dimension_numbers<[1], [0], [0], [1], [0, 0, 1, 1], [], []>} : vector<10x16xf32>, vector<16x384xf32>, vector<10x384xf32> -> vector<10x384xf32>
    %139 = arith.addf %133, %138 : vector<10x384xf32>
    %c23_128 = arith.constant 23 : index
    %c0_129 = arith.constant 0 : index
    %c0_130 = arith.constant 0 : index
    %140 = vector.load %arg2[%c23_128, %c0_129, %c0_130] : memref<49x10x16xf32, #tpu.memory_space<vmem>>, vector<1x10x16xf32>
    %141 = vector.shape_cast %140 : vector<1x10x16xf32> to vector<10x16xf32>
    %c0_131 = arith.constant 0 : index
    %c0_132 = arith.constant 0 : index
    %c68 = arith.constant 68 : index
    %142 = vector.load %arg1[%c0_131, %c0_132, %c68] : memref<2x16x528xf32, #tpu.memory_space<vmem>>, vector<1x16x384xf32>
    %143 = vector.shape_cast %142 : vector<1x16x384xf32> to vector<16x384xf32>
    %cst_133 = arith.constant dense<0.000000e+00> : vector<10x384xf32>
    %144 = tpu.matmul %141, %143, %cst_133 {dimension_numbers = #tpu.dot_dimension_numbers<[1], [0], [0], [1], [0, 0, 1, 1], [], []>} : vector<10x16xf32>, vector<16x384xf32>, vector<10x384xf32> -> vector<10x384xf32>
    %145 = arith.addf %139, %144 : vector<10x384xf32>
    %c24_134 = arith.constant 24 : index
    %c0_135 = arith.constant 0 : index
    %c0_136 = arith.constant 0 : index
    %146 = vector.load %arg2[%c24_134, %c0_135, %c0_136] : memref<49x10x16xf32, #tpu.memory_space<vmem>>, vector<1x10x16xf32>
    %147 = vector.shape_cast %146 : vector<1x10x16xf32> to vector<10x16xf32>
    %c0_137 = arith.constant 0 : index
    %c0_138 = arith.constant 0 : index
    %c69 = arith.constant 69 : index
    %148 = vector.load %arg1[%c0_137, %c0_138, %c69] : memref<2x16x528xf32, #tpu.memory_space<vmem>>, vector<1x16x384xf32>
    %149 = vector.shape_cast %148 : vector<1x16x384xf32> to vector<16x384xf32>
    %cst_139 = arith.constant dense<0.000000e+00> : vector<10x384xf32>
    %150 = tpu.matmul %147, %149, %cst_139 {dimension_numbers = #tpu.dot_dimension_numbers<[1], [0], [0], [1], [0, 0, 1, 1], [], []>} : vector<10x16xf32>, vector<16x384xf32>, vector<10x384xf32> -> vector<10x384xf32>
    %151 = arith.addf %145, %150 : vector<10x384xf32>
    %c25_140 = arith.constant 25 : index
    %c0_141 = arith.constant 0 : index
    %c0_142 = arith.constant 0 : index
    %152 = vector.load %arg2[%c25_140, %c0_141, %c0_142] : memref<49x10x16xf32, #tpu.memory_space<vmem>>, vector<1x10x16xf32>
    %153 = vector.shape_cast %152 : vector<1x10x16xf32> to vector<10x16xf32>
    %c0_143 = arith.constant 0 : index
    %c0_144 = arith.constant 0 : index
    %c70 = arith.constant 70 : index
    %154 = vector.load %arg1[%c0_143, %c0_144, %c70] : memref<2x16x528xf32, #tpu.memory_space<vmem>>, vector<1x16x384xf32>
    %155 = vector.shape_cast %154 : vector<1x16x384xf32> to vector<16x384xf32>
    %cst_145 = arith.constant dense<0.000000e+00> : vector<10x384xf32>
    %156 = tpu.matmul %153, %155, %cst_145 {dimension_numbers = #tpu.dot_dimension_numbers<[1], [0], [0], [1], [0, 0, 1, 1], [], []>} : vector<10x16xf32>, vector<16x384xf32>, vector<10x384xf32> -> vector<10x384xf32>
    %157 = arith.addf %151, %156 : vector<10x384xf32>
    %c26_146 = arith.constant 26 : index
    %c0_147 = arith.constant 0 : index
    %c0_148 = arith.constant 0 : index
    %158 = vector.load %arg2[%c26_146, %c0_147, %c0_148] : memref<49x10x16xf32, #tpu.memory_space<vmem>>, vector<1x10x16xf32>
    %159 = vector.shape_cast %158 : vector<1x10x16xf32> to vector<10x16xf32>
    %c0_149 = arith.constant 0 : index
    %c0_150 = arith.constant 0 : index
    %c71 = arith.constant 71 : index
    %160 = vector.load %arg1[%c0_149, %c0_150, %c71] : memref<2x16x528xf32, #tpu.memory_space<vmem>>, vector<1x16x384xf32>
    %161 = vector.shape_cast %160 : vector<1x16x384xf32> to vector<16x384xf32>
    %cst_151 = arith.constant dense<0.000000e+00> : vector<10x384xf32>
    %162 = tpu.matmul %159, %161, %cst_151 {dimension_numbers = #tpu.dot_dimension_numbers<[1], [0], [0], [1], [0, 0, 1, 1], [], []>} : vector<10x16xf32>, vector<16x384xf32>, vector<10x384xf32> -> vector<10x384xf32>
    %163 = arith.addf %157, %162 : vector<10x384xf32>
    %c27_152 = arith.constant 27 : index
    %c0_153 = arith.constant 0 : index
    %c0_154 = arith.constant 0 : index
    %164 = vector.load %arg2[%c27_152, %c0_153, %c0_154] : memref<49x10x16xf32, #tpu.memory_space<vmem>>, vector<1x10x16xf32>
    %165 = vector.shape_cast %164 : vector<1x10x16xf32> to vector<10x16xf32>
    %c0_155 = arith.constant 0 : index
    %c0_156 = arith.constant 0 : index
    %c72 = arith.constant 72 : index
    %166 = vector.load %arg1[%c0_155, %c0_156, %c72] : memref<2x16x528xf32, #tpu.memory_space<vmem>>, vector<1x16x384xf32>
    %167 = vector.shape_cast %166 : vector<1x16x384xf32> to vector<16x384xf32>
    %cst_157 = arith.constant dense<0.000000e+00> : vector<10x384xf32>
    %168 = tpu.matmul %165, %167, %cst_157 {dimension_numbers = #tpu.dot_dimension_numbers<[1], [0], [0], [1], [0, 0, 1, 1], [], []>} : vector<10x16xf32>, vector<16x384xf32>, vector<10x384xf32> -> vector<10x384xf32>
    %169 = arith.addf %163, %168 : vector<10x384xf32>
    %c28_158 = arith.constant 28 : index
    %c0_159 = arith.constant 0 : index
    %c0_160 = arith.constant 0 : index
    %170 = vector.load %arg2[%c28_158, %c0_159, %c0_160] : memref<49x10x16xf32, #tpu.memory_space<vmem>>, vector<1x10x16xf32>
    %171 = vector.shape_cast %170 : vector<1x10x16xf32> to vector<10x16xf32>
    %c0_161 = arith.constant 0 : index
    %c0_162 = arith.constant 0 : index
    %c88 = arith.constant 88 : index
    %172 = vector.load %arg1[%c0_161, %c0_162, %c88] : memref<2x16x528xf32, #tpu.memory_space<vmem>>, vector<1x16x384xf32>
    %173 = vector.shape_cast %172 : vector<1x16x384xf32> to vector<16x384xf32>
    %cst_163 = arith.constant dense<0.000000e+00> : vector<10x384xf32>
    %174 = tpu.matmul %171, %173, %cst_163 {dimension_numbers = #tpu.dot_dimension_numbers<[1], [0], [0], [1], [0, 0, 1, 1], [], []>} : vector<10x16xf32>, vector<16x384xf32>, vector<10x384xf32> -> vector<10x384xf32>
    %175 = arith.addf %169, %174 : vector<10x384xf32>
    %c29 = arith.constant 29 : index
    %c0_164 = arith.constant 0 : index
    %c0_165 = arith.constant 0 : index
    %176 = vector.load %arg2[%c29, %c0_164, %c0_165] : memref<49x10x16xf32, #tpu.memory_space<vmem>>, vector<1x10x16xf32>
    %177 = vector.shape_cast %176 : vector<1x10x16xf32> to vector<10x16xf32>
    %c0_166 = arith.constant 0 : index
    %c0_167 = arith.constant 0 : index
    %c89 = arith.constant 89 : index
    %178 = vector.load %arg1[%c0_166, %c0_167, %c89] : memref<2x16x528xf32, #tpu.memory_space<vmem>>, vector<1x16x384xf32>
    %179 = vector.shape_cast %178 : vector<1x16x384xf32> to vector<16x384xf32>
    %cst_168 = arith.constant dense<0.000000e+00> : vector<10x384xf32>
    %180 = tpu.matmul %177, %179, %cst_168 {dimension_numbers = #tpu.dot_dimension_numbers<[1], [0], [0], [1], [0, 0, 1, 1], [], []>} : vector<10x16xf32>, vector<16x384xf32>, vector<10x384xf32> -> vector<10x384xf32>
    %181 = arith.addf %175, %180 : vector<10x384xf32>
    %c30 = arith.constant 30 : index
    %c0_169 = arith.constant 0 : index
    %c0_170 = arith.constant 0 : index
    %182 = vector.load %arg2[%c30, %c0_169, %c0_170] : memref<49x10x16xf32, #tpu.memory_space<vmem>>, vector<1x10x16xf32>
    %183 = vector.shape_cast %182 : vector<1x10x16xf32> to vector<10x16xf32>
    %c0_171 = arith.constant 0 : index
    %c0_172 = arith.constant 0 : index
    %c90 = arith.constant 90 : index
    %184 = vector.load %arg1[%c0_171, %c0_172, %c90] : memref<2x16x528xf32, #tpu.memory_space<vmem>>, vector<1x16x384xf32>
    %185 = vector.shape_cast %184 : vector<1x16x384xf32> to vector<16x384xf32>
    %cst_173 = arith.constant dense<0.000000e+00> : vector<10x384xf32>
    %186 = tpu.matmul %183, %185, %cst_173 {dimension_numbers = #tpu.dot_dimension_numbers<[1], [0], [0], [1], [0, 0, 1, 1], [], []>} : vector<10x16xf32>, vector<16x384xf32>, vector<10x384xf32> -> vector<10x384xf32>
    %187 = arith.addf %181, %186 : vector<10x384xf32>
    %c31 = arith.constant 31 : index
    %c0_174 = arith.constant 0 : index
    %c0_175 = arith.constant 0 : index
    %188 = vector.load %arg2[%c31, %c0_174, %c0_175] : memref<49x10x16xf32, #tpu.memory_space<vmem>>, vector<1x10x16xf32>
    %189 = vector.shape_cast %188 : vector<1x10x16xf32> to vector<10x16xf32>
    %c0_176 = arith.constant 0 : index
    %c0_177 = arith.constant 0 : index
    %c91 = arith.constant 91 : index
    %190 = vector.load %arg1[%c0_176, %c0_177, %c91] : memref<2x16x528xf32, #tpu.memory_space<vmem>>, vector<1x16x384xf32>
    %191 = vector.shape_cast %190 : vector<1x16x384xf32> to vector<16x384xf32>
    %cst_178 = arith.constant dense<0.000000e+00> : vector<10x384xf32>
    %192 = tpu.matmul %189, %191, %cst_178 {dimension_numbers = #tpu.dot_dimension_numbers<[1], [0], [0], [1], [0, 0, 1, 1], [], []>} : vector<10x16xf32>, vector<16x384xf32>, vector<10x384xf32> -> vector<10x384xf32>
    %193 = arith.addf %187, %192 : vector<10x384xf32>
    %c32 = arith.constant 32 : index
    %c0_179 = arith.constant 0 : index
    %c0_180 = arith.constant 0 : index
    %194 = vector.load %arg2[%c32, %c0_179, %c0_180] : memref<49x10x16xf32, #tpu.memory_space<vmem>>, vector<1x10x16xf32>
    %195 = vector.shape_cast %194 : vector<1x10x16xf32> to vector<10x16xf32>
    %c0_181 = arith.constant 0 : index
    %c0_182 = arith.constant 0 : index
    %c92 = arith.constant 92 : index
    %196 = vector.load %arg1[%c0_181, %c0_182, %c92] : memref<2x16x528xf32, #tpu.memory_space<vmem>>, vector<1x16x384xf32>
    %197 = vector.shape_cast %196 : vector<1x16x384xf32> to vector<16x384xf32>
    %cst_183 = arith.constant dense<0.000000e+00> : vector<10x384xf32>
    %198 = tpu.matmul %195, %197, %cst_183 {dimension_numbers = #tpu.dot_dimension_numbers<[1], [0], [0], [1], [0, 0, 1, 1], [], []>} : vector<10x16xf32>, vector<16x384xf32>, vector<10x384xf32> -> vector<10x384xf32>
    %199 = arith.addf %193, %198 : vector<10x384xf32>
    %c33 = arith.constant 33 : index
    %c0_184 = arith.constant 0 : index
    %c0_185 = arith.constant 0 : index
    %200 = vector.load %arg2[%c33, %c0_184, %c0_185] : memref<49x10x16xf32, #tpu.memory_space<vmem>>, vector<1x10x16xf32>
    %201 = vector.shape_cast %200 : vector<1x10x16xf32> to vector<10x16xf32>
    %c0_186 = arith.constant 0 : index
    %c0_187 = arith.constant 0 : index
    %c93 = arith.constant 93 : index
    %202 = vector.load %arg1[%c0_186, %c0_187, %c93] : memref<2x16x528xf32, #tpu.memory_space<vmem>>, vector<1x16x384xf32>
    %203 = vector.shape_cast %202 : vector<1x16x384xf32> to vector<16x384xf32>
    %cst_188 = arith.constant dense<0.000000e+00> : vector<10x384xf32>
    %204 = tpu.matmul %201, %203, %cst_188 {dimension_numbers = #tpu.dot_dimension_numbers<[1], [0], [0], [1], [0, 0, 1, 1], [], []>} : vector<10x16xf32>, vector<16x384xf32>, vector<10x384xf32> -> vector<10x384xf32>
    %205 = arith.addf %199, %204 : vector<10x384xf32>
    %c34 = arith.constant 34 : index
    %c0_189 = arith.constant 0 : index
    %c0_190 = arith.constant 0 : index
    %206 = vector.load %arg2[%c34, %c0_189, %c0_190] : memref<49x10x16xf32, #tpu.memory_space<vmem>>, vector<1x10x16xf32>
    %207 = vector.shape_cast %206 : vector<1x10x16xf32> to vector<10x16xf32>
    %c0_191 = arith.constant 0 : index
    %c0_192 = arith.constant 0 : index
    %c94 = arith.constant 94 : index
    %208 = vector.load %arg1[%c0_191, %c0_192, %c94] : memref<2x16x528xf32, #tpu.memory_space<vmem>>, vector<1x16x384xf32>
    %209 = vector.shape_cast %208 : vector<1x16x384xf32> to vector<16x384xf32>
    %cst_193 = arith.constant dense<0.000000e+00> : vector<10x384xf32>
    %210 = tpu.matmul %207, %209, %cst_193 {dimension_numbers = #tpu.dot_dimension_numbers<[1], [0], [0], [1], [0, 0, 1, 1], [], []>} : vector<10x16xf32>, vector<16x384xf32>, vector<10x384xf32> -> vector<10x384xf32>
    %211 = arith.addf %205, %210 : vector<10x384xf32>
    %c35 = arith.constant 35 : index
    %c0_194 = arith.constant 0 : index
    %c0_195 = arith.constant 0 : index
    %212 = vector.load %arg2[%c35, %c0_194, %c0_195] : memref<49x10x16xf32, #tpu.memory_space<vmem>>, vector<1x10x16xf32>
    %213 = vector.shape_cast %212 : vector<1x10x16xf32> to vector<10x16xf32>
    %c0_196 = arith.constant 0 : index
    %c0_197 = arith.constant 0 : index
    %c110 = arith.constant 110 : index
    %214 = vector.load %arg1[%c0_196, %c0_197, %c110] : memref<2x16x528xf32, #tpu.memory_space<vmem>>, vector<1x16x384xf32>
    %215 = vector.shape_cast %214 : vector<1x16x384xf32> to vector<16x384xf32>
    %cst_198 = arith.constant dense<0.000000e+00> : vector<10x384xf32>
    %216 = tpu.matmul %213, %215, %cst_198 {dimension_numbers = #tpu.dot_dimension_numbers<[1], [0], [0], [1], [0, 0, 1, 1], [], []>} : vector<10x16xf32>, vector<16x384xf32>, vector<10x384xf32> -> vector<10x384xf32>
    %217 = arith.addf %211, %216 : vector<10x384xf32>
    %c36 = arith.constant 36 : index
    %c0_199 = arith.constant 0 : index
    %c0_200 = arith.constant 0 : index
    %218 = vector.load %arg2[%c36, %c0_199, %c0_200] : memref<49x10x16xf32, #tpu.memory_space<vmem>>, vector<1x10x16xf32>
    %219 = vector.shape_cast %218 : vector<1x10x16xf32> to vector<10x16xf32>
    %c0_201 = arith.constant 0 : index
    %c0_202 = arith.constant 0 : index
    %c111 = arith.constant 111 : index
    %220 = vector.load %arg1[%c0_201, %c0_202, %c111] : memref<2x16x528xf32, #tpu.memory_space<vmem>>, vector<1x16x384xf32>
    %221 = vector.shape_cast %220 : vector<1x16x384xf32> to vector<16x384xf32>
    %cst_203 = arith.constant dense<0.000000e+00> : vector<10x384xf32>
    %222 = tpu.matmul %219, %221, %cst_203 {dimension_numbers = #tpu.dot_dimension_numbers<[1], [0], [0], [1], [0, 0, 1, 1], [], []>} : vector<10x16xf32>, vector<16x384xf32>, vector<10x384xf32> -> vector<10x384xf32>
    %223 = arith.addf %217, %222 : vector<10x384xf32>
    %c37 = arith.constant 37 : index
    %c0_204 = arith.constant 0 : index
    %c0_205 = arith.constant 0 : index
    %224 = vector.load %arg2[%c37, %c0_204, %c0_205] : memref<49x10x16xf32, #tpu.memory_space<vmem>>, vector<1x10x16xf32>
    %225 = vector.shape_cast %224 : vector<1x10x16xf32> to vector<10x16xf32>
    %c0_206 = arith.constant 0 : index
    %c0_207 = arith.constant 0 : index
    %c112 = arith.constant 112 : index
    %226 = vector.load %arg1[%c0_206, %c0_207, %c112] : memref<2x16x528xf32, #tpu.memory_space<vmem>>, vector<1x16x384xf32>
    %227 = vector.shape_cast %226 : vector<1x16x384xf32> to vector<16x384xf32>
    %cst_208 = arith.constant dense<0.000000e+00> : vector<10x384xf32>
    %228 = tpu.matmul %225, %227, %cst_208 {dimension_numbers = #tpu.dot_dimension_numbers<[1], [0], [0], [1], [0, 0, 1, 1], [], []>} : vector<10x16xf32>, vector<16x384xf32>, vector<10x384xf32> -> vector<10x384xf32>
    %229 = arith.addf %223, %228 : vector<10x384xf32>
    %c38 = arith.constant 38 : index
    %c0_209 = arith.constant 0 : index
    %c0_210 = arith.constant 0 : index
    %230 = vector.load %arg2[%c38, %c0_209, %c0_210] : memref<49x10x16xf32, #tpu.memory_space<vmem>>, vector<1x10x16xf32>
    %231 = vector.shape_cast %230 : vector<1x10x16xf32> to vector<10x16xf32>
    %c0_211 = arith.constant 0 : index
    %c0_212 = arith.constant 0 : index
    %c113 = arith.constant 113 : index
    %232 = vector.load %arg1[%c0_211, %c0_212, %c113] : memref<2x16x528xf32, #tpu.memory_space<vmem>>, vector<1x16x384xf32>
    %233 = vector.shape_cast %232 : vector<1x16x384xf32> to vector<16x384xf32>
    %cst_213 = arith.constant dense<0.000000e+00> : vector<10x384xf32>
    %234 = tpu.matmul %231, %233, %cst_213 {dimension_numbers = #tpu.dot_dimension_numbers<[1], [0], [0], [1], [0, 0, 1, 1], [], []>} : vector<10x16xf32>, vector<16x384xf32>, vector<10x384xf32> -> vector<10x384xf32>
    %235 = arith.addf %229, %234 : vector<10x384xf32>
    %c39 = arith.constant 39 : index
    %c0_214 = arith.constant 0 : index
    %c0_215 = arith.constant 0 : index
    %236 = vector.load %arg2[%c39, %c0_214, %c0_215] : memref<49x10x16xf32, #tpu.memory_space<vmem>>, vector<1x10x16xf32>
    %237 = vector.shape_cast %236 : vector<1x10x16xf32> to vector<10x16xf32>
    %c0_216 = arith.constant 0 : index
    %c0_217 = arith.constant 0 : index
    %c114 = arith.constant 114 : index
    %238 = vector.load %arg1[%c0_216, %c0_217, %c114] : memref<2x16x528xf32, #tpu.memory_space<vmem>>, vector<1x16x384xf32>
    %239 = vector.shape_cast %238 : vector<1x16x384xf32> to vector<16x384xf32>
    %cst_218 = arith.constant dense<0.000000e+00> : vector<10x384xf32>
    %240 = tpu.matmul %237, %239, %cst_218 {dimension_numbers = #tpu.dot_dimension_numbers<[1], [0], [0], [1], [0, 0, 1, 1], [], []>} : vector<10x16xf32>, vector<16x384xf32>, vector<10x384xf32> -> vector<10x384xf32>
    %241 = arith.addf %235, %240 : vector<10x384xf32>
    %c40 = arith.constant 40 : index
    %c0_219 = arith.constant 0 : index
    %c0_220 = arith.constant 0 : index
    %242 = vector.load %arg2[%c40, %c0_219, %c0_220] : memref<49x10x16xf32, #tpu.memory_space<vmem>>, vector<1x10x16xf32>
    %243 = vector.shape_cast %242 : vector<1x10x16xf32> to vector<10x16xf32>
    %c0_221 = arith.constant 0 : index
    %c0_222 = arith.constant 0 : index
    %c115 = arith.constant 115 : index
    %244 = vector.load %arg1[%c0_221, %c0_222, %c115] : memref<2x16x528xf32, #tpu.memory_space<vmem>>, vector<1x16x384xf32>
    %245 = vector.shape_cast %244 : vector<1x16x384xf32> to vector<16x384xf32>
    %cst_223 = arith.constant dense<0.000000e+00> : vector<10x384xf32>
    %246 = tpu.matmul %243, %245, %cst_223 {dimension_numbers = #tpu.dot_dimension_numbers<[1], [0], [0], [1], [0, 0, 1, 1], [], []>} : vector<10x16xf32>, vector<16x384xf32>, vector<10x384xf32> -> vector<10x384xf32>
    %247 = arith.addf %241, %246 : vector<10x384xf32>
    %c41 = arith.constant 41 : index
    %c0_224 = arith.constant 0 : index
    %c0_225 = arith.constant 0 : index
    %248 = vector.load %arg2[%c41, %c0_224, %c0_225] : memref<49x10x16xf32, #tpu.memory_space<vmem>>, vector<1x10x16xf32>
    %249 = vector.shape_cast %248 : vector<1x10x16xf32> to vector<10x16xf32>
    %c0_226 = arith.constant 0 : index
    %c0_227 = arith.constant 0 : index
    %c116 = arith.constant 116 : index
    %250 = vector.load %arg1[%c0_226, %c0_227, %c116] : memref<2x16x528xf32, #tpu.memory_space<vmem>>, vector<1x16x384xf32>
    %251 = vector.shape_cast %250 : vector<1x16x384xf32> to vector<16x384xf32>
    %cst_228 = arith.constant dense<0.000000e+00> : vector<10x384xf32>
    %252 = tpu.matmul %249, %251, %cst_228 {dimension_numbers = #tpu.dot_dimension_numbers<[1], [0], [0], [1], [0, 0, 1, 1], [], []>} : vector<10x16xf32>, vector<16x384xf32>, vector<10x384xf32> -> vector<10x384xf32>
    %253 = arith.addf %247, %252 : vector<10x384xf32>
    %c42 = arith.constant 42 : index
    %c0_229 = arith.constant 0 : index
    %c0_230 = arith.constant 0 : index
    %254 = vector.load %arg2[%c42, %c0_229, %c0_230] : memref<49x10x16xf32, #tpu.memory_space<vmem>>, vector<1x10x16xf32>
    %255 = vector.shape_cast %254 : vector<1x10x16xf32> to vector<10x16xf32>
    %c0_231 = arith.constant 0 : index
    %c0_232 = arith.constant 0 : index
    %c132 = arith.constant 132 : index
    %256 = vector.load %arg1[%c0_231, %c0_232, %c132] : memref<2x16x528xf32, #tpu.memory_space<vmem>>, vector<1x16x384xf32>
    %257 = vector.shape_cast %256 : vector<1x16x384xf32> to vector<16x384xf32>
    %cst_233 = arith.constant dense<0.000000e+00> : vector<10x384xf32>
    %258 = tpu.matmul %255, %257, %cst_233 {dimension_numbers = #tpu.dot_dimension_numbers<[1], [0], [0], [1], [0, 0, 1, 1], [], []>} : vector<10x16xf32>, vector<16x384xf32>, vector<10x384xf32> -> vector<10x384xf32>
    %259 = arith.addf %253, %258 : vector<10x384xf32>
    %c43 = arith.constant 43 : index
    %c0_234 = arith.constant 0 : index
    %c0_235 = arith.constant 0 : index
    %260 = vector.load %arg2[%c43, %c0_234, %c0_235] : memref<49x10x16xf32, #tpu.memory_space<vmem>>, vector<1x10x16xf32>
    %261 = vector.shape_cast %260 : vector<1x10x16xf32> to vector<10x16xf32>
    %c0_236 = arith.constant 0 : index
    %c0_237 = arith.constant 0 : index
    %c133 = arith.constant 133 : index
    %262 = vector.load %arg1[%c0_236, %c0_237, %c133] : memref<2x16x528xf32, #tpu.memory_space<vmem>>, vector<1x16x384xf32>
    %263 = vector.shape_cast %262 : vector<1x16x384xf32> to vector<16x384xf32>
    %cst_238 = arith.constant dense<0.000000e+00> : vector<10x384xf32>
    %264 = tpu.matmul %261, %263, %cst_238 {dimension_numbers = #tpu.dot_dimension_numbers<[1], [0], [0], [1], [0, 0, 1, 1], [], []>} : vector<10x16xf32>, vector<16x384xf32>, vector<10x384xf32> -> vector<10x384xf32>
    %265 = arith.addf %259, %264 : vector<10x384xf32>
    %c44_239 = arith.constant 44 : index
    %c0_240 = arith.constant 0 : index
    %c0_241 = arith.constant 0 : index
    %266 = vector.load %arg2[%c44_239, %c0_240, %c0_241] : memref<49x10x16xf32, #tpu.memory_space<vmem>>, vector<1x10x16xf32>
    %267 = vector.shape_cast %266 : vector<1x10x16xf32> to vector<10x16xf32>
    %c0_242 = arith.constant 0 : index
    %c0_243 = arith.constant 0 : index
    %c134 = arith.constant 134 : index
    %268 = vector.load %arg1[%c0_242, %c0_243, %c134] : memref<2x16x528xf32, #tpu.memory_space<vmem>>, vector<1x16x384xf32>
    %269 = vector.shape_cast %268 : vector<1x16x384xf32> to vector<16x384xf32>
    %cst_244 = arith.constant dense<0.000000e+00> : vector<10x384xf32>
    %270 = tpu.matmul %267, %269, %cst_244 {dimension_numbers = #tpu.dot_dimension_numbers<[1], [0], [0], [1], [0, 0, 1, 1], [], []>} : vector<10x16xf32>, vector<16x384xf32>, vector<10x384xf32> -> vector<10x384xf32>
    %271 = arith.addf %265, %270 : vector<10x384xf32>
    %c45_245 = arith.constant 45 : index
    %c0_246 = arith.constant 0 : index
    %c0_247 = arith.constant 0 : index
    %272 = vector.load %arg2[%c45_245, %c0_246, %c0_247] : memref<49x10x16xf32, #tpu.memory_space<vmem>>, vector<1x10x16xf32>
    %273 = vector.shape_cast %272 : vector<1x10x16xf32> to vector<10x16xf32>
    %c0_248 = arith.constant 0 : index
    %c0_249 = arith.constant 0 : index
    %c135 = arith.constant 135 : index
    %274 = vector.load %arg1[%c0_248, %c0_249, %c135] : memref<2x16x528xf32, #tpu.memory_space<vmem>>, vector<1x16x384xf32>
    %275 = vector.shape_cast %274 : vector<1x16x384xf32> to vector<16x384xf32>
    %cst_250 = arith.constant dense<0.000000e+00> : vector<10x384xf32>
    %276 = tpu.matmul %273, %275, %cst_250 {dimension_numbers = #tpu.dot_dimension_numbers<[1], [0], [0], [1], [0, 0, 1, 1], [], []>} : vector<10x16xf32>, vector<16x384xf32>, vector<10x384xf32> -> vector<10x384xf32>
    %277 = arith.addf %271, %276 : vector<10x384xf32>
    %c46_251 = arith.constant 46 : index
    %c0_252 = arith.constant 0 : index
    %c0_253 = arith.constant 0 : index
    %278 = vector.load %arg2[%c46_251, %c0_252, %c0_253] : memref<49x10x16xf32, #tpu.memory_space<vmem>>, vector<1x10x16xf32>
    %279 = vector.shape_cast %278 : vector<1x10x16xf32> to vector<10x16xf32>
    %c0_254 = arith.constant 0 : index
    %c0_255 = arith.constant 0 : index
    %c136 = arith.constant 136 : index
    %280 = vector.load %arg1[%c0_254, %c0_255, %c136] : memref<2x16x528xf32, #tpu.memory_space<vmem>>, vector<1x16x384xf32>
    %281 = vector.shape_cast %280 : vector<1x16x384xf32> to vector<16x384xf32>
    %cst_256 = arith.constant dense<0.000000e+00> : vector<10x384xf32>
    %282 = tpu.matmul %279, %281, %cst_256 {dimension_numbers = #tpu.dot_dimension_numbers<[1], [0], [0], [1], [0, 0, 1, 1], [], []>} : vector<10x16xf32>, vector<16x384xf32>, vector<10x384xf32> -> vector<10x384xf32>
    %283 = arith.addf %277, %282 : vector<10x384xf32>
    %c47_257 = arith.constant 47 : index
    %c0_258 = arith.constant 0 : index
    %c0_259 = arith.constant 0 : index
    %284 = vector.load %arg2[%c47_257, %c0_258, %c0_259] : memref<49x10x16xf32, #tpu.memory_space<vmem>>, vector<1x10x16xf32>
    %285 = vector.shape_cast %284 : vector<1x10x16xf32> to vector<10x16xf32>
    %c0_260 = arith.constant 0 : index
    %c0_261 = arith.constant 0 : index
    %c137 = arith.constant 137 : index
    %286 = vector.load %arg1[%c0_260, %c0_261, %c137] : memref<2x16x528xf32, #tpu.memory_space<vmem>>, vector<1x16x384xf32>
    %287 = vector.shape_cast %286 : vector<1x16x384xf32> to vector<16x384xf32>
    %cst_262 = arith.constant dense<0.000000e+00> : vector<10x384xf32>
    %288 = tpu.matmul %285, %287, %cst_262 {dimension_numbers = #tpu.dot_dimension_numbers<[1], [0], [0], [1], [0, 0, 1, 1], [], []>} : vector<10x16xf32>, vector<16x384xf32>, vector<10x384xf32> -> vector<10x384xf32>
    %289 = arith.addf %283, %288 : vector<10x384xf32>
    %c48_263 = arith.constant 48 : index
    %c0_264 = arith.constant 0 : index
    %c0_265 = arith.constant 0 : index
    %290 = vector.load %arg2[%c48_263, %c0_264, %c0_265] : memref<49x10x16xf32, #tpu.memory_space<vmem>>, vector<1x10x16xf32>
    %291 = vector.shape_cast %290 : vector<1x10x16xf32> to vector<10x16xf32>
    %c0_266 = arith.constant 0 : index
    %c0_267 = arith.constant 0 : index
    %c138 = arith.constant 138 : index
    %292 = vector.load %arg1[%c0_266, %c0_267, %c138] : memref<2x16x528xf32, #tpu.memory_space<vmem>>, vector<1x16x384xf32>
    %293 = vector.shape_cast %292 : vector<1x16x384xf32> to vector<16x384xf32>
    %cst_268 = arith.constant dense<0.000000e+00> : vector<10x384xf32>
    %294 = tpu.matmul %291, %293, %cst_268 {dimension_numbers = #tpu.dot_dimension_numbers<[1], [0], [0], [1], [0, 0, 1, 1], [], []>} : vector<10x16xf32>, vector<16x384xf32>, vector<10x384xf32> -> vector<10x384xf32>
    %295 = arith.addf %289, %294 : vector<10x384xf32>
    %296 = arith.addf %295, %0 : vector<10x384xf32>
    %cst_269 = arith.constant dense<0xFF800000> : vector<10xf32>
    %297 = vector.multi_reduction <maximumf>, %296, %cst_269 [1] : vector<10x384xf32> to vector<10xf32>
    %298 = vector.shape_cast %297 : vector<10xf32> to vector<10x1xf32>
    %299 = vector.broadcast %298 : vector<10x1xf32> to vector<10x384xf32>
    %300 = arith.subf %296, %299 : vector<10x384xf32>
    %301 = math.exp %300 : vector<10x384xf32>
    %cst_270 = arith.constant dense<0.000000e+00> : vector<10xf32>
    %302 = vector.multi_reduction <add>, %301, %cst_270 [1] : vector<10x384xf32> to vector<10xf32>
    %303 = vector.shape_cast %302 : vector<10xf32> to vector<10x1xf32>
    %304 = vector.broadcast %1 : vector<1x384xf32> to vector<10x384xf32>
    %305 = arith.mulf %301, %304 : vector<10x384xf32>
    %cst_271 = arith.constant dense<0.000000e+00> : vector<10xf32>
    %306 = vector.multi_reduction <add>, %305, %cst_271 [1] : vector<10x384xf32> to vector<10xf32>
    %307 = vector.shape_cast %306 : vector<10xf32> to vector<10x1xf32>
    %308 = vector.broadcast %2 : vector<1x384xf32> to vector<10x384xf32>
    %309 = arith.mulf %301, %308 : vector<10x384xf32>
    %cst_272 = arith.constant dense<0.000000e+00> : vector<10xf32>
    %310 = vector.multi_reduction <add>, %309, %cst_272 [1] : vector<10x384xf32> to vector<10xf32>
    %311 = vector.shape_cast %310 : vector<10xf32> to vector<10x1xf32>
    %312 = tpu.concatenate %307, %311 in 1 : vector<10x1xf32>, vector<10x1xf32> -> vector<10x2xf32>
    %313 = vector.broadcast %303 : vector<10x1xf32> to vector<10x2xf32>
    %314 = arith.divf %312, %313 : vector<10x2xf32>
    %c0_273 = arith.constant 0 : index
    %c0_274 = arith.constant 0 : index
    %c0_275 = arith.constant 0 : index
    %315 = vector.load %arg5[%c0_273, %c0_274, %c0_275] : memref<2x10x2xf32, #tpu.memory_space<vmem>>, vector<1x10x2xf32>
    %316 = vector.shape_cast %315 : vector<1x10x2xf32> to vector<10x2xf32>
    %317 = vector.shape_cast %314 : vector<10x2xf32> to vector<1x10x2xf32>
    tpu.vector_store %arg5[%c0_273, %c0_274, %c0_275], %317 {strides = array<i32>} : memref<2x10x2xf32, #tpu.memory_space<vmem>>, vector<1x10x2xf32>,
    %c0_276 = arith.constant 0 : index
    %c0_277 = arith.constant 0 : index
    %c0_278 = arith.constant 0 : index
    %318 = vector.load %arg2[%c0_276, %c0_277, %c0_278] : memref<49x10x16xf32, #tpu.memory_space<vmem>>, vector<1x10x16xf32>
    %319 = vector.shape_cast %318 : vector<1x10x16xf32> to vector<10x16xf32>
    %c1_279 = arith.constant 1 : index
    %c0_280 = arith.constant 0 : index
    %c0_281 = arith.constant 0 : index
    %320 = vector.load %arg1[%c1_279, %c0_280, %c0_281] : memref<2x16x528xf32, #tpu.memory_space<vmem>>, vector<1x16x384xf32>
    %321 = vector.shape_cast %320 : vector<1x16x384xf32> to vector<16x384xf32>
    %cst_282 = arith.constant dense<0.000000e+00> : vector<10x384xf32>
    %322 = tpu.matmul %319, %321, %cst_282 {dimension_numbers = #tpu.dot_dimension_numbers<[1], [0], [0], [1], [0, 0, 1, 1], [], []>} : vector<10x16xf32>, vector<16x384xf32>, vector<10x384xf32> -> vector<10x384xf32>
    %c1_283 = arith.constant 1 : index
    %c0_284 = arith.constant 0 : index
    %c0_285 = arith.constant 0 : index
    %323 = vector.load %arg2[%c1_283, %c0_284, %c0_285] : memref<49x10x16xf32, #tpu.memory_space<vmem>>, vector<1x10x16xf32>
    %324 = vector.shape_cast %323 : vector<1x10x16xf32> to vector<10x16xf32>
    %c1_286 = arith.constant 1 : index
    %c0_287 = arith.constant 0 : index
    %c1_288 = arith.constant 1 : index
    %325 = vector.load %arg1[%c1_286, %c0_287, %c1_288] : memref<2x16x528xf32, #tpu.memory_space<vmem>>, vector<1x16x384xf32>
    %326 = vector.shape_cast %325 : vector<1x16x384xf32> to vector<16x384xf32>
    %cst_289 = arith.constant dense<0.000000e+00> : vector<10x384xf32>
    %327 = tpu.matmul %324, %326, %cst_289 {dimension_numbers = #tpu.dot_dimension_numbers<[1], [0], [0], [1], [0, 0, 1, 1], [], []>} : vector<10x16xf32>, vector<16x384xf32>, vector<10x384xf32> -> vector<10x384xf32>
    %328 = arith.addf %322, %327 : vector<10x384xf32>
    %c2_290 = arith.constant 2 : index
    %c0_291 = arith.constant 0 : index
    %c0_292 = arith.constant 0 : index
    %329 = vector.load %arg2[%c2_290, %c0_291, %c0_292] : memref<49x10x16xf32, #tpu.memory_space<vmem>>, vector<1x10x16xf32>
    %330 = vector.shape_cast %329 : vector<1x10x16xf32> to vector<10x16xf32>
    %c1_293 = arith.constant 1 : index
    %c0_294 = arith.constant 0 : index
    %c2_295 = arith.constant 2 : index
    %331 = vector.load %arg1[%c1_293, %c0_294, %c2_295] : memref<2x16x528xf32, #tpu.memory_space<vmem>>, vector<1x16x384xf32>
    %332 = vector.shape_cast %331 : vector<1x16x384xf32> to vector<16x384xf32>
    %cst_296 = arith.constant dense<0.000000e+00> : vector<10x384xf32>
    %333 = tpu.matmul %330, %332, %cst_296 {dimension_numbers = #tpu.dot_dimension_numbers<[1], [0], [0], [1], [0, 0, 1, 1], [], []>} : vector<10x16xf32>, vector<16x384xf32>, vector<10x384xf32> -> vector<10x384xf32>
    %334 = arith.addf %328, %333 : vector<10x384xf32>
    %c3_297 = arith.constant 3 : index
    %c0_298 = arith.constant 0 : index
    %c0_299 = arith.constant 0 : index
    %335 = vector.load %arg2[%c3_297, %c0_298, %c0_299] : memref<49x10x16xf32, #tpu.memory_space<vmem>>, vector<1x10x16xf32>
    %336 = vector.shape_cast %335 : vector<1x10x16xf32> to vector<10x16xf32>
    %c1_300 = arith.constant 1 : index
    %c0_301 = arith.constant 0 : index
    %c3_302 = arith.constant 3 : index
    %337 = vector.load %arg1[%c1_300, %c0_301, %c3_302] : memref<2x16x528xf32, #tpu.memory_space<vmem>>, vector<1x16x384xf32>
    %338 = vector.shape_cast %337 : vector<1x16x384xf32> to vector<16x384xf32>
    %cst_303 = arith.constant dense<0.000000e+00> : vector<10x384xf32>
    %339 = tpu.matmul %336, %338, %cst_303 {dimension_numbers = #tpu.dot_dimension_numbers<[1], [0], [0], [1], [0, 0, 1, 1], [], []>} : vector<10x16xf32>, vector<16x384xf32>, vector<10x384xf32> -> vector<10x384xf32>
    %340 = arith.addf %334, %339 : vector<10x384xf32>
    %c4_304 = arith.constant 4 : index
    %c0_305 = arith.constant 0 : index
    %c0_306 = arith.constant 0 : index
    %341 = vector.load %arg2[%c4_304, %c0_305, %c0_306] : memref<49x10x16xf32, #tpu.memory_space<vmem>>, vector<1x10x16xf32>
    %342 = vector.shape_cast %341 : vector<1x10x16xf32> to vector<10x16xf32>
    %c1_307 = arith.constant 1 : index
    %c0_308 = arith.constant 0 : index
    %c4_309 = arith.constant 4 : index
    %343 = vector.load %arg1[%c1_307, %c0_308, %c4_309] : memref<2x16x528xf32, #tpu.memory_space<vmem>>, vector<1x16x384xf32>
    %344 = vector.shape_cast %343 : vector<1x16x384xf32> to vector<16x384xf32>
    %cst_310 = arith.constant dense<0.000000e+00> : vector<10x384xf32>
    %345 = tpu.matmul %342, %344, %cst_310 {dimension_numbers = #tpu.dot_dimension_numbers<[1], [0], [0], [1], [0, 0, 1, 1], [], []>} : vector<10x16xf32>, vector<16x384xf32>, vector<10x384xf32> -> vector<10x384xf32>
    %346 = arith.addf %340, %345 : vector<10x384xf32>
    %c5_311 = arith.constant 5 : index
    %c0_312 = arith.constant 0 : index
    %c0_313 = arith.constant 0 : index
    %347 = vector.load %arg2[%c5_311, %c0_312, %c0_313] : memref<49x10x16xf32, #tpu.memory_space<vmem>>, vector<1x10x16xf32>
    %348 = vector.shape_cast %347 : vector<1x10x16xf32> to vector<10x16xf32>
    %c1_314 = arith.constant 1 : index
    %c0_315 = arith.constant 0 : index
    %c5_316 = arith.constant 5 : index
    %349 = vector.load %arg1[%c1_314, %c0_315, %c5_316] : memref<2x16x528xf32, #tpu.memory_space<vmem>>, vector<1x16x384xf32>
    %350 = vector.shape_cast %349 : vector<1x16x384xf32> to vector<16x384xf32>
    %cst_317 = arith.constant dense<0.000000e+00> : vector<10x384xf32>
    %351 = tpu.matmul %348, %350, %cst_317 {dimension_numbers = #tpu.dot_dimension_numbers<[1], [0], [0], [1], [0, 0, 1, 1], [], []>} : vector<10x16xf32>, vector<16x384xf32>, vector<10x384xf32> -> vector<10x384xf32>
    %352 = arith.addf %346, %351 : vector<10x384xf32>
    %c6_318 = arith.constant 6 : index
    %c0_319 = arith.constant 0 : index
    %c0_320 = arith.constant 0 : index
    %353 = vector.load %arg2[%c6_318, %c0_319, %c0_320] : memref<49x10x16xf32, #tpu.memory_space<vmem>>, vector<1x10x16xf32>
    %354 = vector.shape_cast %353 : vector<1x10x16xf32> to vector<10x16xf32>
    %c1_321 = arith.constant 1 : index
    %c0_322 = arith.constant 0 : index
    %c6_323 = arith.constant 6 : index
    %355 = vector.load %arg1[%c1_321, %c0_322, %c6_323] : memref<2x16x528xf32, #tpu.memory_space<vmem>>, vector<1x16x384xf32>
    %356 = vector.shape_cast %355 : vector<1x16x384xf32> to vector<16x384xf32>
    %cst_324 = arith.constant dense<0.000000e+00> : vector<10x384xf32>
    %357 = tpu.matmul %354, %356, %cst_324 {dimension_numbers = #tpu.dot_dimension_numbers<[1], [0], [0], [1], [0, 0, 1, 1], [], []>} : vector<10x16xf32>, vector<16x384xf32>, vector<10x384xf32> -> vector<10x384xf32>
    %358 = arith.addf %352, %357 : vector<10x384xf32>
    %c7_325 = arith.constant 7 : index
    %c0_326 = arith.constant 0 : index
    %c0_327 = arith.constant 0 : index
    %359 = vector.load %arg2[%c7_325, %c0_326, %c0_327] : memref<49x10x16xf32, #tpu.memory_space<vmem>>, vector<1x10x16xf32>
    %360 = vector.shape_cast %359 : vector<1x10x16xf32> to vector<10x16xf32>
    %c1_328 = arith.constant 1 : index
    %c0_329 = arith.constant 0 : index
    %c22_330 = arith.constant 22 : index
    %361 = vector.load %arg1[%c1_328, %c0_329, %c22_330] : memref<2x16x528xf32, #tpu.memory_space<vmem>>, vector<1x16x384xf32>
    %362 = vector.shape_cast %361 : vector<1x16x384xf32> to vector<16x384xf32>
    %cst_331 = arith.constant dense<0.000000e+00> : vector<10x384xf32>
    %363 = tpu.matmul %360, %362, %cst_331 {dimension_numbers = #tpu.dot_dimension_numbers<[1], [0], [0], [1], [0, 0, 1, 1], [], []>} : vector<10x16xf32>, vector<16x384xf32>, vector<10x384xf32> -> vector<10x384xf32>
    %364 = arith.addf %358, %363 : vector<10x384xf32>
    %c8_332 = arith.constant 8 : index
    %c0_333 = arith.constant 0 : index
    %c0_334 = arith.constant 0 : index
    %365 = vector.load %arg2[%c8_332, %c0_333, %c0_334] : memref<49x10x16xf32, #tpu.memory_space<vmem>>, vector<1x10x16xf32>
    %366 = vector.shape_cast %365 : vector<1x10x16xf32> to vector<10x16xf32>
    %c1_335 = arith.constant 1 : index
    %c0_336 = arith.constant 0 : index
    %c23_337 = arith.constant 23 : index
    %367 = vector.load %arg1[%c1_335, %c0_336, %c23_337] : memref<2x16x528xf32, #tpu.memory_space<vmem>>, vector<1x16x384xf32>
    %368 = vector.shape_cast %367 : vector<1x16x384xf32> to vector<16x384xf32>
    %cst_338 = arith.constant dense<0.000000e+00> : vector<10x384xf32>
    %369 = tpu.matmul %366, %368, %cst_338 {dimension_numbers = #tpu.dot_dimension_numbers<[1], [0], [0], [1], [0, 0, 1, 1], [], []>} : vector<10x16xf32>, vector<16x384xf32>, vector<10x384xf32> -> vector<10x384xf32>
    %370 = arith.addf %364, %369 : vector<10x384xf32>
    %c9_339 = arith.constant 9 : index
    %c0_340 = arith.constant 0 : index
    %c0_341 = arith.constant 0 : index
    %371 = vector.load %arg2[%c9_339, %c0_340, %c0_341] : memref<49x10x16xf32, #tpu.memory_space<vmem>>, vector<1x10x16xf32>
    %372 = vector.shape_cast %371 : vector<1x10x16xf32> to vector<10x16xf32>
    %c1_342 = arith.constant 1 : index
    %c0_343 = arith.constant 0 : index
    %c24_344 = arith.constant 24 : index
    %373 = vector.load %arg1[%c1_342, %c0_343, %c24_344] : memref<2x16x528xf32, #tpu.memory_space<vmem>>, vector<1x16x384xf32>
    %374 = vector.shape_cast %373 : vector<1x16x384xf32> to vector<16x384xf32>
    %cst_345 = arith.constant dense<0.000000e+00> : vector<10x384xf32>
    %375 = tpu.matmul %372, %374, %cst_345 {dimension_numbers = #tpu.dot_dimension_numbers<[1], [0], [0], [1], [0, 0, 1, 1], [], []>} : vector<10x16xf32>, vector<16x384xf32>, vector<10x384xf32> -> vector<10x384xf32>
    %376 = arith.addf %370, %375 : vector<10x384xf32>
    %c10_346 = arith.constant 10 : index
    %c0_347 = arith.constant 0 : index
    %c0_348 = arith.constant 0 : index
    %377 = vector.load %arg2[%c10_346, %c0_347, %c0_348] : memref<49x10x16xf32, #tpu.memory_space<vmem>>, vector<1x10x16xf32>
    %378 = vector.shape_cast %377 : vector<1x10x16xf32> to vector<10x16xf32>
    %c1_349 = arith.constant 1 : index
    %c0_350 = arith.constant 0 : index
    %c25_351 = arith.constant 25 : index
    %379 = vector.load %arg1[%c1_349, %c0_350, %c25_351] : memref<2x16x528xf32, #tpu.memory_space<vmem>>, vector<1x16x384xf32>
    %380 = vector.shape_cast %379 : vector<1x16x384xf32> to vector<16x384xf32>
    %cst_352 = arith.constant dense<0.000000e+00> : vector<10x384xf32>
    %381 = tpu.matmul %378, %380, %cst_352 {dimension_numbers = #tpu.dot_dimension_numbers<[1], [0], [0], [1], [0, 0, 1, 1], [], []>} : vector<10x16xf32>, vector<16x384xf32>, vector<10x384xf32> -> vector<10x384xf32>
    %382 = arith.addf %376, %381 : vector<10x384xf32>
    %c11_353 = arith.constant 11 : index
    %c0_354 = arith.constant 0 : index
    %c0_355 = arith.constant 0 : index
    %383 = vector.load %arg2[%c11_353, %c0_354, %c0_355] : memref<49x10x16xf32, #tpu.memory_space<vmem>>, vector<1x10x16xf32>
    %384 = vector.shape_cast %383 : vector<1x10x16xf32> to vector<10x16xf32>
    %c1_356 = arith.constant 1 : index
    %c0_357 = arith.constant 0 : index
    %c26_358 = arith.constant 26 : index
    %385 = vector.load %arg1[%c1_356, %c0_357, %c26_358] : memref<2x16x528xf32, #tpu.memory_space<vmem>>, vector<1x16x384xf32>
    %386 = vector.shape_cast %385 : vector<1x16x384xf32> to vector<16x384xf32>
    %cst_359 = arith.constant dense<0.000000e+00> : vector<10x384xf32>
    %387 = tpu.matmul %384, %386, %cst_359 {dimension_numbers = #tpu.dot_dimension_numbers<[1], [0], [0], [1], [0, 0, 1, 1], [], []>} : vector<10x16xf32>, vector<16x384xf32>, vector<10x384xf32> -> vector<10x384xf32>
    %388 = arith.addf %382, %387 : vector<10x384xf32>
    %c12_360 = arith.constant 12 : index
    %c0_361 = arith.constant 0 : index
    %c0_362 = arith.constant 0 : index
    %389 = vector.load %arg2[%c12_360, %c0_361, %c0_362] : memref<49x10x16xf32, #tpu.memory_space<vmem>>, vector<1x10x16xf32>
    %390 = vector.shape_cast %389 : vector<1x10x16xf32> to vector<10x16xf32>
    %c1_363 = arith.constant 1 : index
    %c0_364 = arith.constant 0 : index
    %c27_365 = arith.constant 27 : index
    %391 = vector.load %arg1[%c1_363, %c0_364, %c27_365] : memref<2x16x528xf32, #tpu.memory_space<vmem>>, vector<1x16x384xf32>
    %392 = vector.shape_cast %391 : vector<1x16x384xf32> to vector<16x384xf32>
    %cst_366 = arith.constant dense<0.000000e+00> : vector<10x384xf32>
    %393 = tpu.matmul %390, %392, %cst_366 {dimension_numbers = #tpu.dot_dimension_numbers<[1], [0], [0], [1], [0, 0, 1, 1], [], []>} : vector<10x16xf32>, vector<16x384xf32>, vector<10x384xf32> -> vector<10x384xf32>
    %394 = arith.addf %388, %393 : vector<10x384xf32>
    %c13_367 = arith.constant 13 : index
    %c0_368 = arith.constant 0 : index
    %c0_369 = arith.constant 0 : index
    %395 = vector.load %arg2[%c13_367, %c0_368, %c0_369] : memref<49x10x16xf32, #tpu.memory_space<vmem>>, vector<1x10x16xf32>
    %396 = vector.shape_cast %395 : vector<1x10x16xf32> to vector<10x16xf32>
    %c1_370 = arith.constant 1 : index
    %c0_371 = arith.constant 0 : index
    %c28_372 = arith.constant 28 : index
    %397 = vector.load %arg1[%c1_370, %c0_371, %c28_372] : memref<2x16x528xf32, #tpu.memory_space<vmem>>, vector<1x16x384xf32>
    %398 = vector.shape_cast %397 : vector<1x16x384xf32> to vector<16x384xf32>
    %cst_373 = arith.constant dense<0.000000e+00> : vector<10x384xf32>
    %399 = tpu.matmul %396, %398, %cst_373 {dimension_numbers = #tpu.dot_dimension_numbers<[1], [0], [0], [1], [0, 0, 1, 1], [], []>} : vector<10x16xf32>, vector<16x384xf32>, vector<10x384xf32> -> vector<10x384xf32>
    %400 = arith.addf %394, %399 : vector<10x384xf32>
    %c14_374 = arith.constant 14 : index
    %c0_375 = arith.constant 0 : index
    %c0_376 = arith.constant 0 : index
    %401 = vector.load %arg2[%c14_374, %c0_375, %c0_376] : memref<49x10x16xf32, #tpu.memory_space<vmem>>, vector<1x10x16xf32>
    %402 = vector.shape_cast %401 : vector<1x10x16xf32> to vector<10x16xf32>
    %c1_377 = arith.constant 1 : index
    %c0_378 = arith.constant 0 : index
    %c44_379 = arith.constant 44 : index
    %403 = vector.load %arg1[%c1_377, %c0_378, %c44_379] : memref<2x16x528xf32, #tpu.memory_space<vmem>>, vector<1x16x384xf32>
    %404 = vector.shape_cast %403 : vector<1x16x384xf32> to vector<16x384xf32>
    %cst_380 = arith.constant dense<0.000000e+00> : vector<10x384xf32>
    %405 = tpu.matmul %402, %404, %cst_380 {dimension_numbers = #tpu.dot_dimension_numbers<[1], [0], [0], [1], [0, 0, 1, 1], [], []>} : vector<10x16xf32>, vector<16x384xf32>, vector<10x384xf32> -> vector<10x384xf32>
    %406 = arith.addf %400, %405 : vector<10x384xf32>
    %c15_381 = arith.constant 15 : index
    %c0_382 = arith.constant 0 : index
    %c0_383 = arith.constant 0 : index
    %407 = vector.load %arg2[%c15_381, %c0_382, %c0_383] : memref<49x10x16xf32, #tpu.memory_space<vmem>>, vector<1x10x16xf32>
    %408 = vector.shape_cast %407 : vector<1x10x16xf32> to vector<10x16xf32>
    %c1_384 = arith.constant 1 : index
    %c0_385 = arith.constant 0 : index
    %c45_386 = arith.constant 45 : index
    %409 = vector.load %arg1[%c1_384, %c0_385, %c45_386] : memref<2x16x528xf32, #tpu.memory_space<vmem>>, vector<1x16x384xf32>
    %410 = vector.shape_cast %409 : vector<1x16x384xf32> to vector<16x384xf32>
    %cst_387 = arith.constant dense<0.000000e+00> : vector<10x384xf32>
    %411 = tpu.matmul %408, %410, %cst_387 {dimension_numbers = #tpu.dot_dimension_numbers<[1], [0], [0], [1], [0, 0, 1, 1], [], []>} : vector<10x16xf32>, vector<16x384xf32>, vector<10x384xf32> -> vector<10x384xf32>
    %412 = arith.addf %406, %411 : vector<10x384xf32>
    %c16_388 = arith.constant 16 : index
    %c0_389 = arith.constant 0 : index
    %c0_390 = arith.constant 0 : index
    %413 = vector.load %arg2[%c16_388, %c0_389, %c0_390] : memref<49x10x16xf32, #tpu.memory_space<vmem>>, vector<1x10x16xf32>
    %414 = vector.shape_cast %413 : vector<1x10x16xf32> to vector<10x16xf32>
    %c1_391 = arith.constant 1 : index
    %c0_392 = arith.constant 0 : index
    %c46_393 = arith.constant 46 : index
    %415 = vector.load %arg1[%c1_391, %c0_392, %c46_393] : memref<2x16x528xf32, #tpu.memory_space<vmem>>, vector<1x16x384xf32>
    %416 = vector.shape_cast %415 : vector<1x16x384xf32> to vector<16x384xf32>
    %cst_394 = arith.constant dense<0.000000e+00> : vector<10x384xf32>
    %417 = tpu.matmul %414, %416, %cst_394 {dimension_numbers = #tpu.dot_dimension_numbers<[1], [0], [0], [1], [0, 0, 1, 1], [], []>} : vector<10x16xf32>, vector<16x384xf32>, vector<10x384xf32> -> vector<10x384xf32>
    %418 = arith.addf %412, %417 : vector<10x384xf32>
    %c17_395 = arith.constant 17 : index
    %c0_396 = arith.constant 0 : index
    %c0_397 = arith.constant 0 : index
    %419 = vector.load %arg2[%c17_395, %c0_396, %c0_397] : memref<49x10x16xf32, #tpu.memory_space<vmem>>, vector<1x10x16xf32>
    %420 = vector.shape_cast %419 : vector<1x10x16xf32> to vector<10x16xf32>
    %c1_398 = arith.constant 1 : index
    %c0_399 = arith.constant 0 : index
    %c47_400 = arith.constant 47 : index
    %421 = vector.load %arg1[%c1_398, %c0_399, %c47_400] : memref<2x16x528xf32, #tpu.memory_space<vmem>>, vector<1x16x384xf32>
    %422 = vector.shape_cast %421 : vector<1x16x384xf32> to vector<16x384xf32>
    %cst_401 = arith.constant dense<0.000000e+00> : vector<10x384xf32>
    %423 = tpu.matmul %420, %422, %cst_401 {dimension_numbers = #tpu.dot_dimension_numbers<[1], [0], [0], [1], [0, 0, 1, 1], [], []>} : vector<10x16xf32>, vector<16x384xf32>, vector<10x384xf32> -> vector<10x384xf32>
    %424 = arith.addf %418, %423 : vector<10x384xf32>
    %c18_402 = arith.constant 18 : index
    %c0_403 = arith.constant 0 : index
    %c0_404 = arith.constant 0 : index
    %425 = vector.load %arg2[%c18_402, %c0_403, %c0_404] : memref<49x10x16xf32, #tpu.memory_space<vmem>>, vector<1x10x16xf32>
    %426 = vector.shape_cast %425 : vector<1x10x16xf32> to vector<10x16xf32>
    %c1_405 = arith.constant 1 : index
    %c0_406 = arith.constant 0 : index
    %c48_407 = arith.constant 48 : index
    %427 = vector.load %arg1[%c1_405, %c0_406, %c48_407] : memref<2x16x528xf32, #tpu.memory_space<vmem>>, vector<1x16x384xf32>
    %428 = vector.shape_cast %427 : vector<1x16x384xf32> to vector<16x384xf32>
    %cst_408 = arith.constant dense<0.000000e+00> : vector<10x384xf32>
    %429 = tpu.matmul %426, %428, %cst_408 {dimension_numbers = #tpu.dot_dimension_numbers<[1], [0], [0], [1], [0, 0, 1, 1], [], []>} : vector<10x16xf32>, vector<16x384xf32>, vector<10x384xf32> -> vector<10x384xf32>
    %430 = arith.addf %424, %429 : vector<10x384xf32>
    %c19_409 = arith.constant 19 : index
    %c0_410 = arith.constant 0 : index
    %c0_411 = arith.constant 0 : index
    %431 = vector.load %arg2[%c19_409, %c0_410, %c0_411] : memref<49x10x16xf32, #tpu.memory_space<vmem>>, vector<1x10x16xf32>
    %432 = vector.shape_cast %431 : vector<1x10x16xf32> to vector<10x16xf32>
    %c1_412 = arith.constant 1 : index
    %c0_413 = arith.constant 0 : index
    %c49_414 = arith.constant 49 : index
    %433 = vector.load %arg1[%c1_412, %c0_413, %c49_414] : memref<2x16x528xf32, #tpu.memory_space<vmem>>, vector<1x16x384xf32>
    %434 = vector.shape_cast %433 : vector<1x16x384xf32> to vector<16x384xf32>
    %cst_415 = arith.constant dense<0.000000e+00> : vector<10x384xf32>
    %435 = tpu.matmul %432, %434, %cst_415 {dimension_numbers = #tpu.dot_dimension_numbers<[1], [0], [0], [1], [0, 0, 1, 1], [], []>} : vector<10x16xf32>, vector<16x384xf32>, vector<10x384xf32> -> vector<10x384xf32>
    %436 = arith.addf %430, %435 : vector<10x384xf32>
    %c20_416 = arith.constant 20 : index
    %c0_417 = arith.constant 0 : index
    %c0_418 = arith.constant 0 : index
    %437 = vector.load %arg2[%c20_416, %c0_417, %c0_418] : memref<49x10x16xf32, #tpu.memory_space<vmem>>, vector<1x10x16xf32>
    %438 = vector.shape_cast %437 : vector<1x10x16xf32> to vector<10x16xf32>
    %c1_419 = arith.constant 1 : index
    %c0_420 = arith.constant 0 : index
    %c50_421 = arith.constant 50 : index
    %439 = vector.load %arg1[%c1_419, %c0_420, %c50_421] : memref<2x16x528xf32, #tpu.memory_space<vmem>>, vector<1x16x384xf32>
    %440 = vector.shape_cast %439 : vector<1x16x384xf32> to vector<16x384xf32>
    %cst_422 = arith.constant dense<0.000000e+00> : vector<10x384xf32>
    %441 = tpu.matmul %438, %440, %cst_422 {dimension_numbers = #tpu.dot_dimension_numbers<[1], [0], [0], [1], [0, 0, 1, 1], [], []>} : vector<10x16xf32>, vector<16x384xf32>, vector<10x384xf32> -> vector<10x384xf32>
    %442 = arith.addf %436, %441 : vector<10x384xf32>
    %c21_423 = arith.constant 21 : index
    %c0_424 = arith.constant 0 : index
    %c0_425 = arith.constant 0 : index
    %443 = vector.load %arg2[%c21_423, %c0_424, %c0_425] : memref<49x10x16xf32, #tpu.memory_space<vmem>>, vector<1x10x16xf32>
    %444 = vector.shape_cast %443 : vector<1x10x16xf32> to vector<10x16xf32>
    %c1_426 = arith.constant 1 : index
    %c0_427 = arith.constant 0 : index
    %c66_428 = arith.constant 66 : index
    %445 = vector.load %arg1[%c1_426, %c0_427, %c66_428] : memref<2x16x528xf32, #tpu.memory_space<vmem>>, vector<1x16x384xf32>
    %446 = vector.shape_cast %445 : vector<1x16x384xf32> to vector<16x384xf32>
    %cst_429 = arith.constant dense<0.000000e+00> : vector<10x384xf32>
    %447 = tpu.matmul %444, %446, %cst_429 {dimension_numbers = #tpu.dot_dimension_numbers<[1], [0], [0], [1], [0, 0, 1, 1], [], []>} : vector<10x16xf32>, vector<16x384xf32>, vector<10x384xf32> -> vector<10x384xf32>
    %448 = arith.addf %442, %447 : vector<10x384xf32>
    %c22_430 = arith.constant 22 : index
    %c0_431 = arith.constant 0 : index
    %c0_432 = arith.constant 0 : index
    %449 = vector.load %arg2[%c22_430, %c0_431, %c0_432] : memref<49x10x16xf32, #tpu.memory_space<vmem>>, vector<1x10x16xf32>
    %450 = vector.shape_cast %449 : vector<1x10x16xf32> to vector<10x16xf32>
    %c1_433 = arith.constant 1 : index
    %c0_434 = arith.constant 0 : index
    %c67_435 = arith.constant 67 : index
    %451 = vector.load %arg1[%c1_433, %c0_434, %c67_435] : memref<2x16x528xf32, #tpu.memory_space<vmem>>, vector<1x16x384xf32>
    %452 = vector.shape_cast %451 : vector<1x16x384xf32> to vector<16x384xf32>
    %cst_436 = arith.constant dense<0.000000e+00> : vector<10x384xf32>
    %453 = tpu.matmul %450, %452, %cst_436 {dimension_numbers = #tpu.dot_dimension_numbers<[1], [0], [0], [1], [0, 0, 1, 1], [], []>} : vector<10x16xf32>, vector<16x384xf32>, vector<10x384xf32> -> vector<10x384xf32>
    %454 = arith.addf %448, %453 : vector<10x384xf32>
    %c23_437 = arith.constant 23 : index
    %c0_438 = arith.constant 0 : index
    %c0_439 = arith.constant 0 : index
    %455 = vector.load %arg2[%c23_437, %c0_438, %c0_439] : memref<49x10x16xf32, #tpu.memory_space<vmem>>, vector<1x10x16xf32>
    %456 = vector.shape_cast %455 : vector<1x10x16xf32> to vector<10x16xf32>
    %c1_440 = arith.constant 1 : index
    %c0_441 = arith.constant 0 : index
    %c68_442 = arith.constant 68 : index
    %457 = vector.load %arg1[%c1_440, %c0_441, %c68_442] : memref<2x16x528xf32, #tpu.memory_space<vmem>>, vector<1x16x384xf32>
    %458 = vector.shape_cast %457 : vector<1x16x384xf32> to vector<16x384xf32>
    %cst_443 = arith.constant dense<0.000000e+00> : vector<10x384xf32>
    %459 = tpu.matmul %456, %458, %cst_443 {dimension_numbers = #tpu.dot_dimension_numbers<[1], [0], [0], [1], [0, 0, 1, 1], [], []>} : vector<10x16xf32>, vector<16x384xf32>, vector<10x384xf32> -> vector<10x384xf32>
    %460 = arith.addf %454, %459 : vector<10x384xf32>
    %c24_444 = arith.constant 24 : index
    %c0_445 = arith.constant 0 : index
    %c0_446 = arith.constant 0 : index
    %461 = vector.load %arg2[%c24_444, %c0_445, %c0_446] : memref<49x10x16xf32, #tpu.memory_space<vmem>>, vector<1x10x16xf32>
    %462 = vector.shape_cast %461 : vector<1x10x16xf32> to vector<10x16xf32>
    %c1_447 = arith.constant 1 : index
    %c0_448 = arith.constant 0 : index
    %c69_449 = arith.constant 69 : index
    %463 = vector.load %arg1[%c1_447, %c0_448, %c69_449] : memref<2x16x528xf32, #tpu.memory_space<vmem>>, vector<1x16x384xf32>
    %464 = vector.shape_cast %463 : vector<1x16x384xf32> to vector<16x384xf32>
    %cst_450 = arith.constant dense<0.000000e+00> : vector<10x384xf32>
    %465 = tpu.matmul %462, %464, %cst_450 {dimension_numbers = #tpu.dot_dimension_numbers<[1], [0], [0], [1], [0, 0, 1, 1], [], []>} : vector<10x16xf32>, vector<16x384xf32>, vector<10x384xf32> -> vector<10x384xf32>
    %466 = arith.addf %460, %465 : vector<10x384xf32>
    %c25_451 = arith.constant 25 : index
    %c0_452 = arith.constant 0 : index
    %c0_453 = arith.constant 0 : index
    %467 = vector.load %arg2[%c25_451, %c0_452, %c0_453] : memref<49x10x16xf32, #tpu.memory_space<vmem>>, vector<1x10x16xf32>
    %468 = vector.shape_cast %467 : vector<1x10x16xf32> to vector<10x16xf32>
    %c1_454 = arith.constant 1 : index
    %c0_455 = arith.constant 0 : index
    %c70_456 = arith.constant 70 : index
    %469 = vector.load %arg1[%c1_454, %c0_455, %c70_456] : memref<2x16x528xf32, #tpu.memory_space<vmem>>, vector<1x16x384xf32>
    %470 = vector.shape_cast %469 : vector<1x16x384xf32> to vector<16x384xf32>
    %cst_457 = arith.constant dense<0.000000e+00> : vector<10x384xf32>
    %471 = tpu.matmul %468, %470, %cst_457 {dimension_numbers = #tpu.dot_dimension_numbers<[1], [0], [0], [1], [0, 0, 1, 1], [], []>} : vector<10x16xf32>, vector<16x384xf32>, vector<10x384xf32> -> vector<10x384xf32>
    %472 = arith.addf %466, %471 : vector<10x384xf32>
    %c26_458 = arith.constant 26 : index
    %c0_459 = arith.constant 0 : index
    %c0_460 = arith.constant 0 : index
    %473 = vector.load %arg2[%c26_458, %c0_459, %c0_460] : memref<49x10x16xf32, #tpu.memory_space<vmem>>, vector<1x10x16xf32>
    %474 = vector.shape_cast %473 : vector<1x10x16xf32> to vector<10x16xf32>
    %c1_461 = arith.constant 1 : index
    %c0_462 = arith.constant 0 : index
    %c71_463 = arith.constant 71 : index
    %475 = vector.load %arg1[%c1_461, %c0_462, %c71_463] : memref<2x16x528xf32, #tpu.memory_space<vmem>>, vector<1x16x384xf32>
    %476 = vector.shape_cast %475 : vector<1x16x384xf32> to vector<16x384xf32>
    %cst_464 = arith.constant dense<0.000000e+00> : vector<10x384xf32>
    %477 = tpu.matmul %474, %476, %cst_464 {dimension_numbers = #tpu.dot_dimension_numbers<[1], [0], [0], [1], [0, 0, 1, 1], [], []>} : vector<10x16xf32>, vector<16x384xf32>, vector<10x384xf32> -> vector<10x384xf32>
    %478 = arith.addf %472, %477 : vector<10x384xf32>
    %c27_465 = arith.constant 27 : index
    %c0_466 = arith.constant 0 : index
    %c0_467 = arith.constant 0 : index
    %479 = vector.load %arg2[%c27_465, %c0_466, %c0_467] : memref<49x10x16xf32, #tpu.memory_space<vmem>>, vector<1x10x16xf32>
    %480 = vector.shape_cast %479 : vector<1x10x16xf32> to vector<10x16xf32>
    %c1_468 = arith.constant 1 : index
    %c0_469 = arith.constant 0 : index
    %c72_470 = arith.constant 72 : index
    %481 = vector.load %arg1[%c1_468, %c0_469, %c72_470] : memref<2x16x528xf32, #tpu.memory_space<vmem>>, vector<1x16x384xf32>
    %482 = vector.shape_cast %481 : vector<1x16x384xf32> to vector<16x384xf32>
    %cst_471 = arith.constant dense<0.000000e+00> : vector<10x384xf32>
    %483 = tpu.matmul %480, %482, %cst_471 {dimension_numbers = #tpu.dot_dimension_numbers<[1], [0], [0], [1], [0, 0, 1, 1], [], []>} : vector<10x16xf32>, vector<16x384xf32>, vector<10x384xf32> -> vector<10x384xf32>
    %484 = arith.addf %478, %483 : vector<10x384xf32>
    %c28_472 = arith.constant 28 : index
    %c0_473 = arith.constant 0 : index
    %c0_474 = arith.constant 0 : index
    %485 = vector.load %arg2[%c28_472, %c0_473, %c0_474] : memref<49x10x16xf32, #tpu.memory_space<vmem>>, vector<1x10x16xf32>
    %486 = vector.shape_cast %485 : vector<1x10x16xf32> to vector<10x16xf32>
    %c1_475 = arith.constant 1 : index
    %c0_476 = arith.constant 0 : index
    %c88_477 = arith.constant 88 : index
    %487 = vector.load %arg1[%c1_475, %c0_476, %c88_477] : memref<2x16x528xf32, #tpu.memory_space<vmem>>, vector<1x16x384xf32>
    %488 = vector.shape_cast %487 : vector<1x16x384xf32> to vector<16x384xf32>
    %cst_478 = arith.constant dense<0.000000e+00> : vector<10x384xf32>
    %489 = tpu.matmul %486, %488, %cst_478 {dimension_numbers = #tpu.dot_dimension_numbers<[1], [0], [0], [1], [0, 0, 1, 1], [], []>} : vector<10x16xf32>, vector<16x384xf32>, vector<10x384xf32> -> vector<10x384xf32>
    %490 = arith.addf %484, %489 : vector<10x384xf32>
    %c29_479 = arith.constant 29 : index
    %c0_480 = arith.constant 0 : index
    %c0_481 = arith.constant 0 : index
    %491 = vector.load %arg2[%c29_479, %c0_480, %c0_481] : memref<49x10x16xf32, #tpu.memory_space<vmem>>, vector<1x10x16xf32>
    %492 = vector.shape_cast %491 : vector<1x10x16xf32> to vector<10x16xf32>
    %c1_482 = arith.constant 1 : index
    %c0_483 = arith.constant 0 : index
    %c89_484 = arith.constant 89 : index
    %493 = vector.load %arg1[%c1_482, %c0_483, %c89_484] : memref<2x16x528xf32, #tpu.memory_space<vmem>>, vector<1x16x384xf32>
    %494 = vector.shape_cast %493 : vector<1x16x384xf32> to vector<16x384xf32>
    %cst_485 = arith.constant dense<0.000000e+00> : vector<10x384xf32>
    %495 = tpu.matmul %492, %494, %cst_485 {dimension_numbers = #tpu.dot_dimension_numbers<[1], [0], [0], [1], [0, 0, 1, 1], [], []>} : vector<10x16xf32>, vector<16x384xf32>, vector<10x384xf32> -> vector<10x384xf32>
    %496 = arith.addf %490, %495 : vector<10x384xf32>
    %c30_486 = arith.constant 30 : index
    %c0_487 = arith.constant 0 : index
    %c0_488 = arith.constant 0 : index
    %497 = vector.load %arg2[%c30_486, %c0_487, %c0_488] : memref<49x10x16xf32, #tpu.memory_space<vmem>>, vector<1x10x16xf32>
    %498 = vector.shape_cast %497 : vector<1x10x16xf32> to vector<10x16xf32>
    %c1_489 = arith.constant 1 : index
    %c0_490 = arith.constant 0 : index
    %c90_491 = arith.constant 90 : index
    %499 = vector.load %arg1[%c1_489, %c0_490, %c90_491] : memref<2x16x528xf32, #tpu.memory_space<vmem>>, vector<1x16x384xf32>
    %500 = vector.shape_cast %499 : vector<1x16x384xf32> to vector<16x384xf32>
    %cst_492 = arith.constant dense<0.000000e+00> : vector<10x384xf32>
    %501 = tpu.matmul %498, %500, %cst_492 {dimension_numbers = #tpu.dot_dimension_numbers<[1], [0], [0], [1], [0, 0, 1, 1], [], []>} : vector<10x16xf32>, vector<16x384xf32>, vector<10x384xf32> -> vector<10x384xf32>
    %502 = arith.addf %496, %501 : vector<10x384xf32>
    %c31_493 = arith.constant 31 : index
    %c0_494 = arith.constant 0 : index
    %c0_495 = arith.constant 0 : index
    %503 = vector.load %arg2[%c31_493, %c0_494, %c0_495] : memref<49x10x16xf32, #tpu.memory_space<vmem>>, vector<1x10x16xf32>
    %504 = vector.shape_cast %503 : vector<1x10x16xf32> to vector<10x16xf32>
    %c1_496 = arith.constant 1 : index
    %c0_497 = arith.constant 0 : index
    %c91_498 = arith.constant 91 : index
    %505 = vector.load %arg1[%c1_496, %c0_497, %c91_498] : memref<2x16x528xf32, #tpu.memory_space<vmem>>, vector<1x16x384xf32>
    %506 = vector.shape_cast %505 : vector<1x16x384xf32> to vector<16x384xf32>
    %cst_499 = arith.constant dense<0.000000e+00> : vector<10x384xf32>
    %507 = tpu.matmul %504, %506, %cst_499 {dimension_numbers = #tpu.dot_dimension_numbers<[1], [0], [0], [1], [0, 0, 1, 1], [], []>} : vector<10x16xf32>, vector<16x384xf32>, vector<10x384xf32> -> vector<10x384xf32>
    %508 = arith.addf %502, %507 : vector<10x384xf32>
    %c32_500 = arith.constant 32 : index
    %c0_501 = arith.constant 0 : index
    %c0_502 = arith.constant 0 : index
    %509 = vector.load %arg2[%c32_500, %c0_501, %c0_502] : memref<49x10x16xf32, #tpu.memory_space<vmem>>, vector<1x10x16xf32>
    %510 = vector.shape_cast %509 : vector<1x10x16xf32> to vector<10x16xf32>
    %c1_503 = arith.constant 1 : index
    %c0_504 = arith.constant 0 : index
    %c92_505 = arith.constant 92 : index
    %511 = vector.load %arg1[%c1_503, %c0_504, %c92_505] : memref<2x16x528xf32, #tpu.memory_space<vmem>>, vector<1x16x384xf32>
    %512 = vector.shape_cast %511 : vector<1x16x384xf32> to vector<16x384xf32>
    %cst_506 = arith.constant dense<0.000000e+00> : vector<10x384xf32>
    %513 = tpu.matmul %510, %512, %cst_506 {dimension_numbers = #tpu.dot_dimension_numbers<[1], [0], [0], [1], [0, 0, 1, 1], [], []>} : vector<10x16xf32>, vector<16x384xf32>, vector<10x384xf32> -> vector<10x384xf32>
    %514 = arith.addf %508, %513 : vector<10x384xf32>
    %c33_507 = arith.constant 33 : index
    %c0_508 = arith.constant 0 : index
    %c0_509 = arith.constant 0 : index
    %515 = vector.load %arg2[%c33_507, %c0_508, %c0_509] : memref<49x10x16xf32, #tpu.memory_space<vmem>>, vector<1x10x16xf32>
    %516 = vector.shape_cast %515 : vector<1x10x16xf32> to vector<10x16xf32>
    %c1_510 = arith.constant 1 : index
    %c0_511 = arith.constant 0 : index
    %c93_512 = arith.constant 93 : index
    %517 = vector.load %arg1[%c1_510, %c0_511, %c93_512] : memref<2x16x528xf32, #tpu.memory_space<vmem>>, vector<1x16x384xf32>
    %518 = vector.shape_cast %517 : vector<1x16x384xf32> to vector<16x384xf32>
    %cst_513 = arith.constant dense<0.000000e+00> : vector<10x384xf32>
    %519 = tpu.matmul %516, %518, %cst_513 {dimension_numbers = #tpu.dot_dimension_numbers<[1], [0], [0], [1], [0, 0, 1, 1], [], []>} : vector<10x16xf32>, vector<16x384xf32>, vector<10x384xf32> -> vector<10x384xf32>
    %520 = arith.addf %514, %519 : vector<10x384xf32>
    %c34_514 = arith.constant 34 : index
    %c0_515 = arith.constant 0 : index
    %c0_516 = arith.constant 0 : index
    %521 = vector.load %arg2[%c34_514, %c0_515, %c0_516] : memref<49x10x16xf32, #tpu.memory_space<vmem>>, vector<1x10x16xf32>
    %522 = vector.shape_cast %521 : vector<1x10x16xf32> to vector<10x16xf32>
    %c1_517 = arith.constant 1 : index
    %c0_518 = arith.constant 0 : index
    %c94_519 = arith.constant 94 : index
    %523 = vector.load %arg1[%c1_517, %c0_518, %c94_519] : memref<2x16x528xf32, #tpu.memory_space<vmem>>, vector<1x16x384xf32>
    %524 = vector.shape_cast %523 : vector<1x16x384xf32> to vector<16x384xf32>
    %cst_520 = arith.constant dense<0.000000e+00> : vector<10x384xf32>
    %525 = tpu.matmul %522, %524, %cst_520 {dimension_numbers = #tpu.dot_dimension_numbers<[1], [0], [0], [1], [0, 0, 1, 1], [], []>} : vector<10x16xf32>, vector<16x384xf32>, vector<10x384xf32> -> vector<10x384xf32>
    %526 = arith.addf %520, %525 : vector<10x384xf32>
    %c35_521 = arith.constant 35 : index
    %c0_522 = arith.constant 0 : index
    %c0_523 = arith.constant 0 : index
    %527 = vector.load %arg2[%c35_521, %c0_522, %c0_523] : memref<49x10x16xf32, #tpu.memory_space<vmem>>, vector<1x10x16xf32>
    %528 = vector.shape_cast %527 : vector<1x10x16xf32> to vector<10x16xf32>
    %c1_524 = arith.constant 1 : index
    %c0_525 = arith.constant 0 : index
    %c110_526 = arith.constant 110 : index
    %529 = vector.load %arg1[%c1_524, %c0_525, %c110_526] : memref<2x16x528xf32, #tpu.memory_space<vmem>>, vector<1x16x384xf32>
    %530 = vector.shape_cast %529 : vector<1x16x384xf32> to vector<16x384xf32>
    %cst_527 = arith.constant dense<0.000000e+00> : vector<10x384xf32>
    %531 = tpu.matmul %528, %530, %cst_527 {dimension_numbers = #tpu.dot_dimension_numbers<[1], [0], [0], [1], [0, 0, 1, 1], [], []>} : vector<10x16xf32>, vector<16x384xf32>, vector<10x384xf32> -> vector<10x384xf32>
    %532 = arith.addf %526, %531 : vector<10x384xf32>
    %c36_528 = arith.constant 36 : index
    %c0_529 = arith.constant 0 : index
    %c0_530 = arith.constant 0 : index
    %533 = vector.load %arg2[%c36_528, %c0_529, %c0_530] : memref<49x10x16xf32, #tpu.memory_space<vmem>>, vector<1x10x16xf32>
    %534 = vector.shape_cast %533 : vector<1x10x16xf32> to vector<10x16xf32>
    %c1_531 = arith.constant 1 : index
    %c0_532 = arith.constant 0 : index
    %c111_533 = arith.constant 111 : index
    %535 = vector.load %arg1[%c1_531, %c0_532, %c111_533] : memref<2x16x528xf32, #tpu.memory_space<vmem>>, vector<1x16x384xf32>
    %536 = vector.shape_cast %535 : vector<1x16x384xf32> to vector<16x384xf32>
    %cst_534 = arith.constant dense<0.000000e+00> : vector<10x384xf32>
    %537 = tpu.matmul %534, %536, %cst_534 {dimension_numbers = #tpu.dot_dimension_numbers<[1], [0], [0], [1], [0, 0, 1, 1], [], []>} : vector<10x16xf32>, vector<16x384xf32>, vector<10x384xf32> -> vector<10x384xf32>
    %538 = arith.addf %532, %537 : vector<10x384xf32>
    %c37_535 = arith.constant 37 : index
    %c0_536 = arith.constant 0 : index
    %c0_537 = arith.constant 0 : index
    %539 = vector.load %arg2[%c37_535, %c0_536, %c0_537] : memref<49x10x16xf32, #tpu.memory_space<vmem>>, vector<1x10x16xf32>
    %540 = vector.shape_cast %539 : vector<1x10x16xf32> to vector<10x16xf32>
    %c1_538 = arith.constant 1 : index
    %c0_539 = arith.constant 0 : index
    %c112_540 = arith.constant 112 : index
    %541 = vector.load %arg1[%c1_538, %c0_539, %c112_540] : memref<2x16x528xf32, #tpu.memory_space<vmem>>, vector<1x16x384xf32>
    %542 = vector.shape_cast %541 : vector<1x16x384xf32> to vector<16x384xf32>
    %cst_541 = arith.constant dense<0.000000e+00> : vector<10x384xf32>
    %543 = tpu.matmul %540, %542, %cst_541 {dimension_numbers = #tpu.dot_dimension_numbers<[1], [0], [0], [1], [0, 0, 1, 1], [], []>} : vector<10x16xf32>, vector<16x384xf32>, vector<10x384xf32> -> vector<10x384xf32>
    %544 = arith.addf %538, %543 : vector<10x384xf32>
    %c38_542 = arith.constant 38 : index
    %c0_543 = arith.constant 0 : index
    %c0_544 = arith.constant 0 : index
    %545 = vector.load %arg2[%c38_542, %c0_543, %c0_544] : memref<49x10x16xf32, #tpu.memory_space<vmem>>, vector<1x10x16xf32>
    %546 = vector.shape_cast %545 : vector<1x10x16xf32> to vector<10x16xf32>
    %c1_545 = arith.constant 1 : index
    %c0_546 = arith.constant 0 : index
    %c113_547 = arith.constant 113 : index
    %547 = vector.load %arg1[%c1_545, %c0_546, %c113_547] : memref<2x16x528xf32, #tpu.memory_space<vmem>>, vector<1x16x384xf32>
    %548 = vector.shape_cast %547 : vector<1x16x384xf32> to vector<16x384xf32>
    %cst_548 = arith.constant dense<0.000000e+00> : vector<10x384xf32>
    %549 = tpu.matmul %546, %548, %cst_548 {dimension_numbers = #tpu.dot_dimension_numbers<[1], [0], [0], [1], [0, 0, 1, 1], [], []>} : vector<10x16xf32>, vector<16x384xf32>, vector<10x384xf32> -> vector<10x384xf32>
    %550 = arith.addf %544, %549 : vector<10x384xf32>
    %c39_549 = arith.constant 39 : index
    %c0_550 = arith.constant 0 : index
    %c0_551 = arith.constant 0 : index
    %551 = vector.load %arg2[%c39_549, %c0_550, %c0_551] : memref<49x10x16xf32, #tpu.memory_space<vmem>>, vector<1x10x16xf32>
    %552 = vector.shape_cast %551 : vector<1x10x16xf32> to vector<10x16xf32>
    %c1_552 = arith.constant 1 : index
    %c0_553 = arith.constant 0 : index
    %c114_554 = arith.constant 114 : index
    %553 = vector.load %arg1[%c1_552, %c0_553, %c114_554] : memref<2x16x528xf32, #tpu.memory_space<vmem>>, vector<1x16x384xf32>
    %554 = vector.shape_cast %553 : vector<1x16x384xf32> to vector<16x384xf32>
    %cst_555 = arith.constant dense<0.000000e+00> : vector<10x384xf32>
    %555 = tpu.matmul %552, %554, %cst_555 {dimension_numbers = #tpu.dot_dimension_numbers<[1], [0], [0], [1], [0, 0, 1, 1], [], []>} : vector<10x16xf32>, vector<16x384xf32>, vector<10x384xf32> -> vector<10x384xf32>
    %556 = arith.addf %550, %555 : vector<10x384xf32>
    %c40_556 = arith.constant 40 : index
    %c0_557 = arith.constant 0 : index
    %c0_558 = arith.constant 0 : index
    %557 = vector.load %arg2[%c40_556, %c0_557, %c0_558] : memref<49x10x16xf32, #tpu.memory_space<vmem>>, vector<1x10x16xf32>
    %558 = vector.shape_cast %557 : vector<1x10x16xf32> to vector<10x16xf32>
    %c1_559 = arith.constant 1 : index
    %c0_560 = arith.constant 0 : index
    %c115_561 = arith.constant 115 : index
    %559 = vector.load %arg1[%c1_559, %c0_560, %c115_561] : memref<2x16x528xf32, #tpu.memory_space<vmem>>, vector<1x16x384xf32>
    %560 = vector.shape_cast %559 : vector<1x16x384xf32> to vector<16x384xf32>
    %cst_562 = arith.constant dense<0.000000e+00> : vector<10x384xf32>
    %561 = tpu.matmul %558, %560, %cst_562 {dimension_numbers = #tpu.dot_dimension_numbers<[1], [0], [0], [1], [0, 0, 1, 1], [], []>} : vector<10x16xf32>, vector<16x384xf32>, vector<10x384xf32> -> vector<10x384xf32>
    %562 = arith.addf %556, %561 : vector<10x384xf32>
    %c41_563 = arith.constant 41 : index
    %c0_564 = arith.constant 0 : index
    %c0_565 = arith.constant 0 : index
    %563 = vector.load %arg2[%c41_563, %c0_564, %c0_565] : memref<49x10x16xf32, #tpu.memory_space<vmem>>, vector<1x10x16xf32>
    %564 = vector.shape_cast %563 : vector<1x10x16xf32> to vector<10x16xf32>
    %c1_566 = arith.constant 1 : index
    %c0_567 = arith.constant 0 : index
    %c116_568 = arith.constant 116 : index
    %565 = vector.load %arg1[%c1_566, %c0_567, %c116_568] : memref<2x16x528xf32, #tpu.memory_space<vmem>>, vector<1x16x384xf32>
    %566 = vector.shape_cast %565 : vector<1x16x384xf32> to vector<16x384xf32>
    %cst_569 = arith.constant dense<0.000000e+00> : vector<10x384xf32>
    %567 = tpu.matmul %564, %566, %cst_569 {dimension_numbers = #tpu.dot_dimension_numbers<[1], [0], [0], [1], [0, 0, 1, 1], [], []>} : vector<10x16xf32>, vector<16x384xf32>, vector<10x384xf32> -> vector<10x384xf32>
    %568 = arith.addf %562, %567 : vector<10x384xf32>
    %c42_570 = arith.constant 42 : index
    %c0_571 = arith.constant 0 : index
    %c0_572 = arith.constant 0 : index
    %569 = vector.load %arg2[%c42_570, %c0_571, %c0_572] : memref<49x10x16xf32, #tpu.memory_space<vmem>>, vector<1x10x16xf32>
    %570 = vector.shape_cast %569 : vector<1x10x16xf32> to vector<10x16xf32>
    %c1_573 = arith.constant 1 : index
    %c0_574 = arith.constant 0 : index
    %c132_575 = arith.constant 132 : index
    %571 = vector.load %arg1[%c1_573, %c0_574, %c132_575] : memref<2x16x528xf32, #tpu.memory_space<vmem>>, vector<1x16x384xf32>
    %572 = vector.shape_cast %571 : vector<1x16x384xf32> to vector<16x384xf32>
    %cst_576 = arith.constant dense<0.000000e+00> : vector<10x384xf32>
    %573 = tpu.matmul %570, %572, %cst_576 {dimension_numbers = #tpu.dot_dimension_numbers<[1], [0], [0], [1], [0, 0, 1, 1], [], []>} : vector<10x16xf32>, vector<16x384xf32>, vector<10x384xf32> -> vector<10x384xf32>
    %574 = arith.addf %568, %573 : vector<10x384xf32>
    %c43_577 = arith.constant 43 : index
    %c0_578 = arith.constant 0 : index
    %c0_579 = arith.constant 0 : index
    %575 = vector.load %arg2[%c43_577, %c0_578, %c0_579] : memref<49x10x16xf32, #tpu.memory_space<vmem>>, vector<1x10x16xf32>
    %576 = vector.shape_cast %575 : vector<1x10x16xf32> to vector<10x16xf32>
    %c1_580 = arith.constant 1 : index
    %c0_581 = arith.constant 0 : index
    %c133_582 = arith.constant 133 : index
    %577 = vector.load %arg1[%c1_580, %c0_581, %c133_582] : memref<2x16x528xf32, #tpu.memory_space<vmem>>, vector<1x16x384xf32>
    %578 = vector.shape_cast %577 : vector<1x16x384xf32> to vector<16x384xf32>
    %cst_583 = arith.constant dense<0.000000e+00> : vector<10x384xf32>
    %579 = tpu.matmul %576, %578, %cst_583 {dimension_numbers = #tpu.dot_dimension_numbers<[1], [0], [0], [1], [0, 0, 1, 1], [], []>} : vector<10x16xf32>, vector<16x384xf32>, vector<10x384xf32> -> vector<10x384xf32>
    %580 = arith.addf %574, %579 : vector<10x384xf32>
    %c44_584 = arith.constant 44 : index
    %c0_585 = arith.constant 0 : index
    %c0_586 = arith.constant 0 : index
    %581 = vector.load %arg2[%c44_584, %c0_585, %c0_586] : memref<49x10x16xf32, #tpu.memory_space<vmem>>, vector<1x10x16xf32>
    %582 = vector.shape_cast %581 : vector<1x10x16xf32> to vector<10x16xf32>
    %c1_587 = arith.constant 1 : index
    %c0_588 = arith.constant 0 : index
    %c134_589 = arith.constant 134 : index
    %583 = vector.load %arg1[%c1_587, %c0_588, %c134_589] : memref<2x16x528xf32, #tpu.memory_space<vmem>>, vector<1x16x384xf32>
    %584 = vector.shape_cast %583 : vector<1x16x384xf32> to vector<16x384xf32>
    %cst_590 = arith.constant dense<0.000000e+00> : vector<10x384xf32>
    %585 = tpu.matmul %582, %584, %cst_590 {dimension_numbers = #tpu.dot_dimension_numbers<[1], [0], [0], [1], [0, 0, 1, 1], [], []>} : vector<10x16xf32>, vector<16x384xf32>, vector<10x384xf32> -> vector<10x384xf32>
    %586 = arith.addf %580, %585 : vector<10x384xf32>
    %c45_591 = arith.constant 45 : index
    %c0_592 = arith.constant 0 : index
    %c0_593 = arith.constant 0 : index
    %587 = vector.load %arg2[%c45_591, %c0_592, %c0_593] : memref<49x10x16xf32, #tpu.memory_space<vmem>>, vector<1x10x16xf32>
    %588 = vector.shape_cast %587 : vector<1x10x16xf32> to vector<10x16xf32>
    %c1_594 = arith.constant 1 : index
    %c0_595 = arith.constant 0 : index
    %c135_596 = arith.constant 135 : index
    %589 = vector.load %arg1[%c1_594, %c0_595, %c135_596] : memref<2x16x528xf32, #tpu.memory_space<vmem>>, vector<1x16x384xf32>
    %590 = vector.shape_cast %589 : vector<1x16x384xf32> to vector<16x384xf32>
    %cst_597 = arith.constant dense<0.000000e+00> : vector<10x384xf32>
    %591 = tpu.matmul %588, %590, %cst_597 {dimension_numbers = #tpu.dot_dimension_numbers<[1], [0], [0], [1], [0, 0, 1, 1], [], []>} : vector<10x16xf32>, vector<16x384xf32>, vector<10x384xf32> -> vector<10x384xf32>
    %592 = arith.addf %586, %591 : vector<10x384xf32>
    %c46_598 = arith.constant 46 : index
    %c0_599 = arith.constant 0 : index
    %c0_600 = arith.constant 0 : index
    %593 = vector.load %arg2[%c46_598, %c0_599, %c0_600] : memref<49x10x16xf32, #tpu.memory_space<vmem>>, vector<1x10x16xf32>
    %594 = vector.shape_cast %593 : vector<1x10x16xf32> to vector<10x16xf32>
    %c1_601 = arith.constant 1 : index
    %c0_602 = arith.constant 0 : index
    %c136_603 = arith.constant 136 : index
    %595 = vector.load %arg1[%c1_601, %c0_602, %c136_603] : memref<2x16x528xf32, #tpu.memory_space<vmem>>, vector<1x16x384xf32>
    %596 = vector.shape_cast %595 : vector<1x16x384xf32> to vector<16x384xf32>
    %cst_604 = arith.constant dense<0.000000e+00> : vector<10x384xf32>
    %597 = tpu.matmul %594, %596, %cst_604 {dimension_numbers = #tpu.dot_dimension_numbers<[1], [0], [0], [1], [0, 0, 1, 1], [], []>} : vector<10x16xf32>, vector<16x384xf32>, vector<10x384xf32> -> vector<10x384xf32>
    %598 = arith.addf %592, %597 : vector<10x384xf32>
    %c47_605 = arith.constant 47 : index
    %c0_606 = arith.constant 0 : index
    %c0_607 = arith.constant 0 : index
    %599 = vector.load %arg2[%c47_605, %c0_606, %c0_607] : memref<49x10x16xf32, #tpu.memory_space<vmem>>, vector<1x10x16xf32>
    %600 = vector.shape_cast %599 : vector<1x10x16xf32> to vector<10x16xf32>
    %c1_608 = arith.constant 1 : index
    %c0_609 = arith.constant 0 : index
    %c137_610 = arith.constant 137 : index
    %601 = vector.load %arg1[%c1_608, %c0_609, %c137_610] : memref<2x16x528xf32, #tpu.memory_space<vmem>>, vector<1x16x384xf32>
    %602 = vector.shape_cast %601 : vector<1x16x384xf32> to vector<16x384xf32>
    %cst_611 = arith.constant dense<0.000000e+00> : vector<10x384xf32>
    %603 = tpu.matmul %600, %602, %cst_611 {dimension_numbers = #tpu.dot_dimension_numbers<[1], [0], [0], [1], [0, 0, 1, 1], [], []>} : vector<10x16xf32>, vector<16x384xf32>, vector<10x384xf32> -> vector<10x384xf32>
    %604 = arith.addf %598, %603 : vector<10x384xf32>
    %c48_612 = arith.constant 48 : index
    %c0_613 = arith.constant 0 : index
    %c0_614 = arith.constant 0 : index
    %605 = vector.load %arg2[%c48_612, %c0_613, %c0_614] : memref<49x10x16xf32, #tpu.memory_space<vmem>>, vector<1x10x16xf32>
    %606 = vector.shape_cast %605 : vector<1x10x16xf32> to vector<10x16xf32>
    %c1_615 = arith.constant 1 : index
    %c0_616 = arith.constant 0 : index
    %c138_617 = arith.constant 138 : index
    %607 = vector.load %arg1[%c1_615, %c0_616, %c138_617] : memref<2x16x528xf32, #tpu.memory_space<vmem>>, vector<1x16x384xf32>
    %608 = vector.shape_cast %607 : vector<1x16x384xf32> to vector<16x384xf32>
    %cst_618 = arith.constant dense<0.000000e+00> : vector<10x384xf32>
    %609 = tpu.matmul %606, %608, %cst_618 {dimension_numbers = #tpu.dot_dimension_numbers<[1], [0], [0], [1], [0, 0, 1, 1], [], []>} : vector<10x16xf32>, vector<16x384xf32>, vector<10x384xf32> -> vector<10x384xf32>
    %610 = arith.addf %604, %609 : vector<10x384xf32>
    %611 = arith.addf %610, %0 : vector<10x384xf32>
    %cst_619 = arith.constant dense<0xFF800000> : vector<10xf32>
    %612 = vector.multi_reduction <maximumf>, %611, %cst_619 [1] : vector<10x384xf32> to vector<10xf32>
    %613 = vector.shape_cast %612 : vector<10xf32> to vector<10x1xf32>
    %614 = vector.broadcast %613 : vector<10x1xf32> to vector<10x384xf32>
    %615 = arith.subf %611, %614 : vector<10x384xf32>
    %616 = math.exp %615 : vector<10x384xf32>
    %cst_620 = arith.constant dense<0.000000e+00> : vector<10xf32>
    %617 = vector.multi_reduction <add>, %616, %cst_620 [1] : vector<10x384xf32> to vector<10xf32>
    %618 = vector.shape_cast %617 : vector<10xf32> to vector<10x1xf32>
    %619 = vector.broadcast %1 : vector<1x384xf32> to vector<10x384xf32>
    %620 = arith.mulf %616, %619 : vector<10x384xf32>
    %cst_621 = arith.constant dense<0.000000e+00> : vector<10xf32>
    %621 = vector.multi_reduction <add>, %620, %cst_621 [1] : vector<10x384xf32> to vector<10xf32>
    %622 = vector.shape_cast %621 : vector<10xf32> to vector<10x1xf32>
    %623 = vector.broadcast %2 : vector<1x384xf32> to vector<10x384xf32>
    %624 = arith.mulf %616, %623 : vector<10x384xf32>
    %cst_622 = arith.constant dense<0.000000e+00> : vector<10xf32>
    %625 = vector.multi_reduction <add>, %624, %cst_622 [1] : vector<10x384xf32> to vector<10xf32>
    %626 = vector.shape_cast %625 : vector<10xf32> to vector<10x1xf32>
    %627 = tpu.concatenate %622, %626 in 1 : vector<10x1xf32>, vector<10x1xf32> -> vector<10x2xf32>
    %628 = vector.broadcast %618 : vector<10x1xf32> to vector<10x2xf32>
    %629 = arith.divf %627, %628 : vector<10x2xf32>
    %c1_623 = arith.constant 1 : index
    %c0_624 = arith.constant 0 : index
    %c0_625 = arith.constant 0 : index
    %630 = vector.load %arg5[%c1_623, %c0_624, %c0_625] : memref<2x10x2xf32, #tpu.memory_space<vmem>>, vector<1x10x2xf32>
    %631 = vector.shape_cast %630 : vector<1x10x2xf32> to vector<10x2xf32>
    %632 = vector.shape_cast %629 : vector<10x2xf32> to vector<1x10x2xf32>
    tpu.vector_store %arg5[%c1_623, %c0_624, %c0_625], %632 {strides = array<i32>} : memref<2x10x2xf32, #tpu.memory_space<vmem>>, vector<1x10x2xf32>,
    return
  }
  func.func @transform_0(%arg0: i32) -> (i32, i32, i32) {
    %c0_i32 = arith.constant 0 : i32
    %c0_i32_0 = arith.constant 0 : i32
    %c0_i32_1 = arith.constant 0 : i32
    return %arg0, %c0_i32, %c0_i32_0 : i32, i32, i32
  }
  func.func @transform_1(%arg0: i32) -> (i32, i32, i32) {
    %c0_i32 = arith.constant 0 : i32
    %c0_i32_0 = arith.constant 0 : i32
    %c0_i32_1 = arith.constant 0 : i32
    %c0_i32_2 = arith.constant 0 : i32
    return %c0_i32, %c0_i32_0, %c0_i32_1 : i32, i32, i32
  }
  func.func @transform_2(%arg0: i32) -> (i32, i32) {
    %c0_i32 = arith.constant 0 : i32
    %c0_i32_0 = arith.constant 0 : i32
    %c0_i32_1 = arith.constant 0 : i32
    return %c0_i32, %c0_i32_0 : i32, i32
  }
  func.func @transform_3(%arg0: i32) -> (i32, i32) {
    %c0_i32 = arith.constant 0 : i32
    %c0_i32_0 = arith.constant 0 : i32
    %c0_i32_1 = arith.constant 0 : i32
    return %c0_i32, %c0_i32_0 : i32, i32
  }
  func.func @transform_4(%arg0: i32) -> (i32, i32, i32) {
    %c0_i32 = arith.constant 0 : i32
    %c0_i32_0 = arith.constant 0 : i32
    %c0_i32_1 = arith.constant 0 : i32
    return %arg0, %c0_i32, %c0_i32_0 : i32, i32, i32
  }
}

</mosaic_0001>

<llo_original>
// kernel: tpu_custom_call.1
$region0: #{tpu_custom_call.1}
  #allocation0 [shape = 'u32[]', space=smem, size = 0x4, offset = 0x4, fixed_abs, tag = 'smem constant byte address 0x4 - core index']
  #allocation1 [shape = 'u32[72,128]{1,0:T(1,128)}', space=vmem, size = 0x9000, scoped, tag = 'internal scratch']
  %s0 = inlined_call_operand.vmem [shape: f32[2,16,528], index: 0, kind: input, shape index: {}]
  %s1 = inlined_call_operand.vmem [shape: f32[49,10,16], index: 1, kind: input, shape index: {}]
  %s2 = inlined_call_operand.vmem [shape: f32[10,384], index: 2, kind: input, shape index: {}]
  %s3 = inlined_call_operand.vmem [shape: f32[2,384], index: 3, kind: input, shape index: {}]
  %s4 = inlined_call_operand.vmem [shape: f32[2,10,2], index: 4, kind: output, shape index: {}]
  %s5 = sld [smem:[#allocation0]]
  $region26: #{tpu_custom_call.1} parent=0
    _
  %s7 = ssub.s32 1, %s5
  %s8 = scalar_select 0, %s7, %s5
  // Predicated region
  $region2: #{tpu_custom_call.1} parent=0 // pred_check
    _
  $region3: #{tpu_custom_call.1} parent=0 // pred_check_branch
    %10 = sbr.rel (0) target = $region5
  $region4: #{tpu_custom_call.1} parent=0 // pred_region
    _
  $region5: #{tpu_custom_call.1} parent=0 // pred_fallthru
    _
  // Predicated region
  $region6: #{tpu_custom_call.1} parent=0 // pred_check
    _
  $region7: #{tpu_custom_call.1} parent=0 // pred_check_branch
    %12 = sbr.rel (0) target = $region9
  $region8: #{tpu_custom_call.1} parent=0 // pred_region
    _
  $region9: #{tpu_custom_call.1} parent=0 // pred_fallthru
    _
  // Predicated region
  $region10: #{tpu_custom_call.1} parent=0 // pred_check
    _
  $region11: #{tpu_custom_call.1} parent=0 // pred_check_branch
    %14 = sbr.rel (0) target = $region13
  $region12: #{tpu_custom_call.1} parent=0 // pred_region
    _
  $region13: #{tpu_custom_call.1} parent=0 // pred_fallthru
    _
  // Predicated region
  $region14: #{tpu_custom_call.1} parent=0 // pred_check
    _
  $region15: #{tpu_custom_call.1} parent=0 // pred_check_branch
    %16 = sbr.rel (0) target = $region17
  $region16: #{tpu_custom_call.1} parent=0 // pred_region
    _
  $region17: #{tpu_custom_call.1} parent=0 // pred_fallthru
    _
  %v17 = vld [vmem:[%s2] sm:$0xff]
  %v18 = vld [vmem:[%s2 + $0x8] sm:$0xff]
  %v19 = vld [vmem:[%s2 + $0x10] sm:$0xff]
  %v20 = vld [vmem:[%s2 + $0x18] sm:$0x3]
  %v21 = vld [vmem:[%s2 + $0x20] sm:$0x3]
  %v22 = vld [vmem:[%s2 + $0x28] sm:$0x3]
  %v23 = vld [vmem:[%s3] ss:$2 sm:$0x7]
  %s24 = scalar_lea.vmem %s3, 1
  %v25 = vld [vmem:[%s24] ss:$2 sm:$0x7]
  %v26 = vld [vmem:[%s1] sm:$0xff]
  %v27 = vld [vmem:[%s1 + $0x8] sm:$0x3]
  %v28 = vld [vmem:[%s0] sm:$0xff]
  %v29 = vld [vmem:[%s0 + $0x8] sm:$0xff]
  %v30 = vld [vmem:[%s0 + $0x10] sm:$0xff]
  %v31 = vld [vmem:[%s0 + $0x28] sm:$0xff]
  %v32 = vld [vmem:[%s0 + $0x30] sm:$0xff]
  %v33 = vld [vmem:[%s0 + $0x38] sm:$0xff]
  %s34 = scalar_lea.vmem %s1, 16
  %v35 = vld [vmem:[%s34] sm:$0xff]
  %v36 = vld [vmem:[%s34 + $0x8] sm:$0x3]
  %v37 = vld [vmem:[%s0 + $0x18] sm:$0xff]
  %v38 = vld [vmem:[%s0 + $0x40] sm:$0xff]
  %47 = vrot.lane.b32.xlu0 %v28, 127
  %v48 = vpop.permute.xlu0 %47
  %49 = vrot.lane.b32.xlu0 %v29, 127
  %v50 = vpop.permute.xlu0 %49
  %51 = vrot.lane.b32.xlu0 %v30, 127
  %v52 = vpop.permute.xlu0 %51
  %53 = vrot.lane.b32.xlu0 %v37, 127
  %v54 = vpop.permute.xlu0 %53
  %55 = vrot.lane.b32.xlu0 %v31, 127
  %v56 = vpop.permute.xlu0 %55
  %57 = vrot.lane.b32.xlu0 %v32, 127
  %v58 = vpop.permute.xlu0 %57
  %59 = vrot.lane.b32.xlu0 %v33, 127
  %v60 = vpop.permute.xlu0 %59
  %61 = vrot.lane.b32.xlu0 %v38, 127
  %v62 = vpop.permute.xlu0 %61
  %vm63 = vcmask 1039360
  %v64 = vsel %vm63, %v48, %v50
  %v65 = vsel %vm63, %v50, %v52
  %v66 = vsel %vm63, %v52, %v54
  %v67 = vsel %vm63, %v56, %v58
  %v68 = vsel %vm63, %v58, %v60
  %v69 = vsel %vm63, %v60, %v62
  %vm76 = vcmask 130048
  %v78 = vsel %vm76, %v35, 0
  %v81 = vsel %vm76, %v36, 0
  %83 = vmatpush.msra.mxu0 0.0
  %84 = vmatpush.msra.mxu0 0.0
  %85 = vmatpush.msra.mxu0 0.0
  %86 = vmatpush.msra.mxu0 0.0
  %87 = vmatpush.msra.mxu0 0.0
  %88 = vmatpush.msra.mxu0 0.0
  %89 = vmatpush.msra.mxu0 0.0
  %90 = vmatpush.msra.mxu0 0.0
  %91 = vmatpush.msra.mxu0 0.0
  %92 = vmatpush.msra.mxu0 0.0
  %93 = vmatpush.msra.mxu0 0.0
  %94 = vmatpush.msra.mxu0 0.0
  %95 = vmatpush.msra.mxu0 0.0
  %96 = vmatpush.msra.mxu0 0.0
  %97 = vmatpush.msra.mxu0 %v67
  %98 = vmatpush.msra.mxu0 %v64
  %99 = vmatmul.f32.gmra.mxu0 %v78
  %v100 = vpop.f32.mrf.mxu0
  %v101 = vadd.f32 0.0, %v100
  %102 = vmatmul.f32.gmra.mxu0 %v81
  %v103 = vpop.f32.mrf.mxu0
  %v104 = vadd.f32 0.0, %v103
  %105 = vdwg.mxu0
  %106 = vmatpush.msra.mxu0 0.0
  %107 = vmatpush.msra.mxu0 0.0
  %108 = vmatpush.msra.mxu0 0.0
  %109 = vmatpush.msra.mxu0 0.0
  %110 = vmatpush.msra.mxu0 0.0
  %111 = vmatpush.msra.mxu0 0.0
  %112 = vmatpush.msra.mxu0 0.0
  %113 = vmatpush.msra.mxu0 0.0
  %114 = vmatpush.msra.mxu0 0.0
  %115 = vmatpush.msra.mxu0 0.0
  %116 = vmatpush.msra.mxu0 0.0
  %117 = vmatpush.msra.mxu0 0.0
  %118 = vmatpush.msra.mxu0 0.0
  %119 = vmatpush.msra.mxu0 0.0
  %120 = vmatpush.msra.mxu0 %v68
  %121 = vmatpush.msra.mxu0 %v65
  %122 = vmatmul.f32.gmra.mxu0 %v78
  %v123 = vpop.f32.mrf.mxu0
  %v124 = vadd.f32 0.0, %v123
  %125 = vmatmul.f32.gmra.mxu0 %v81
  %v126 = vpop.f32.mrf.mxu0
  %v127 = vadd.f32 0.0, %v126
  %128 = vdwg.mxu0
  %129 = vmatpush.msra.mxu0 0.0
  %130 = vmatpush.msra.mxu0 0.0
  %131 = vmatpush.msra.mxu0 0.0
  %132 = vmatpush.msra.mxu0 0.0
  %133 = vmatpush.msra.mxu0 0.0
  %134 = vmatpush.msra.mxu0 0.0
  %135 = vmatpush.msra.mxu0 0.0
  %136 = vmatpush.msra.mxu0 0.0
  %137 = vmatpush.msra.mxu0 0.0
  %138 = vmatpush.msra.mxu0 0.0
  %139 = vmatpush.msra.mxu0 0.0
  %140 = vmatpush.msra.mxu0 0.0
  %141 = vmatpush.msra.mxu0 0.0
  %142 = vmatpush.msra.mxu0 0.0
  %143 = vmatpush.msra.mxu0 %v69
  %144 = vmatpush.msra.mxu0 %v66
  %145 = vmatmul.f32.gmra.mxu0 %v78
  %v146 = vpop.f32.mrf.mxu0
  %v147 = vadd.f32 0.0, %v146
  %148 = vmatmul.f32.gmra.mxu0 %v81
  %v149 = vpop.f32.mrf.mxu0
  %v150 = vadd.f32 0.0, %v149
  %151 = vdwg.mxu0
  %v153 = vsel %vm76, %v26, 0
  %v156 = vsel %vm76, %v27, 0
  %158 = vmatpush.msra.mxu0 0.0
  %159 = vmatpush.msra.mxu0 0.0
  %160 = vmatpush.msra.mxu0 0.0
  %161 = vmatpush.msra.mxu0 0.0
  %162 = vmatpush.msra.mxu0 0.0
  %163 = vmatpush.msra.mxu0 0.0
  %164 = vmatpush.msra.mxu0 0.0
  %165 = vmatpush.msra.mxu0 0.0
  %166 = vmatpush.msra.mxu0 0.0
  %167 = vmatpush.msra.mxu0 0.0
  %168 = vmatpush.msra.mxu0 0.0
  %169 = vmatpush.msra.mxu0 0.0
  %170 = vmatpush.msra.mxu0 0.0
  %171 = vmatpush.msra.mxu0 0.0
  %172 = vmatpush.msra.mxu0 %v31
  %173 = vmatpush.msra.mxu0 %v28
  %174 = vmatmul.f32.gmra.mxu0 %v153
  %v175 = vpop.f32.mrf.mxu0
  %v176 = vadd.f32 %v101, %v175
  %177 = vmatmul.f32.gmra.mxu0 %v156
  %v178 = vpop.f32.mrf.mxu0
  %v179 = vadd.f32 %v104, %v178
  %180 = vdwg.mxu0
  %181 = vmatpush.msra.mxu0 0.0
  %182 = vmatpush.msra.mxu0 0.0
  %183 = vmatpush.msra.mxu0 0.0
  %184 = vmatpush.msra.mxu0 0.0
  %185 = vmatpush.msra.mxu0 0.0
  %186 = vmatpush.msra.mxu0 0.0
  %187 = vmatpush.msra.mxu0 0.0
  %188 = vmatpush.msra.mxu0 0.0
  %189 = vmatpush.msra.mxu0 0.0
  %190 = vmatpush.msra.mxu0 0.0
  %191 = vmatpush.msra.mxu0 0.0
  %192 = vmatpush.msra.mxu0 0.0
  %193 = vmatpush.msra.mxu0 0.0
  %194 = vmatpush.msra.mxu0 0.0
  %195 = vmatpush.msra.mxu0 %v32
  %196 = vmatpush.msra.mxu0 %v29
  %197 = vmatmul.f32.gmra.mxu0 %v153
  %v198 = vpop.f32.mrf.mxu0
  %v199 = vadd.f32 %v124, %v198
  %200 = vmatmul.f32.gmra.mxu0 %v156
  %v201 = vpop.f32.mrf.mxu0
  %v202 = vadd.f32 %v127, %v201
  %203 = vdwg.mxu0
  %204 = vmatpush.msra.mxu0 0.0
  %205 = vmatpush.msra.mxu0 0.0
  %206 = vmatpush.msra.mxu0 0.0
  %207 = vmatpush.msra.mxu0 0.0
  %208 = vmatpush.msra.mxu0 0.0
  %209 = vmatpush.msra.mxu0 0.0
  %210 = vmatpush.msra.mxu0 0.0
  %211 = vmatpush.msra.mxu0 0.0
  %212 = vmatpush.msra.mxu0 0.0
  %213 = vmatpush.msra.mxu0 0.0
  %214 = vmatpush.msra.mxu0 0.0
  %215 = vmatpush.msra.mxu0 0.0
  %216 = vmatpush.msra.mxu0 0.0
  %217 = vmatpush.msra.mxu0 0.0
  %218 = vmatpush.msra.mxu0 %v33
  %219 = vmatpush.msra.mxu0 %v30
  %220 = vmatmul.f32.gmra.mxu0 %v153
  %v221 = vpop.f32.mrf.mxu0
  %v222 = vadd.f32 %v147, %v221
  %223 = vmatmul.f32.gmra.mxu0 %v156
  %v224 = vpop.f32.mrf.mxu0
  %v225 = vadd.f32 %v150, %v224
  %226 = vdwg.mxu0
  %s227 = scalar_lea.vmem %s1, 32
  %v228 = vld [vmem:[%s227] sm:$0xff]
  %v229 = vld [vmem:[%s227 + $0x8] sm:$0x3]
  %230 = vrot.lane.b32.xlu0 %v28, 126
  %v231 = vpop.permute.xlu0 %230
  %232 = vrot.lane.b32.xlu0 %v29, 126
  %v233 = vpop.permute.xlu0 %232
  %234 = vrot.lane.b32.xlu0 %v30, 126
  %v235 = vpop.permute.xlu0 %234
  %236 = vrot.lane.b32.xlu0 %v37, 126
  %v237 = vpop.permute.xlu0 %236
  %238 = vrot.lane.b32.xlu0 %v31, 126
  %v239 = vpop.permute.xlu0 %238
  %240 = vrot.lane.b32.xlu0 %v32, 126
  %v241 = vpop.permute.xlu0 %240
  %242 = vrot.lane.b32.xlu0 %v33, 126
  %v243 = vpop.permute.xlu0 %242
  %244 = vrot.lane.b32.xlu0 %v38, 126
  %v245 = vpop.permute.xlu0 %244
  %vm246 = vcmask 1031168
  %v247 = vsel %vm246, %v231, %v233
  %v248 = vsel %vm246, %v233, %v235
  %v249 = vsel %vm246, %v235, %v237
  %v250 = vsel %vm246, %v239, %v241
  %v251 = vsel %vm246, %v241, %v243
  %v252 = vsel %vm246, %v243, %v245
  %v260 = vsel %vm76, %v228, 0
  %v263 = vsel %vm76, %v229, 0
  %265 = vmatpush.msra.mxu0 0.0
  %266 = vmatpush.msra.mxu0 0.0
  %267 = vmatpush.msra.mxu0 0.0
  %268 = vmatpush.msra.mxu0 0.0
  %269 = vmatpush.msra.mxu0 0.0
  %270 = vmatpush.msra.mxu0 0.0
  %271 = vmatpush.msra.mxu0 0.0
  %272 = vmatpush.msra.mxu0 0.0
  %273 = vmatpush.msra.mxu0 0.0
  %274 = vmatpush.msra.mxu0 0.0
  %275 = vmatpush.msra.mxu0 0.0
  %276 = vmatpush.msra.mxu0 0.0
  %277 = vmatpush.msra.mxu0 0.0
  %278 = vmatpush.msra.mxu0 0.0
  %279 = vmatpush.msra.mxu0 %v250
  %280 = vmatpush.msra.mxu0 %v247
  %281 = vmatmul.f32.gmra.mxu0 %v260
  %v282 = vpop.f32.mrf.mxu0
  %v283 = vadd.f32 0.0, %v282
  %284 = vmatmul.f32.gmra.mxu0 %v263
  %v285 = vpop.f32.mrf.mxu0
  %v286 = vadd.f32 0.0, %v285
  %287 = vdwg.mxu0
  %288 = vmatpush.msra.mxu0 0.0
  %289 = vmatpush.msra.mxu0 0.0
  %290 = vmatpush.msra.mxu0 0.0
  %291 = vmatpush.msra.mxu0 0.0
  %292 = vmatpush.msra.mxu0 0.0
  %293 = vmatpush.msra.mxu0 0.0
  %294 = vmatpush.msra.mxu0 0.0
  %295 = vmatpush.msra.mxu0 0.0
  %296 = vmatpush.msra.mxu0 0.0
  %297 = vmatpush.msra.mxu0 0.0
  %298 = vmatpush.msra.mxu0 0.0
  %299 = vmatpush.msra.mxu0 0.0
  %300 = vmatpush.msra.mxu0 0.0
  %301 = vmatpush.msra.mxu0 0.0
  %302 = vmatpush.msra.mxu0 %v251
  %303 = vmatpush.msra.mxu0 %v248
  %304 = vmatmul.f32.gmra.mxu0 %v260
  %v305 = vpop.f32.mrf.mxu0
  %v306 = vadd.f32 0.0, %v305
  %307 = vmatmul.f32.gmra.mxu0 %v263
  %v308 = vpop.f32.mrf.mxu0
  %v309 = vadd.f32 0.0, %v308
  %310 = vdwg.mxu0
  %311 = vmatpush.msra.mxu0 0.0
  %312 = vmatpush.msra.mxu0 0.0
  %313 = vmatpush.msra.mxu0 0.0
  %314 = vmatpush.msra.mxu0 0.0
  %315 = vmatpush.msra.mxu0 0.0
  %316 = vmatpush.msra.mxu0 0.0
  %317 = vmatpush.msra.mxu0 0.0
  %318 = vmatpush.msra.mxu0 0.0
  %319 = vmatpush.msra.mxu0 0.0
  %320 = vmatpush.msra.mxu0 0.0
  %321 = vmatpush.msra.mxu0 0.0
  %322 = vmatpush.msra.mxu0 0.0
  %323 = vmatpush.msra.mxu0 0.0
  %324 = vmatpush.msra.mxu0 0.0
  %325 = vmatpush.msra.mxu0 %v252
  %326 = vmatpush.msra.mxu0 %v249
  %327 = vmatmul.f32.gmra.mxu0 %v260
  %v328 = vpop.f32.mrf.mxu0
  %v329 = vadd.f32 0.0, %v328
  %330 = vmatmul.f32.gmra.mxu0 %v263
  %v331 = vpop.f32.mrf.mxu0
  %v332 = vadd.f32 0.0, %v331
  %333 = vdwg.mxu0
  %v334 = vadd.f32 %v176, %v283
  %v335 = vadd.f32 %v199, %v306
  %v336 = vadd.f32 %v222, %v329
  %v337 = vadd.f32 %v179, %v286
  %v338 = vadd.f32 %v202, %v309
  %v339 = vadd.f32 %v225, %v332
  %s340 = scalar_lea.vmem %s1, 48
  %v341 = vld [vmem:[%s340] sm:$0xff]
  %v342 = vld [vmem:[%s340 + $0x8] sm:$0x3]
  %343 = vrot.lane.b32.xlu0 %v28, 125
  %v344 = vpop.permute.xlu0 %343
  %345 = vrot.lane.b32.xlu0 %v29, 125
  %v346 = vpop.permute.xlu0 %345
  %347 = vrot.lane.b32.xlu0 %v30, 125
  %v348 = vpop.permute.xlu0 %347
  %349 = vrot.lane.b32.xlu0 %v37, 125
  %v350 = vpop.permute.xlu0 %349
  %351 = vrot.lane.b32.xlu0 %v31, 125
  %v352 = vpop.permute.xlu0 %351
  %353 = vrot.lane.b32.xlu0 %v32, 125
  %v354 = vpop.permute.xlu0 %353
  %355 = vrot.lane.b32.xlu0 %v33, 125
  %v356 = vpop.permute.xlu0 %355
  %357 = vrot.lane.b32.xlu0 %v38, 125
  %v358 = vpop.permute.xlu0 %357
  %vm359 = vcmask 1022976
  %v360 = vsel %vm359, %v344, %v346
  %v361 = vsel %vm359, %v346, %v348
  %v362 = vsel %vm359, %v348, %v350
  %v363 = vsel %vm359, %v352, %v354
  %v364 = vsel %vm359, %v354, %v356
  %v365 = vsel %vm359, %v356, %v358
  %v373 = vsel %vm76, %v341, 0
  %v376 = vsel %vm76, %v342, 0
  %378 = vmatpush.msra.mxu0 0.0
  %379 = vmatpush.msra.mxu0 0.0
  %380 = vmatpush.msra.mxu0 0.0
  %381 = vmatpush.msra.mxu0 0.0
  %382 = vmatpush.msra.mxu0 0.0
  %383 = vmatpush.msra.mxu0 0.0
  %384 = vmatpush.msra.mxu0 0.0
  %385 = vmatpush.msra.mxu0 0.0
  %386 = vmatpush.msra.mxu0 0.0
  %387 = vmatpush.msra.mxu0 0.0
  %388 = vmatpush.msra.mxu0 0.0
  %389 = vmatpush.msra.mxu0 0.0
  %390 = vmatpush.msra.mxu0 0.0
  %391 = vmatpush.msra.mxu0 0.0
  %392 = vmatpush.msra.mxu0 %v363
  %393 = vmatpush.msra.mxu0 %v360
  %394 = vmatmul.f32.gmra.mxu0 %v373
  %v395 = vpop.f32.mrf.mxu0
  %v396 = vadd.f32 0.0, %v395
  %397 = vmatmul.f32.gmra.mxu0 %v376
  %v398 = vpop.f32.mrf.mxu0
  %v399 = vadd.f32 0.0, %v398
  %400 = vdwg.mxu0
  %401 = vmatpush.msra.mxu0 0.0
  %402 = vmatpush.msra.mxu0 0.0
  %403 = vmatpush.msra.mxu0 0.0
  %404 = vmatpush.msra.mxu0 0.0
  %405 = vmatpush.msra.mxu0 0.0
  %406 = vmatpush.msra.mxu0 0.0
  %407 = vmatpush.msra.mxu0 0.0
  %408 = vmatpush.msra.mxu0 0.0
  %409 = vmatpush.msra.mxu0 0.0
  %410 = vmatpush.msra.mxu0 0.0
  %411 = vmatpush.msra.mxu0 0.0
  %412 = vmatpush.msra.mxu0 0.0
  %413 = vmatpush.msra.mxu0 0.0
  %414 = vmatpush.msra.mxu0 0.0
  %415 = vmatpush.msra.mxu0 %v364
  %416 = vmatpush.msra.mxu0 %v361
  %417 = vmatmul.f32.gmra.mxu0 %v373
  %v418 = vpop.f32.mrf.mxu0
  %v419 = vadd.f32 0.0, %v418
  %420 = vmatmul.f32.gmra.mxu0 %v376
  %v421 = vpop.f32.mrf.mxu0
  %v422 = vadd.f32 0.0, %v421
  %423 = vdwg.mxu0
  %424 = vmatpush.msra.mxu0 0.0
  %425 = vmatpush.msra.mxu0 0.0
  %426 = vmatpush.msra.mxu0 0.0
  %427 = vmatpush.msra.mxu0 0.0
  %428 = vmatpush.msra.mxu0 0.0
  %429 = vmatpush.msra.mxu0 0.0
  %430 = vmatpush.msra.mxu0 0.0
  %431 = vmatpush.msra.mxu0 0.0
  %432 = vmatpush.msra.mxu0 0.0
  %433 = vmatpush.msra.mxu0 0.0
  %434 = vmatpush.msra.mxu0 0.0
  %435 = vmatpush.msra.mxu0 0.0
  %436 = vmatpush.msra.mxu0 0.0
  %437 = vmatpush.msra.mxu0 0.0
  %438 = vmatpush.msra.mxu0 %v365
  %439 = vmatpush.msra.mxu0 %v362
  %440 = vmatmul.f32.gmra.mxu0 %v373
  %v441 = vpop.f32.mrf.mxu0
  %v442 = vadd.f32 0.0, %v441
  %443 = vmatmul.f32.gmra.mxu0 %v376
  %v444 = vpop.f32.mrf.mxu0
  %v445 = vadd.f32 0.0, %v444
  %446 = vdwg.mxu0
  %v447 = vadd.f32 %v334, %v396
  %v448 = vadd.f32 %v335, %v419
  %v449 = vadd.f32 %v336, %v442
  %v450 = vadd.f32 %v337, %v399
  %v451 = vadd.f32 %v338, %v422
  %v452 = vadd.f32 %v339, %v445
  %s453 = scalar_lea.vmem %s1, 64
  %v454 = vld [vmem:[%s453] sm:$0xff]
  %v455 = vld [vmem:[%s453 + $0x8] sm:$0x3]
  %456 = vrot.lane.b32.xlu0 %v28, 124
  %v457 = vpop.permute.xlu0 %456
  %458 = vrot.lane.b32.xlu0 %v29, 124
  %v459 = vpop.permute.xlu0 %458
  %460 = vrot.lane.b32.xlu0 %v30, 124
  %v461 = vpop.permute.xlu0 %460
  %462 = vrot.lane.b32.xlu0 %v37, 124
  %v463 = vpop.permute.xlu0 %462
  %464 = vrot.lane.b32.xlu0 %v31, 124
  %v465 = vpop.permute.xlu0 %464
  %466 = vrot.lane.b32.xlu0 %v32, 124
  %v467 = vpop.permute.xlu0 %466
  %468 = vrot.lane.b32.xlu0 %v33, 124
  %v469 = vpop.permute.xlu0 %468
  %470 = vrot.lane.b32.xlu0 %v38, 124
  %v471 = vpop.permute.xlu0 %470
  %vm472 = vcmask 1014784
  %v473 = vsel %vm472, %v457, %v459
  %v474 = vsel %vm472, %v459, %v461
  %v475 = vsel %vm472, %v461, %v463
  %v476 = vsel %vm472, %v465, %v467
  %v477 = vsel %vm472, %v467, %v469
  %v478 = vsel %vm472, %v469, %v471
  %v486 = vsel %vm76, %v454, 0
  %v489 = vsel %vm76, %v455, 0
  %491 = vmatpush.msra.mxu0 0.0
  %492 = vmatpush.msra.mxu0 0.0
  %493 = vmatpush.msra.mxu0 0.0
  %494 = vmatpush.msra.mxu0 0.0
  %495 = vmatpush.msra.mxu0 0.0
  %496 = vmatpush.msra.mxu0 0.0
  %497 = vmatpush.msra.mxu0 0.0
  %498 = vmatpush.msra.mxu0 0.0
  %499 = vmatpush.msra.mxu0 0.0
  %500 = vmatpush.msra.mxu0 0.0
  %501 = vmatpush.msra.mxu0 0.0
  %502 = vmatpush.msra.mxu0 0.0
  %503 = vmatpush.msra.mxu0 0.0
  %504 = vmatpush.msra.mxu0 0.0
  %505 = vmatpush.msra.mxu0 %v476
  %506 = vmatpush.msra.mxu0 %v473
  %507 = vmatmul.f32.gmra.mxu0 %v486
  %v508 = vpop.f32.mrf.mxu0
  %v509 = vadd.f32 0.0, %v508
  %510 = vmatmul.f32.gmra.mxu0 %v489
  %v511 = vpop.f32.mrf.mxu0
  %v512 = vadd.f32 0.0, %v511
  %513 = vdwg.mxu0
  %514 = vmatpush.msra.mxu0 0.0
  %515 = vmatpush.msra.mxu0 0.0
  %516 = vmatpush.msra.mxu0 0.0
  %517 = vmatpush.msra.mxu0 0.0
  %518 = vmatpush.msra.mxu0 0.0
  %519 = vmatpush.msra.mxu0 0.0
  %520 = vmatpush.msra.mxu0 0.0
  %521 = vmatpush.msra.mxu0 0.0
  %522 = vmatpush.msra.mxu0 0.0
  %523 = vmatpush.msra.mxu0 0.0
  %524 = vmatpush.msra.mxu0 0.0
  %525 = vmatpush.msra.mxu0 0.0
  %526 = vmatpush.msra.mxu0 0.0
  %527 = vmatpush.msra.mxu0 0.0
  %528 = vmatpush.msra.mxu0 %v477
  %529 = vmatpush.msra.mxu0 %v474
  %530 = vmatmul.f32.gmra.mxu0 %v486
  %v531 = vpop.f32.mrf.mxu0
  %v532 = vadd.f32 0.0, %v531
  %533 = vmatmul.f32.gmra.mxu0 %v489
  %v534 = vpop.f32.mrf.mxu0
  %v535 = vadd.f32 0.0, %v534
  %536 = vdwg.mxu0
  %537 = vmatpush.msra.mxu0 0.0
  %538 = vmatpush.msra.mxu0 0.0
  %539 = vmatpush.msra.mxu0 0.0
  %540 = vmatpush.msra.mxu0 0.0
  %541 = vmatpush.msra.mxu0 0.0
  %542 = vmatpush.msra.mxu0 0.0
  %543 = vmatpush.msra.mxu0 0.0
  %544 = vmatpush.msra.mxu0 0.0
  %545 = vmatpush.msra.mxu0 0.0
  %546 = vmatpush.msra.mxu0 0.0
  %547 = vmatpush.msra.mxu0 0.0
  %548 = vmatpush.msra.mxu0 0.0
  %549 = vmatpush.msra.mxu0 0.0
  %550 = vmatpush.msra.mxu0 0.0
  %551 = vmatpush.msra.mxu0 %v478
  %552 = vmatpush.msra.mxu0 %v475
  %553 = vmatmul.f32.gmra.mxu0 %v486
  %v554 = vpop.f32.mrf.mxu0
  %v555 = vadd.f32 0.0, %v554
  %556 = vmatmul.f32.gmra.mxu0 %v489
  %v557 = vpop.f32.mrf.mxu0
  %v558 = vadd.f32 0.0, %v557
  %559 = vdwg.mxu0
  %v560 = vadd.f32 %v447, %v509
  %v561 = vadd.f32 %v448, %v532
  %v562 = vadd.f32 %v449, %v555
  %v563 = vadd.f32 %v450, %v512
  %v564 = vadd.f32 %v451, %v535
  %v565 = vadd.f32 %v452, %v558
  %s566 = scalar_lea.vmem %s1, 80
  %v567 = vld [vmem:[%s566] sm:$0xff]
  %v568 = vld [vmem:[%s566 + $0x8] sm:$0x3]
  %569 = vrot.lane.b32.xlu0 %v28, 123
  %v570 = vpop.permute.xlu0 %569
  %571 = vrot.lane.b32.xlu0 %v29, 123
  %v572 = vpop.permute.xlu0 %571
  %573 = vrot.lane.b32.xlu0 %v30, 123
  %v574 = vpop.permute.xlu0 %573
  %575 = vrot.lane.b32.xlu0 %v37, 123
  %v576 = vpop.permute.xlu0 %575
  %577 = vrot.lane.b32.xlu0 %v31, 123
  %v578 = vpop.permute.xlu0 %577
  %579 = vrot.lane.b32.xlu0 %v32, 123
  %v580 = vpop.permute.xlu0 %579
  %581 = vrot.lane.b32.xlu0 %v33, 123
  %v582 = vpop.permute.xlu0 %581
  %583 = vrot.lane.b32.xlu0 %v38, 123
  %v584 = vpop.permute.xlu0 %583
  %vm585 = vcmask 1006592
  %v586 = vsel %vm585, %v570, %v572
  %v587 = vsel %vm585, %v572, %v574
  %v588 = vsel %vm585, %v574, %v576
  %v589 = vsel %vm585, %v578, %v580
  %v590 = vsel %vm585, %v580, %v582
  %v591 = vsel %vm585, %v582, %v584
  %v599 = vsel %vm76, %v567, 0
  %v602 = vsel %vm76, %v568, 0
  %604 = vmatpush.msra.mxu0 0.0
  %605 = vmatpush.msra.mxu0 0.0
  %606 = vmatpush.msra.mxu0 0.0
  %607 = vmatpush.msra.mxu0 0.0
  %608 = vmatpush.msra.mxu0 0.0
  %609 = vmatpush.msra.mxu0 0.0
  %610 = vmatpush.msra.mxu0 0.0
  %611 = vmatpush.msra.mxu0 0.0
  %612 = vmatpush.msra.mxu0 0.0
  %613 = vmatpush.msra.mxu0 0.0
  %614 = vmatpush.msra.mxu0 0.0
  %615 = vmatpush.msra.mxu0 0.0
  %616 = vmatpush.msra.mxu0 0.0
  %617 = vmatpush.msra.mxu0 0.0
  %618 = vmatpush.msra.mxu0 %v589
  %619 = vmatpush.msra.mxu0 %v586
  %620 = vmatmul.f32.gmra.mxu0 %v599
  %v621 = vpop.f32.mrf.mxu0
  %v622 = vadd.f32 0.0, %v621
  %623 = vmatmul.f32.gmra.mxu0 %v602
  %v624 = vpop.f32.mrf.mxu0
  %v625 = vadd.f32 0.0, %v624
  %626 = vdwg.mxu0
  %627 = vmatpush.msra.mxu0 0.0
  %628 = vmatpush.msra.mxu0 0.0
  %629 = vmatpush.msra.mxu0 0.0
  %630 = vmatpush.msra.mxu0 0.0
  %631 = vmatpush.msra.mxu0 0.0
  %632 = vmatpush.msra.mxu0 0.0
  %633 = vmatpush.msra.mxu0 0.0
  %634 = vmatpush.msra.mxu0 0.0
  %635 = vmatpush.msra.mxu0 0.0
  %636 = vmatpush.msra.mxu0 0.0
  %637 = vmatpush.msra.mxu0 0.0
  %638 = vmatpush.msra.mxu0 0.0
  %639 = vmatpush.msra.mxu0 0.0
  %640 = vmatpush.msra.mxu0 0.0
  %641 = vmatpush.msra.mxu0 %v590
  %642 = vmatpush.msra.mxu0 %v587
  %643 = vmatmul.f32.gmra.mxu0 %v599
  %v644 = vpop.f32.mrf.mxu0
  %v645 = vadd.f32 0.0, %v644
  %646 = vmatmul.f32.gmra.mxu0 %v602
  %v647 = vpop.f32.mrf.mxu0
  %v648 = vadd.f32 0.0, %v647
  %649 = vdwg.mxu0
  %650 = vmatpush.msra.mxu0 0.0
  %651 = vmatpush.msra.mxu0 0.0
  %652 = vmatpush.msra.mxu0 0.0
  %653 = vmatpush.msra.mxu0 0.0
  %654 = vmatpush.msra.mxu0 0.0
  %655 = vmatpush.msra.mxu0 0.0
  %656 = vmatpush.msra.mxu0 0.0
  %657 = vmatpush.msra.mxu0 0.0
  %658 = vmatpush.msra.mxu0 0.0
  %659 = vmatpush.msra.mxu0 0.0
  %660 = vmatpush.msra.mxu0 0.0
  %661 = vmatpush.msra.mxu0 0.0
  %662 = vmatpush.msra.mxu0 0.0
  %663 = vmatpush.msra.mxu0 0.0
  %664 = vmatpush.msra.mxu0 %v591
  %665 = vmatpush.msra.mxu0 %v588
  %666 = vmatmul.f32.gmra.mxu0 %v599
  %v667 = vpop.f32.mrf.mxu0
  %v668 = vadd.f32 0.0, %v667
  %669 = vmatmul.f32.gmra.mxu0 %v602
  %v670 = vpop.f32.mrf.mxu0
  %v671 = vadd.f32 0.0, %v670
  %672 = vdwg.mxu0
  %v673 = vadd.f32 %v560, %v622
  %v674 = vadd.f32 %v561, %v645
  %v675 = vadd.f32 %v562, %v668
  %v676 = vadd.f32 %v563, %v625
  %v677 = vadd.f32 %v564, %v648
  %v678 = vadd.f32 %v565, %v671
  %s679 = scalar_lea.vmem %s1, 96
  %v680 = vld [vmem:[%s679] sm:$0xff]
  %v681 = vld [vmem:[%s679 + $0x8] sm:$0x3]
  %682 = vrot.lane.b32.xlu0 %v28, 122
  %v683 = vpop.permute.xlu0 %682
  %684 = vrot.lane.b32.xlu0 %v29, 122
  %v685 = vpop.permute.xlu0 %684
  %686 = vrot.lane.b32.xlu0 %v30, 122
  %v687 = vpop.permute.xlu0 %686
  %688 = vrot.lane.b32.xlu0 %v37, 122
  %v689 = vpop.permute.xlu0 %688
  %690 = vrot.lane.b32.xlu0 %v31, 122
  %v691 = vpop.permute.xlu0 %690
  %692 = vrot.lane.b32.xlu0 %v32, 122
  %v693 = vpop.permute.xlu0 %692
  %694 = vrot.lane.b32.xlu0 %v33, 122
  %v695 = vpop.permute.xlu0 %694
  %696 = vrot.lane.b32.xlu0 %v38, 122
  %v697 = vpop.permute.xlu0 %696
  %vm698 = vcmask 998400
  %v699 = vsel %vm698, %v683, %v685
  %v700 = vsel %vm698, %v685, %v687
  %v701 = vsel %vm698, %v687, %v689
  %v702 = vsel %vm698, %v691, %v693
  %v703 = vsel %vm698, %v693, %v695
  %v704 = vsel %vm698, %v695, %v697
  %v712 = vsel %vm76, %v680, 0
  %v715 = vsel %vm76, %v681, 0
  %717 = vmatpush.msra.mxu0 0.0
  %718 = vmatpush.msra.mxu0 0.0
  %719 = vmatpush.msra.mxu0 0.0
  %720 = vmatpush.msra.mxu0 0.0
  %721 = vmatpush.msra.mxu0 0.0
  %722 = vmatpush.msra.mxu0 0.0
  %723 = vmatpush.msra.mxu0 0.0
  %724 = vmatpush.msra.mxu0 0.0
  %725 = vmatpush.msra.mxu0 0.0
  %726 = vmatpush.msra.mxu0 0.0
  %727 = vmatpush.msra.mxu0 0.0
  %728 = vmatpush.msra.mxu0 0.0
  %729 = vmatpush.msra.mxu0 0.0
  %730 = vmatpush.msra.mxu0 0.0
  %731 = vmatpush.msra.mxu0 %v702
  %732 = vmatpush.msra.mxu0 %v699
  %733 = vmatmul.f32.gmra.mxu0 %v712
  %v734 = vpop.f32.mrf.mxu0
  %v735 = vadd.f32 0.0, %v734
  %736 = vmatmul.f32.gmra.mxu0 %v715
  %v737 = vpop.f32.mrf.mxu0
  %v738 = vadd.f32 0.0, %v737
  %739 = vdwg.mxu0
  %740 = vmatpush.msra.mxu0 0.0
  %741 = vmatpush.msra.mxu0 0.0
  %742 = vmatpush.msra.mxu0 0.0
  %743 = vmatpush.msra.mxu0 0.0
  %744 = vmatpush.msra.mxu0 0.0
  %745 = vmatpush.msra.mxu0 0.0
  %746 = vmatpush.msra.mxu0 0.0
  %747 = vmatpush.msra.mxu0 0.0
  %748 = vmatpush.msra.mxu0 0.0
  %749 = vmatpush.msra.mxu0 0.0
  %750 = vmatpush.msra.mxu0 0.0
  %751 = vmatpush.msra.mxu0 0.0
  %752 = vmatpush.msra.mxu0 0.0
  %753 = vmatpush.msra.mxu0 0.0
  %754 = vmatpush.msra.mxu0 %v703
  %755 = vmatpush.msra.mxu0 %v700
  %756 = vmatmul.f32.gmra.mxu0 %v712
  %v757 = vpop.f32.mrf.mxu0
  %v758 = vadd.f32 0.0, %v757
  %759 = vmatmul.f32.gmra.mxu0 %v715
  %v760 = vpop.f32.mrf.mxu0
  %v761 = vadd.f32 0.0, %v760
  %762 = vdwg.mxu0
  %763 = vmatpush.msra.mxu0 0.0
  %764 = vmatpush.msra.mxu0 0.0
  %765 = vmatpush.msra.mxu0 0.0
  %766 = vmatpush.msra.mxu0 0.0
  %767 = vmatpush.msra.mxu0 0.0
  %768 = vmatpush.msra.mxu0 0.0
  %769 = vmatpush.msra.mxu0 0.0
  %770 = vmatpush.msra.mxu0 0.0
  %771 = vmatpush.msra.mxu0 0.0
  %772 = vmatpush.msra.mxu0 0.0
  %773 = vmatpush.msra.mxu0 0.0
  %774 = vmatpush.msra.mxu0 0.0
  %775 = vmatpush.msra.mxu0 0.0
  %776 = vmatpush.msra.mxu0 0.0
  %777 = vmatpush.msra.mxu0 %v704
  %778 = vmatpush.msra.mxu0 %v701
  %779 = vmatmul.f32.gmra.mxu0 %v712
  %v780 = vpop.f32.mrf.mxu0
  %v781 = vadd.f32 0.0, %v780
  %782 = vmatmul.f32.gmra.mxu0 %v715
  %v783 = vpop.f32.mrf.mxu0
  %v784 = vadd.f32 0.0, %v783
  %785 = vdwg.mxu0
  %v786 = vadd.f32 %v673, %v735
  %v787 = vadd.f32 %v674, %v758
  %v788 = vadd.f32 %v675, %v781
  %v789 = vadd.f32 %v676, %v738
  %v790 = vadd.f32 %v677, %v761
  %v791 = vadd.f32 %v678, %v784
  %s792 = scalar_lea.vmem %s1, 112
  %v793 = vld [vmem:[%s792] sm:$0xff]
  %v794 = vld [vmem:[%s792 + $0x8] sm:$0x3]
  %795 = vrot.lane.b32.xlu0 %v28, 106
  %v796 = vpop.permute.xlu0 %795
  %797 = vrot.lane.b32.xlu0 %v29, 106
  %v798 = vpop.permute.xlu0 %797
  %799 = vrot.lane.b32.xlu0 %v30, 106
  %v800 = vpop.permute.xlu0 %799
  %801 = vrot.lane.b32.xlu0 %v37, 106
  %v802 = vpop.permute.xlu0 %801
  %803 = vrot.lane.b32.xlu0 %v31, 106
  %v804 = vpop.permute.xlu0 %803
  %805 = vrot.lane.b32.xlu0 %v32, 106
  %v806 = vpop.permute.xlu0 %805
  %807 = vrot.lane.b32.xlu0 %v33, 106
  %v808 = vpop.permute.xlu0 %807
  %809 = vrot.lane.b32.xlu0 %v38, 106
  %v810 = vpop.permute.xlu0 %809
  %vm811 = vcmask 867328
  %v812 = vsel %vm811, %v796, %v798
  %v813 = vsel %vm811, %v798, %v800
  %v814 = vsel %vm811, %v800, %v802
  %v815 = vsel %vm811, %v804, %v806
  %v816 = vsel %vm811, %v806, %v808
  %v817 = vsel %vm811, %v808, %v810
  %v825 = vsel %vm76, %v793, 0
  %v828 = vsel %vm76, %v794, 0
  %830 = vmatpush.msra.mxu0 0.0
  %831 = vmatpush.msra.mxu0 0.0
  %832 = vmatpush.msra.mxu0 0.0
  %833 = vmatpush.msra.mxu0 0.0
  %834 = vmatpush.msra.mxu0 0.0
  %835 = vmatpush.msra.mxu0 0.0
  %836 = vmatpush.msra.mxu0 0.0
  %837 = vmatpush.msra.mxu0 0.0
  %838 = vmatpush.msra.mxu0 0.0
  %839 = vmatpush.msra.mxu0 0.0
  %840 = vmatpush.msra.mxu0 0.0
  %841 = vmatpush.msra.mxu0 0.0
  %842 = vmatpush.msra.mxu0 0.0
  %843 = vmatpush.msra.mxu0 0.0
  %844 = vmatpush.msra.mxu0 %v815
  %845 = vmatpush.msra.mxu0 %v812
  %846 = vmatmul.f32.gmra.mxu0 %v825
  %v847 = vpop.f32.mrf.mxu0
  %v848 = vadd.f32 0.0, %v847
  %849 = vmatmul.f32.gmra.mxu0 %v828
  %v850 = vpop.f32.mrf.mxu0
  %v851 = vadd.f32 0.0, %v850
  %852 = vdwg.mxu0
  %853 = vmatpush.msra.mxu0 0.0
  %854 = vmatpush.msra.mxu0 0.0
  %855 = vmatpush.msra.mxu0 0.0
  %856 = vmatpush.msra.mxu0 0.0
  %857 = vmatpush.msra.mxu0 0.0
  %858 = vmatpush.msra.mxu0 0.0
  %859 = vmatpush.msra.mxu0 0.0
  %860 = vmatpush.msra.mxu0 0.0
  %861 = vmatpush.msra.mxu0 0.0
  %862 = vmatpush.msra.mxu0 0.0
  %863 = vmatpush.msra.mxu0 0.0
  %864 = vmatpush.msra.mxu0 0.0
  %865 = vmatpush.msra.mxu0 0.0
  %866 = vmatpush.msra.mxu0 0.0
  %867 = vmatpush.msra.mxu0 %v816
  %868 = vmatpush.msra.mxu0 %v813
  %869 = vmatmul.f32.gmra.mxu0 %v825
  %v870 = vpop.f32.mrf.mxu0
  %v871 = vadd.f32 0.0, %v870
  %872 = vmatmul.f32.gmra.mxu0 %v828
  %v873 = vpop.f32.mrf.mxu0
  %v874 = vadd.f32 0.0, %v873
  %875 = vdwg.mxu0
  %876 = vmatpush.msra.mxu0 0.0
  %877 = vmatpush.msra.mxu0 0.0
  %878 = vmatpush.msra.mxu0 0.0
  %879 = vmatpush.msra.mxu0 0.0
  %880 = vmatpush.msra.mxu0 0.0
  %881 = vmatpush.msra.mxu0 0.0
  %882 = vmatpush.msra.mxu0 0.0
  %883 = vmatpush.msra.mxu0 0.0
  %884 = vmatpush.msra.mxu0 0.0
  %885 = vmatpush.msra.mxu0 0.0
  %886 = vmatpush.msra.mxu0 0.0
  %887 = vmatpush.msra.mxu0 0.0
  %888 = vmatpush.msra.mxu0 0.0
  %889 = vmatpush.msra.mxu0 0.0
  %890 = vmatpush.msra.mxu0 %v817
  %891 = vmatpush.msra.mxu0 %v814
  %892 = vmatmul.f32.gmra.mxu0 %v825
  %v893 = vpop.f32.mrf.mxu0
  %v894 = vadd.f32 0.0, %v893
  %895 = vmatmul.f32.gmra.mxu0 %v828
  %v896 = vpop.f32.mrf.mxu0
  %v897 = vadd.f32 0.0, %v896
  %898 = vdwg.mxu0
  %v899 = vadd.f32 %v786, %v848
  %v900 = vadd.f32 %v787, %v871
  %v901 = vadd.f32 %v788, %v894
  %v902 = vadd.f32 %v789, %v851
  %v903 = vadd.f32 %v790, %v874
  %v904 = vadd.f32 %v791, %v897
  %s905 = scalar_lea.vmem %s1, 128
  %v906 = vld [vmem:[%s905] sm:$0xff]
  %v907 = vld [vmem:[%s905 + $0x8] sm:$0x3]
  %908 = vrot.lane.b32.xlu0 %v28, 105
  %v909 = vpop.permute.xlu0 %908
  %910 = vrot.lane.b32.xlu0 %v29, 105
  %v911 = vpop.permute.xlu0 %910
  %912 = vrot.lane.b32.xlu0 %v30, 105
  %v913 = vpop.permute.xlu0 %912
  %914 = vrot.lane.b32.xlu0 %v37, 105
  %v915 = vpop.permute.xlu0 %914
  %916 = vrot.lane.b32.xlu0 %v31, 105
  %v917 = vpop.permute.xlu0 %916
  %918 = vrot.lane.b32.xlu0 %v32, 105
  %v919 = vpop.permute.xlu0 %918
  %920 = vrot.lane.b32.xlu0 %v33, 105
  %v921 = vpop.permute.xlu0 %920
  %922 = vrot.lane.b32.xlu0 %v38, 105
  %v923 = vpop.permute.xlu0 %922
  %vm924 = vcmask 859136
  %v925 = vsel %vm924, %v909, %v911
  %v926 = vsel %vm924, %v911, %v913
  %v927 = vsel %vm924, %v913, %v915
  %v928 = vsel %vm924, %v917, %v919
  %v929 = vsel %vm924, %v919, %v921
  %v930 = vsel %vm924, %v921, %v923
  %v938 = vsel %vm76, %v906, 0
  %v941 = vsel %vm76, %v907, 0
  %943 = vmatpush.msra.mxu0 0.0
  %944 = vmatpush.msra.mxu0 0.0
  %945 = vmatpush.msra.mxu0 0.0
  %946 = vmatpush.msra.mxu0 0.0
  %947 = vmatpush.msra.mxu0 0.0
  %948 = vmatpush.msra.mxu0 0.0
  %949 = vmatpush.msra.mxu0 0.0
  %950 = vmatpush.msra.mxu0 0.0
  %951 = vmatpush.msra.mxu0 0.0
  %952 = vmatpush.msra.mxu0 0.0
  %953 = vmatpush.msra.mxu0 0.0
  %954 = vmatpush.msra.mxu0 0.0
  %955 = vmatpush.msra.mxu0 0.0
  %956 = vmatpush.msra.mxu0 0.0
  %957 = vmatpush.msra.mxu0 %v928
  %958 = vmatpush.msra.mxu0 %v925
  %959 = vmatmul.f32.gmra.mxu0 %v938
  %v960 = vpop.f32.mrf.mxu0
  %v961 = vadd.f32 0.0, %v960
  %962 = vmatmul.f32.gmra.mxu0 %v941
  %v963 = vpop.f32.mrf.mxu0
  %v964 = vadd.f32 0.0, %v963
  %965 = vdwg.mxu0
  %966 = vmatpush.msra.mxu0 0.0
  %967 = vmatpush.msra.mxu0 0.0
  %968 = vmatpush.msra.mxu0 0.0
  %969 = vmatpush.msra.mxu0 0.0
  %970 = vmatpush.msra.mxu0 0.0
  %971 = vmatpush.msra.mxu0 0.0
  %972 = vmatpush.msra.mxu0 0.0
  %973 = vmatpush.msra.mxu0 0.0
  %974 = vmatpush.msra.mxu0 0.0
  %975 = vmatpush.msra.mxu0 0.0
  %976 = vmatpush.msra.mxu0 0.0
  %977 = vmatpush.msra.mxu0 0.0
  %978 = vmatpush.msra.mxu0 0.0
  %979 = vmatpush.msra.mxu0 0.0
  %980 = vmatpush.msra.mxu0 %v929
  %981 = vmatpush.msra.mxu0 %v926
  %982 = vmatmul.f32.gmra.mxu0 %v938
  %v983 = vpop.f32.mrf.mxu0
  %v984 = vadd.f32 0.0, %v983
  %985 = vmatmul.f32.gmra.mxu0 %v941
  %v986 = vpop.f32.mrf.mxu0
  %v987 = vadd.f32 0.0, %v986
  %988 = vdwg.mxu0
  %989 = vmatpush.msra.mxu0 0.0
  %990 = vmatpush.msra.mxu0 0.0
  %991 = vmatpush.msra.mxu0 0.0
  %992 = vmatpush.msra.mxu0 0.0
  %993 = vmatpush.msra.mxu0 0.0
  %994 = vmatpush.msra.mxu0 0.0
  %995 = vmatpush.msra.mxu0 0.0
  %996 = vmatpush.msra.mxu0 0.0
  %997 = vmatpush.msra.mxu0 0.0
  %998 = vmatpush.msra.mxu0 0.0
  %999 = vmatpush.msra.mxu0 0.0
  %1000 = vmatpush.msra.mxu0 0.0
  %1001 = vmatpush.msra.mxu0 0.0
  %1002 = vmatpush.msra.mxu0 0.0
  %1003 = vmatpush.msra.mxu0 %v930
  %1004 = vmatpush.msra.mxu0 %v927
  %1005 = vmatmul.f32.gmra.mxu0 %v938
  %v1006 = vpop.f32.mrf.mxu0
  %v1007 = vadd.f32 0.0, %v1006
  %1008 = vmatmul.f32.gmra.mxu0 %v941
  %v1009 = vpop.f32.mrf.mxu0
  %v1010 = vadd.f32 0.0, %v1009
  %1011 = vdwg.mxu0
  %v1012 = vadd.f32 %v899, %v961
  %v1013 = vadd.f32 %v900, %v984
  %v1014 = vadd.f32 %v901, %v1007
  %v1015 = vadd.f32 %v902, %v964
  %v1016 = vadd.f32 %v903, %v987
  %v1017 = vadd.f32 %v904, %v1010
  %s1018 = scalar_lea.vmem %s1, 144
  %v1019 = vld [vmem:[%s1018] sm:$0xff]
  %v1020 = vld [vmem:[%s1018 + $0x8] sm:$0x3]
  %1021 = vrot.lane.b32.xlu0 %v28, 104
  %v1022 = vpop.permute.xlu0 %1021
  %1023 = vrot.lane.b32.xlu0 %v29, 104
  %v1024 = vpop.permute.xlu0 %1023
  %1025 = vrot.lane.b32.xlu0 %v30, 104
  %v1026 = vpop.permute.xlu0 %1025
  %1027 = vrot.lane.b32.xlu0 %v37, 104
  %v1028 = vpop.permute.xlu0 %1027
  %1029 = vrot.lane.b32.xlu0 %v31, 104
  %v1030 = vpop.permute.xlu0 %1029
  %1031 = vrot.lane.b32.xlu0 %v32, 104
  %v1032 = vpop.permute.xlu0 %1031
  %1033 = vrot.lane.b32.xlu0 %v33, 104
  %v1034 = vpop.permute.xlu0 %1033
  %1035 = vrot.lane.b32.xlu0 %v38, 104
  %v1036 = vpop.permute.xlu0 %1035
  %vm1037 = vcmask 850944
  %v1038 = vsel %vm1037, %v1022, %v1024
  %v1039 = vsel %vm1037, %v1024, %v1026
  %v1040 = vsel %vm1037, %v1026, %v1028
  %v1041 = vsel %vm1037, %v1030, %v1032
  %v1042 = vsel %vm1037, %v1032, %v1034
  %v1043 = vsel %vm1037, %v1034, %v1036
  %v1051 = vsel %vm76, %v1019, 0
  %v1054 = vsel %vm76, %v1020, 0
  %1056 = vmatpush.msra.mxu0 0.0
  %1057 = vmatpush.msra.mxu0 0.0
  %1058 = vmatpush.msra.mxu0 0.0
  %1059 = vmatpush.msra.mxu0 0.0
  %1060 = vmatpush.msra.mxu0 0.0
  %1061 = vmatpush.msra.mxu0 0.0
  %1062 = vmatpush.msra.mxu0 0.0
  %1063 = vmatpush.msra.mxu0 0.0
  %1064 = vmatpush.msra.mxu0 0.0
  %1065 = vmatpush.msra.mxu0 0.0
  %1066 = vmatpush.msra.mxu0 0.0
  %1067 = vmatpush.msra.mxu0 0.0
  %1068 = vmatpush.msra.mxu0 0.0
  %1069 = vmatpush.msra.mxu0 0.0
  %1070 = vmatpush.msra.mxu0 %v1041
  %1071 = vmatpush.msra.mxu0 %v1038
  %1072 = vmatmul.f32.gmra.mxu0 %v1051
  %v1073 = vpop.f32.mrf.mxu0
  %v1074 = vadd.f32 0.0, %v1073
  %1075 = vmatmul.f32.gmra.mxu0 %v1054
  %v1076 = vpop.f32.mrf.mxu0
  %v1077 = vadd.f32 0.0, %v1076
  %1078 = vdwg.mxu0
  %1079 = vmatpush.msra.mxu0 0.0
  %1080 = vmatpush.msra.mxu0 0.0
  %1081 = vmatpush.msra.mxu0 0.0
  %1082 = vmatpush.msra.mxu0 0.0
  %1083 = vmatpush.msra.mxu0 0.0
  %1084 = vmatpush.msra.mxu0 0.0
  %1085 = vmatpush.msra.mxu0 0.0
  %1086 = vmatpush.msra.mxu0 0.0
  %1087 = vmatpush.msra.mxu0 0.0
  %1088 = vmatpush.msra.mxu0 0.0
  %1089 = vmatpush.msra.mxu0 0.0
  %1090 = vmatpush.msra.mxu0 0.0
  %1091 = vmatpush.msra.mxu0 0.0
  %1092 = vmatpush.msra.mxu0 0.0
  %1093 = vmatpush.msra.mxu0 %v1042
  %1094 = vmatpush.msra.mxu0 %v1039
  %1095 = vmatmul.f32.gmra.mxu0 %v1051
  %v1096 = vpop.f32.mrf.mxu0
  %v1097 = vadd.f32 0.0, %v1096
  %1098 = vmatmul.f32.gmra.mxu0 %v1054
  %v1099 = vpop.f32.mrf.mxu0
  %v1100 = vadd.f32 0.0, %v1099
  %1101 = vdwg.mxu0
  %1102 = vmatpush.msra.mxu0 0.0
  %1103 = vmatpush.msra.mxu0 0.0
  %1104 = vmatpush.msra.mxu0 0.0
  %1105 = vmatpush.msra.mxu0 0.0
  %1106 = vmatpush.msra.mxu0 0.0
  %1107 = vmatpush.msra.mxu0 0.0
  %1108 = vmatpush.msra.mxu0 0.0
  %1109 = vmatpush.msra.mxu0 0.0
  %1110 = vmatpush.msra.mxu0 0.0
  %1111 = vmatpush.msra.mxu0 0.0
  %1112 = vmatpush.msra.mxu0 0.0
  %1113 = vmatpush.msra.mxu0 0.0
  %1114 = vmatpush.msra.mxu0 0.0
  %1115 = vmatpush.msra.mxu0 0.0
  %1116 = vmatpush.msra.mxu0 %v1043
  %1117 = vmatpush.msra.mxu0 %v1040
  %1118 = vmatmul.f32.gmra.mxu0 %v1051
  %v1119 = vpop.f32.mrf.mxu0
  %v1120 = vadd.f32 0.0, %v1119
  %1121 = vmatmul.f32.gmra.mxu0 %v1054
  %v1122 = vpop.f32.mrf.mxu0
  %v1123 = vadd.f32 0.0, %v1122
  %1124 = vdwg.mxu0
  %v1125 = vadd.f32 %v1012, %v1074
  %v1126 = vadd.f32 %v1013, %v1097
  %v1127 = vadd.f32 %v1014, %v1120
  %v1128 = vadd.f32 %v1015, %v1077
  %v1129 = vadd.f32 %v1016, %v1100
  %v1130 = vadd.f32 %v1017, %v1123
  %s1131 = scalar_lea.vmem %s1, 160
  %v1132 = vld [vmem:[%s1131] sm:$0xff]
  %v1133 = vld [vmem:[%s1131 + $0x8] sm:$0x3]
  %1134 = vrot.lane.b32.xlu0 %v28, 103
  %v1135 = vpop.permute.xlu0 %1134
  %1136 = vrot.lane.b32.xlu0 %v29, 103
  %v1137 = vpop.permute.xlu0 %1136
  %1138 = vrot.lane.b32.xlu0 %v30, 103
  %v1139 = vpop.permute.xlu0 %1138
  %1140 = vrot.lane.b32.xlu0 %v37, 103
  %v1141 = vpop.permute.xlu0 %1140
  %1142 = vrot.lane.b32.xlu0 %v31, 103
  %v1143 = vpop.permute.xlu0 %1142
  %1144 = vrot.lane.b32.xlu0 %v32, 103
  %v1145 = vpop.permute.xlu0 %1144
  %1146 = vrot.lane.b32.xlu0 %v33, 103
  %v1147 = vpop.permute.xlu0 %1146
  %1148 = vrot.lane.b32.xlu0 %v38, 103
  %v1149 = vpop.permute.xlu0 %1148
  %vm1150 = vcmask 842752
  %v1151 = vsel %vm1150, %v1135, %v1137
  %v1152 = vsel %vm1150, %v1137, %v1139
  %v1153 = vsel %vm1150, %v1139, %v1141
  %v1154 = vsel %vm1150, %v1143, %v1145
  %v1155 = vsel %vm1150, %v1145, %v1147
  %v1156 = vsel %vm1150, %v1147, %v1149
  %v1164 = vsel %vm76, %v1132, 0
  %v1167 = vsel %vm76, %v1133, 0
  %1169 = vmatpush.msra.mxu0 0.0
  %1170 = vmatpush.msra.mxu0 0.0
  %1171 = vmatpush.msra.mxu0 0.0
  %1172 = vmatpush.msra.mxu0 0.0
  %1173 = vmatpush.msra.mxu0 0.0
  %1174 = vmatpush.msra.mxu0 0.0
  %1175 = vmatpush.msra.mxu0 0.0
  %1176 = vmatpush.msra.mxu0 0.0
  %1177 = vmatpush.msra.mxu0 0.0
  %1178 = vmatpush.msra.mxu0 0.0
  %1179 = vmatpush.msra.mxu0 0.0
  %1180 = vmatpush.msra.mxu0 0.0
  %1181 = vmatpush.msra.mxu0 0.0
  %1182 = vmatpush.msra.mxu0 0.0
  %1183 = vmatpush.msra.mxu0 %v1154
  %1184 = vmatpush.msra.mxu0 %v1151
  %1185 = vmatmul.f32.gmra.mxu0 %v1164
  %v1186 = vpop.f32.mrf.mxu0
  %v1187 = vadd.f32 0.0, %v1186
  %1188 = vmatmul.f32.gmra.mxu0 %v1167
  %v1189 = vpop.f32.mrf.mxu0
  %v1190 = vadd.f32 0.0, %v1189
  %1191 = vdwg.mxu0
  %1192 = vmatpush.msra.mxu0 0.0
  %1193 = vmatpush.msra.mxu0 0.0
  %1194 = vmatpush.msra.mxu0 0.0
  %1195 = vmatpush.msra.mxu0 0.0
  %1196 = vmatpush.msra.mxu0 0.0
  %1197 = vmatpush.msra.mxu0 0.0
  %1198 = vmatpush.msra.mxu0 0.0
  %1199 = vmatpush.msra.mxu0 0.0
  %1200 = vmatpush.msra.mxu0 0.0
  %1201 = vmatpush.msra.mxu0 0.0
  %1202 = vmatpush.msra.mxu0 0.0
  %1203 = vmatpush.msra.mxu0 0.0
  %1204 = vmatpush.msra.mxu0 0.0
  %1205 = vmatpush.msra.mxu0 0.0
  %1206 = vmatpush.msra.mxu0 %v1155
  %1207 = vmatpush.msra.mxu0 %v1152
  %1208 = vmatmul.f32.gmra.mxu0 %v1164
  %v1209 = vpop.f32.mrf.mxu0
  %v1210 = vadd.f32 0.0, %v1209
  %1211 = vmatmul.f32.gmra.mxu0 %v1167
  %v1212 = vpop.f32.mrf.mxu0
  %v1213 = vadd.f32 0.0, %v1212
  %1214 = vdwg.mxu0
  %1215 = vmatpush.msra.mxu0 0.0
  %1216 = vmatpush.msra.mxu0 0.0
  %1217 = vmatpush.msra.mxu0 0.0
  %1218 = vmatpush.msra.mxu0 0.0
  %1219 = vmatpush.msra.mxu0 0.0
  %1220 = vmatpush.msra.mxu0 0.0
  %1221 = vmatpush.msra.mxu0 0.0
  %1222 = vmatpush.msra.mxu0 0.0
  %1223 = vmatpush.msra.mxu0 0.0
  %1224 = vmatpush.msra.mxu0 0.0
  %1225 = vmatpush.msra.mxu0 0.0
  %1226 = vmatpush.msra.mxu0 0.0
  %1227 = vmatpush.msra.mxu0 0.0
  %1228 = vmatpush.msra.mxu0 0.0
  %1229 = vmatpush.msra.mxu0 %v1156
  %1230 = vmatpush.msra.mxu0 %v1153
  %1231 = vmatmul.f32.gmra.mxu0 %v1164
  %v1232 = vpop.f32.mrf.mxu0
  %v1233 = vadd.f32 0.0, %v1232
  %1234 = vmatmul.f32.gmra.mxu0 %v1167
  %v1235 = vpop.f32.mrf.mxu0
  %v1236 = vadd.f32 0.0, %v1235
  %1237 = vdwg.mxu0
  %v1238 = vadd.f32 %v1125, %v1187
  %v1239 = vadd.f32 %v1126, %v1210
  %v1240 = vadd.f32 %v1127, %v1233
  %v1241 = vadd.f32 %v1128, %v1190
  %v1242 = vadd.f32 %v1129, %v1213
  %v1243 = vadd.f32 %v1130, %v1236
  %s1244 = scalar_lea.vmem %s1, 176
  %v1245 = vld [vmem:[%s1244] sm:$0xff]
  %v1246 = vld [vmem:[%s1244 + $0x8] sm:$0x3]
  %1247 = vrot.lane.b32.xlu0 %v28, 102
  %v1248 = vpop.permute.xlu0 %1247
  %1249 = vrot.lane.b32.xlu0 %v29, 102
  %v1250 = vpop.permute.xlu0 %1249
  %1251 = vrot.lane.b32.xlu0 %v30, 102
  %v1252 = vpop.permute.xlu0 %1251
  %1253 = vrot.lane.b32.xlu0 %v37, 102
  %v1254 = vpop.permute.xlu0 %1253
  %1255 = vrot.lane.b32.xlu0 %v31, 102
  %v1256 = vpop.permute.xlu0 %1255
  %1257 = vrot.lane.b32.xlu0 %v32, 102
  %v1258 = vpop.permute.xlu0 %1257
  %1259 = vrot.lane.b32.xlu0 %v33, 102
  %v1260 = vpop.permute.xlu0 %1259
  %1261 = vrot.lane.b32.xlu0 %v38, 102
  %v1262 = vpop.permute.xlu0 %1261
  %vm1263 = vcmask 834560
  %v1264 = vsel %vm1263, %v1248, %v1250
  %v1265 = vsel %vm1263, %v1250, %v1252
  %v1266 = vsel %vm1263, %v1252, %v1254
  %v1267 = vsel %vm1263, %v1256, %v1258
  %v1268 = vsel %vm1263, %v1258, %v1260
  %v1269 = vsel %vm1263, %v1260, %v1262
  %v1277 = vsel %vm76, %v1245, 0
  %v1280 = vsel %vm76, %v1246, 0
  %1282 = vmatpush.msra.mxu0 0.0
  %1283 = vmatpush.msra.mxu0 0.0
  %1284 = vmatpush.msra.mxu0 0.0
  %1285 = vmatpush.msra.mxu0 0.0
  %1286 = vmatpush.msra.mxu0 0.0
  %1287 = vmatpush.msra.mxu0 0.0
  %1288 = vmatpush.msra.mxu0 0.0
  %1289 = vmatpush.msra.mxu0 0.0
  %1290 = vmatpush.msra.mxu0 0.0
  %1291 = vmatpush.msra.mxu0 0.0
  %1292 = vmatpush.msra.mxu0 0.0
  %1293 = vmatpush.msra.mxu0 0.0
  %1294 = vmatpush.msra.mxu0 0.0
  %1295 = vmatpush.msra.mxu0 0.0
  %1296 = vmatpush.msra.mxu0 %v1267
  %1297 = vmatpush.msra.mxu0 %v1264
  %1298 = vmatmul.f32.gmra.mxu0 %v1277
  %v1299 = vpop.f32.mrf.mxu0
  %v1300 = vadd.f32 0.0, %v1299
  %1301 = vmatmul.f32.gmra.mxu0 %v1280
  %v1302 = vpop.f32.mrf.mxu0
  %v1303 = vadd.f32 0.0, %v1302
  %1304 = vdwg.mxu0
  %1305 = vmatpush.msra.mxu0 0.0
  %1306 = vmatpush.msra.mxu0 0.0
  %1307 = vmatpush.msra.mxu0 0.0
  %1308 = vmatpush.msra.mxu0 0.0
  %1309 = vmatpush.msra.mxu0 0.0
  %1310 = vmatpush.msra.mxu0 0.0
  %1311 = vmatpush.msra.mxu0 0.0
  %1312 = vmatpush.msra.mxu0 0.0
  %1313 = vmatpush.msra.mxu0 0.0
  %1314 = vmatpush.msra.mxu0 0.0
  %1315 = vmatpush.msra.mxu0 0.0
  %1316 = vmatpush.msra.mxu0 0.0
  %1317 = vmatpush.msra.mxu0 0.0
  %1318 = vmatpush.msra.mxu0 0.0
  %1319 = vmatpush.msra.mxu0 %v1268
  %1320 = vmatpush.msra.mxu0 %v1265
  %1321 = vmatmul.f32.gmra.mxu0 %v1277
  %v1322 = vpop.f32.mrf.mxu0
  %v1323 = vadd.f32 0.0, %v1322
  %1324 = vmatmul.f32.gmra.mxu0 %v1280
  %v1325 = vpop.f32.mrf.mxu0
  %v1326 = vadd.f32 0.0, %v1325
  %1327 = vdwg.mxu0
  %1328 = vmatpush.msra.mxu0 0.0
  %1329 = vmatpush.msra.mxu0 0.0
  %1330 = vmatpush.msra.mxu0 0.0
  %1331 = vmatpush.msra.mxu0 0.0
  %1332 = vmatpush.msra.mxu0 0.0
  %1333 = vmatpush.msra.mxu0 0.0
  %1334 = vmatpush.msra.mxu0 0.0
  %1335 = vmatpush.msra.mxu0 0.0
  %1336 = vmatpush.msra.mxu0 0.0
  %1337 = vmatpush.msra.mxu0 0.0
  %1338 = vmatpush.msra.mxu0 0.0
  %1339 = vmatpush.msra.mxu0 0.0
  %1340 = vmatpush.msra.mxu0 0.0
  %1341 = vmatpush.msra.mxu0 0.0
  %1342 = vmatpush.msra.mxu0 %v1269
  %1343 = vmatpush.msra.mxu0 %v1266
  %1344 = vmatmul.f32.gmra.mxu0 %v1277
  %v1345 = vpop.f32.mrf.mxu0
  %v1346 = vadd.f32 0.0, %v1345
  %1347 = vmatmul.f32.gmra.mxu0 %v1280
  %v1348 = vpop.f32.mrf.mxu0
  %v1349 = vadd.f32 0.0, %v1348
  %1350 = vdwg.mxu0
  %v1351 = vadd.f32 %v1238, %v1300
  %v1352 = vadd.f32 %v1239, %v1323
  %v1353 = vadd.f32 %v1240, %v1346
  %v1354 = vadd.f32 %v1241, %v1303
  %v1355 = vadd.f32 %v1242, %v1326
  %v1356 = vadd.f32 %v1243, %v1349
  %s1357 = scalar_lea.vmem %s1, 192
  %v1358 = vld [vmem:[%s1357] sm:$0xff]
  %v1359 = vld [vmem:[%s1357 + $0x8] sm:$0x3]
  %1360 = vrot.lane.b32.xlu0 %v28, 101
  %v1361 = vpop.permute.xlu0 %1360
  %1362 = vrot.lane.b32.xlu0 %v29, 101
  %v1363 = vpop.permute.xlu0 %1362
  %1364 = vrot.lane.b32.xlu0 %v30, 101
  %v1365 = vpop.permute.xlu0 %1364
  %1366 = vrot.lane.b32.xlu0 %v37, 101
  %v1367 = vpop.permute.xlu0 %1366
  %1368 = vrot.lane.b32.xlu0 %v31, 101
  %v1369 = vpop.permute.xlu0 %1368
  %1370 = vrot.lane.b32.xlu0 %v32, 101
  %v1371 = vpop.permute.xlu0 %1370
  %1372 = vrot.lane.b32.xlu0 %v33, 101
  %v1373 = vpop.permute.xlu0 %1372
  %1374 = vrot.lane.b32.xlu0 %v38, 101
  %v1375 = vpop.permute.xlu0 %1374
  %vm1376 = vcmask 826368
  %v1377 = vsel %vm1376, %v1361, %v1363
  %v1378 = vsel %vm1376, %v1363, %v1365
  %v1379 = vsel %vm1376, %v1365, %v1367
  %v1380 = vsel %vm1376, %v1369, %v1371
  %v1381 = vsel %vm1376, %v1371, %v1373
  %v1382 = vsel %vm1376, %v1373, %v1375
  %v1390 = vsel %vm76, %v1358, 0
  %v1393 = vsel %vm76, %v1359, 0
  %1395 = vmatpush.msra.mxu0 0.0
  %1396 = vmatpush.msra.mxu0 0.0
  %1397 = vmatpush.msra.mxu0 0.0
  %1398 = vmatpush.msra.mxu0 0.0
  %1399 = vmatpush.msra.mxu0 0.0
  %1400 = vmatpush.msra.mxu0 0.0
  %1401 = vmatpush.msra.mxu0 0.0
  %1402 = vmatpush.msra.mxu0 0.0
  %1403 = vmatpush.msra.mxu0 0.0
  %1404 = vmatpush.msra.mxu0 0.0
  %1405 = vmatpush.msra.mxu0 0.0
  %1406 = vmatpush.msra.mxu0 0.0
  %1407 = vmatpush.msra.mxu0 0.0
  %1408 = vmatpush.msra.mxu0 0.0
  %1409 = vmatpush.msra.mxu0 %v1380
  %1410 = vmatpush.msra.mxu0 %v1377
  %1411 = vmatmul.f32.gmra.mxu0 %v1390
  %v1412 = vpop.f32.mrf.mxu0
  %v1413 = vadd.f32 0.0, %v1412
  %1414 = vmatmul.f32.gmra.mxu0 %v1393
  %v1415 = vpop.f32.mrf.mxu0
  %v1416 = vadd.f32 0.0, %v1415
  %1417 = vdwg.mxu0
  %1418 = vmatpush.msra.mxu0 0.0
  %1419 = vmatpush.msra.mxu0 0.0
  %1420 = vmatpush.msra.mxu0 0.0
  %1421 = vmatpush.msra.mxu0 0.0
  %1422 = vmatpush.msra.mxu0 0.0
  %1423 = vmatpush.msra.mxu0 0.0
  %1424 = vmatpush.msra.mxu0 0.0
  %1425 = vmatpush.msra.mxu0 0.0
  %1426 = vmatpush.msra.mxu0 0.0
  %1427 = vmatpush.msra.mxu0 0.0
  %1428 = vmatpush.msra.mxu0 0.0
  %1429 = vmatpush.msra.mxu0 0.0
  %1430 = vmatpush.msra.mxu0 0.0
  %1431 = vmatpush.msra.mxu0 0.0
  %1432 = vmatpush.msra.mxu0 %v1381
  %1433 = vmatpush.msra.mxu0 %v1378
  %1434 = vmatmul.f32.gmra.mxu0 %v1390
  %v1435 = vpop.f32.mrf.mxu0
  %v1436 = vadd.f32 0.0, %v1435
  %1437 = vmatmul.f32.gmra.mxu0 %v1393
  %v1438 = vpop.f32.mrf.mxu0
  %v1439 = vadd.f32 0.0, %v1438
  %1440 = vdwg.mxu0
  %1441 = vmatpush.msra.mxu0 0.0
  %1442 = vmatpush.msra.mxu0 0.0
  %1443 = vmatpush.msra.mxu0 0.0
  %1444 = vmatpush.msra.mxu0 0.0
  %1445 = vmatpush.msra.mxu0 0.0
  %1446 = vmatpush.msra.mxu0 0.0
  %1447 = vmatpush.msra.mxu0 0.0
  %1448 = vmatpush.msra.mxu0 0.0
  %1449 = vmatpush.msra.mxu0 0.0
  %1450 = vmatpush.msra.mxu0 0.0
  %1451 = vmatpush.msra.mxu0 0.0
  %1452 = vmatpush.msra.mxu0 0.0
  %1453 = vmatpush.msra.mxu0 0.0
  %1454 = vmatpush.msra.mxu0 0.0
  %1455 = vmatpush.msra.mxu0 %v1382
  %1456 = vmatpush.msra.mxu0 %v1379
  %1457 = vmatmul.f32.gmra.mxu0 %v1390
  %v1458 = vpop.f32.mrf.mxu0
  %v1459 = vadd.f32 0.0, %v1458
  %1460 = vmatmul.f32.gmra.mxu0 %v1393
  %v1461 = vpop.f32.mrf.mxu0
  %v1462 = vadd.f32 0.0, %v1461
  %1463 = vdwg.mxu0
  %v1464 = vadd.f32 %v1351, %v1413
  %v1465 = vadd.f32 %v1352, %v1436
  %v1466 = vadd.f32 %v1353, %v1459
  %v1467 = vadd.f32 %v1354, %v1416
  %v1468 = vadd.f32 %v1355, %v1439
  %v1469 = vadd.f32 %v1356, %v1462
  %s1470 = scalar_lea.vmem %s1, 208
  %v1471 = vld [vmem:[%s1470] sm:$0xff]
  %v1472 = vld [vmem:[%s1470 + $0x8] sm:$0x3]
  %1473 = vrot.lane.b32.xlu0 %v28, 100
  %v1474 = vpop.permute.xlu0 %1473
  %1475 = vrot.lane.b32.xlu0 %v29, 100
  %v1476 = vpop.permute.xlu0 %1475
  %1477 = vrot.lane.b32.xlu0 %v30, 100
  %v1478 = vpop.permute.xlu0 %1477
  %1479 = vrot.lane.b32.xlu0 %v37, 100
  %v1480 = vpop.permute.xlu0 %1479
  %1481 = vrot.lane.b32.xlu0 %v31, 100
  %v1482 = vpop.permute.xlu0 %1481
  %1483 = vrot.lane.b32.xlu0 %v32, 100
  %v1484 = vpop.permute.xlu0 %1483
  %1485 = vrot.lane.b32.xlu0 %v33, 100
  %v1486 = vpop.permute.xlu0 %1485
  %1487 = vrot.lane.b32.xlu0 %v38, 100
  %v1488 = vpop.permute.xlu0 %1487
  %vm1489 = vcmask 818176
  %v1490 = vsel %vm1489, %v1474, %v1476
  %v1491 = vsel %vm1489, %v1476, %v1478
  %v1492 = vsel %vm1489, %v1478, %v1480
  %v1493 = vsel %vm1489, %v1482, %v1484
  %v1494 = vsel %vm1489, %v1484, %v1486
  %v1495 = vsel %vm1489, %v1486, %v1488
  %v1503 = vsel %vm76, %v1471, 0
  %v1506 = vsel %vm76, %v1472, 0
  %1508 = vmatpush.msra.mxu0 0.0
  %1509 = vmatpush.msra.mxu0 0.0
  %1510 = vmatpush.msra.mxu0 0.0
  %1511 = vmatpush.msra.mxu0 0.0
  %1512 = vmatpush.msra.mxu0 0.0
  %1513 = vmatpush.msra.mxu0 0.0
  %1514 = vmatpush.msra.mxu0 0.0
  %1515 = vmatpush.msra.mxu0 0.0
  %1516 = vmatpush.msra.mxu0 0.0
  %1517 = vmatpush.msra.mxu0 0.0
  %1518 = vmatpush.msra.mxu0 0.0
  %1519 = vmatpush.msra.mxu0 0.0
  %1520 = vmatpush.msra.mxu0 0.0
  %1521 = vmatpush.msra.mxu0 0.0
  %1522 = vmatpush.msra.mxu0 %v1493
  %1523 = vmatpush.msra.mxu0 %v1490
  %1524 = vmatmul.f32.gmra.mxu0 %v1503
  %v1525 = vpop.f32.mrf.mxu0
  %v1526 = vadd.f32 0.0, %v1525
  %1527 = vmatmul.f32.gmra.mxu0 %v1506
  %v1528 = vpop.f32.mrf.mxu0
  %v1529 = vadd.f32 0.0, %v1528
  %1530 = vdwg.mxu0
  %1531 = vmatpush.msra.mxu0 0.0
  %1532 = vmatpush.msra.mxu0 0.0
  %1533 = vmatpush.msra.mxu0 0.0
  %1534 = vmatpush.msra.mxu0 0.0
  %1535 = vmatpush.msra.mxu0 0.0
  %1536 = vmatpush.msra.mxu0 0.0
  %1537 = vmatpush.msra.mxu0 0.0
  %1538 = vmatpush.msra.mxu0 0.0
  %1539 = vmatpush.msra.mxu0 0.0
  %1540 = vmatpush.msra.mxu0 0.0
  %1541 = vmatpush.msra.mxu0 0.0
  %1542 = vmatpush.msra.mxu0 0.0
  %1543 = vmatpush.msra.mxu0 0.0
  %1544 = vmatpush.msra.mxu0 0.0
  %1545 = vmatpush.msra.mxu0 %v1494
  %1546 = vmatpush.msra.mxu0 %v1491
  %1547 = vmatmul.f32.gmra.mxu0 %v1503
  %v1548 = vpop.f32.mrf.mxu0
  %v1549 = vadd.f32 0.0, %v1548
  %1550 = vmatmul.f32.gmra.mxu0 %v1506
  %v1551 = vpop.f32.mrf.mxu0
  %v1552 = vadd.f32 0.0, %v1551
  %1553 = vdwg.mxu0
  %1554 = vmatpush.msra.mxu0 0.0
  %1555 = vmatpush.msra.mxu0 0.0
  %1556 = vmatpush.msra.mxu0 0.0
  %1557 = vmatpush.msra.mxu0 0.0
  %1558 = vmatpush.msra.mxu0 0.0
  %1559 = vmatpush.msra.mxu0 0.0
  %1560 = vmatpush.msra.mxu0 0.0
  %1561 = vmatpush.msra.mxu0 0.0
  %1562 = vmatpush.msra.mxu0 0.0
  %1563 = vmatpush.msra.mxu0 0.0
  %1564 = vmatpush.msra.mxu0 0.0
  %1565 = vmatpush.msra.mxu0 0.0
  %1566 = vmatpush.msra.mxu0 0.0
  %1567 = vmatpush.msra.mxu0 0.0
  %1568 = vmatpush.msra.mxu0 %v1495
  %1569 = vmatpush.msra.mxu0 %v1492
  %1570 = vmatmul.f32.gmra.mxu0 %v1503
  %v1571 = vpop.f32.mrf.mxu0
  %v1572 = vadd.f32 0.0, %v1571
  %1573 = vmatmul.f32.gmra.mxu0 %v1506
  %v1574 = vpop.f32.mrf.mxu0
  %v1575 = vadd.f32 0.0, %v1574
  %1576 = vdwg.mxu0
  %v1577 = vadd.f32 %v1464, %v1526
  %v1578 = vadd.f32 %v1465, %v1549
  %v1579 = vadd.f32 %v1466, %v1572
  %v1580 = vadd.f32 %v1467, %v1529
  %v1581 = vadd.f32 %v1468, %v1552
  %v1582 = vadd.f32 %v1469, %v1575
  %s1583 = scalar_lea.vmem %s1, 224
  %v1584 = vld [vmem:[%s1583] sm:$0xff]
  %v1585 = vld [vmem:[%s1583 + $0x8] sm:$0x3]
  %1586 = vrot.lane.b32.xlu0 %v28, 84
  %v1587 = vpop.permute.xlu0 %1586
  %1588 = vrot.lane.b32.xlu0 %v29, 84
  %v1589 = vpop.permute.xlu0 %1588
  %1590 = vrot.lane.b32.xlu0 %v30, 84
  %v1591 = vpop.permute.xlu0 %1590
  %1592 = vrot.lane.b32.xlu0 %v37, 84
  %v1593 = vpop.permute.xlu0 %1592
  %1594 = vrot.lane.b32.xlu0 %v31, 84
  %v1595 = vpop.permute.xlu0 %1594
  %1596 = vrot.lane.b32.xlu0 %v32, 84
  %v1597 = vpop.permute.xlu0 %1596
  %1598 = vrot.lane.b32.xlu0 %v33, 84
  %v1599 = vpop.permute.xlu0 %1598
  %1600 = vrot.lane.b32.xlu0 %v38, 84
  %v1601 = vpop.permute.xlu0 %1600
  %vm1602 = vcmask 687104
  %v1603 = vsel %vm1602, %v1587, %v1589
  %v1604 = vsel %vm1602, %v1589, %v1591
  %v1605 = vsel %vm1602, %v1591, %v1593
  %v1606 = vsel %vm1602, %v1595, %v1597
  %v1607 = vsel %vm1602, %v1597, %v1599
  %v1608 = vsel %vm1602, %v1599, %v1601
  %v1616 = vsel %vm76, %v1584, 0
  %v1619 = vsel %vm76, %v1585, 0
  %1621 = vmatpush.msra.mxu0 0.0
  %1622 = vmatpush.msra.mxu0 0.0
  %1623 = vmatpush.msra.mxu0 0.0
  %1624 = vmatpush.msra.mxu0 0.0
  %1625 = vmatpush.msra.mxu0 0.0
  %1626 = vmatpush.msra.mxu0 0.0
  %1627 = vmatpush.msra.mxu0 0.0
  %1628 = vmatpush.msra.mxu0 0.0
  %1629 = vmatpush.msra.mxu0 0.0
  %1630 = vmatpush.msra.mxu0 0.0
  %1631 = vmatpush.msra.mxu0 0.0
  %1632 = vmatpush.msra.mxu0 0.0
  %1633 = vmatpush.msra.mxu0 0.0
  %1634 = vmatpush.msra.mxu0 0.0
  %1635 = vmatpush.msra.mxu0 %v1606
  %1636 = vmatpush.msra.mxu0 %v1603
  %1637 = vmatmul.f32.gmra.mxu0 %v1616
  %v1638 = vpop.f32.mrf.mxu0
  %v1639 = vadd.f32 0.0, %v1638
  %1640 = vmatmul.f32.gmra.mxu0 %v1619
  %v1641 = vpop.f32.mrf.mxu0
  %v1642 = vadd.f32 0.0, %v1641
  %1643 = vdwg.mxu0
  %1644 = vmatpush.msra.mxu0 0.0
  %1645 = vmatpush.msra.mxu0 0.0
  %1646 = vmatpush.msra.mxu0 0.0
  %1647 = vmatpush.msra.mxu0 0.0
  %1648 = vmatpush.msra.mxu0 0.0
  %1649 = vmatpush.msra.mxu0 0.0
  %1650 = vmatpush.msra.mxu0 0.0
  %1651 = vmatpush.msra.mxu0 0.0
  %1652 = vmatpush.msra.mxu0 0.0
  %1653 = vmatpush.msra.mxu0 0.0
  %1654 = vmatpush.msra.mxu0 0.0
  %1655 = vmatpush.msra.mxu0 0.0
  %1656 = vmatpush.msra.mxu0 0.0
  %1657 = vmatpush.msra.mxu0 0.0
  %1658 = vmatpush.msra.mxu0 %v1607
  %1659 = vmatpush.msra.mxu0 %v1604
  %1660 = vmatmul.f32.gmra.mxu0 %v1616
  %v1661 = vpop.f32.mrf.mxu0
  %v1662 = vadd.f32 0.0, %v1661
  %1663 = vmatmul.f32.gmra.mxu0 %v1619
  %v1664 = vpop.f32.mrf.mxu0
  %v1665 = vadd.f32 0.0, %v1664
  %1666 = vdwg.mxu0
  %1667 = vmatpush.msra.mxu0 0.0
  %1668 = vmatpush.msra.mxu0 0.0
  %1669 = vmatpush.msra.mxu0 0.0
  %1670 = vmatpush.msra.mxu0 0.0
  %1671 = vmatpush.msra.mxu0 0.0
  %1672 = vmatpush.msra.mxu0 0.0
  %1673 = vmatpush.msra.mxu0 0.0
  %1674 = vmatpush.msra.mxu0 0.0
  %1675 = vmatpush.msra.mxu0 0.0
  %1676 = vmatpush.msra.mxu0 0.0
  %1677 = vmatpush.msra.mxu0 0.0
  %1678 = vmatpush.msra.mxu0 0.0
  %1679 = vmatpush.msra.mxu0 0.0
  %1680 = vmatpush.msra.mxu0 0.0
  %1681 = vmatpush.msra.mxu0 %v1608
  %1682 = vmatpush.msra.mxu0 %v1605
  %1683 = vmatmul.f32.gmra.mxu0 %v1616
  %v1684 = vpop.f32.mrf.mxu0
  %v1685 = vadd.f32 0.0, %v1684
  %1686 = vmatmul.f32.gmra.mxu0 %v1619
  %v1687 = vpop.f32.mrf.mxu0
  %v1688 = vadd.f32 0.0, %v1687
  %1689 = vdwg.mxu0
  %v1690 = vadd.f32 %v1577, %v1639
  %v1691 = vadd.f32 %v1578, %v1662
  %v1692 = vadd.f32 %v1579, %v1685
  %v1693 = vadd.f32 %v1580, %v1642
  %v1694 = vadd.f32 %v1581, %v1665
  %v1695 = vadd.f32 %v1582, %v1688
  %s1696 = scalar_lea.vmem %s1, 240
  %v1697 = vld [vmem:[%s1696] sm:$0xff]
  %v1698 = vld [vmem:[%s1696 + $0x8] sm:$0x3]
  %1699 = vrot.lane.b32.xlu0 %v28, 83
  %v1700 = vpop.permute.xlu0 %1699
  %1701 = vrot.lane.b32.xlu0 %v29, 83
  %v1702 = vpop.permute.xlu0 %1701
  %1703 = vrot.lane.b32.xlu0 %v30, 83
  %v1704 = vpop.permute.xlu0 %1703
  %1705 = vrot.lane.b32.xlu0 %v37, 83
  %v1706 = vpop.permute.xlu0 %1705
  %1707 = vrot.lane.b32.xlu0 %v31, 83
  %v1708 = vpop.permute.xlu0 %1707
  %1709 = vrot.lane.b32.xlu0 %v32, 83
  %v1710 = vpop.permute.xlu0 %1709
  %1711 = vrot.lane.b32.xlu0 %v33, 83
  %v1712 = vpop.permute.xlu0 %1711
  %1713 = vrot.lane.b32.xlu0 %v38, 83
  %v1714 = vpop.permute.xlu0 %1713
  %vm1715 = vcmask 678912
  %v1716 = vsel %vm1715, %v1700, %v1702
  %v1717 = vsel %vm1715, %v1702, %v1704
  %v1718 = vsel %vm1715, %v1704, %v1706
  %v1719 = vsel %vm1715, %v1708, %v1710
  %v1720 = vsel %vm1715, %v1710, %v1712
  %v1721 = vsel %vm1715, %v1712, %v1714
  %v1729 = vsel %vm76, %v1697, 0
  %v1732 = vsel %vm76, %v1698, 0
  %1734 = vmatpush.msra.mxu0 0.0
  %1735 = vmatpush.msra.mxu0 0.0
  %1736 = vmatpush.msra.mxu0 0.0
  %1737 = vmatpush.msra.mxu0 0.0
  %1738 = vmatpush.msra.mxu0 0.0
  %1739 = vmatpush.msra.mxu0 0.0
  %1740 = vmatpush.msra.mxu0 0.0
  %1741 = vmatpush.msra.mxu0 0.0
  %1742 = vmatpush.msra.mxu0 0.0
  %1743 = vmatpush.msra.mxu0 0.0
  %1744 = vmatpush.msra.mxu0 0.0
  %1745 = vmatpush.msra.mxu0 0.0
  %1746 = vmatpush.msra.mxu0 0.0
  %1747 = vmatpush.msra.mxu0 0.0
  %1748 = vmatpush.msra.mxu0 %v1719
  %1749 = vmatpush.msra.mxu0 %v1716
  %1750 = vmatmul.f32.gmra.mxu0 %v1729
  %v1751 = vpop.f32.mrf.mxu0
  %v1752 = vadd.f32 0.0, %v1751
  %1753 = vmatmul.f32.gmra.mxu0 %v1732
  %v1754 = vpop.f32.mrf.mxu0
  %v1755 = vadd.f32 0.0, %v1754
  %1756 = vdwg.mxu0
  %1757 = vmatpush.msra.mxu0 0.0
  %1758 = vmatpush.msra.mxu0 0.0
  %1759 = vmatpush.msra.mxu0 0.0
  %1760 = vmatpush.msra.mxu0 0.0
  %1761 = vmatpush.msra.mxu0 0.0
  %1762 = vmatpush.msra.mxu0 0.0
  %1763 = vmatpush.msra.mxu0 0.0
  %1764 = vmatpush.msra.mxu0 0.0
  %1765 = vmatpush.msra.mxu0 0.0
  %1766 = vmatpush.msra.mxu0 0.0
  %1767 = vmatpush.msra.mxu0 0.0
  %1768 = vmatpush.msra.mxu0 0.0
  %1769 = vmatpush.msra.mxu0 0.0
  %1770 = vmatpush.msra.mxu0 0.0
  %1771 = vmatpush.msra.mxu0 %v1720
  %1772 = vmatpush.msra.mxu0 %v1717
  %1773 = vmatmul.f32.gmra.mxu0 %v1729
  %v1774 = vpop.f32.mrf.mxu0
  %v1775 = vadd.f32 0.0, %v1774
  %1776 = vmatmul.f32.gmra.mxu0 %v1732
  %v1777 = vpop.f32.mrf.mxu0
  %v1778 = vadd.f32 0.0, %v1777
  %1779 = vdwg.mxu0
  %1780 = vmatpush.msra.mxu0 0.0
  %1781 = vmatpush.msra.mxu0 0.0
  %1782 = vmatpush.msra.mxu0 0.0
  %1783 = vmatpush.msra.mxu0 0.0
  %1784 = vmatpush.msra.mxu0 0.0
  %1785 = vmatpush.msra.mxu0 0.0
  %1786 = vmatpush.msra.mxu0 0.0
  %1787 = vmatpush.msra.mxu0 0.0
  %1788 = vmatpush.msra.mxu0 0.0
  %1789 = vmatpush.msra.mxu0 0.0
  %1790 = vmatpush.msra.mxu0 0.0
  %1791 = vmatpush.msra.mxu0 0.0
  %1792 = vmatpush.msra.mxu0 0.0
  %1793 = vmatpush.msra.mxu0 0.0
  %1794 = vmatpush.msra.mxu0 %v1721
  %1795 = vmatpush.msra.mxu0 %v1718
  %1796 = vmatmul.f32.gmra.mxu0 %v1729
  %v1797 = vpop.f32.mrf.mxu0
  %v1798 = vadd.f32 0.0, %v1797
  %1799 = vmatmul.f32.gmra.mxu0 %v1732
  %v1800 = vpop.f32.mrf.mxu0
  %v1801 = vadd.f32 0.0, %v1800
  %1802 = vdwg.mxu0
  %v1803 = vadd.f32 %v1690, %v1752
  %v1804 = vadd.f32 %v1691, %v1775
  %v1805 = vadd.f32 %v1692, %v1798
  %v1806 = vadd.f32 %v1693, %v1755
  %v1807 = vadd.f32 %v1694, %v1778
  %v1808 = vadd.f32 %v1695, %v1801
  %s1809 = scalar_lea.vmem %s1, 256
  %v1810 = vld [vmem:[%s1809] sm:$0xff]
  %v1811 = vld [vmem:[%s1809 + $0x8] sm:$0x3]
  %1812 = vrot.lane.b32.xlu0 %v28, 82
  %v1813 = vpop.permute.xlu0 %1812
  %1814 = vrot.lane.b32.xlu0 %v29, 82
  %v1815 = vpop.permute.xlu0 %1814
  %1816 = vrot.lane.b32.xlu0 %v30, 82
  %v1817 = vpop.permute.xlu0 %1816
  %1818 = vrot.lane.b32.xlu0 %v37, 82
  %v1819 = vpop.permute.xlu0 %1818
  %1820 = vrot.lane.b32.xlu0 %v31, 82
  %v1821 = vpop.permute.xlu0 %1820
  %1822 = vrot.lane.b32.xlu0 %v32, 82
  %v1823 = vpop.permute.xlu0 %1822
  %1824 = vrot.lane.b32.xlu0 %v33, 82
  %v1825 = vpop.permute.xlu0 %1824
  %1826 = vrot.lane.b32.xlu0 %v38, 82
  %v1827 = vpop.permute.xlu0 %1826
  %vm1828 = vcmask 670720
  %v1829 = vsel %vm1828, %v1813, %v1815
  %v1830 = vsel %vm1828, %v1815, %v1817
  %v1831 = vsel %vm1828, %v1817, %v1819
  %v1832 = vsel %vm1828, %v1821, %v1823
  %v1833 = vsel %vm1828, %v1823, %v1825
  %v1834 = vsel %vm1828, %v1825, %v1827
  %v1842 = vsel %vm76, %v1810, 0
  %v1845 = vsel %vm76, %v1811, 0
  %1847 = vmatpush.msra.mxu0 0.0
  %1848 = vmatpush.msra.mxu0 0.0
  %1849 = vmatpush.msra.mxu0 0.0
  %1850 = vmatpush.msra.mxu0 0.0
  %1851 = vmatpush.msra.mxu0 0.0
  %1852 = vmatpush.msra.mxu0 0.0
  %1853 = vmatpush.msra.mxu0 0.0
  %1854 = vmatpush.msra.mxu0 0.0
  %1855 = vmatpush.msra.mxu0 0.0
  %1856 = vmatpush.msra.mxu0 0.0
  %1857 = vmatpush.msra.mxu0 0.0
  %1858 = vmatpush.msra.mxu0 0.0
  %1859 = vmatpush.msra.mxu0 0.0
  %1860 = vmatpush.msra.mxu0 0.0
  %1861 = vmatpush.msra.mxu0 %v1832
  %1862 = vmatpush.msra.mxu0 %v1829
  %1863 = vmatmul.f32.gmra.mxu0 %v1842
  %v1864 = vpop.f32.mrf.mxu0
  %v1865 = vadd.f32 0.0, %v1864
  %1866 = vmatmul.f32.gmra.mxu0 %v1845
  %v1867 = vpop.f32.mrf.mxu0
  %v1868 = vadd.f32 0.0, %v1867
  %1869 = vdwg.mxu0
  %1870 = vmatpush.msra.mxu0 0.0
  %1871 = vmatpush.msra.mxu0 0.0
  %1872 = vmatpush.msra.mxu0 0.0
  %1873 = vmatpush.msra.mxu0 0.0
  %1874 = vmatpush.msra.mxu0 0.0
  %1875 = vmatpush.msra.mxu0 0.0
  %1876 = vmatpush.msra.mxu0 0.0
  %1877 = vmatpush.msra.mxu0 0.0
  %1878 = vmatpush.msra.mxu0 0.0
  %1879 = vmatpush.msra.mxu0 0.0
  %1880 = vmatpush.msra.mxu0 0.0
  %1881 = vmatpush.msra.mxu0 0.0
  %1882 = vmatpush.msra.mxu0 0.0
  %1883 = vmatpush.msra.mxu0 0.0
  %1884 = vmatpush.msra.mxu0 %v1833
  %1885 = vmatpush.msra.mxu0 %v1830
  %1886 = vmatmul.f32.gmra.mxu0 %v1842
  %v1887 = vpop.f32.mrf.mxu0
  %v1888 = vadd.f32 0.0, %v1887
  %1889 = vmatmul.f32.gmra.mxu0 %v1845
  %v1890 = vpop.f32.mrf.mxu0
  %v1891 = vadd.f32 0.0, %v1890
  %1892 = vdwg.mxu0
  %1893 = vmatpush.msra.mxu0 0.0
  %1894 = vmatpush.msra.mxu0 0.0
  %1895 = vmatpush.msra.mxu0 0.0
  %1896 = vmatpush.msra.mxu0 0.0
  %1897 = vmatpush.msra.mxu0 0.0
  %1898 = vmatpush.msra.mxu0 0.0
  %1899 = vmatpush.msra.mxu0 0.0
  %1900 = vmatpush.msra.mxu0 0.0
  %1901 = vmatpush.msra.mxu0 0.0
  %1902 = vmatpush.msra.mxu0 0.0
  %1903 = vmatpush.msra.mxu0 0.0
  %1904 = vmatpush.msra.mxu0 0.0
  %1905 = vmatpush.msra.mxu0 0.0
  %1906 = vmatpush.msra.mxu0 0.0
  %1907 = vmatpush.msra.mxu0 %v1834
  %1908 = vmatpush.msra.mxu0 %v1831
  %1909 = vmatmul.f32.gmra.mxu0 %v1842
  %v1910 = vpop.f32.mrf.mxu0
  %v1911 = vadd.f32 0.0, %v1910
  %1912 = vmatmul.f32.gmra.mxu0 %v1845
  %v1913 = vpop.f32.mrf.mxu0
  %v1914 = vadd.f32 0.0, %v1913
  %1915 = vdwg.mxu0
  %v1916 = vadd.f32 %v1803, %v1865
  %v1917 = vadd.f32 %v1804, %v1888
  %v1918 = vadd.f32 %v1805, %v1911
  %v1919 = vadd.f32 %v1806, %v1868
  %v1920 = vadd.f32 %v1807, %v1891
  %v1921 = vadd.f32 %v1808, %v1914
  %s1922 = scalar_lea.vmem %s1, 272
  %v1923 = vld [vmem:[%s1922] sm:$0xff]
  %v1924 = vld [vmem:[%s1922 + $0x8] sm:$0x3]
  %1925 = vrot.lane.b32.xlu0 %v28, 81
  %v1926 = vpop.permute.xlu0 %1925
  %1927 = vrot.lane.b32.xlu0 %v29, 81
  %v1928 = vpop.permute.xlu0 %1927
  %1929 = vrot.lane.b32.xlu0 %v30, 81
  %v1930 = vpop.permute.xlu0 %1929
  %1931 = vrot.lane.b32.xlu0 %v37, 81
  %v1932 = vpop.permute.xlu0 %1931
  %1933 = vrot.lane.b32.xlu0 %v31, 81
  %v1934 = vpop.permute.xlu0 %1933
  %1935 = vrot.lane.b32.xlu0 %v32, 81
  %v1936 = vpop.permute.xlu0 %1935
  %1937 = vrot.lane.b32.xlu0 %v33, 81
  %v1938 = vpop.permute.xlu0 %1937
  %1939 = vrot.lane.b32.xlu0 %v38, 81
  %v1940 = vpop.permute.xlu0 %1939
  %vm1941 = vcmask 662528
  %v1942 = vsel %vm1941, %v1926, %v1928
  %v1943 = vsel %vm1941, %v1928, %v1930
  %v1944 = vsel %vm1941, %v1930, %v1932
  %v1945 = vsel %vm1941, %v1934, %v1936
  %v1946 = vsel %vm1941, %v1936, %v1938
  %v1947 = vsel %vm1941, %v1938, %v1940
  %v1955 = vsel %vm76, %v1923, 0
  %v1958 = vsel %vm76, %v1924, 0
  %1960 = vmatpush.msra.mxu0 0.0
  %1961 = vmatpush.msra.mxu0 0.0
  %1962 = vmatpush.msra.mxu0 0.0
  %1963 = vmatpush.msra.mxu0 0.0
  %1964 = vmatpush.msra.mxu0 0.0
  %1965 = vmatpush.msra.mxu0 0.0
  %1966 = vmatpush.msra.mxu0 0.0
  %1967 = vmatpush.msra.mxu0 0.0
  %1968 = vmatpush.msra.mxu0 0.0
  %1969 = vmatpush.msra.mxu0 0.0
  %1970 = vmatpush.msra.mxu0 0.0
  %1971 = vmatpush.msra.mxu0 0.0
  %1972 = vmatpush.msra.mxu0 0.0
  %1973 = vmatpush.msra.mxu0 0.0
  %1974 = vmatpush.msra.mxu0 %v1945
  %1975 = vmatpush.msra.mxu0 %v1942
  %1976 = vmatmul.f32.gmra.mxu0 %v1955
  %v1977 = vpop.f32.mrf.mxu0
  %v1978 = vadd.f32 0.0, %v1977
  %1979 = vmatmul.f32.gmra.mxu0 %v1958
  %v1980 = vpop.f32.mrf.mxu0
  %v1981 = vadd.f32 0.0, %v1980
  %1982 = vdwg.mxu0
  %1983 = vmatpush.msra.mxu0 0.0
  %1984 = vmatpush.msra.mxu0 0.0
  %1985 = vmatpush.msra.mxu0 0.0
  %1986 = vmatpush.msra.mxu0 0.0
  %1987 = vmatpush.msra.mxu0 0.0
  %1988 = vmatpush.msra.mxu0 0.0
  %1989 = vmatpush.msra.mxu0 0.0
  %1990 = vmatpush.msra.mxu0 0.0
  %1991 = vmatpush.msra.mxu0 0.0
  %1992 = vmatpush.msra.mxu0 0.0
  %1993 = vmatpush.msra.mxu0 0.0
  %1994 = vmatpush.msra.mxu0 0.0
  %1995 = vmatpush.msra.mxu0 0.0
  %1996 = vmatpush.msra.mxu0 0.0
  %1997 = vmatpush.msra.mxu0 %v1946
  %1998 = vmatpush.msra.mxu0 %v1943
  %1999 = vmatmul.f32.gmra.mxu0 %v1955
  %v2000 = vpop.f32.mrf.mxu0
  %v2001 = vadd.f32 0.0, %v2000
  %2002 = vmatmul.f32.gmra.mxu0 %v1958
  %v2003 = vpop.f32.mrf.mxu0
  %v2004 = vadd.f32 0.0, %v2003
  %2005 = vdwg.mxu0
  %2006 = vmatpush.msra.mxu0 0.0
  %2007 = vmatpush.msra.mxu0 0.0
  %2008 = vmatpush.msra.mxu0 0.0
  %2009 = vmatpush.msra.mxu0 0.0
  %2010 = vmatpush.msra.mxu0 0.0
  %2011 = vmatpush.msra.mxu0 0.0
  %2012 = vmatpush.msra.mxu0 0.0
  %2013 = vmatpush.msra.mxu0 0.0
  %2014 = vmatpush.msra.mxu0 0.0
  %2015 = vmatpush.msra.mxu0 0.0
  %2016 = vmatpush.msra.mxu0 0.0
  %2017 = vmatpush.msra.mxu0 0.0
  %2018 = vmatpush.msra.mxu0 0.0
  %2019 = vmatpush.msra.mxu0 0.0
  %2020 = vmatpush.msra.mxu0 %v1947
  %2021 = vmatpush.msra.mxu0 %v1944
  %2022 = vmatmul.f32.gmra.mxu0 %v1955
  %v2023 = vpop.f32.mrf.mxu0
  %v2024 = vadd.f32 0.0, %v2023
  %2025 = vmatmul.f32.gmra.mxu0 %v1958
  %v2026 = vpop.f32.mrf.mxu0
  %v2027 = vadd.f32 0.0, %v2026
  %2028 = vdwg.mxu0
  %v2029 = vadd.f32 %v1916, %v1978
  %v2030 = vadd.f32 %v1917, %v2001
  %v2031 = vadd.f32 %v1918, %v2024
  %v2032 = vadd.f32 %v1919, %v1981
  %v2033 = vadd.f32 %v1920, %v2004
  %v2034 = vadd.f32 %v1921, %v2027
  %s2035 = scalar_lea.vmem %s1, 288
  %v2036 = vld [vmem:[%s2035] sm:$0xff]
  %v2037 = vld [vmem:[%s2035 + $0x8] sm:$0x3]
  %2038 = vrot.lane.b32.xlu0 %v28, 80
  %v2039 = vpop.permute.xlu0 %2038
  %2040 = vrot.lane.b32.xlu0 %v29, 80
  %v2041 = vpop.permute.xlu0 %2040
  %2042 = vrot.lane.b32.xlu0 %v30, 80
  %v2043 = vpop.permute.xlu0 %2042
  %2044 = vrot.lane.b32.xlu0 %v37, 80
  %v2045 = vpop.permute.xlu0 %2044
  %2046 = vrot.lane.b32.xlu0 %v31, 80
  %v2047 = vpop.permute.xlu0 %2046
  %2048 = vrot.lane.b32.xlu0 %v32, 80
  %v2049 = vpop.permute.xlu0 %2048
  %2050 = vrot.lane.b32.xlu0 %v33, 80
  %v2051 = vpop.permute.xlu0 %2050
  %2052 = vrot.lane.b32.xlu0 %v38, 80
  %v2053 = vpop.permute.xlu0 %2052
  %vm2054 = vcmask 654336
  %v2055 = vsel %vm2054, %v2039, %v2041
  %v2056 = vsel %vm2054, %v2041, %v2043
  %v2057 = vsel %vm2054, %v2043, %v2045
  %v2058 = vsel %vm2054, %v2047, %v2049
  %v2059 = vsel %vm2054, %v2049, %v2051
  %v2060 = vsel %vm2054, %v2051, %v2053
  %v2068 = vsel %vm76, %v2036, 0
  %v2071 = vsel %vm76, %v2037, 0
  %2073 = vmatpush.msra.mxu0 0.0
  %2074 = vmatpush.msra.mxu0 0.0
  %2075 = vmatpush.msra.mxu0 0.0
  %2076 = vmatpush.msra.mxu0 0.0
  %2077 = vmatpush.msra.mxu0 0.0
  %2078 = vmatpush.msra.mxu0 0.0
  %2079 = vmatpush.msra.mxu0 0.0
  %2080 = vmatpush.msra.mxu0 0.0
  %2081 = vmatpush.msra.mxu0 0.0
  %2082 = vmatpush.msra.mxu0 0.0
  %2083 = vmatpush.msra.mxu0 0.0
  %2084 = vmatpush.msra.mxu0 0.0
  %2085 = vmatpush.msra.mxu0 0.0
  %2086 = vmatpush.msra.mxu0 0.0
  %2087 = vmatpush.msra.mxu0 %v2058
  %2088 = vmatpush.msra.mxu0 %v2055
  %2089 = vmatmul.f32.gmra.mxu0 %v2068
  %v2090 = vpop.f32.mrf.mxu0
  %v2091 = vadd.f32 0.0, %v2090
  %2092 = vmatmul.f32.gmra.mxu0 %v2071
  %v2093 = vpop.f32.mrf.mxu0
  %v2094 = vadd.f32 0.0, %v2093
  %2095 = vdwg.mxu0
  %2096 = vmatpush.msra.mxu0 0.0
  %2097 = vmatpush.msra.mxu0 0.0
  %2098 = vmatpush.msra.mxu0 0.0
  %2099 = vmatpush.msra.mxu0 0.0
  %2100 = vmatpush.msra.mxu0 0.0
  %2101 = vmatpush.msra.mxu0 0.0
  %2102 = vmatpush.msra.mxu0 0.0
  %2103 = vmatpush.msra.mxu0 0.0
  %2104 = vmatpush.msra.mxu0 0.0
  %2105 = vmatpush.msra.mxu0 0.0
  %2106 = vmatpush.msra.mxu0 0.0
  %2107 = vmatpush.msra.mxu0 0.0
  %2108 = vmatpush.msra.mxu0 0.0
  %2109 = vmatpush.msra.mxu0 0.0
  %2110 = vmatpush.msra.mxu0 %v2059
  %2111 = vmatpush.msra.mxu0 %v2056
  %2112 = vmatmul.f32.gmra.mxu0 %v2068
  %v2113 = vpop.f32.mrf.mxu0
  %v2114 = vadd.f32 0.0, %v2113
  %2115 = vmatmul.f32.gmra.mxu0 %v2071
  %v2116 = vpop.f32.mrf.mxu0
  %v2117 = vadd.f32 0.0, %v2116
  %2118 = vdwg.mxu0
  %2119 = vmatpush.msra.mxu0 0.0
  %2120 = vmatpush.msra.mxu0 0.0
  %2121 = vmatpush.msra.mxu0 0.0
  %2122 = vmatpush.msra.mxu0 0.0
  %2123 = vmatpush.msra.mxu0 0.0
  %2124 = vmatpush.msra.mxu0 0.0
  %2125 = vmatpush.msra.mxu0 0.0
  %2126 = vmatpush.msra.mxu0 0.0
  %2127 = vmatpush.msra.mxu0 0.0
  %2128 = vmatpush.msra.mxu0 0.0
  %2129 = vmatpush.msra.mxu0 0.0
  %2130 = vmatpush.msra.mxu0 0.0
  %2131 = vmatpush.msra.mxu0 0.0
  %2132 = vmatpush.msra.mxu0 0.0
  %2133 = vmatpush.msra.mxu0 %v2060
  %2134 = vmatpush.msra.mxu0 %v2057
  %2135 = vmatmul.f32.gmra.mxu0 %v2068
  %v2136 = vpop.f32.mrf.mxu0
  %v2137 = vadd.f32 0.0, %v2136
  %2138 = vmatmul.f32.gmra.mxu0 %v2071
  %v2139 = vpop.f32.mrf.mxu0
  %v2140 = vadd.f32 0.0, %v2139
  %2141 = vdwg.mxu0
  %v2142 = vadd.f32 %v2029, %v2091
  %v2143 = vadd.f32 %v2030, %v2114
  %v2144 = vadd.f32 %v2031, %v2137
  %v2145 = vadd.f32 %v2032, %v2094
  %v2146 = vadd.f32 %v2033, %v2117
  %v2147 = vadd.f32 %v2034, %v2140
  %s2148 = scalar_lea.vmem %s1, 304
  %v2149 = vld [vmem:[%s2148] sm:$0xff]
  %v2150 = vld [vmem:[%s2148 + $0x8] sm:$0x3]
  %2151 = vrot.lane.b32.xlu0 %v28, 79
  %v2152 = vpop.permute.xlu0 %2151
  %2153 = vrot.lane.b32.xlu0 %v29, 79
  %v2154 = vpop.permute.xlu0 %2153
  %2155 = vrot.lane.b32.xlu0 %v30, 79
  %v2156 = vpop.permute.xlu0 %2155
  %2157 = vrot.lane.b32.xlu0 %v37, 79
  %v2158 = vpop.permute.xlu0 %2157
  %2159 = vrot.lane.b32.xlu0 %v31, 79
  %v2160 = vpop.permute.xlu0 %2159
  %2161 = vrot.lane.b32.xlu0 %v32, 79
  %v2162 = vpop.permute.xlu0 %2161
  %2163 = vrot.lane.b32.xlu0 %v33, 79
  %v2164 = vpop.permute.xlu0 %2163
  %2165 = vrot.lane.b32.xlu0 %v38, 79
  %v2166 = vpop.permute.xlu0 %2165
  %vm2167 = vcmask 646144
  %v2168 = vsel %vm2167, %v2152, %v2154
  %v2169 = vsel %vm2167, %v2154, %v2156
  %v2170 = vsel %vm2167, %v2156, %v2158
  %v2171 = vsel %vm2167, %v2160, %v2162
  %v2172 = vsel %vm2167, %v2162, %v2164
  %v2173 = vsel %vm2167, %v2164, %v2166
  %v2181 = vsel %vm76, %v2149, 0
  %v2184 = vsel %vm76, %v2150, 0
  %2186 = vmatpush.msra.mxu0 0.0
  %2187 = vmatpush.msra.mxu0 0.0
  %2188 = vmatpush.msra.mxu0 0.0
  %2189 = vmatpush.msra.mxu0 0.0
  %2190 = vmatpush.msra.mxu0 0.0
  %2191 = vmatpush.msra.mxu0 0.0
  %2192 = vmatpush.msra.mxu0 0.0
  %2193 = vmatpush.msra.mxu0 0.0
  %2194 = vmatpush.msra.mxu0 0.0
  %2195 = vmatpush.msra.mxu0 0.0
  %2196 = vmatpush.msra.mxu0 0.0
  %2197 = vmatpush.msra.mxu0 0.0
  %2198 = vmatpush.msra.mxu0 0.0
  %2199 = vmatpush.msra.mxu0 0.0
  %2200 = vmatpush.msra.mxu0 %v2171
  %2201 = vmatpush.msra.mxu0 %v2168
  %2202 = vmatmul.f32.gmra.mxu0 %v2181
  %v2203 = vpop.f32.mrf.mxu0
  %v2204 = vadd.f32 0.0, %v2203
  %2205 = vmatmul.f32.gmra.mxu0 %v2184
  %v2206 = vpop.f32.mrf.mxu0
  %v2207 = vadd.f32 0.0, %v2206
  %2208 = vdwg.mxu0
  %2209 = vmatpush.msra.mxu0 0.0
  %2210 = vmatpush.msra.mxu0 0.0
  %2211 = vmatpush.msra.mxu0 0.0
  %2212 = vmatpush.msra.mxu0 0.0
  %2213 = vmatpush.msra.mxu0 0.0
  %2214 = vmatpush.msra.mxu0 0.0
  %2215 = vmatpush.msra.mxu0 0.0
  %2216 = vmatpush.msra.mxu0 0.0
  %2217 = vmatpush.msra.mxu0 0.0
  %2218 = vmatpush.msra.mxu0 0.0
  %2219 = vmatpush.msra.mxu0 0.0
  %2220 = vmatpush.msra.mxu0 0.0
  %2221 = vmatpush.msra.mxu0 0.0
  %2222 = vmatpush.msra.mxu0 0.0
  %2223 = vmatpush.msra.mxu0 %v2172
  %2224 = vmatpush.msra.mxu0 %v2169
  %2225 = vmatmul.f32.gmra.mxu0 %v2181
  %v2226 = vpop.f32.mrf.mxu0
  %v2227 = vadd.f32 0.0, %v2226
  %2228 = vmatmul.f32.gmra.mxu0 %v2184
  %v2229 = vpop.f32.mrf.mxu0
  %v2230 = vadd.f32 0.0, %v2229
  %2231 = vdwg.mxu0
  %2232 = vmatpush.msra.mxu0 0.0
  %2233 = vmatpush.msra.mxu0 0.0
  %2234 = vmatpush.msra.mxu0 0.0
  %2235 = vmatpush.msra.mxu0 0.0
  %2236 = vmatpush.msra.mxu0 0.0
  %2237 = vmatpush.msra.mxu0 0.0
  %2238 = vmatpush.msra.mxu0 0.0
  %2239 = vmatpush.msra.mxu0 0.0
  %2240 = vmatpush.msra.mxu0 0.0
  %2241 = vmatpush.msra.mxu0 0.0
  %2242 = vmatpush.msra.mxu0 0.0
  %2243 = vmatpush.msra.mxu0 0.0
  %2244 = vmatpush.msra.mxu0 0.0
  %2245 = vmatpush.msra.mxu0 0.0
  %2246 = vmatpush.msra.mxu0 %v2173
  %2247 = vmatpush.msra.mxu0 %v2170
  %2248 = vmatmul.f32.gmra.mxu0 %v2181
  %v2249 = vpop.f32.mrf.mxu0
  %v2250 = vadd.f32 0.0, %v2249
  %2251 = vmatmul.f32.gmra.mxu0 %v2184
  %v2252 = vpop.f32.mrf.mxu0
  %v2253 = vadd.f32 0.0, %v2252
  %2254 = vdwg.mxu0
  %v2255 = vadd.f32 %v2142, %v2204
  %v2256 = vadd.f32 %v2143, %v2227
  %v2257 = vadd.f32 %v2144, %v2250
  %v2258 = vadd.f32 %v2145, %v2207
  %v2259 = vadd.f32 %v2146, %v2230
  %v2260 = vadd.f32 %v2147, %v2253
  %s2261 = scalar_lea.vmem %s1, 320
  %v2262 = vld [vmem:[%s2261] sm:$0xff]
  %v2263 = vld [vmem:[%s2261 + $0x8] sm:$0x3]
  %2264 = vrot.lane.b32.xlu0 %v28, 78
  %v2265 = vpop.permute.xlu0 %2264
  %2266 = vrot.lane.b32.xlu0 %v29, 78
  %v2267 = vpop.permute.xlu0 %2266
  %2268 = vrot.lane.b32.xlu0 %v30, 78
  %v2269 = vpop.permute.xlu0 %2268
  %2270 = vrot.lane.b32.xlu0 %v37, 78
  %v2271 = vpop.permute.xlu0 %2270
  %2272 = vrot.lane.b32.xlu0 %v31, 78
  %v2273 = vpop.permute.xlu0 %2272
  %2274 = vrot.lane.b32.xlu0 %v32, 78
  %v2275 = vpop.permute.xlu0 %2274
  %2276 = vrot.lane.b32.xlu0 %v33, 78
  %v2277 = vpop.permute.xlu0 %2276
  %2278 = vrot.lane.b32.xlu0 %v38, 78
  %v2279 = vpop.permute.xlu0 %2278
  %vm2280 = vcmask 637952
  %v2281 = vsel %vm2280, %v2265, %v2267
  %v2282 = vsel %vm2280, %v2267, %v2269
  %v2283 = vsel %vm2280, %v2269, %v2271
  %v2284 = vsel %vm2280, %v2273, %v2275
  %v2285 = vsel %vm2280, %v2275, %v2277
  %v2286 = vsel %vm2280, %v2277, %v2279
  %v2294 = vsel %vm76, %v2262, 0
  %v2297 = vsel %vm76, %v2263, 0
  %2299 = vmatpush.msra.mxu0 0.0
  %2300 = vmatpush.msra.mxu0 0.0
  %2301 = vmatpush.msra.mxu0 0.0
  %2302 = vmatpush.msra.mxu0 0.0
  %2303 = vmatpush.msra.mxu0 0.0
  %2304 = vmatpush.msra.mxu0 0.0
  %2305 = vmatpush.msra.mxu0 0.0
  %2306 = vmatpush.msra.mxu0 0.0
  %2307 = vmatpush.msra.mxu0 0.0
  %2308 = vmatpush.msra.mxu0 0.0
  %2309 = vmatpush.msra.mxu0 0.0
  %2310 = vmatpush.msra.mxu0 0.0
  %2311 = vmatpush.msra.mxu0 0.0
  %2312 = vmatpush.msra.mxu0 0.0
  %2313 = vmatpush.msra.mxu0 %v2284
  %2314 = vmatpush.msra.mxu0 %v2281
  %2315 = vmatmul.f32.gmra.mxu0 %v2294
  %v2316 = vpop.f32.mrf.mxu0
  %v2317 = vadd.f32 0.0, %v2316
  %2318 = vmatmul.f32.gmra.mxu0 %v2297
  %v2319 = vpop.f32.mrf.mxu0
  %v2320 = vadd.f32 0.0, %v2319
  %2321 = vdwg.mxu0
  %2322 = vmatpush.msra.mxu0 0.0
  %2323 = vmatpush.msra.mxu0 0.0
  %2324 = vmatpush.msra.mxu0 0.0
  %2325 = vmatpush.msra.mxu0 0.0
  %2326 = vmatpush.msra.mxu0 0.0
  %2327 = vmatpush.msra.mxu0 0.0
  %2328 = vmatpush.msra.mxu0 0.0
  %2329 = vmatpush.msra.mxu0 0.0
  %2330 = vmatpush.msra.mxu0 0.0
  %2331 = vmatpush.msra.mxu0 0.0
  %2332 = vmatpush.msra.mxu0 0.0
  %2333 = vmatpush.msra.mxu0 0.0
  %2334 = vmatpush.msra.mxu0 0.0
  %2335 = vmatpush.msra.mxu0 0.0
  %2336 = vmatpush.msra.mxu0 %v2285
  %2337 = vmatpush.msra.mxu0 %v2282
  %2338 = vmatmul.f32.gmra.mxu0 %v2294
  %v2339 = vpop.f32.mrf.mxu0
  %v2340 = vadd.f32 0.0, %v2339
  %2341 = vmatmul.f32.gmra.mxu0 %v2297
  %v2342 = vpop.f32.mrf.mxu0
  %v2343 = vadd.f32 0.0, %v2342
  %2344 = vdwg.mxu0
  %2345 = vmatpush.msra.mxu0 0.0
  %2346 = vmatpush.msra.mxu0 0.0
  %2347 = vmatpush.msra.mxu0 0.0
  %2348 = vmatpush.msra.mxu0 0.0
  %2349 = vmatpush.msra.mxu0 0.0
  %2350 = vmatpush.msra.mxu0 0.0
  %2351 = vmatpush.msra.mxu0 0.0
  %2352 = vmatpush.msra.mxu0 0.0
  %2353 = vmatpush.msra.mxu0 0.0
  %2354 = vmatpush.msra.mxu0 0.0
  %2355 = vmatpush.msra.mxu0 0.0
  %2356 = vmatpush.msra.mxu0 0.0
  %2357 = vmatpush.msra.mxu0 0.0
  %2358 = vmatpush.msra.mxu0 0.0
  %2359 = vmatpush.msra.mxu0 %v2286
  %2360 = vmatpush.msra.mxu0 %v2283
  %2361 = vmatmul.f32.gmra.mxu0 %v2294
  %v2362 = vpop.f32.mrf.mxu0
  %v2363 = vadd.f32 0.0, %v2362
  %2364 = vmatmul.f32.gmra.mxu0 %v2297
  %v2365 = vpop.f32.mrf.mxu0
  %v2366 = vadd.f32 0.0, %v2365
  %2367 = vdwg.mxu0
  %v2368 = vadd.f32 %v2255, %v2317
  %v2369 = vadd.f32 %v2256, %v2340
  %v2370 = vadd.f32 %v2257, %v2363
  %v2371 = vadd.f32 %v2258, %v2320
  %v2372 = vadd.f32 %v2259, %v2343
  %v2373 = vadd.f32 %v2260, %v2366
  %s2374 = scalar_lea.vmem %s1, 336
  %v2375 = vld [vmem:[%s2374] sm:$0xff]
  %v2376 = vld [vmem:[%s2374 + $0x8] sm:$0x3]
  %2377 = vrot.lane.b32.xlu0 %v28, 62
  %v2378 = vpop.permute.xlu0 %2377
  %2379 = vrot.lane.b32.xlu0 %v29, 62
  %v2380 = vpop.permute.xlu0 %2379
  %2381 = vrot.lane.b32.xlu0 %v30, 62
  %v2382 = vpop.permute.xlu0 %2381
  %2383 = vrot.lane.b32.xlu0 %v37, 62
  %v2384 = vpop.permute.xlu0 %2383
  %2385 = vrot.lane.b32.xlu0 %v31, 62
  %v2386 = vpop.permute.xlu0 %2385
  %2387 = vrot.lane.b32.xlu0 %v32, 62
  %v2388 = vpop.permute.xlu0 %2387
  %2389 = vrot.lane.b32.xlu0 %v33, 62
  %v2390 = vpop.permute.xlu0 %2389
  %2391 = vrot.lane.b32.xlu0 %v38, 62
  %v2392 = vpop.permute.xlu0 %2391
  %vm2393 = vcmask 506880
  %v2394 = vsel %vm2393, %v2378, %v2380
  %v2395 = vsel %vm2393, %v2380, %v2382
  %v2396 = vsel %vm2393, %v2382, %v2384
  %v2397 = vsel %vm2393, %v2386, %v2388
  %v2398 = vsel %vm2393, %v2388, %v2390
  %v2399 = vsel %vm2393, %v2390, %v2392
  %v2407 = vsel %vm76, %v2375, 0
  %v2410 = vsel %vm76, %v2376, 0
  %2412 = vmatpush.msra.mxu0 0.0
  %2413 = vmatpush.msra.mxu0 0.0
  %2414 = vmatpush.msra.mxu0 0.0
  %2415 = vmatpush.msra.mxu0 0.0
  %2416 = vmatpush.msra.mxu0 0.0
  %2417 = vmatpush.msra.mxu0 0.0
  %2418 = vmatpush.msra.mxu0 0.0
  %2419 = vmatpush.msra.mxu0 0.0
  %2420 = vmatpush.msra.mxu0 0.0
  %2421 = vmatpush.msra.mxu0 0.0
  %2422 = vmatpush.msra.mxu0 0.0
  %2423 = vmatpush.msra.mxu0 0.0
  %2424 = vmatpush.msra.mxu0 0.0
  %2425 = vmatpush.msra.mxu0 0.0
  %2426 = vmatpush.msra.mxu0 %v2397
  %2427 = vmatpush.msra.mxu0 %v2394
  %2428 = vmatmul.f32.gmra.mxu0 %v2407
  %v2429 = vpop.f32.mrf.mxu0
  %v2430 = vadd.f32 0.0, %v2429
  %2431 = vmatmul.f32.gmra.mxu0 %v2410
  %v2432 = vpop.f32.mrf.mxu0
  %v2433 = vadd.f32 0.0, %v2432
  %2434 = vdwg.mxu0
  %2435 = vmatpush.msra.mxu0 0.0
  %2436 = vmatpush.msra.mxu0 0.0
  %2437 = vmatpush.msra.mxu0 0.0
  %2438 = vmatpush.msra.mxu0 0.0
  %2439 = vmatpush.msra.mxu0 0.0
  %2440 = vmatpush.msra.mxu0 0.0
  %2441 = vmatpush.msra.mxu0 0.0
  %2442 = vmatpush.msra.mxu0 0.0
  %2443 = vmatpush.msra.mxu0 0.0
  %2444 = vmatpush.msra.mxu0 0.0
  %2445 = vmatpush.msra.mxu0 0.0
  %2446 = vmatpush.msra.mxu0 0.0
  %2447 = vmatpush.msra.mxu0 0.0
  %2448 = vmatpush.msra.mxu0 0.0
  %2449 = vmatpush.msra.mxu0 %v2398
  %2450 = vmatpush.msra.mxu0 %v2395
  %2451 = vmatmul.f32.gmra.mxu0 %v2407
  %v2452 = vpop.f32.mrf.mxu0
  %v2453 = vadd.f32 0.0, %v2452
  %2454 = vmatmul.f32.gmra.mxu0 %v2410
  %v2455 = vpop.f32.mrf.mxu0
  %v2456 = vadd.f32 0.0, %v2455
  %2457 = vdwg.mxu0
  %2458 = vmatpush.msra.mxu0 0.0
  %2459 = vmatpush.msra.mxu0 0.0
  %2460 = vmatpush.msra.mxu0 0.0
  %2461 = vmatpush.msra.mxu0 0.0
  %2462 = vmatpush.msra.mxu0 0.0
  %2463 = vmatpush.msra.mxu0 0.0
  %2464 = vmatpush.msra.mxu0 0.0
  %2465 = vmatpush.msra.mxu0 0.0
  %2466 = vmatpush.msra.mxu0 0.0
  %2467 = vmatpush.msra.mxu0 0.0
  %2468 = vmatpush.msra.mxu0 0.0
  %2469 = vmatpush.msra.mxu0 0.0
  %2470 = vmatpush.msra.mxu0 0.0
  %2471 = vmatpush.msra.mxu0 0.0
  %2472 = vmatpush.msra.mxu0 %v2399
  %2473 = vmatpush.msra.mxu0 %v2396
  %2474 = vmatmul.f32.gmra.mxu0 %v2407
  %v2475 = vpop.f32.mrf.mxu0
  %v2476 = vadd.f32 0.0, %v2475
  %2477 = vmatmul.f32.gmra.mxu0 %v2410
  %v2478 = vpop.f32.mrf.mxu0
  %v2479 = vadd.f32 0.0, %v2478
  %2480 = vdwg.mxu0
  %v2481 = vadd.f32 %v2368, %v2430
  %v2482 = vadd.f32 %v2369, %v2453
  %v2483 = vadd.f32 %v2370, %v2476
  %v2484 = vadd.f32 %v2371, %v2433
  %v2485 = vadd.f32 %v2372, %v2456
  %v2486 = vadd.f32 %v2373, %v2479
  %s2487 = scalar_lea.vmem %s1, 352
  %v2488 = vld [vmem:[%s2487] sm:$0xff]
  %v2489 = vld [vmem:[%s2487 + $0x8] sm:$0x3]
  %2490 = vrot.lane.b32.xlu0 %v28, 61
  %v2491 = vpop.permute.xlu0 %2490
  %2492 = vrot.lane.b32.xlu0 %v29, 61
  %v2493 = vpop.permute.xlu0 %2492
  %2494 = vrot.lane.b32.xlu0 %v30, 61
  %v2495 = vpop.permute.xlu0 %2494
  %2496 = vrot.lane.b32.xlu0 %v37, 61
  %v2497 = vpop.permute.xlu0 %2496
  %2498 = vrot.lane.b32.xlu0 %v31, 61
  %v2499 = vpop.permute.xlu0 %2498
  %2500 = vrot.lane.b32.xlu0 %v32, 61
  %v2501 = vpop.permute.xlu0 %2500
  %2502 = vrot.lane.b32.xlu0 %v33, 61
  %v2503 = vpop.permute.xlu0 %2502
  %2504 = vrot.lane.b32.xlu0 %v38, 61
  %v2505 = vpop.permute.xlu0 %2504
  %vm2506 = vcmask 498688
  %v2507 = vsel %vm2506, %v2491, %v2493
  %v2508 = vsel %vm2506, %v2493, %v2495
  %v2509 = vsel %vm2506, %v2495, %v2497
  %v2510 = vsel %vm2506, %v2499, %v2501
  %v2511 = vsel %vm2506, %v2501, %v2503
  %v2512 = vsel %vm2506, %v2503, %v2505
  %v2520 = vsel %vm76, %v2488, 0
  %v2523 = vsel %vm76, %v2489, 0
  %2525 = vmatpush.msra.mxu0 0.0
  %2526 = vmatpush.msra.mxu0 0.0
  %2527 = vmatpush.msra.mxu0 0.0
  %2528 = vmatpush.msra.mxu0 0.0
  %2529 = vmatpush.msra.mxu0 0.0
  %2530 = vmatpush.msra.mxu0 0.0
  %2531 = vmatpush.msra.mxu0 0.0
  %2532 = vmatpush.msra.mxu0 0.0
  %2533 = vmatpush.msra.mxu0 0.0
  %2534 = vmatpush.msra.mxu0 0.0
  %2535 = vmatpush.msra.mxu0 0.0
  %2536 = vmatpush.msra.mxu0 0.0
  %2537 = vmatpush.msra.mxu0 0.0
  %2538 = vmatpush.msra.mxu0 0.0
  %2539 = vmatpush.msra.mxu0 %v2510
  %2540 = vmatpush.msra.mxu0 %v2507
  %2541 = vmatmul.f32.gmra.mxu0 %v2520
  %v2542 = vpop.f32.mrf.mxu0
  %v2543 = vadd.f32 0.0, %v2542
  %2544 = vmatmul.f32.gmra.mxu0 %v2523
  %v2545 = vpop.f32.mrf.mxu0
  %v2546 = vadd.f32 0.0, %v2545
  %2547 = vdwg.mxu0
  %2548 = vmatpush.msra.mxu0 0.0
  %2549 = vmatpush.msra.mxu0 0.0
  %2550 = vmatpush.msra.mxu0 0.0
  %2551 = vmatpush.msra.mxu0 0.0
  %2552 = vmatpush.msra.mxu0 0.0
  %2553 = vmatpush.msra.mxu0 0.0
  %2554 = vmatpush.msra.mxu0 0.0
  %2555 = vmatpush.msra.mxu0 0.0
  %2556 = vmatpush.msra.mxu0 0.0
  %2557 = vmatpush.msra.mxu0 0.0
  %2558 = vmatpush.msra.mxu0 0.0
  %2559 = vmatpush.msra.mxu0 0.0
  %2560 = vmatpush.msra.mxu0 0.0
  %2561 = vmatpush.msra.mxu0 0.0
  %2562 = vmatpush.msra.mxu0 %v2511
  %2563 = vmatpush.msra.mxu0 %v2508
  %2564 = vmatmul.f32.gmra.mxu0 %v2520
  %v2565 = vpop.f32.mrf.mxu0
  %v2566 = vadd.f32 0.0, %v2565
  %2567 = vmatmul.f32.gmra.mxu0 %v2523
  %v2568 = vpop.f32.mrf.mxu0
  %v2569 = vadd.f32 0.0, %v2568
  %2570 = vdwg.mxu0
  %2571 = vmatpush.msra.mxu0 0.0
  %2572 = vmatpush.msra.mxu0 0.0
  %2573 = vmatpush.msra.mxu0 0.0
  %2574 = vmatpush.msra.mxu0 0.0
  %2575 = vmatpush.msra.mxu0 0.0
  %2576 = vmatpush.msra.mxu0 0.0
  %2577 = vmatpush.msra.mxu0 0.0
  %2578 = vmatpush.msra.mxu0 0.0
  %2579 = vmatpush.msra.mxu0 0.0
  %2580 = vmatpush.msra.mxu0 0.0
  %2581 = vmatpush.msra.mxu0 0.0
  %2582 = vmatpush.msra.mxu0 0.0
  %2583 = vmatpush.msra.mxu0 0.0
  %2584 = vmatpush.msra.mxu0 0.0
  %2585 = vmatpush.msra.mxu0 %v2512
  %2586 = vmatpush.msra.mxu0 %v2509
  %2587 = vmatmul.f32.gmra.mxu0 %v2520
  %v2588 = vpop.f32.mrf.mxu0
  %v2589 = vadd.f32 0.0, %v2588
  %2590 = vmatmul.f32.gmra.mxu0 %v2523
  %v2591 = vpop.f32.mrf.mxu0
  %v2592 = vadd.f32 0.0, %v2591
  %2593 = vdwg.mxu0
  %v2594 = vadd.f32 %v2481, %v2543
  %v2595 = vadd.f32 %v2482, %v2566
  %v2596 = vadd.f32 %v2483, %v2589
  %v2597 = vadd.f32 %v2484, %v2546
  %v2598 = vadd.f32 %v2485, %v2569
  %v2599 = vadd.f32 %v2486, %v2592
  %s2600 = scalar_lea.vmem %s1, 368
  %v2601 = vld [vmem:[%s2600] sm:$0xff]
  %v2602 = vld [vmem:[%s2600 + $0x8] sm:$0x3]
  %2603 = vrot.lane.b32.xlu0 %v28, 60
  %v2604 = vpop.permute.xlu0 %2603
  %2605 = vrot.lane.b32.xlu0 %v29, 60
  %v2606 = vpop.permute.xlu0 %2605
  %2607 = vrot.lane.b32.xlu0 %v30, 60
  %v2608 = vpop.permute.xlu0 %2607
  %2609 = vrot.lane.b32.xlu0 %v37, 60
  %v2610 = vpop.permute.xlu0 %2609
  %2611 = vrot.lane.b32.xlu0 %v31, 60
  %v2612 = vpop.permute.xlu0 %2611
  %2613 = vrot.lane.b32.xlu0 %v32, 60
  %v2614 = vpop.permute.xlu0 %2613
  %2615 = vrot.lane.b32.xlu0 %v33, 60
  %v2616 = vpop.permute.xlu0 %2615
  %2617 = vrot.lane.b32.xlu0 %v38, 60
  %v2618 = vpop.permute.xlu0 %2617
  %vm2619 = vcmask 490496
  %v2620 = vsel %vm2619, %v2604, %v2606
  %v2621 = vsel %vm2619, %v2606, %v2608
  %v2622 = vsel %vm2619, %v2608, %v2610
  %v2623 = vsel %vm2619, %v2612, %v2614
  %v2624 = vsel %vm2619, %v2614, %v2616
  %v2625 = vsel %vm2619, %v2616, %v2618
  %v2633 = vsel %vm76, %v2601, 0
  %v2636 = vsel %vm76, %v2602, 0
  %2638 = vmatpush.msra.mxu0 0.0
  %2639 = vmatpush.msra.mxu0 0.0
  %2640 = vmatpush.msra.mxu0 0.0
  %2641 = vmatpush.msra.mxu0 0.0
  %2642 = vmatpush.msra.mxu0 0.0
  %2643 = vmatpush.msra.mxu0 0.0
  %2644 = vmatpush.msra.mxu0 0.0
  %2645 = vmatpush.msra.mxu0 0.0
  %2646 = vmatpush.msra.mxu0 0.0
  %2647 = vmatpush.msra.mxu0 0.0
  %2648 = vmatpush.msra.mxu0 0.0
  %2649 = vmatpush.msra.mxu0 0.0
  %2650 = vmatpush.msra.mxu0 0.0
  %2651 = vmatpush.msra.mxu0 0.0
  %2652 = vmatpush.msra.mxu0 %v2623
  %2653 = vmatpush.msra.mxu0 %v2620
  %2654 = vmatmul.f32.gmra.mxu0 %v2633
  %v2655 = vpop.f32.mrf.mxu0
  %v2656 = vadd.f32 0.0, %v2655
  %2657 = vmatmul.f32.gmra.mxu0 %v2636
  %v2658 = vpop.f32.mrf.mxu0
  %v2659 = vadd.f32 0.0, %v2658
  %2660 = vdwg.mxu0
  %2661 = vmatpush.msra.mxu0 0.0
  %2662 = vmatpush.msra.mxu0 0.0
  %2663 = vmatpush.msra.mxu0 0.0
  %2664 = vmatpush.msra.mxu0 0.0
  %2665 = vmatpush.msra.mxu0 0.0
  %2666 = vmatpush.msra.mxu0 0.0
  %2667 = vmatpush.msra.mxu0 0.0
  %2668 = vmatpush.msra.mxu0 0.0
  %2669 = vmatpush.msra.mxu0 0.0
  %2670 = vmatpush.msra.mxu0 0.0
  %2671 = vmatpush.msra.mxu0 0.0
  %2672 = vmatpush.msra.mxu0 0.0
  %2673 = vmatpush.msra.mxu0 0.0
  %2674 = vmatpush.msra.mxu0 0.0
  %2675 = vmatpush.msra.mxu0 %v2624
  %2676 = vmatpush.msra.mxu0 %v2621
  %2677 = vmatmul.f32.gmra.mxu0 %v2633
  %v2678 = vpop.f32.mrf.mxu0
  %v2679 = vadd.f32 0.0, %v2678
  %2680 = vmatmul.f32.gmra.mxu0 %v2636
  %v2681 = vpop.f32.mrf.mxu0
  %v2682 = vadd.f32 0.0, %v2681
  %2683 = vdwg.mxu0
  %2684 = vmatpush.msra.mxu0 0.0
  %2685 = vmatpush.msra.mxu0 0.0
  %2686 = vmatpush.msra.mxu0 0.0
  %2687 = vmatpush.msra.mxu0 0.0
  %2688 = vmatpush.msra.mxu0 0.0
  %2689 = vmatpush.msra.mxu0 0.0
  %2690 = vmatpush.msra.mxu0 0.0
  %2691 = vmatpush.msra.mxu0 0.0
  %2692 = vmatpush.msra.mxu0 0.0
  %2693 = vmatpush.msra.mxu0 0.0
  %2694 = vmatpush.msra.mxu0 0.0
  %2695 = vmatpush.msra.mxu0 0.0
  %2696 = vmatpush.msra.mxu0 0.0
  %2697 = vmatpush.msra.mxu0 0.0
  %2698 = vmatpush.msra.mxu0 %v2625
  %2699 = vmatpush.msra.mxu0 %v2622
  %2700 = vmatmul.f32.gmra.mxu0 %v2633
  %v2701 = vpop.f32.mrf.mxu0
  %v2702 = vadd.f32 0.0, %v2701
  %2703 = vmatmul.f32.gmra.mxu0 %v2636
  %v2704 = vpop.f32.mrf.mxu0
  %v2705 = vadd.f32 0.0, %v2704
  %2706 = vdwg.mxu0
  %v2707 = vadd.f32 %v2594, %v2656
  %v2708 = vadd.f32 %v2595, %v2679
  %v2709 = vadd.f32 %v2596, %v2702
  %v2710 = vadd.f32 %v2597, %v2659
  %v2711 = vadd.f32 %v2598, %v2682
  %v2712 = vadd.f32 %v2599, %v2705
  %s2713 = scalar_lea.vmem %s1, 384
  %v2714 = vld [vmem:[%s2713] sm:$0xff]
  %v2715 = vld [vmem:[%s2713 + $0x8] sm:$0x3]
  %2716 = vrot.lane.b32.xlu0 %v28, 59
  %v2717 = vpop.permute.xlu0 %2716
  %2718 = vrot.lane.b32.xlu0 %v29, 59
  %v2719 = vpop.permute.xlu0 %2718
  %2720 = vrot.lane.b32.xlu0 %v30, 59
  %v2721 = vpop.permute.xlu0 %2720
  %2722 = vrot.lane.b32.xlu0 %v37, 59
  %v2723 = vpop.permute.xlu0 %2722
  %2724 = vrot.lane.b32.xlu0 %v31, 59
  %v2725 = vpop.permute.xlu0 %2724
  %2726 = vrot.lane.b32.xlu0 %v32, 59
  %v2727 = vpop.permute.xlu0 %2726
  %2728 = vrot.lane.b32.xlu0 %v33, 59
  %v2729 = vpop.permute.xlu0 %2728
  %2730 = vrot.lane.b32.xlu0 %v38, 59
  %v2731 = vpop.permute.xlu0 %2730
  %vm2732 = vcmask 482304
  %v2733 = vsel %vm2732, %v2717, %v2719
  %v2734 = vsel %vm2732, %v2719, %v2721
  %v2735 = vsel %vm2732, %v2721, %v2723
  %v2736 = vsel %vm2732, %v2725, %v2727
  %v2737 = vsel %vm2732, %v2727, %v2729
  %v2738 = vsel %vm2732, %v2729, %v2731
  %v2746 = vsel %vm76, %v2714, 0
  %v2749 = vsel %vm76, %v2715, 0
  %2751 = vmatpush.msra.mxu0 0.0
  %2752 = vmatpush.msra.mxu0 0.0
  %2753 = vmatpush.msra.mxu0 0.0
  %2754 = vmatpush.msra.mxu0 0.0
  %2755 = vmatpush.msra.mxu0 0.0
  %2756 = vmatpush.msra.mxu0 0.0
  %2757 = vmatpush.msra.mxu0 0.0
  %2758 = vmatpush.msra.mxu0 0.0
  %2759 = vmatpush.msra.mxu0 0.0
  %2760 = vmatpush.msra.mxu0 0.0
  %2761 = vmatpush.msra.mxu0 0.0
  %2762 = vmatpush.msra.mxu0 0.0
  %2763 = vmatpush.msra.mxu0 0.0
  %2764 = vmatpush.msra.mxu0 0.0
  %2765 = vmatpush.msra.mxu0 %v2736
  %2766 = vmatpush.msra.mxu0 %v2733
  %2767 = vmatmul.f32.gmra.mxu0 %v2746
  %v2768 = vpop.f32.mrf.mxu0
  %v2769 = vadd.f32 0.0, %v2768
  %2770 = vmatmul.f32.gmra.mxu0 %v2749
  %v2771 = vpop.f32.mrf.mxu0
  %v2772 = vadd.f32 0.0, %v2771
  %2773 = vdwg.mxu0
  %2774 = vmatpush.msra.mxu0 0.0
  %2775 = vmatpush.msra.mxu0 0.0
  %2776 = vmatpush.msra.mxu0 0.0
  %2777 = vmatpush.msra.mxu0 0.0
  %2778 = vmatpush.msra.mxu0 0.0
  %2779 = vmatpush.msra.mxu0 0.0
  %2780 = vmatpush.msra.mxu0 0.0
  %2781 = vmatpush.msra.mxu0 0.0
  %2782 = vmatpush.msra.mxu0 0.0
  %2783 = vmatpush.msra.mxu0 0.0
  %2784 = vmatpush.msra.mxu0 0.0
  %2785 = vmatpush.msra.mxu0 0.0
  %2786 = vmatpush.msra.mxu0 0.0
  %2787 = vmatpush.msra.mxu0 0.0
  %2788 = vmatpush.msra.mxu0 %v2737
  %2789 = vmatpush.msra.mxu0 %v2734
  %2790 = vmatmul.f32.gmra.mxu0 %v2746
  %v2791 = vpop.f32.mrf.mxu0
  %v2792 = vadd.f32 0.0, %v2791
  %2793 = vmatmul.f32.gmra.mxu0 %v2749
  %v2794 = vpop.f32.mrf.mxu0
  %v2795 = vadd.f32 0.0, %v2794
  %2796 = vdwg.mxu0
  %2797 = vmatpush.msra.mxu0 0.0
  %2798 = vmatpush.msra.mxu0 0.0
  %2799 = vmatpush.msra.mxu0 0.0
  %2800 = vmatpush.msra.mxu0 0.0
  %2801 = vmatpush.msra.mxu0 0.0
  %2802 = vmatpush.msra.mxu0 0.0
  %2803 = vmatpush.msra.mxu0 0.0
  %2804 = vmatpush.msra.mxu0 0.0
  %2805 = vmatpush.msra.mxu0 0.0
  %2806 = vmatpush.msra.mxu0 0.0
  %2807 = vmatpush.msra.mxu0 0.0
  %2808 = vmatpush.msra.mxu0 0.0
  %2809 = vmatpush.msra.mxu0 0.0
  %2810 = vmatpush.msra.mxu0 0.0
  %2811 = vmatpush.msra.mxu0 %v2738
  %2812 = vmatpush.msra.mxu0 %v2735
  %2813 = vmatmul.f32.gmra.mxu0 %v2746
  %v2814 = vpop.f32.mrf.mxu0
  %v2815 = vadd.f32 0.0, %v2814
  %2816 = vmatmul.f32.gmra.mxu0 %v2749
  %v2817 = vpop.f32.mrf.mxu0
  %v2818 = vadd.f32 0.0, %v2817
  %2819 = vdwg.mxu0
  %v2820 = vadd.f32 %v2707, %v2769
  %v2821 = vadd.f32 %v2708, %v2792
  %v2822 = vadd.f32 %v2709, %v2815
  %v2823 = vadd.f32 %v2710, %v2772
  %v2824 = vadd.f32 %v2711, %v2795
  %v2825 = vadd.f32 %v2712, %v2818
  %s2826 = scalar_lea.vmem %s1, 400
  %v2827 = vld [vmem:[%s2826] sm:$0xff]
  %v2828 = vld [vmem:[%s2826 + $0x8] sm:$0x3]
  %2829 = vrot.lane.b32.xlu0 %v28, 58
  %v2830 = vpop.permute.xlu0 %2829
  %2831 = vrot.lane.b32.xlu0 %v29, 58
  %v2832 = vpop.permute.xlu0 %2831
  %2833 = vrot.lane.b32.xlu0 %v30, 58
  %v2834 = vpop.permute.xlu0 %2833
  %2835 = vrot.lane.b32.xlu0 %v37, 58
  %v2836 = vpop.permute.xlu0 %2835
  %2837 = vrot.lane.b32.xlu0 %v31, 58
  %v2838 = vpop.permute.xlu0 %2837
  %2839 = vrot.lane.b32.xlu0 %v32, 58
  %v2840 = vpop.permute.xlu0 %2839
  %2841 = vrot.lane.b32.xlu0 %v33, 58
  %v2842 = vpop.permute.xlu0 %2841
  %2843 = vrot.lane.b32.xlu0 %v38, 58
  %v2844 = vpop.permute.xlu0 %2843
  %vm2845 = vcmask 474112
  %v2846 = vsel %vm2845, %v2830, %v2832
  %v2847 = vsel %vm2845, %v2832, %v2834
  %v2848 = vsel %vm2845, %v2834, %v2836
  %v2849 = vsel %vm2845, %v2838, %v2840
  %v2850 = vsel %vm2845, %v2840, %v2842
  %v2851 = vsel %vm2845, %v2842, %v2844
  %v2859 = vsel %vm76, %v2827, 0
  %v2862 = vsel %vm76, %v2828, 0
  %2864 = vmatpush.msra.mxu0 0.0
  %2865 = vmatpush.msra.mxu0 0.0
  %2866 = vmatpush.msra.mxu0 0.0
  %2867 = vmatpush.msra.mxu0 0.0
  %2868 = vmatpush.msra.mxu0 0.0
  %2869 = vmatpush.msra.mxu0 0.0
  %2870 = vmatpush.msra.mxu0 0.0
  %2871 = vmatpush.msra.mxu0 0.0
  %2872 = vmatpush.msra.mxu0 0.0
  %2873 = vmatpush.msra.mxu0 0.0
  %2874 = vmatpush.msra.mxu0 0.0
  %2875 = vmatpush.msra.mxu0 0.0
  %2876 = vmatpush.msra.mxu0 0.0
  %2877 = vmatpush.msra.mxu0 0.0
  %2878 = vmatpush.msra.mxu0 %v2849
  %2879 = vmatpush.msra.mxu0 %v2846
  %2880 = vmatmul.f32.gmra.mxu0 %v2859
  %v2881 = vpop.f32.mrf.mxu0
  %v2882 = vadd.f32 0.0, %v2881
  %2883 = vmatmul.f32.gmra.mxu0 %v2862
  %v2884 = vpop.f32.mrf.mxu0
  %v2885 = vadd.f32 0.0, %v2884
  %2886 = vdwg.mxu0
  %2887 = vmatpush.msra.mxu0 0.0
  %2888 = vmatpush.msra.mxu0 0.0
  %2889 = vmatpush.msra.mxu0 0.0
  %2890 = vmatpush.msra.mxu0 0.0
  %2891 = vmatpush.msra.mxu0 0.0
  %2892 = vmatpush.msra.mxu0 0.0
  %2893 = vmatpush.msra.mxu0 0.0
  %2894 = vmatpush.msra.mxu0 0.0
  %2895 = vmatpush.msra.mxu0 0.0
  %2896 = vmatpush.msra.mxu0 0.0
  %2897 = vmatpush.msra.mxu0 0.0
  %2898 = vmatpush.msra.mxu0 0.0
  %2899 = vmatpush.msra.mxu0 0.0
  %2900 = vmatpush.msra.mxu0 0.0
  %2901 = vmatpush.msra.mxu0 %v2850
  %2902 = vmatpush.msra.mxu0 %v2847
  %2903 = vmatmul.f32.gmra.mxu0 %v2859
  %v2904 = vpop.f32.mrf.mxu0
  %v2905 = vadd.f32 0.0, %v2904
  %2906 = vmatmul.f32.gmra.mxu0 %v2862
  %v2907 = vpop.f32.mrf.mxu0
  %v2908 = vadd.f32 0.0, %v2907
  %2909 = vdwg.mxu0
  %2910 = vmatpush.msra.mxu0 0.0
  %2911 = vmatpush.msra.mxu0 0.0
  %2912 = vmatpush.msra.mxu0 0.0
  %2913 = vmatpush.msra.mxu0 0.0
  %2914 = vmatpush.msra.mxu0 0.0
  %2915 = vmatpush.msra.mxu0 0.0
  %2916 = vmatpush.msra.mxu0 0.0
  %2917 = vmatpush.msra.mxu0 0.0
  %2918 = vmatpush.msra.mxu0 0.0
  %2919 = vmatpush.msra.mxu0 0.0
  %2920 = vmatpush.msra.mxu0 0.0
  %2921 = vmatpush.msra.mxu0 0.0
  %2922 = vmatpush.msra.mxu0 0.0
  %2923 = vmatpush.msra.mxu0 0.0
  %2924 = vmatpush.msra.mxu0 %v2851
  %2925 = vmatpush.msra.mxu0 %v2848
  %2926 = vmatmul.f32.gmra.mxu0 %v2859
  %v2927 = vpop.f32.mrf.mxu0
  %v2928 = vadd.f32 0.0, %v2927
  %2929 = vmatmul.f32.gmra.mxu0 %v2862
  %v2930 = vpop.f32.mrf.mxu0
  %v2931 = vadd.f32 0.0, %v2930
  %2932 = vdwg.mxu0
  %v2933 = vadd.f32 %v2820, %v2882
  %v2934 = vadd.f32 %v2821, %v2905
  %v2935 = vadd.f32 %v2822, %v2928
  %v2936 = vadd.f32 %v2823, %v2885
  %v2937 = vadd.f32 %v2824, %v2908
  %v2938 = vadd.f32 %v2825, %v2931
  %s2939 = scalar_lea.vmem %s1, 416
  %v2940 = vld [vmem:[%s2939] sm:$0xff]
  %v2941 = vld [vmem:[%s2939 + $0x8] sm:$0x3]
  %2942 = vrot.lane.b32.xlu0 %v28, 57
  %v2943 = vpop.permute.xlu0 %2942
  %2944 = vrot.lane.b32.xlu0 %v29, 57
  %v2945 = vpop.permute.xlu0 %2944
  %2946 = vrot.lane.b32.xlu0 %v30, 57
  %v2947 = vpop.permute.xlu0 %2946
  %2948 = vrot.lane.b32.xlu0 %v37, 57
  %v2949 = vpop.permute.xlu0 %2948
  %2950 = vrot.lane.b32.xlu0 %v31, 57
  %v2951 = vpop.permute.xlu0 %2950
  %2952 = vrot.lane.b32.xlu0 %v32, 57
  %v2953 = vpop.permute.xlu0 %2952
  %2954 = vrot.lane.b32.xlu0 %v33, 57
  %v2955 = vpop.permute.xlu0 %2954
  %2956 = vrot.lane.b32.xlu0 %v38, 57
  %v2957 = vpop.permute.xlu0 %2956
  %vm2958 = vcmask 465920
  %v2959 = vsel %vm2958, %v2943, %v2945
  %v2960 = vsel %vm2958, %v2945, %v2947
  %v2961 = vsel %vm2958, %v2947, %v2949
  %v2962 = vsel %vm2958, %v2951, %v2953
  %v2963 = vsel %vm2958, %v2953, %v2955
  %v2964 = vsel %vm2958, %v2955, %v2957
  %v2972 = vsel %vm76, %v2940, 0
  %v2975 = vsel %vm76, %v2941, 0
  %2977 = vmatpush.msra.mxu0 0.0
  %2978 = vmatpush.msra.mxu0 0.0
  %2979 = vmatpush.msra.mxu0 0.0
  %2980 = vmatpush.msra.mxu0 0.0
  %2981 = vmatpush.msra.mxu0 0.0
  %2982 = vmatpush.msra.mxu0 0.0
  %2983 = vmatpush.msra.mxu0 0.0
  %2984 = vmatpush.msra.mxu0 0.0
  %2985 = vmatpush.msra.mxu0 0.0
  %2986 = vmatpush.msra.mxu0 0.0
  %2987 = vmatpush.msra.mxu0 0.0
  %2988 = vmatpush.msra.mxu0 0.0
  %2989 = vmatpush.msra.mxu0 0.0
  %2990 = vmatpush.msra.mxu0 0.0
  %2991 = vmatpush.msra.mxu0 %v2962
  %2992 = vmatpush.msra.mxu0 %v2959
  %2993 = vmatmul.f32.gmra.mxu0 %v2972
  %v2994 = vpop.f32.mrf.mxu0
  %v2995 = vadd.f32 0.0, %v2994
  %2996 = vmatmul.f32.gmra.mxu0 %v2975
  %v2997 = vpop.f32.mrf.mxu0
  %v2998 = vadd.f32 0.0, %v2997
  %2999 = vdwg.mxu0
  %3000 = vmatpush.msra.mxu0 0.0
  %3001 = vmatpush.msra.mxu0 0.0
  %3002 = vmatpush.msra.mxu0 0.0
  %3003 = vmatpush.msra.mxu0 0.0
  %3004 = vmatpush.msra.mxu0 0.0
  %3005 = vmatpush.msra.mxu0 0.0
  %3006 = vmatpush.msra.mxu0 0.0
  %3007 = vmatpush.msra.mxu0 0.0
  %3008 = vmatpush.msra.mxu0 0.0
  %3009 = vmatpush.msra.mxu0 0.0
  %3010 = vmatpush.msra.mxu0 0.0
  %3011 = vmatpush.msra.mxu0 0.0
  %3012 = vmatpush.msra.mxu0 0.0
  %3013 = vmatpush.msra.mxu0 0.0
  %3014 = vmatpush.msra.mxu0 %v2963
  %3015 = vmatpush.msra.mxu0 %v2960
  %3016 = vmatmul.f32.gmra.mxu0 %v2972
  %v3017 = vpop.f32.mrf.mxu0
  %v3018 = vadd.f32 0.0, %v3017
  %3019 = vmatmul.f32.gmra.mxu0 %v2975
  %v3020 = vpop.f32.mrf.mxu0
  %v3021 = vadd.f32 0.0, %v3020
  %3022 = vdwg.mxu0
  %3023 = vmatpush.msra.mxu0 0.0
  %3024 = vmatpush.msra.mxu0 0.0
  %3025 = vmatpush.msra.mxu0 0.0
  %3026 = vmatpush.msra.mxu0 0.0
  %3027 = vmatpush.msra.mxu0 0.0
  %3028 = vmatpush.msra.mxu0 0.0
  %3029 = vmatpush.msra.mxu0 0.0
  %3030 = vmatpush.msra.mxu0 0.0
  %3031 = vmatpush.msra.mxu0 0.0
  %3032 = vmatpush.msra.mxu0 0.0
  %3033 = vmatpush.msra.mxu0 0.0
  %3034 = vmatpush.msra.mxu0 0.0
  %3035 = vmatpush.msra.mxu0 0.0
  %3036 = vmatpush.msra.mxu0 0.0
  %3037 = vmatpush.msra.mxu0 %v2964
  %3038 = vmatpush.msra.mxu0 %v2961
  %3039 = vmatmul.f32.gmra.mxu0 %v2972
  %v3040 = vpop.f32.mrf.mxu0
  %v3041 = vadd.f32 0.0, %v3040
  %3042 = vmatmul.f32.gmra.mxu0 %v2975
  %v3043 = vpop.f32.mrf.mxu0
  %v3044 = vadd.f32 0.0, %v3043
  %3045 = vdwg.mxu0
  %v3046 = vadd.f32 %v2933, %v2995
  %v3047 = vadd.f32 %v2934, %v3018
  %v3048 = vadd.f32 %v2935, %v3041
  %v3049 = vadd.f32 %v2936, %v2998
  %v3050 = vadd.f32 %v2937, %v3021
  %v3051 = vadd.f32 %v2938, %v3044
  %s3052 = scalar_lea.vmem %s1, 432
  %v3053 = vld [vmem:[%s3052] sm:$0xff]
  %v3054 = vld [vmem:[%s3052 + $0x8] sm:$0x3]
  %3055 = vrot.lane.b32.xlu0 %v28, 56
  %v3056 = vpop.permute.xlu0 %3055
  %3057 = vrot.lane.b32.xlu0 %v29, 56
  %v3058 = vpop.permute.xlu0 %3057
  %3059 = vrot.lane.b32.xlu0 %v30, 56
  %v3060 = vpop.permute.xlu0 %3059
  %3061 = vrot.lane.b32.xlu0 %v37, 56
  %v3062 = vpop.permute.xlu0 %3061
  %3063 = vrot.lane.b32.xlu0 %v31, 56
  %v3064 = vpop.permute.xlu0 %3063
  %3065 = vrot.lane.b32.xlu0 %v32, 56
  %v3066 = vpop.permute.xlu0 %3065
  %3067 = vrot.lane.b32.xlu0 %v33, 56
  %v3068 = vpop.permute.xlu0 %3067
  %3069 = vrot.lane.b32.xlu0 %v38, 56
  %v3070 = vpop.permute.xlu0 %3069
  %vm3071 = vcmask 457728
  %v3072 = vsel %vm3071, %v3056, %v3058
  %v3073 = vsel %vm3071, %v3058, %v3060
  %v3074 = vsel %vm3071, %v3060, %v3062
  %v3075 = vsel %vm3071, %v3064, %v3066
  %v3076 = vsel %vm3071, %v3066, %v3068
  %v3077 = vsel %vm3071, %v3068, %v3070
  %v3085 = vsel %vm76, %v3053, 0
  %v3088 = vsel %vm76, %v3054, 0
  %3090 = vmatpush.msra.mxu0 0.0
  %3091 = vmatpush.msra.mxu0 0.0
  %3092 = vmatpush.msra.mxu0 0.0
  %3093 = vmatpush.msra.mxu0 0.0
  %3094 = vmatpush.msra.mxu0 0.0
  %3095 = vmatpush.msra.mxu0 0.0
  %3096 = vmatpush.msra.mxu0 0.0
  %3097 = vmatpush.msra.mxu0 0.0
  %3098 = vmatpush.msra.mxu0 0.0
  %3099 = vmatpush.msra.mxu0 0.0
  %3100 = vmatpush.msra.mxu0 0.0
  %3101 = vmatpush.msra.mxu0 0.0
  %3102 = vmatpush.msra.mxu0 0.0
  %3103 = vmatpush.msra.mxu0 0.0
  %3104 = vmatpush.msra.mxu0 %v3075
  %3105 = vmatpush.msra.mxu0 %v3072
  %3106 = vmatmul.f32.gmra.mxu0 %v3085
  %v3107 = vpop.f32.mrf.mxu0
  %v3108 = vadd.f32 0.0, %v3107
  %3109 = vmatmul.f32.gmra.mxu0 %v3088
  %v3110 = vpop.f32.mrf.mxu0
  %v3111 = vadd.f32 0.0, %v3110
  %3112 = vdwg.mxu0
  %3113 = vmatpush.msra.mxu0 0.0
  %3114 = vmatpush.msra.mxu0 0.0
  %3115 = vmatpush.msra.mxu0 0.0
  %3116 = vmatpush.msra.mxu0 0.0
  %3117 = vmatpush.msra.mxu0 0.0
  %3118 = vmatpush.msra.mxu0 0.0
  %3119 = vmatpush.msra.mxu0 0.0
  %3120 = vmatpush.msra.mxu0 0.0
  %3121 = vmatpush.msra.mxu0 0.0
  %3122 = vmatpush.msra.mxu0 0.0
  %3123 = vmatpush.msra.mxu0 0.0
  %3124 = vmatpush.msra.mxu0 0.0
  %3125 = vmatpush.msra.mxu0 0.0
  %3126 = vmatpush.msra.mxu0 0.0
  %3127 = vmatpush.msra.mxu0 %v3076
  %3128 = vmatpush.msra.mxu0 %v3073
  %3129 = vmatmul.f32.gmra.mxu0 %v3085
  %v3130 = vpop.f32.mrf.mxu0
  %v3131 = vadd.f32 0.0, %v3130
  %3132 = vmatmul.f32.gmra.mxu0 %v3088
  %v3133 = vpop.f32.mrf.mxu0
  %v3134 = vadd.f32 0.0, %v3133
  %3135 = vdwg.mxu0
  %3136 = vmatpush.msra.mxu0 0.0
  %3137 = vmatpush.msra.mxu0 0.0
  %3138 = vmatpush.msra.mxu0 0.0
  %3139 = vmatpush.msra.mxu0 0.0
  %3140 = vmatpush.msra.mxu0 0.0
  %3141 = vmatpush.msra.mxu0 0.0
  %3142 = vmatpush.msra.mxu0 0.0
  %3143 = vmatpush.msra.mxu0 0.0
  %3144 = vmatpush.msra.mxu0 0.0
  %3145 = vmatpush.msra.mxu0 0.0
  %3146 = vmatpush.msra.mxu0 0.0
  %3147 = vmatpush.msra.mxu0 0.0
  %3148 = vmatpush.msra.mxu0 0.0
  %3149 = vmatpush.msra.mxu0 0.0
  %3150 = vmatpush.msra.mxu0 %v3077
  %3151 = vmatpush.msra.mxu0 %v3074
  %3152 = vmatmul.f32.gmra.mxu0 %v3085
  %v3153 = vpop.f32.mrf.mxu0
  %v3154 = vadd.f32 0.0, %v3153
  %3155 = vmatmul.f32.gmra.mxu0 %v3088
  %v3156 = vpop.f32.mrf.mxu0
  %v3157 = vadd.f32 0.0, %v3156
  %3158 = vdwg.mxu0
  %v3159 = vadd.f32 %v3046, %v3108
  %v3160 = vadd.f32 %v3047, %v3131
  %v3161 = vadd.f32 %v3048, %v3154
  %v3162 = vadd.f32 %v3049, %v3111
  %v3163 = vadd.f32 %v3050, %v3134
  %v3164 = vadd.f32 %v3051, %v3157
  %s3165 = scalar_lea.vmem %s1, 448
  %v3166 = vld [vmem:[%s3165] sm:$0xff]
  %v3167 = vld [vmem:[%s3165 + $0x8] sm:$0x3]
  %3168 = vrot.lane.b32.xlu0 %v28, 40
  %v3169 = vpop.permute.xlu0 %3168
  %3170 = vrot.lane.b32.xlu0 %v29, 40
  %v3171 = vpop.permute.xlu0 %3170
  %3172 = vrot.lane.b32.xlu0 %v30, 40
  %v3173 = vpop.permute.xlu0 %3172
  %3174 = vrot.lane.b32.xlu0 %v37, 40
  %v3175 = vpop.permute.xlu0 %3174
  %3176 = vrot.lane.b32.xlu0 %v31, 40
  %v3177 = vpop.permute.xlu0 %3176
  %3178 = vrot.lane.b32.xlu0 %v32, 40
  %v3179 = vpop.permute.xlu0 %3178
  %3180 = vrot.lane.b32.xlu0 %v33, 40
  %v3181 = vpop.permute.xlu0 %3180
  %3182 = vrot.lane.b32.xlu0 %v38, 40
  %v3183 = vpop.permute.xlu0 %3182
  %vm3184 = vcmask 326656
  %v3185 = vsel %vm3184, %v3169, %v3171
  %v3186 = vsel %vm3184, %v3171, %v3173
  %v3187 = vsel %vm3184, %v3173, %v3175
  %v3188 = vsel %vm3184, %v3177, %v3179
  %v3189 = vsel %vm3184, %v3179, %v3181
  %v3190 = vsel %vm3184, %v3181, %v3183
  %v3198 = vsel %vm76, %v3166, 0
  %v3201 = vsel %vm76, %v3167, 0
  %3203 = vmatpush.msra.mxu0 0.0
  %3204 = vmatpush.msra.mxu0 0.0
  %3205 = vmatpush.msra.mxu0 0.0
  %3206 = vmatpush.msra.mxu0 0.0
  %3207 = vmatpush.msra.mxu0 0.0
  %3208 = vmatpush.msra.mxu0 0.0
  %3209 = vmatpush.msra.mxu0 0.0
  %3210 = vmatpush.msra.mxu0 0.0
  %3211 = vmatpush.msra.mxu0 0.0
  %3212 = vmatpush.msra.mxu0 0.0
  %3213 = vmatpush.msra.mxu0 0.0
  %3214 = vmatpush.msra.mxu0 0.0
  %3215 = vmatpush.msra.mxu0 0.0
  %3216 = vmatpush.msra.mxu0 0.0
  %3217 = vmatpush.msra.mxu0 %v3188
  %3218 = vmatpush.msra.mxu0 %v3185
  %3219 = vmatmul.f32.gmra.mxu0 %v3198
  %v3220 = vpop.f32.mrf.mxu0
  %v3221 = vadd.f32 0.0, %v3220
  %3222 = vmatmul.f32.gmra.mxu0 %v3201
  %v3223 = vpop.f32.mrf.mxu0
  %v3224 = vadd.f32 0.0, %v3223
  %3225 = vdwg.mxu0
  %3226 = vmatpush.msra.mxu0 0.0
  %3227 = vmatpush.msra.mxu0 0.0
  %3228 = vmatpush.msra.mxu0 0.0
  %3229 = vmatpush.msra.mxu0 0.0
  %3230 = vmatpush.msra.mxu0 0.0
  %3231 = vmatpush.msra.mxu0 0.0
  %3232 = vmatpush.msra.mxu0 0.0
  %3233 = vmatpush.msra.mxu0 0.0
  %3234 = vmatpush.msra.mxu0 0.0
  %3235 = vmatpush.msra.mxu0 0.0
  %3236 = vmatpush.msra.mxu0 0.0
  %3237 = vmatpush.msra.mxu0 0.0
  %3238 = vmatpush.msra.mxu0 0.0
  %3239 = vmatpush.msra.mxu0 0.0
  %3240 = vmatpush.msra.mxu0 %v3189
  %3241 = vmatpush.msra.mxu0 %v3186
  %3242 = vmatmul.f32.gmra.mxu0 %v3198
  %v3243 = vpop.f32.mrf.mxu0
  %v3244 = vadd.f32 0.0, %v3243
  %3245 = vmatmul.f32.gmra.mxu0 %v3201
  %v3246 = vpop.f32.mrf.mxu0
  %v3247 = vadd.f32 0.0, %v3246
  %3248 = vdwg.mxu0
  %3249 = vmatpush.msra.mxu0 0.0
  %3250 = vmatpush.msra.mxu0 0.0
  %3251 = vmatpush.msra.mxu0 0.0
  %3252 = vmatpush.msra.mxu0 0.0
  %3253 = vmatpush.msra.mxu0 0.0
  %3254 = vmatpush.msra.mxu0 0.0
  %3255 = vmatpush.msra.mxu0 0.0
  %3256 = vmatpush.msra.mxu0 0.0
  %3257 = vmatpush.msra.mxu0 0.0
  %3258 = vmatpush.msra.mxu0 0.0
  %3259 = vmatpush.msra.mxu0 0.0
  %3260 = vmatpush.msra.mxu0 0.0
  %3261 = vmatpush.msra.mxu0 0.0
  %3262 = vmatpush.msra.mxu0 0.0
  %3263 = vmatpush.msra.mxu0 %v3190
  %3264 = vmatpush.msra.mxu0 %v3187
  %3265 = vmatmul.f32.gmra.mxu0 %v3198
  %v3266 = vpop.f32.mrf.mxu0
  %v3267 = vadd.f32 0.0, %v3266
  %3268 = vmatmul.f32.gmra.mxu0 %v3201
  %v3269 = vpop.f32.mrf.mxu0
  %v3270 = vadd.f32 0.0, %v3269
  %3271 = vdwg.mxu0
  %v3272 = vadd.f32 %v3159, %v3221
  %v3273 = vadd.f32 %v3160, %v3244
  %v3274 = vadd.f32 %v3161, %v3267
  %v3275 = vadd.f32 %v3162, %v3224
  %v3276 = vadd.f32 %v3163, %v3247
  %v3277 = vadd.f32 %v3164, %v3270
  %s3278 = scalar_lea.vmem %s1, 464
  %v3279 = vld [vmem:[%s3278] sm:$0xff]
  %v3280 = vld [vmem:[%s3278 + $0x8] sm:$0x3]
  %3281 = vrot.lane.b32.xlu0 %v28, 39
  %v3282 = vpop.permute.xlu0 %3281
  %3283 = vrot.lane.b32.xlu0 %v29, 39
  %v3284 = vpop.permute.xlu0 %3283
  %3285 = vrot.lane.b32.xlu0 %v30, 39
  %v3286 = vpop.permute.xlu0 %3285
  %3287 = vrot.lane.b32.xlu0 %v37, 39
  %v3288 = vpop.permute.xlu0 %3287
  %3289 = vrot.lane.b32.xlu0 %v31, 39
  %v3290 = vpop.permute.xlu0 %3289
  %3291 = vrot.lane.b32.xlu0 %v32, 39
  %v3292 = vpop.permute.xlu0 %3291
  %3293 = vrot.lane.b32.xlu0 %v33, 39
  %v3294 = vpop.permute.xlu0 %3293
  %3295 = vrot.lane.b32.xlu0 %v38, 39
  %v3296 = vpop.permute.xlu0 %3295
  %vm3297 = vcmask 318464
  %v3298 = vsel %vm3297, %v3282, %v3284
  %v3299 = vsel %vm3297, %v3284, %v3286
  %v3300 = vsel %vm3297, %v3286, %v3288
  %v3301 = vsel %vm3297, %v3290, %v3292
  %v3302 = vsel %vm3297, %v3292, %v3294
  %v3303 = vsel %vm3297, %v3294, %v3296
  %v3311 = vsel %vm76, %v3279, 0
  %v3314 = vsel %vm76, %v3280, 0
  %3316 = vmatpush.msra.mxu0 0.0
  %3317 = vmatpush.msra.mxu0 0.0
  %3318 = vmatpush.msra.mxu0 0.0
  %3319 = vmatpush.msra.mxu0 0.0
  %3320 = vmatpush.msra.mxu0 0.0
  %3321 = vmatpush.msra.mxu0 0.0
  %3322 = vmatpush.msra.mxu0 0.0
  %3323 = vmatpush.msra.mxu0 0.0
  %3324 = vmatpush.msra.mxu0 0.0
  %3325 = vmatpush.msra.mxu0 0.0
  %3326 = vmatpush.msra.mxu0 0.0
  %3327 = vmatpush.msra.mxu0 0.0
  %3328 = vmatpush.msra.mxu0 0.0
  %3329 = vmatpush.msra.mxu0 0.0
  %3330 = vmatpush.msra.mxu0 %v3301
  %3331 = vmatpush.msra.mxu0 %v3298
  %3332 = vmatmul.f32.gmra.mxu0 %v3311
  %v3333 = vpop.f32.mrf.mxu0
  %v3334 = vadd.f32 0.0, %v3333
  %3335 = vmatmul.f32.gmra.mxu0 %v3314
  %v3336 = vpop.f32.mrf.mxu0
  %v3337 = vadd.f32 0.0, %v3336
  %3338 = vdwg.mxu0
  %3339 = vmatpush.msra.mxu0 0.0
  %3340 = vmatpush.msra.mxu0 0.0
  %3341 = vmatpush.msra.mxu0 0.0
  %3342 = vmatpush.msra.mxu0 0.0
  %3343 = vmatpush.msra.mxu0 0.0
  %3344 = vmatpush.msra.mxu0 0.0
  %3345 = vmatpush.msra.mxu0 0.0
  %3346 = vmatpush.msra.mxu0 0.0
  %3347 = vmatpush.msra.mxu0 0.0
  %3348 = vmatpush.msra.mxu0 0.0
  %3349 = vmatpush.msra.mxu0 0.0
  %3350 = vmatpush.msra.mxu0 0.0
  %3351 = vmatpush.msra.mxu0 0.0
  %3352 = vmatpush.msra.mxu0 0.0
  %3353 = vmatpush.msra.mxu0 %v3302
  %3354 = vmatpush.msra.mxu0 %v3299
  %3355 = vmatmul.f32.gmra.mxu0 %v3311
  %v3356 = vpop.f32.mrf.mxu0
  %v3357 = vadd.f32 0.0, %v3356
  %3358 = vmatmul.f32.gmra.mxu0 %v3314
  %v3359 = vpop.f32.mrf.mxu0
  %v3360 = vadd.f32 0.0, %v3359
  %3361 = vdwg.mxu0
  %3362 = vmatpush.msra.mxu0 0.0
  %3363 = vmatpush.msra.mxu0 0.0
  %3364 = vmatpush.msra.mxu0 0.0
  %3365 = vmatpush.msra.mxu0 0.0
  %3366 = vmatpush.msra.mxu0 0.0
  %3367 = vmatpush.msra.mxu0 0.0
  %3368 = vmatpush.msra.mxu0 0.0
  %3369 = vmatpush.msra.mxu0 0.0
  %3370 = vmatpush.msra.mxu0 0.0
  %3371 = vmatpush.msra.mxu0 0.0
  %3372 = vmatpush.msra.mxu0 0.0
  %3373 = vmatpush.msra.mxu0 0.0
  %3374 = vmatpush.msra.mxu0 0.0
  %3375 = vmatpush.msra.mxu0 0.0
  %3376 = vmatpush.msra.mxu0 %v3303
  %3377 = vmatpush.msra.mxu0 %v3300
  %3378 = vmatmul.f32.gmra.mxu0 %v3311
  %v3379 = vpop.f32.mrf.mxu0
  %v3380 = vadd.f32 0.0, %v3379
  %3381 = vmatmul.f32.gmra.mxu0 %v3314
  %v3382 = vpop.f32.mrf.mxu0
  %v3383 = vadd.f32 0.0, %v3382
  %3384 = vdwg.mxu0
  %v3385 = vadd.f32 %v3272, %v3334
  %v3386 = vadd.f32 %v3273, %v3357
  %v3387 = vadd.f32 %v3274, %v3380
  %v3388 = vadd.f32 %v3275, %v3337
  %v3389 = vadd.f32 %v3276, %v3360
  %v3390 = vadd.f32 %v3277, %v3383
  %s3391 = scalar_lea.vmem %s1, 480
  %v3392 = vld [vmem:[%s3391] sm:$0xff]
  %v3393 = vld [vmem:[%s3391 + $0x8] sm:$0x3]
  %3394 = vrot.lane.b32.xlu0 %v28, 38
  %v3395 = vpop.permute.xlu0 %3394
  %3396 = vrot.lane.b32.xlu0 %v29, 38
  %v3397 = vpop.permute.xlu0 %3396
  %3398 = vrot.lane.b32.xlu0 %v30, 38
  %v3399 = vpop.permute.xlu0 %3398
  %3400 = vrot.lane.b32.xlu0 %v37, 38
  %v3401 = vpop.permute.xlu0 %3400
  %3402 = vrot.lane.b32.xlu0 %v31, 38
  %v3403 = vpop.permute.xlu0 %3402
  %3404 = vrot.lane.b32.xlu0 %v32, 38
  %v3405 = vpop.permute.xlu0 %3404
  %3406 = vrot.lane.b32.xlu0 %v33, 38
  %v3407 = vpop.permute.xlu0 %3406
  %3408 = vrot.lane.b32.xlu0 %v38, 38
  %v3409 = vpop.permute.xlu0 %3408
  %vm3410 = vcmask 310272
  %v3411 = vsel %vm3410, %v3395, %v3397
  %v3412 = vsel %vm3410, %v3397, %v3399
  %v3413 = vsel %vm3410, %v3399, %v3401
  %v3414 = vsel %vm3410, %v3403, %v3405
  %v3415 = vsel %vm3410, %v3405, %v3407
  %v3416 = vsel %vm3410, %v3407, %v3409
  %v3424 = vsel %vm76, %v3392, 0
  %v3427 = vsel %vm76, %v3393, 0
  %3429 = vmatpush.msra.mxu0 0.0
  %3430 = vmatpush.msra.mxu0 0.0
  %3431 = vmatpush.msra.mxu0 0.0
  %3432 = vmatpush.msra.mxu0 0.0
  %3433 = vmatpush.msra.mxu0 0.0
  %3434 = vmatpush.msra.mxu0 0.0
  %3435 = vmatpush.msra.mxu0 0.0
  %3436 = vmatpush.msra.mxu0 0.0
  %3437 = vmatpush.msra.mxu0 0.0
  %3438 = vmatpush.msra.mxu0 0.0
  %3439 = vmatpush.msra.mxu0 0.0
  %3440 = vmatpush.msra.mxu0 0.0
  %3441 = vmatpush.msra.mxu0 0.0
  %3442 = vmatpush.msra.mxu0 0.0
  %3443 = vmatpush.msra.mxu0 %v3414
  %3444 = vmatpush.msra.mxu0 %v3411
  %3445 = vmatmul.f32.gmra.mxu0 %v3424
  %v3446 = vpop.f32.mrf.mxu0
  %v3447 = vadd.f32 0.0, %v3446
  %3448 = vmatmul.f32.gmra.mxu0 %v3427
  %v3449 = vpop.f32.mrf.mxu0
  %v3450 = vadd.f32 0.0, %v3449
  %3451 = vdwg.mxu0
  %3452 = vmatpush.msra.mxu0 0.0
  %3453 = vmatpush.msra.mxu0 0.0
  %3454 = vmatpush.msra.mxu0 0.0
  %3455 = vmatpush.msra.mxu0 0.0
  %3456 = vmatpush.msra.mxu0 0.0
  %3457 = vmatpush.msra.mxu0 0.0
  %3458 = vmatpush.msra.mxu0 0.0
  %3459 = vmatpush.msra.mxu0 0.0
  %3460 = vmatpush.msra.mxu0 0.0
  %3461 = vmatpush.msra.mxu0 0.0
  %3462 = vmatpush.msra.mxu0 0.0
  %3463 = vmatpush.msra.mxu0 0.0
  %3464 = vmatpush.msra.mxu0 0.0
  %3465 = vmatpush.msra.mxu0 0.0
  %3466 = vmatpush.msra.mxu0 %v3415
  %3467 = vmatpush.msra.mxu0 %v3412
  %3468 = vmatmul.f32.gmra.mxu0 %v3424
  %v3469 = vpop.f32.mrf.mxu0
  %v3470 = vadd.f32 0.0, %v3469
  %3471 = vmatmul.f32.gmra.mxu0 %v3427
  %v3472 = vpop.f32.mrf.mxu0
  %v3473 = vadd.f32 0.0, %v3472
  %3474 = vdwg.mxu0
  %3475 = vmatpush.msra.mxu0 0.0
  %3476 = vmatpush.msra.mxu0 0.0
  %3477 = vmatpush.msra.mxu0 0.0
  %3478 = vmatpush.msra.mxu0 0.0
  %3479 = vmatpush.msra.mxu0 0.0
  %3480 = vmatpush.msra.mxu0 0.0
  %3481 = vmatpush.msra.mxu0 0.0
  %3482 = vmatpush.msra.mxu0 0.0
  %3483 = vmatpush.msra.mxu0 0.0
  %3484 = vmatpush.msra.mxu0 0.0
  %3485 = vmatpush.msra.mxu0 0.0
  %3486 = vmatpush.msra.mxu0 0.0
  %3487 = vmatpush.msra.mxu0 0.0
  %3488 = vmatpush.msra.mxu0 0.0
  %3489 = vmatpush.msra.mxu0 %v3416
  %3490 = vmatpush.msra.mxu0 %v3413
  %3491 = vmatmul.f32.gmra.mxu0 %v3424
  %v3492 = vpop.f32.mrf.mxu0
  %v3493 = vadd.f32 0.0, %v3492
  %3494 = vmatmul.f32.gmra.mxu0 %v3427
  %v3495 = vpop.f32.mrf.mxu0
  %v3496 = vadd.f32 0.0, %v3495
  %3497 = vdwg.mxu0
  %v3498 = vadd.f32 %v3385, %v3447
  %v3499 = vadd.f32 %v3386, %v3470
  %v3500 = vadd.f32 %v3387, %v3493
  %v3501 = vadd.f32 %v3388, %v3450
  %v3502 = vadd.f32 %v3389, %v3473
  %v3503 = vadd.f32 %v3390, %v3496
  %s3504 = scalar_lea.vmem %s1, 496
  %v3505 = vld [vmem:[%s3504] sm:$0xff]
  %v3506 = vld [vmem:[%s3504 + $0x8] sm:$0x3]
  %3507 = vrot.lane.b32.xlu0 %v28, 37
  %v3508 = vpop.permute.xlu0 %3507
  %3509 = vrot.lane.b32.xlu0 %v29, 37
  %v3510 = vpop.permute.xlu0 %3509
  %3511 = vrot.lane.b32.xlu0 %v30, 37
  %v3512 = vpop.permute.xlu0 %3511
  %3513 = vrot.lane.b32.xlu0 %v37, 37
  %v3514 = vpop.permute.xlu0 %3513
  %3515 = vrot.lane.b32.xlu0 %v31, 37
  %v3516 = vpop.permute.xlu0 %3515
  %3517 = vrot.lane.b32.xlu0 %v32, 37
  %v3518 = vpop.permute.xlu0 %3517
  %3519 = vrot.lane.b32.xlu0 %v33, 37
  %v3520 = vpop.permute.xlu0 %3519
  %3521 = vrot.lane.b32.xlu0 %v38, 37
  %v3522 = vpop.permute.xlu0 %3521
  %vm3523 = vcmask 302080
  %v3524 = vsel %vm3523, %v3508, %v3510
  %v3525 = vsel %vm3523, %v3510, %v3512
  %v3526 = vsel %vm3523, %v3512, %v3514
  %v3527 = vsel %vm3523, %v3516, %v3518
  %v3528 = vsel %vm3523, %v3518, %v3520
  %v3529 = vsel %vm3523, %v3520, %v3522
  %v3537 = vsel %vm76, %v3505, 0
  %v3540 = vsel %vm76, %v3506, 0
  %3542 = vmatpush.msra.mxu0 0.0
  %3543 = vmatpush.msra.mxu0 0.0
  %3544 = vmatpush.msra.mxu0 0.0
  %3545 = vmatpush.msra.mxu0 0.0
  %3546 = vmatpush.msra.mxu0 0.0
  %3547 = vmatpush.msra.mxu0 0.0
  %3548 = vmatpush.msra.mxu0 0.0
  %3549 = vmatpush.msra.mxu0 0.0
  %3550 = vmatpush.msra.mxu0 0.0
  %3551 = vmatpush.msra.mxu0 0.0
  %3552 = vmatpush.msra.mxu0 0.0
  %3553 = vmatpush.msra.mxu0 0.0
  %3554 = vmatpush.msra.mxu0 0.0
  %3555 = vmatpush.msra.mxu0 0.0
  %3556 = vmatpush.msra.mxu0 %v3527
  %3557 = vmatpush.msra.mxu0 %v3524
  %3558 = vmatmul.f32.gmra.mxu0 %v3537
  %v3559 = vpop.f32.mrf.mxu0
  %v3560 = vadd.f32 0.0, %v3559
  %3561 = vmatmul.f32.gmra.mxu0 %v3540
  %v3562 = vpop.f32.mrf.mxu0
  %v3563 = vadd.f32 0.0, %v3562
  %3564 = vdwg.mxu0
  %3565 = vmatpush.msra.mxu0 0.0
  %3566 = vmatpush.msra.mxu0 0.0
  %3567 = vmatpush.msra.mxu0 0.0
  %3568 = vmatpush.msra.mxu0 0.0
  %3569 = vmatpush.msra.mxu0 0.0
  %3570 = vmatpush.msra.mxu0 0.0
  %3571 = vmatpush.msra.mxu0 0.0
  %3572 = vmatpush.msra.mxu0 0.0
  %3573 = vmatpush.msra.mxu0 0.0
  %3574 = vmatpush.msra.mxu0 0.0
  %3575 = vmatpush.msra.mxu0 0.0
  %3576 = vmatpush.msra.mxu0 0.0
  %3577 = vmatpush.msra.mxu0 0.0
  %3578 = vmatpush.msra.mxu0 0.0
  %3579 = vmatpush.msra.mxu0 %v3528
  %3580 = vmatpush.msra.mxu0 %v3525
  %3581 = vmatmul.f32.gmra.mxu0 %v3537
  %v3582 = vpop.f32.mrf.mxu0
  %v3583 = vadd.f32 0.0, %v3582
  %3584 = vmatmul.f32.gmra.mxu0 %v3540
  %v3585 = vpop.f32.mrf.mxu0
  %v3586 = vadd.f32 0.0, %v3585
  %3587 = vdwg.mxu0
  %3588 = vmatpush.msra.mxu0 0.0
  %3589 = vmatpush.msra.mxu0 0.0
  %3590 = vmatpush.msra.mxu0 0.0
  %3591 = vmatpush.msra.mxu0 0.0
  %3592 = vmatpush.msra.mxu0 0.0
  %3593 = vmatpush.msra.mxu0 0.0
  %3594 = vmatpush.msra.mxu0 0.0
  %3595 = vmatpush.msra.mxu0 0.0
  %3596 = vmatpush.msra.mxu0 0.0
  %3597 = vmatpush.msra.mxu0 0.0
  %3598 = vmatpush.msra.mxu0 0.0
  %3599 = vmatpush.msra.mxu0 0.0
  %3600 = vmatpush.msra.mxu0 0.0
  %3601 = vmatpush.msra.mxu0 0.0
  %3602 = vmatpush.msra.mxu0 %v3529
  %3603 = vmatpush.msra.mxu0 %v3526
  %3604 = vmatmul.f32.gmra.mxu0 %v3537
  %v3605 = vpop.f32.mrf.mxu0
  %v3606 = vadd.f32 0.0, %v3605
  %3607 = vmatmul.f32.gmra.mxu0 %v3540
  %v3608 = vpop.f32.mrf.mxu0
  %v3609 = vadd.f32 0.0, %v3608
  %3610 = vdwg.mxu0
  %v3611 = vadd.f32 %v3498, %v3560
  %v3612 = vadd.f32 %v3499, %v3583
  %v3613 = vadd.f32 %v3500, %v3606
  %v3614 = vadd.f32 %v3501, %v3563
  %v3615 = vadd.f32 %v3502, %v3586
  %v3616 = vadd.f32 %v3503, %v3609
  %s3617 = scalar_lea.vmem %s1, 512
  %v3618 = vld [vmem:[%s3617] sm:$0xff]
  %v3619 = vld [vmem:[%s3617 + $0x8] sm:$0x3]
  %3620 = vrot.lane.b32.xlu0 %v28, 36
  %v3621 = vpop.permute.xlu0 %3620
  %3622 = vrot.lane.b32.xlu0 %v29, 36
  %v3623 = vpop.permute.xlu0 %3622
  %3624 = vrot.lane.b32.xlu0 %v30, 36
  %v3625 = vpop.permute.xlu0 %3624
  %3626 = vrot.lane.b32.xlu0 %v37, 36
  %v3627 = vpop.permute.xlu0 %3626
  %3628 = vrot.lane.b32.xlu0 %v31, 36
  %v3629 = vpop.permute.xlu0 %3628
  %3630 = vrot.lane.b32.xlu0 %v32, 36
  %v3631 = vpop.permute.xlu0 %3630
  %3632 = vrot.lane.b32.xlu0 %v33, 36
  %v3633 = vpop.permute.xlu0 %3632
  %3634 = vrot.lane.b32.xlu0 %v38, 36
  %v3635 = vpop.permute.xlu0 %3634
  %vm3636 = vcmask 293888
  %v3637 = vsel %vm3636, %v3621, %v3623
  %v3638 = vsel %vm3636, %v3623, %v3625
  %v3639 = vsel %vm3636, %v3625, %v3627
  %v3640 = vsel %vm3636, %v3629, %v3631
  %v3641 = vsel %vm3636, %v3631, %v3633
  %v3642 = vsel %vm3636, %v3633, %v3635
  %v3650 = vsel %vm76, %v3618, 0
  %v3653 = vsel %vm76, %v3619, 0
  %3655 = vmatpush.msra.mxu0 0.0
  %3656 = vmatpush.msra.mxu0 0.0
  %3657 = vmatpush.msra.mxu0 0.0
  %3658 = vmatpush.msra.mxu0 0.0
  %3659 = vmatpush.msra.mxu0 0.0
  %3660 = vmatpush.msra.mxu0 0.0
  %3661 = vmatpush.msra.mxu0 0.0
  %3662 = vmatpush.msra.mxu0 0.0
  %3663 = vmatpush.msra.mxu0 0.0
  %3664 = vmatpush.msra.mxu0 0.0
  %3665 = vmatpush.msra.mxu0 0.0
  %3666 = vmatpush.msra.mxu0 0.0
  %3667 = vmatpush.msra.mxu0 0.0
  %3668 = vmatpush.msra.mxu0 0.0
  %3669 = vmatpush.msra.mxu0 %v3640
  %3670 = vmatpush.msra.mxu0 %v3637
  %3671 = vmatmul.f32.gmra.mxu0 %v3650
  %v3672 = vpop.f32.mrf.mxu0
  %v3673 = vadd.f32 0.0, %v3672
  %3674 = vmatmul.f32.gmra.mxu0 %v3653
  %v3675 = vpop.f32.mrf.mxu0
  %v3676 = vadd.f32 0.0, %v3675
  %3677 = vdwg.mxu0
  %3678 = vmatpush.msra.mxu0 0.0
  %3679 = vmatpush.msra.mxu0 0.0
  %3680 = vmatpush.msra.mxu0 0.0
  %3681 = vmatpush.msra.mxu0 0.0
  %3682 = vmatpush.msra.mxu0 0.0
  %3683 = vmatpush.msra.mxu0 0.0
  %3684 = vmatpush.msra.mxu0 0.0
  %3685 = vmatpush.msra.mxu0 0.0
  %3686 = vmatpush.msra.mxu0 0.0
  %3687 = vmatpush.msra.mxu0 0.0
  %3688 = vmatpush.msra.mxu0 0.0
  %3689 = vmatpush.msra.mxu0 0.0
  %3690 = vmatpush.msra.mxu0 0.0
  %3691 = vmatpush.msra.mxu0 0.0
  %3692 = vmatpush.msra.mxu0 %v3641
  %3693 = vmatpush.msra.mxu0 %v3638
  %3694 = vmatmul.f32.gmra.mxu0 %v3650
  %v3695 = vpop.f32.mrf.mxu0
  %v3696 = vadd.f32 0.0, %v3695
  %3697 = vmatmul.f32.gmra.mxu0 %v3653
  %v3698 = vpop.f32.mrf.mxu0
  %v3699 = vadd.f32 0.0, %v3698
  %3700 = vdwg.mxu0
  %3701 = vmatpush.msra.mxu0 0.0
  %3702 = vmatpush.msra.mxu0 0.0
  %3703 = vmatpush.msra.mxu0 0.0
  %3704 = vmatpush.msra.mxu0 0.0
  %3705 = vmatpush.msra.mxu0 0.0
  %3706 = vmatpush.msra.mxu0 0.0
  %3707 = vmatpush.msra.mxu0 0.0
  %3708 = vmatpush.msra.mxu0 0.0
  %3709 = vmatpush.msra.mxu0 0.0
  %3710 = vmatpush.msra.mxu0 0.0
  %3711 = vmatpush.msra.mxu0 0.0
  %3712 = vmatpush.msra.mxu0 0.0
  %3713 = vmatpush.msra.mxu0 0.0
  %3714 = vmatpush.msra.mxu0 0.0
  %3715 = vmatpush.msra.mxu0 %v3642
  %3716 = vmatpush.msra.mxu0 %v3639
  %3717 = vmatmul.f32.gmra.mxu0 %v3650
  %v3718 = vpop.f32.mrf.mxu0
  %v3719 = vadd.f32 0.0, %v3718
  %3720 = vmatmul.f32.gmra.mxu0 %v3653
  %v3721 = vpop.f32.mrf.mxu0
  %v3722 = vadd.f32 0.0, %v3721
  %3723 = vdwg.mxu0
  %v3724 = vadd.f32 %v3611, %v3673
  %v3725 = vadd.f32 %v3612, %v3696
  %v3726 = vadd.f32 %v3613, %v3719
  %v3727 = vadd.f32 %v3614, %v3676
  %v3728 = vadd.f32 %v3615, %v3699
  %v3729 = vadd.f32 %v3616, %v3722
  %s3730 = scalar_lea.vmem %s1, 528
  %v3731 = vld [vmem:[%s3730] sm:$0xff]
  %v3732 = vld [vmem:[%s3730 + $0x8] sm:$0x3]
  %3733 = vrot.lane.b32.xlu0 %v28, 35
  %v3734 = vpop.permute.xlu0 %3733
  %3735 = vrot.lane.b32.xlu0 %v29, 35
  %v3736 = vpop.permute.xlu0 %3735
  %3737 = vrot.lane.b32.xlu0 %v30, 35
  %v3738 = vpop.permute.xlu0 %3737
  %3739 = vrot.lane.b32.xlu0 %v37, 35
  %v3740 = vpop.permute.xlu0 %3739
  %3741 = vrot.lane.b32.xlu0 %v31, 35
  %v3742 = vpop.permute.xlu0 %3741
  %3743 = vrot.lane.b32.xlu0 %v32, 35
  %v3744 = vpop.permute.xlu0 %3743
  %3745 = vrot.lane.b32.xlu0 %v33, 35
  %v3746 = vpop.permute.xlu0 %3745
  %3747 = vrot.lane.b32.xlu0 %v38, 35
  %v3748 = vpop.permute.xlu0 %3747
  %vm3749 = vcmask 285696
  %v3750 = vsel %vm3749, %v3734, %v3736
  %v3751 = vsel %vm3749, %v3736, %v3738
  %v3752 = vsel %vm3749, %v3738, %v3740
  %v3753 = vsel %vm3749, %v3742, %v3744
  %v3754 = vsel %vm3749, %v3744, %v3746
  %v3755 = vsel %vm3749, %v3746, %v3748
  %v3763 = vsel %vm76, %v3731, 0
  %v3766 = vsel %vm76, %v3732, 0
  %3768 = vmatpush.msra.mxu0 0.0
  %3769 = vmatpush.msra.mxu0 0.0
  %3770 = vmatpush.msra.mxu0 0.0
  %3771 = vmatpush.msra.mxu0 0.0
  %3772 = vmatpush.msra.mxu0 0.0
  %3773 = vmatpush.msra.mxu0 0.0
  %3774 = vmatpush.msra.mxu0 0.0
  %3775 = vmatpush.msra.mxu0 0.0
  %3776 = vmatpush.msra.mxu0 0.0
  %3777 = vmatpush.msra.mxu0 0.0
  %3778 = vmatpush.msra.mxu0 0.0
  %3779 = vmatpush.msra.mxu0 0.0
  %3780 = vmatpush.msra.mxu0 0.0
  %3781 = vmatpush.msra.mxu0 0.0
  %3782 = vmatpush.msra.mxu0 %v3753
  %3783 = vmatpush.msra.mxu0 %v3750
  %3784 = vmatmul.f32.gmra.mxu0 %v3763
  %v3785 = vpop.f32.mrf.mxu0
  %v3786 = vadd.f32 0.0, %v3785
  %3787 = vmatmul.f32.gmra.mxu0 %v3766
  %v3788 = vpop.f32.mrf.mxu0
  %v3789 = vadd.f32 0.0, %v3788
  %3790 = vdwg.mxu0
  %3791 = vmatpush.msra.mxu0 0.0
  %3792 = vmatpush.msra.mxu0 0.0
  %3793 = vmatpush.msra.mxu0 0.0
  %3794 = vmatpush.msra.mxu0 0.0
  %3795 = vmatpush.msra.mxu0 0.0
  %3796 = vmatpush.msra.mxu0 0.0
  %3797 = vmatpush.msra.mxu0 0.0
  %3798 = vmatpush.msra.mxu0 0.0
  %3799 = vmatpush.msra.mxu0 0.0
  %3800 = vmatpush.msra.mxu0 0.0
  %3801 = vmatpush.msra.mxu0 0.0
  %3802 = vmatpush.msra.mxu0 0.0
  %3803 = vmatpush.msra.mxu0 0.0
  %3804 = vmatpush.msra.mxu0 0.0
  %3805 = vmatpush.msra.mxu0 %v3754
  %3806 = vmatpush.msra.mxu0 %v3751
  %3807 = vmatmul.f32.gmra.mxu0 %v3763
  %v3808 = vpop.f32.mrf.mxu0
  %v3809 = vadd.f32 0.0, %v3808
  %3810 = vmatmul.f32.gmra.mxu0 %v3766
  %v3811 = vpop.f32.mrf.mxu0
  %v3812 = vadd.f32 0.0, %v3811
  %3813 = vdwg.mxu0
  %3814 = vmatpush.msra.mxu0 0.0
  %3815 = vmatpush.msra.mxu0 0.0
  %3816 = vmatpush.msra.mxu0 0.0
  %3817 = vmatpush.msra.mxu0 0.0
  %3818 = vmatpush.msra.mxu0 0.0
  %3819 = vmatpush.msra.mxu0 0.0
  %3820 = vmatpush.msra.mxu0 0.0
  %3821 = vmatpush.msra.mxu0 0.0
  %3822 = vmatpush.msra.mxu0 0.0
  %3823 = vmatpush.msra.mxu0 0.0
  %3824 = vmatpush.msra.mxu0 0.0
  %3825 = vmatpush.msra.mxu0 0.0
  %3826 = vmatpush.msra.mxu0 0.0
  %3827 = vmatpush.msra.mxu0 0.0
  %3828 = vmatpush.msra.mxu0 %v3755
  %3829 = vmatpush.msra.mxu0 %v3752
  %3830 = vmatmul.f32.gmra.mxu0 %v3763
  %v3831 = vpop.f32.mrf.mxu0
  %v3832 = vadd.f32 0.0, %v3831
  %3833 = vmatmul.f32.gmra.mxu0 %v3766
  %v3834 = vpop.f32.mrf.mxu0
  %v3835 = vadd.f32 0.0, %v3834
  %3836 = vdwg.mxu0
  %v3837 = vadd.f32 %v3724, %v3786
  %v3838 = vadd.f32 %v3725, %v3809
  %v3839 = vadd.f32 %v3726, %v3832
  %v3840 = vadd.f32 %v3727, %v3789
  %v3841 = vadd.f32 %v3728, %v3812
  %v3842 = vadd.f32 %v3729, %v3835
  %s3843 = scalar_lea.vmem %s1, 544
  %v3844 = vld [vmem:[%s3843] sm:$0xff]
  %v3845 = vld [vmem:[%s3843 + $0x8] sm:$0x3]
  %3846 = vrot.lane.b32.xlu0 %v28, 34
  %v3847 = vpop.permute.xlu0 %3846
  %3848 = vrot.lane.b32.xlu0 %v29, 34
  %v3849 = vpop.permute.xlu0 %3848
  %3850 = vrot.lane.b32.xlu0 %v30, 34
  %v3851 = vpop.permute.xlu0 %3850
  %3852 = vrot.lane.b32.xlu0 %v37, 34
  %v3853 = vpop.permute.xlu0 %3852
  %3854 = vrot.lane.b32.xlu0 %v31, 34
  %v3855 = vpop.permute.xlu0 %3854
  %3856 = vrot.lane.b32.xlu0 %v32, 34
  %v3857 = vpop.permute.xlu0 %3856
  %3858 = vrot.lane.b32.xlu0 %v33, 34
  %v3859 = vpop.permute.xlu0 %3858
  %3860 = vrot.lane.b32.xlu0 %v38, 34
  %v3861 = vpop.permute.xlu0 %3860
  %vm3862 = vcmask 277504
  %v3863 = vsel %vm3862, %v3847, %v3849
  %v3864 = vsel %vm3862, %v3849, %v3851
  %v3865 = vsel %vm3862, %v3851, %v3853
  %v3866 = vsel %vm3862, %v3855, %v3857
  %v3867 = vsel %vm3862, %v3857, %v3859
  %v3868 = vsel %vm3862, %v3859, %v3861
  %v3876 = vsel %vm76, %v3844, 0
  %v3879 = vsel %vm76, %v3845, 0
  %3881 = vmatpush.msra.mxu0 0.0
  %3882 = vmatpush.msra.mxu0 0.0
  %3883 = vmatpush.msra.mxu0 0.0
  %3884 = vmatpush.msra.mxu0 0.0
  %3885 = vmatpush.msra.mxu0 0.0
  %3886 = vmatpush.msra.mxu0 0.0
  %3887 = vmatpush.msra.mxu0 0.0
  %3888 = vmatpush.msra.mxu0 0.0
  %3889 = vmatpush.msra.mxu0 0.0
  %3890 = vmatpush.msra.mxu0 0.0
  %3891 = vmatpush.msra.mxu0 0.0
  %3892 = vmatpush.msra.mxu0 0.0
  %3893 = vmatpush.msra.mxu0 0.0
  %3894 = vmatpush.msra.mxu0 0.0
  %3895 = vmatpush.msra.mxu0 %v3866
  %3896 = vmatpush.msra.mxu0 %v3863
  %3897 = vmatmul.f32.gmra.mxu0 %v3876
  %v3898 = vpop.f32.mrf.mxu0
  %v3899 = vadd.f32 0.0, %v3898
  %3900 = vmatmul.f32.gmra.mxu0 %v3879
  %v3901 = vpop.f32.mrf.mxu0
  %v3902 = vadd.f32 0.0, %v3901
  %3903 = vdwg.mxu0
  %3904 = vmatpush.msra.mxu0 0.0
  %3905 = vmatpush.msra.mxu0 0.0
  %3906 = vmatpush.msra.mxu0 0.0
  %3907 = vmatpush.msra.mxu0 0.0
  %3908 = vmatpush.msra.mxu0 0.0
  %3909 = vmatpush.msra.mxu0 0.0
  %3910 = vmatpush.msra.mxu0 0.0
  %3911 = vmatpush.msra.mxu0 0.0
  %3912 = vmatpush.msra.mxu0 0.0
  %3913 = vmatpush.msra.mxu0 0.0
  %3914 = vmatpush.msra.mxu0 0.0
  %3915 = vmatpush.msra.mxu0 0.0
  %3916 = vmatpush.msra.mxu0 0.0
  %3917 = vmatpush.msra.mxu0 0.0
  %3918 = vmatpush.msra.mxu0 %v3867
  %3919 = vmatpush.msra.mxu0 %v3864
  %3920 = vmatmul.f32.gmra.mxu0 %v3876
  %v3921 = vpop.f32.mrf.mxu0
  %v3922 = vadd.f32 0.0, %v3921
  %3923 = vmatmul.f32.gmra.mxu0 %v3879
  %v3924 = vpop.f32.mrf.mxu0
  %v3925 = vadd.f32 0.0, %v3924
  %3926 = vdwg.mxu0
  %3927 = vmatpush.msra.mxu0 0.0
  %3928 = vmatpush.msra.mxu0 0.0
  %3929 = vmatpush.msra.mxu0 0.0
  %3930 = vmatpush.msra.mxu0 0.0
  %3931 = vmatpush.msra.mxu0 0.0
  %3932 = vmatpush.msra.mxu0 0.0
  %3933 = vmatpush.msra.mxu0 0.0
  %3934 = vmatpush.msra.mxu0 0.0
  %3935 = vmatpush.msra.mxu0 0.0
  %3936 = vmatpush.msra.mxu0 0.0
  %3937 = vmatpush.msra.mxu0 0.0
  %3938 = vmatpush.msra.mxu0 0.0
  %3939 = vmatpush.msra.mxu0 0.0
  %3940 = vmatpush.msra.mxu0 0.0
  %3941 = vmatpush.msra.mxu0 %v3868
  %3942 = vmatpush.msra.mxu0 %v3865
  %3943 = vmatmul.f32.gmra.mxu0 %v3876
  %v3944 = vpop.f32.mrf.mxu0
  %v3945 = vadd.f32 0.0, %v3944
  %3946 = vmatmul.f32.gmra.mxu0 %v3879
  %v3947 = vpop.f32.mrf.mxu0
  %v3948 = vadd.f32 0.0, %v3947
  %3949 = vdwg.mxu0
  %v3950 = vadd.f32 %v3837, %v3899
  %v3951 = vadd.f32 %v3838, %v3922
  %v3952 = vadd.f32 %v3839, %v3945
  %v3953 = vadd.f32 %v3840, %v3902
  %v3954 = vadd.f32 %v3841, %v3925
  %v3955 = vadd.f32 %v3842, %v3948
  %s3956 = scalar_lea.vmem %s1, 560
  %v3957 = vld [vmem:[%s3956] sm:$0xff]
  %v3958 = vld [vmem:[%s3956 + $0x8] sm:$0x3]
  %3959 = vrot.lane.b32.xlu0 %v28, 18
  %v3960 = vpop.permute.xlu0 %3959
  %3961 = vrot.lane.b32.xlu0 %v29, 18
  %v3962 = vpop.permute.xlu0 %3961
  %3963 = vrot.lane.b32.xlu0 %v30, 18
  %v3964 = vpop.permute.xlu0 %3963
  %3965 = vrot.lane.b32.xlu0 %v37, 18
  %v3966 = vpop.permute.xlu0 %3965
  %3967 = vrot.lane.b32.xlu0 %v31, 18
  %v3968 = vpop.permute.xlu0 %3967
  %3969 = vrot.lane.b32.xlu0 %v32, 18
  %v3970 = vpop.permute.xlu0 %3969
  %3971 = vrot.lane.b32.xlu0 %v33, 18
  %v3972 = vpop.permute.xlu0 %3971
  %3973 = vrot.lane.b32.xlu0 %v38, 18
  %v3974 = vpop.permute.xlu0 %3973
  %vm3975 = vcmask 146432
  %v3976 = vsel %vm3975, %v3960, %v3962
  %v3977 = vsel %vm3975, %v3962, %v3964
  %v3978 = vsel %vm3975, %v3964, %v3966
  %v3979 = vsel %vm3975, %v3968, %v3970
  %v3980 = vsel %vm3975, %v3970, %v3972
  %v3981 = vsel %vm3975, %v3972, %v3974
  %v3989 = vsel %vm76, %v3957, 0
  %v3992 = vsel %vm76, %v3958, 0
  %3994 = vmatpush.msra.mxu0 0.0
  %3995 = vmatpush.msra.mxu0 0.0
  %3996 = vmatpush.msra.mxu0 0.0
  %3997 = vmatpush.msra.mxu0 0.0
  %3998 = vmatpush.msra.mxu0 0.0
  %3999 = vmatpush.msra.mxu0 0.0
  %4000 = vmatpush.msra.mxu0 0.0
  %4001 = vmatpush.msra.mxu0 0.0
  %4002 = vmatpush.msra.mxu0 0.0
  %4003 = vmatpush.msra.mxu0 0.0
  %4004 = vmatpush.msra.mxu0 0.0
  %4005 = vmatpush.msra.mxu0 0.0
  %4006 = vmatpush.msra.mxu0 0.0
  %4007 = vmatpush.msra.mxu0 0.0
  %4008 = vmatpush.msra.mxu0 %v3979
  %4009 = vmatpush.msra.mxu0 %v3976
  %4010 = vmatmul.f32.gmra.mxu0 %v3989
  %v4011 = vpop.f32.mrf.mxu0
  %v4012 = vadd.f32 0.0, %v4011
  %4013 = vmatmul.f32.gmra.mxu0 %v3992
  %v4014 = vpop.f32.mrf.mxu0
  %v4015 = vadd.f32 0.0, %v4014
  %4016 = vdwg.mxu0
  %4017 = vmatpush.msra.mxu0 0.0
  %4018 = vmatpush.msra.mxu0 0.0
  %4019 = vmatpush.msra.mxu0 0.0
  %4020 = vmatpush.msra.mxu0 0.0
  %4021 = vmatpush.msra.mxu0 0.0
  %4022 = vmatpush.msra.mxu0 0.0
  %4023 = vmatpush.msra.mxu0 0.0
  %4024 = vmatpush.msra.mxu0 0.0
  %4025 = vmatpush.msra.mxu0 0.0
  %4026 = vmatpush.msra.mxu0 0.0
  %4027 = vmatpush.msra.mxu0 0.0
  %4028 = vmatpush.msra.mxu0 0.0
  %4029 = vmatpush.msra.mxu0 0.0
  %4030 = vmatpush.msra.mxu0 0.0
  %4031 = vmatpush.msra.mxu0 %v3980
  %4032 = vmatpush.msra.mxu0 %v3977
  %4033 = vmatmul.f32.gmra.mxu0 %v3989
  %v4034 = vpop.f32.mrf.mxu0
  %v4035 = vadd.f32 0.0, %v4034
  %4036 = vmatmul.f32.gmra.mxu0 %v3992
  %v4037 = vpop.f32.mrf.mxu0
  %v4038 = vadd.f32 0.0, %v4037
  %4039 = vdwg.mxu0
  %4040 = vmatpush.msra.mxu0 0.0
  %4041 = vmatpush.msra.mxu0 0.0
  %4042 = vmatpush.msra.mxu0 0.0
  %4043 = vmatpush.msra.mxu0 0.0
  %4044 = vmatpush.msra.mxu0 0.0
  %4045 = vmatpush.msra.mxu0 0.0
  %4046 = vmatpush.msra.mxu0 0.0
  %4047 = vmatpush.msra.mxu0 0.0
  %4048 = vmatpush.msra.mxu0 0.0
  %4049 = vmatpush.msra.mxu0 0.0
  %4050 = vmatpush.msra.mxu0 0.0
  %4051 = vmatpush.msra.mxu0 0.0
  %4052 = vmatpush.msra.mxu0 0.0
  %4053 = vmatpush.msra.mxu0 0.0
  %4054 = vmatpush.msra.mxu0 %v3981
  %4055 = vmatpush.msra.mxu0 %v3978
  %4056 = vmatmul.f32.gmra.mxu0 %v3989
  %v4057 = vpop.f32.mrf.mxu0
  %v4058 = vadd.f32 0.0, %v4057
  %4059 = vmatmul.f32.gmra.mxu0 %v3992
  %v4060 = vpop.f32.mrf.mxu0
  %v4061 = vadd.f32 0.0, %v4060
  %4062 = vdwg.mxu0
  %v4063 = vadd.f32 %v3950, %v4012
  %v4064 = vadd.f32 %v3951, %v4035
  %v4065 = vadd.f32 %v3952, %v4058
  %v4066 = vadd.f32 %v3953, %v4015
  %v4067 = vadd.f32 %v3954, %v4038
  %v4068 = vadd.f32 %v3955, %v4061
  %s4069 = scalar_lea.vmem %s1, 576
  %v4070 = vld [vmem:[%s4069] sm:$0xff]
  %v4071 = vld [vmem:[%s4069 + $0x8] sm:$0x3]
  %4072 = vrot.lane.b32.xlu0 %v28, 17
  %v4073 = vpop.permute.xlu0 %4072
  %4074 = vrot.lane.b32.xlu0 %v29, 17
  %v4075 = vpop.permute.xlu0 %4074
  %4076 = vrot.lane.b32.xlu0 %v30, 17
  %v4077 = vpop.permute.xlu0 %4076
  %4078 = vrot.lane.b32.xlu0 %v37, 17
  %v4079 = vpop.permute.xlu0 %4078
  %4080 = vrot.lane.b32.xlu0 %v31, 17
  %v4081 = vpop.permute.xlu0 %4080
  %4082 = vrot.lane.b32.xlu0 %v32, 17
  %v4083 = vpop.permute.xlu0 %4082
  %4084 = vrot.lane.b32.xlu0 %v33, 17
  %v4085 = vpop.permute.xlu0 %4084
  %4086 = vrot.lane.b32.xlu0 %v38, 17
  %v4087 = vpop.permute.xlu0 %4086
  %vm4088 = vcmask 138240
  %v4089 = vsel %vm4088, %v4073, %v4075
  %v4090 = vsel %vm4088, %v4075, %v4077
  %v4091 = vsel %vm4088, %v4077, %v4079
  %v4092 = vsel %vm4088, %v4081, %v4083
  %v4093 = vsel %vm4088, %v4083, %v4085
  %v4094 = vsel %vm4088, %v4085, %v4087
  %v4102 = vsel %vm76, %v4070, 0
  %v4105 = vsel %vm76, %v4071, 0
  %4107 = vmatpush.msra.mxu0 0.0
  %4108 = vmatpush.msra.mxu0 0.0
  %4109 = vmatpush.msra.mxu0 0.0
  %4110 = vmatpush.msra.mxu0 0.0
  %4111 = vmatpush.msra.mxu0 0.0
  %4112 = vmatpush.msra.mxu0 0.0
  %4113 = vmatpush.msra.mxu0 0.0
  %4114 = vmatpush.msra.mxu0 0.0
  %4115 = vmatpush.msra.mxu0 0.0
  %4116 = vmatpush.msra.mxu0 0.0
  %4117 = vmatpush.msra.mxu0 0.0
  %4118 = vmatpush.msra.mxu0 0.0
  %4119 = vmatpush.msra.mxu0 0.0
  %4120 = vmatpush.msra.mxu0 0.0
  %4121 = vmatpush.msra.mxu0 %v4092
  %4122 = vmatpush.msra.mxu0 %v4089
  %4123 = vmatmul.f32.gmra.mxu0 %v4102
  %v4124 = vpop.f32.mrf.mxu0
  %v4125 = vadd.f32 0.0, %v4124
  %4126 = vmatmul.f32.gmra.mxu0 %v4105
  %v4127 = vpop.f32.mrf.mxu0
  %v4128 = vadd.f32 0.0, %v4127
  %4129 = vdwg.mxu0
  %4130 = vmatpush.msra.mxu0 0.0
  %4131 = vmatpush.msra.mxu0 0.0
  %4132 = vmatpush.msra.mxu0 0.0
  %4133 = vmatpush.msra.mxu0 0.0
  %4134 = vmatpush.msra.mxu0 0.0
  %4135 = vmatpush.msra.mxu0 0.0
  %4136 = vmatpush.msra.mxu0 0.0
  %4137 = vmatpush.msra.mxu0 0.0
  %4138 = vmatpush.msra.mxu0 0.0
  %4139 = vmatpush.msra.mxu0 0.0
  %4140 = vmatpush.msra.mxu0 0.0
  %4141 = vmatpush.msra.mxu0 0.0
  %4142 = vmatpush.msra.mxu0 0.0
  %4143 = vmatpush.msra.mxu0 0.0
  %4144 = vmatpush.msra.mxu0 %v4093
  %4145 = vmatpush.msra.mxu0 %v4090
  %4146 = vmatmul.f32.gmra.mxu0 %v4102
  %v4147 = vpop.f32.mrf.mxu0
  %v4148 = vadd.f32 0.0, %v4147
  %4149 = vmatmul.f32.gmra.mxu0 %v4105
  %v4150 = vpop.f32.mrf.mxu0
  %v4151 = vadd.f32 0.0, %v4150
  %4152 = vdwg.mxu0
  %4153 = vmatpush.msra.mxu0 0.0
  %4154 = vmatpush.msra.mxu0 0.0
  %4155 = vmatpush.msra.mxu0 0.0
  %4156 = vmatpush.msra.mxu0 0.0
  %4157 = vmatpush.msra.mxu0 0.0
  %4158 = vmatpush.msra.mxu0 0.0
  %4159 = vmatpush.msra.mxu0 0.0
  %4160 = vmatpush.msra.mxu0 0.0
  %4161 = vmatpush.msra.mxu0 0.0
  %4162 = vmatpush.msra.mxu0 0.0
  %4163 = vmatpush.msra.mxu0 0.0
  %4164 = vmatpush.msra.mxu0 0.0
  %4165 = vmatpush.msra.mxu0 0.0
  %4166 = vmatpush.msra.mxu0 0.0
  %4167 = vmatpush.msra.mxu0 %v4094
  %4168 = vmatpush.msra.mxu0 %v4091
  %4169 = vmatmul.f32.gmra.mxu0 %v4102
  %v4170 = vpop.f32.mrf.mxu0
  %v4171 = vadd.f32 0.0, %v4170
  %4172 = vmatmul.f32.gmra.mxu0 %v4105
  %v4173 = vpop.f32.mrf.mxu0
  %v4174 = vadd.f32 0.0, %v4173
  %4175 = vdwg.mxu0
  %v4176 = vadd.f32 %v4063, %v4125
  %v4177 = vadd.f32 %v4064, %v4148
  %v4178 = vadd.f32 %v4065, %v4171
  %v4179 = vadd.f32 %v4066, %v4128
  %v4180 = vadd.f32 %v4067, %v4151
  %v4181 = vadd.f32 %v4068, %v4174
  %s4182 = scalar_lea.vmem %s1, 592
  %v4183 = vld [vmem:[%s4182] sm:$0xff]
  %v4184 = vld [vmem:[%s4182 + $0x8] sm:$0x3]
  %4185 = vrot.lane.b32.xlu0 %v28, 16
  %v4186 = vpop.permute.xlu0 %4185
  %4187 = vrot.lane.b32.xlu0 %v29, 16
  %v4188 = vpop.permute.xlu0 %4187
  %4189 = vrot.lane.b32.xlu0 %v30, 16
  %v4190 = vpop.permute.xlu0 %4189
  %4191 = vrot.lane.b32.xlu0 %v37, 16
  %v4192 = vpop.permute.xlu0 %4191
  %4193 = vrot.lane.b32.xlu0 %v31, 16
  %v4194 = vpop.permute.xlu0 %4193
  %4195 = vrot.lane.b32.xlu0 %v32, 16
  %v4196 = vpop.permute.xlu0 %4195
  %4197 = vrot.lane.b32.xlu0 %v33, 16
  %v4198 = vpop.permute.xlu0 %4197
  %4199 = vrot.lane.b32.xlu0 %v38, 16
  %v4200 = vpop.permute.xlu0 %4199
  %v4201 = vsel %vm76, %v4186, %v4188
  %v4202 = vsel %vm76, %v4188, %v4190
  %v4203 = vsel %vm76, %v4190, %v4192
  %v4204 = vsel %vm76, %v4194, %v4196
  %v4205 = vsel %vm76, %v4196, %v4198
  %v4206 = vsel %vm76, %v4198, %v4200
  %v4214 = vsel %vm76, %v4183, 0
  %v4217 = vsel %vm76, %v4184, 0
  %4219 = vmatpush.msra.mxu0 0.0
  %4220 = vmatpush.msra.mxu0 0.0
  %4221 = vmatpush.msra.mxu0 0.0
  %4222 = vmatpush.msra.mxu0 0.0
  %4223 = vmatpush.msra.mxu0 0.0
  %4224 = vmatpush.msra.mxu0 0.0
  %4225 = vmatpush.msra.mxu0 0.0
  %4226 = vmatpush.msra.mxu0 0.0
  %4227 = vmatpush.msra.mxu0 0.0
  %4228 = vmatpush.msra.mxu0 0.0
  %4229 = vmatpush.msra.mxu0 0.0
  %4230 = vmatpush.msra.mxu0 0.0
  %4231 = vmatpush.msra.mxu0 0.0
  %4232 = vmatpush.msra.mxu0 0.0
  %4233 = vmatpush.msra.mxu0 %v4204
  %4234 = vmatpush.msra.mxu0 %v4201
  %4235 = vmatmul.f32.gmra.mxu0 %v4214
  %v4236 = vpop.f32.mrf.mxu0
  %v4237 = vadd.f32 0.0, %v4236
  %4238 = vmatmul.f32.gmra.mxu0 %v4217
  %v4239 = vpop.f32.mrf.mxu0
  %v4240 = vadd.f32 0.0, %v4239
  %4241 = vdwg.mxu0
  %4242 = vmatpush.msra.mxu0 0.0
  %4243 = vmatpush.msra.mxu0 0.0
  %4244 = vmatpush.msra.mxu0 0.0
  %4245 = vmatpush.msra.mxu0 0.0
  %4246 = vmatpush.msra.mxu0 0.0
  %4247 = vmatpush.msra.mxu0 0.0
  %4248 = vmatpush.msra.mxu0 0.0
  %4249 = vmatpush.msra.mxu0 0.0
  %4250 = vmatpush.msra.mxu0 0.0
  %4251 = vmatpush.msra.mxu0 0.0
  %4252 = vmatpush.msra.mxu0 0.0
  %4253 = vmatpush.msra.mxu0 0.0
  %4254 = vmatpush.msra.mxu0 0.0
  %4255 = vmatpush.msra.mxu0 0.0
  %4256 = vmatpush.msra.mxu0 %v4205
  %4257 = vmatpush.msra.mxu0 %v4202
  %4258 = vmatmul.f32.gmra.mxu0 %v4214
  %v4259 = vpop.f32.mrf.mxu0
  %v4260 = vadd.f32 0.0, %v4259
  %4261 = vmatmul.f32.gmra.mxu0 %v4217
  %v4262 = vpop.f32.mrf.mxu0
  %v4263 = vadd.f32 0.0, %v4262
  %4264 = vdwg.mxu0
  %4265 = vmatpush.msra.mxu0 0.0
  %4266 = vmatpush.msra.mxu0 0.0
  %4267 = vmatpush.msra.mxu0 0.0
  %4268 = vmatpush.msra.mxu0 0.0
  %4269 = vmatpush.msra.mxu0 0.0
  %4270 = vmatpush.msra.mxu0 0.0
  %4271 = vmatpush.msra.mxu0 0.0
  %4272 = vmatpush.msra.mxu0 0.0
  %4273 = vmatpush.msra.mxu0 0.0
  %4274 = vmatpush.msra.mxu0 0.0
  %4275 = vmatpush.msra.mxu0 0.0
  %4276 = vmatpush.msra.mxu0 0.0
  %4277 = vmatpush.msra.mxu0 0.0
  %4278 = vmatpush.msra.mxu0 0.0
  %4279 = vmatpush.msra.mxu0 %v4206
  %4280 = vmatpush.msra.mxu0 %v4203
  %4281 = vmatmul.f32.gmra.mxu0 %v4214
  %v4282 = vpop.f32.mrf.mxu0
  %v4283 = vadd.f32 0.0, %v4282
  %4284 = vmatmul.f32.gmra.mxu0 %v4217
  %v4285 = vpop.f32.mrf.mxu0
  %v4286 = vadd.f32 0.0, %v4285
  %4287 = vdwg.mxu0
  %v4288 = vadd.f32 %v4176, %v4237
  %v4289 = vadd.f32 %v4177, %v4260
  %v4290 = vadd.f32 %v4178, %v4283
  %v4291 = vadd.f32 %v4179, %v4240
  %v4292 = vadd.f32 %v4180, %v4263
  %v4293 = vadd.f32 %v4181, %v4286
  %s4294 = scalar_lea.vmem %s1, 608
  %v4295 = vld [vmem:[%s4294] sm:$0xff]
  %v4296 = vld [vmem:[%s4294 + $0x8] sm:$0x3]
  %4297 = vrot.lane.b32.xlu0 %v28, 15
  %v4298 = vpop.permute.xlu0 %4297
  %4299 = vrot.lane.b32.xlu0 %v29, 15
  %v4300 = vpop.permute.xlu0 %4299
  %4301 = vrot.lane.b32.xlu0 %v30, 15
  %v4302 = vpop.permute.xlu0 %4301
  %4303 = vrot.lane.b32.xlu0 %v37, 15
  %v4304 = vpop.permute.xlu0 %4303
  %4305 = vrot.lane.b32.xlu0 %v31, 15
  %v4306 = vpop.permute.xlu0 %4305
  %4307 = vrot.lane.b32.xlu0 %v32, 15
  %v4308 = vpop.permute.xlu0 %4307
  %4309 = vrot.lane.b32.xlu0 %v33, 15
  %v4310 = vpop.permute.xlu0 %4309
  %4311 = vrot.lane.b32.xlu0 %v38, 15
  %v4312 = vpop.permute.xlu0 %4311
  %vm4313 = vcmask 121856
  %v4314 = vsel %vm4313, %v4298, %v4300
  %v4315 = vsel %vm4313, %v4300, %v4302
  %v4316 = vsel %vm4313, %v4302, %v4304
  %v4317 = vsel %vm4313, %v4306, %v4308
  %v4318 = vsel %vm4313, %v4308, %v4310
  %v4319 = vsel %vm4313, %v4310, %v4312
  %v4327 = vsel %vm76, %v4295, 0
  %v4330 = vsel %vm76, %v4296, 0
  %4332 = vmatpush.msra.mxu0 0.0
  %4333 = vmatpush.msra.mxu0 0.0
  %4334 = vmatpush.msra.mxu0 0.0
  %4335 = vmatpush.msra.mxu0 0.0
  %4336 = vmatpush.msra.mxu0 0.0
  %4337 = vmatpush.msra.mxu0 0.0
  %4338 = vmatpush.msra.mxu0 0.0
  %4339 = vmatpush.msra.mxu0 0.0
  %4340 = vmatpush.msra.mxu0 0.0
  %4341 = vmatpush.msra.mxu0 0.0
  %4342 = vmatpush.msra.mxu0 0.0
  %4343 = vmatpush.msra.mxu0 0.0
  %4344 = vmatpush.msra.mxu0 0.0
  %4345 = vmatpush.msra.mxu0 0.0
  %4346 = vmatpush.msra.mxu0 %v4317
  %4347 = vmatpush.msra.mxu0 %v4314
  %4348 = vmatmul.f32.gmra.mxu0 %v4327
  %v4349 = vpop.f32.mrf.mxu0
  %v4350 = vadd.f32 0.0, %v4349
  %4351 = vmatmul.f32.gmra.mxu0 %v4330
  %v4352 = vpop.f32.mrf.mxu0
  %v4353 = vadd.f32 0.0, %v4352
  %4354 = vdwg.mxu0
  %4355 = vmatpush.msra.mxu0 0.0
  %4356 = vmatpush.msra.mxu0 0.0
  %4357 = vmatpush.msra.mxu0 0.0
  %4358 = vmatpush.msra.mxu0 0.0
  %4359 = vmatpush.msra.mxu0 0.0
  %4360 = vmatpush.msra.mxu0 0.0
  %4361 = vmatpush.msra.mxu0 0.0
  %4362 = vmatpush.msra.mxu0 0.0
  %4363 = vmatpush.msra.mxu0 0.0
  %4364 = vmatpush.msra.mxu0 0.0
  %4365 = vmatpush.msra.mxu0 0.0
  %4366 = vmatpush.msra.mxu0 0.0
  %4367 = vmatpush.msra.mxu0 0.0
  %4368 = vmatpush.msra.mxu0 0.0
  %4369 = vmatpush.msra.mxu0 %v4318
  %4370 = vmatpush.msra.mxu0 %v4315
  %4371 = vmatmul.f32.gmra.mxu0 %v4327
  %v4372 = vpop.f32.mrf.mxu0
  %v4373 = vadd.f32 0.0, %v4372
  %4374 = vmatmul.f32.gmra.mxu0 %v4330
  %v4375 = vpop.f32.mrf.mxu0
  %v4376 = vadd.f32 0.0, %v4375
  %4377 = vdwg.mxu0
  %4378 = vmatpush.msra.mxu0 0.0
  %4379 = vmatpush.msra.mxu0 0.0
  %4380 = vmatpush.msra.mxu0 0.0
  %4381 = vmatpush.msra.mxu0 0.0
  %4382 = vmatpush.msra.mxu0 0.0
  %4383 = vmatpush.msra.mxu0 0.0
  %4384 = vmatpush.msra.mxu0 0.0
  %4385 = vmatpush.msra.mxu0 0.0
  %4386 = vmatpush.msra.mxu0 0.0
  %4387 = vmatpush.msra.mxu0 0.0
  %4388 = vmatpush.msra.mxu0 0.0
  %4389 = vmatpush.msra.mxu0 0.0
  %4390 = vmatpush.msra.mxu0 0.0
  %4391 = vmatpush.msra.mxu0 0.0
  %4392 = vmatpush.msra.mxu0 %v4319
  %4393 = vmatpush.msra.mxu0 %v4316
  %4394 = vmatmul.f32.gmra.mxu0 %v4327
  %v4395 = vpop.f32.mrf.mxu0
  %v4396 = vadd.f32 0.0, %v4395
  %4397 = vmatmul.f32.gmra.mxu0 %v4330
  %v4398 = vpop.f32.mrf.mxu0
  %v4399 = vadd.f32 0.0, %v4398
  %4400 = vdwg.mxu0
  %v4401 = vadd.f32 %v4288, %v4350
  %v4402 = vadd.f32 %v4289, %v4373
  %v4403 = vadd.f32 %v4290, %v4396
  %v4404 = vadd.f32 %v4291, %v4353
  %v4405 = vadd.f32 %v4292, %v4376
  %v4406 = vadd.f32 %v4293, %v4399
  %s4407 = scalar_lea.vmem %s1, 624
  %v4408 = vld [vmem:[%s4407] sm:$0xff]
  %v4409 = vld [vmem:[%s4407 + $0x8] sm:$0x3]
  %4410 = vrot.lane.b32.xlu0 %v28, 14
  %v4411 = vpop.permute.xlu0 %4410
  %4412 = vrot.lane.b32.xlu0 %v29, 14
  %v4413 = vpop.permute.xlu0 %4412
  %4414 = vrot.lane.b32.xlu0 %v30, 14
  %v4415 = vpop.permute.xlu0 %4414
  %4416 = vrot.lane.b32.xlu0 %v37, 14
  %v4417 = vpop.permute.xlu0 %4416
  %4418 = vrot.lane.b32.xlu0 %v31, 14
  %v4419 = vpop.permute.xlu0 %4418
  %4420 = vrot.lane.b32.xlu0 %v32, 14
  %v4421 = vpop.permute.xlu0 %4420
  %4422 = vrot.lane.b32.xlu0 %v33, 14
  %v4423 = vpop.permute.xlu0 %4422
  %4424 = vrot.lane.b32.xlu0 %v38, 14
  %v4425 = vpop.permute.xlu0 %4424
  %vm4426 = vcmask 113664
  %v4427 = vsel %vm4426, %v4411, %v4413
  %v4428 = vsel %vm4426, %v4413, %v4415
  %v4429 = vsel %vm4426, %v4415, %v4417
  %v4430 = vsel %vm4426, %v4419, %v4421
  %v4431 = vsel %vm4426, %v4421, %v4423
  %v4432 = vsel %vm4426, %v4423, %v4425
  %v4440 = vsel %vm76, %v4408, 0
  %v4443 = vsel %vm76, %v4409, 0
  %4445 = vmatpush.msra.mxu0 0.0
  %4446 = vmatpush.msra.mxu0 0.0
  %4447 = vmatpush.msra.mxu0 0.0
  %4448 = vmatpush.msra.mxu0 0.0
  %4449 = vmatpush.msra.mxu0 0.0
  %4450 = vmatpush.msra.mxu0 0.0
  %4451 = vmatpush.msra.mxu0 0.0
  %4452 = vmatpush.msra.mxu0 0.0
  %4453 = vmatpush.msra.mxu0 0.0
  %4454 = vmatpush.msra.mxu0 0.0
  %4455 = vmatpush.msra.mxu0 0.0
  %4456 = vmatpush.msra.mxu0 0.0
  %4457 = vmatpush.msra.mxu0 0.0
  %4458 = vmatpush.msra.mxu0 0.0
  %4459 = vmatpush.msra.mxu0 %v4430
  %4460 = vmatpush.msra.mxu0 %v4427
  %4461 = vmatmul.f32.gmra.mxu0 %v4440
  %v4462 = vpop.f32.mrf.mxu0
  %v4463 = vadd.f32 0.0, %v4462
  %4464 = vmatmul.f32.gmra.mxu0 %v4443
  %v4465 = vpop.f32.mrf.mxu0
  %v4466 = vadd.f32 0.0, %v4465
  %4467 = vdwg.mxu0
  %4468 = vmatpush.msra.mxu0 0.0
  %4469 = vmatpush.msra.mxu0 0.0
  %4470 = vmatpush.msra.mxu0 0.0
  %4471 = vmatpush.msra.mxu0 0.0
  %4472 = vmatpush.msra.mxu0 0.0
  %4473 = vmatpush.msra.mxu0 0.0
  %4474 = vmatpush.msra.mxu0 0.0
  %4475 = vmatpush.msra.mxu0 0.0
  %4476 = vmatpush.msra.mxu0 0.0
  %4477 = vmatpush.msra.mxu0 0.0
  %4478 = vmatpush.msra.mxu0 0.0
  %4479 = vmatpush.msra.mxu0 0.0
  %4480 = vmatpush.msra.mxu0 0.0
  %4481 = vmatpush.msra.mxu0 0.0
  %4482 = vmatpush.msra.mxu0 %v4431
  %4483 = vmatpush.msra.mxu0 %v4428
  %4484 = vmatmul.f32.gmra.mxu0 %v4440
  %v4485 = vpop.f32.mrf.mxu0
  %v4486 = vadd.f32 0.0, %v4485
  %4487 = vmatmul.f32.gmra.mxu0 %v4443
  %v4488 = vpop.f32.mrf.mxu0
  %v4489 = vadd.f32 0.0, %v4488
  %4490 = vdwg.mxu0
  %4491 = vmatpush.msra.mxu0 0.0
  %4492 = vmatpush.msra.mxu0 0.0
  %4493 = vmatpush.msra.mxu0 0.0
  %4494 = vmatpush.msra.mxu0 0.0
  %4495 = vmatpush.msra.mxu0 0.0
  %4496 = vmatpush.msra.mxu0 0.0
  %4497 = vmatpush.msra.mxu0 0.0
  %4498 = vmatpush.msra.mxu0 0.0
  %4499 = vmatpush.msra.mxu0 0.0
  %4500 = vmatpush.msra.mxu0 0.0
  %4501 = vmatpush.msra.mxu0 0.0
  %4502 = vmatpush.msra.mxu0 0.0
  %4503 = vmatpush.msra.mxu0 0.0
  %4504 = vmatpush.msra.mxu0 0.0
  %4505 = vmatpush.msra.mxu0 %v4432
  %4506 = vmatpush.msra.mxu0 %v4429
  %4507 = vmatmul.f32.gmra.mxu0 %v4440
  %v4508 = vpop.f32.mrf.mxu0
  %v4509 = vadd.f32 0.0, %v4508
  %4510 = vmatmul.f32.gmra.mxu0 %v4443
  %v4511 = vpop.f32.mrf.mxu0
  %v4512 = vadd.f32 0.0, %v4511
  %4513 = vdwg.mxu0
  %v4514 = vadd.f32 %v4401, %v4463
  %v4515 = vadd.f32 %v4402, %v4486
  %v4516 = vadd.f32 %v4403, %v4509
  %v4517 = vadd.f32 %v4404, %v4466
  %v4518 = vadd.f32 %v4405, %v4489
  %v4519 = vadd.f32 %v4406, %v4512
  %s4520 = scalar_lea.vmem %s1, 640
  %v4521 = vld [vmem:[%s4520] sm:$0xff]
  %v4522 = vld [vmem:[%s4520 + $0x8] sm:$0x3]
  %4523 = vrot.lane.b32.xlu0 %v28, 13
  %v4524 = vpop.permute.xlu0 %4523
  %4525 = vrot.lane.b32.xlu0 %v29, 13
  %v4526 = vpop.permute.xlu0 %4525
  %4527 = vrot.lane.b32.xlu0 %v30, 13
  %v4528 = vpop.permute.xlu0 %4527
  %4529 = vrot.lane.b32.xlu0 %v37, 13
  %v4530 = vpop.permute.xlu0 %4529
  %4531 = vrot.lane.b32.xlu0 %v31, 13
  %v4532 = vpop.permute.xlu0 %4531
  %4533 = vrot.lane.b32.xlu0 %v32, 13
  %v4534 = vpop.permute.xlu0 %4533
  %4535 = vrot.lane.b32.xlu0 %v33, 13
  %v4536 = vpop.permute.xlu0 %4535
  %4537 = vrot.lane.b32.xlu0 %v38, 13
  %v4538 = vpop.permute.xlu0 %4537
  %vm4539 = vcmask 105472
  %v4540 = vsel %vm4539, %v4524, %v4526
  %v4541 = vsel %vm4539, %v4526, %v4528
  %v4542 = vsel %vm4539, %v4528, %v4530
  %v4543 = vsel %vm4539, %v4532, %v4534
  %v4544 = vsel %vm4539, %v4534, %v4536
  %v4545 = vsel %vm4539, %v4536, %v4538
  %v4553 = vsel %vm76, %v4521, 0
  %v4556 = vsel %vm76, %v4522, 0
  %4558 = vmatpush.msra.mxu0 0.0
  %4559 = vmatpush.msra.mxu0 0.0
  %4560 = vmatpush.msra.mxu0 0.0
  %4561 = vmatpush.msra.mxu0 0.0
  %4562 = vmatpush.msra.mxu0 0.0
  %4563 = vmatpush.msra.mxu0 0.0
  %4564 = vmatpush.msra.mxu0 0.0
  %4565 = vmatpush.msra.mxu0 0.0
  %4566 = vmatpush.msra.mxu0 0.0
  %4567 = vmatpush.msra.mxu0 0.0
  %4568 = vmatpush.msra.mxu0 0.0
  %4569 = vmatpush.msra.mxu0 0.0
  %4570 = vmatpush.msra.mxu0 0.0
  %4571 = vmatpush.msra.mxu0 0.0
  %4572 = vmatpush.msra.mxu0 %v4543
  %4573 = vmatpush.msra.mxu0 %v4540
  %4574 = vmatmul.f32.gmra.mxu0 %v4553
  %v4575 = vpop.f32.mrf.mxu0
  %v4576 = vadd.f32 0.0, %v4575
  %4577 = vmatmul.f32.gmra.mxu0 %v4556
  %v4578 = vpop.f32.mrf.mxu0
  %v4579 = vadd.f32 0.0, %v4578
  %4580 = vdwg.mxu0
  %4581 = vmatpush.msra.mxu0 0.0
  %4582 = vmatpush.msra.mxu0 0.0
  %4583 = vmatpush.msra.mxu0 0.0
  %4584 = vmatpush.msra.mxu0 0.0
  %4585 = vmatpush.msra.mxu0 0.0
  %4586 = vmatpush.msra.mxu0 0.0
  %4587 = vmatpush.msra.mxu0 0.0
  %4588 = vmatpush.msra.mxu0 0.0
  %4589 = vmatpush.msra.mxu0 0.0
  %4590 = vmatpush.msra.mxu0 0.0
  %4591 = vmatpush.msra.mxu0 0.0
  %4592 = vmatpush.msra.mxu0 0.0
  %4593 = vmatpush.msra.mxu0 0.0
  %4594 = vmatpush.msra.mxu0 0.0
  %4595 = vmatpush.msra.mxu0 %v4544
  %4596 = vmatpush.msra.mxu0 %v4541
  %4597 = vmatmul.f32.gmra.mxu0 %v4553
  %v4598 = vpop.f32.mrf.mxu0
  %v4599 = vadd.f32 0.0, %v4598
  %4600 = vmatmul.f32.gmra.mxu0 %v4556
  %v4601 = vpop.f32.mrf.mxu0
  %v4602 = vadd.f32 0.0, %v4601
  %4603 = vdwg.mxu0
  %4604 = vmatpush.msra.mxu0 0.0
  %4605 = vmatpush.msra.mxu0 0.0
  %4606 = vmatpush.msra.mxu0 0.0
  %4607 = vmatpush.msra.mxu0 0.0
  %4608 = vmatpush.msra.mxu0 0.0
  %4609 = vmatpush.msra.mxu0 0.0
  %4610 = vmatpush.msra.mxu0 0.0
  %4611 = vmatpush.msra.mxu0 0.0
  %4612 = vmatpush.msra.mxu0 0.0
  %4613 = vmatpush.msra.mxu0 0.0
  %4614 = vmatpush.msra.mxu0 0.0
  %4615 = vmatpush.msra.mxu0 0.0
  %4616 = vmatpush.msra.mxu0 0.0
  %4617 = vmatpush.msra.mxu0 0.0
  %4618 = vmatpush.msra.mxu0 %v4545
  %4619 = vmatpush.msra.mxu0 %v4542
  %4620 = vmatmul.f32.gmra.mxu0 %v4553
  %v4621 = vpop.f32.mrf.mxu0
  %v4622 = vadd.f32 0.0, %v4621
  %4623 = vmatmul.f32.gmra.mxu0 %v4556
  %v4624 = vpop.f32.mrf.mxu0
  %v4625 = vadd.f32 0.0, %v4624
  %4626 = vdwg.mxu0
  %v4627 = vadd.f32 %v4514, %v4576
  %v4628 = vadd.f32 %v4515, %v4599
  %v4629 = vadd.f32 %v4516, %v4622
  %v4630 = vadd.f32 %v4517, %v4579
  %v4631 = vadd.f32 %v4518, %v4602
  %v4632 = vadd.f32 %v4519, %v4625
  %s4633 = scalar_lea.vmem %s1, 656
  %v4634 = vld [vmem:[%s4633] sm:$0xff]
  %v4635 = vld [vmem:[%s4633 + $0x8] sm:$0x3]
  %4636 = vrot.lane.b32.xlu0 %v28, 12
  %v4637 = vpop.permute.xlu0 %4636
  %4638 = vrot.lane.b32.xlu0 %v29, 12
  %v4639 = vpop.permute.xlu0 %4638
  %4640 = vrot.lane.b32.xlu0 %v30, 12
  %v4641 = vpop.permute.xlu0 %4640
  %4642 = vrot.lane.b32.xlu0 %v37, 12
  %v4643 = vpop.permute.xlu0 %4642
  %4644 = vrot.lane.b32.xlu0 %v31, 12
  %v4645 = vpop.permute.xlu0 %4644
  %4646 = vrot.lane.b32.xlu0 %v32, 12
  %v4647 = vpop.permute.xlu0 %4646
  %4648 = vrot.lane.b32.xlu0 %v33, 12
  %v4649 = vpop.permute.xlu0 %4648
  %4650 = vrot.lane.b32.xlu0 %v38, 12
  %v4651 = vpop.permute.xlu0 %4650
  %vm4652 = vcmask 97280
  %v4653 = vsel %vm4652, %v4637, %v4639
  %v4654 = vsel %vm4652, %v4639, %v4641
  %v4655 = vsel %vm4652, %v4641, %v4643
  %v4656 = vsel %vm4652, %v4645, %v4647
  %v4657 = vsel %vm4652, %v4647, %v4649
  %v4658 = vsel %vm4652, %v4649, %v4651
  %v4666 = vsel %vm76, %v4634, 0
  %v4669 = vsel %vm76, %v4635, 0
  %4671 = vmatpush.msra.mxu0 0.0
  %4672 = vmatpush.msra.mxu0 0.0
  %4673 = vmatpush.msra.mxu0 0.0
  %4674 = vmatpush.msra.mxu0 0.0
  %4675 = vmatpush.msra.mxu0 0.0
  %4676 = vmatpush.msra.mxu0 0.0
  %4677 = vmatpush.msra.mxu0 0.0
  %4678 = vmatpush.msra.mxu0 0.0
  %4679 = vmatpush.msra.mxu0 0.0
  %4680 = vmatpush.msra.mxu0 0.0
  %4681 = vmatpush.msra.mxu0 0.0
  %4682 = vmatpush.msra.mxu0 0.0
  %4683 = vmatpush.msra.mxu0 0.0
  %4684 = vmatpush.msra.mxu0 0.0
  %4685 = vmatpush.msra.mxu0 %v4656
  %4686 = vmatpush.msra.mxu0 %v4653
  %4687 = vmatmul.f32.gmra.mxu0 %v4666
  %v4688 = vpop.f32.mrf.mxu0
  %v4689 = vadd.f32 0.0, %v4688
  %4690 = vmatmul.f32.gmra.mxu0 %v4669
  %v4691 = vpop.f32.mrf.mxu0
  %v4692 = vadd.f32 0.0, %v4691
  %4693 = vdwg.mxu0
  %4694 = vmatpush.msra.mxu0 0.0
  %4695 = vmatpush.msra.mxu0 0.0
  %4696 = vmatpush.msra.mxu0 0.0
  %4697 = vmatpush.msra.mxu0 0.0
  %4698 = vmatpush.msra.mxu0 0.0
  %4699 = vmatpush.msra.mxu0 0.0
  %4700 = vmatpush.msra.mxu0 0.0
  %4701 = vmatpush.msra.mxu0 0.0
  %4702 = vmatpush.msra.mxu0 0.0
  %4703 = vmatpush.msra.mxu0 0.0
  %4704 = vmatpush.msra.mxu0 0.0
  %4705 = vmatpush.msra.mxu0 0.0
  %4706 = vmatpush.msra.mxu0 0.0
  %4707 = vmatpush.msra.mxu0 0.0
  %4708 = vmatpush.msra.mxu0 %v4657
  %4709 = vmatpush.msra.mxu0 %v4654
  %4710 = vmatmul.f32.gmra.mxu0 %v4666
  %v4711 = vpop.f32.mrf.mxu0
  %v4712 = vadd.f32 0.0, %v4711
  %4713 = vmatmul.f32.gmra.mxu0 %v4669
  %v4714 = vpop.f32.mrf.mxu0
  %v4715 = vadd.f32 0.0, %v4714
  %4716 = vdwg.mxu0
  %4717 = vmatpush.msra.mxu0 0.0
  %4718 = vmatpush.msra.mxu0 0.0
  %4719 = vmatpush.msra.mxu0 0.0
  %4720 = vmatpush.msra.mxu0 0.0
  %4721 = vmatpush.msra.mxu0 0.0
  %4722 = vmatpush.msra.mxu0 0.0
  %4723 = vmatpush.msra.mxu0 0.0
  %4724 = vmatpush.msra.mxu0 0.0
  %4725 = vmatpush.msra.mxu0 0.0
  %4726 = vmatpush.msra.mxu0 0.0
  %4727 = vmatpush.msra.mxu0 0.0
  %4728 = vmatpush.msra.mxu0 0.0
  %4729 = vmatpush.msra.mxu0 0.0
  %4730 = vmatpush.msra.mxu0 0.0
  %4731 = vmatpush.msra.mxu0 %v4658
  %4732 = vmatpush.msra.mxu0 %v4655
  %4733 = vmatmul.f32.gmra.mxu0 %v4666
  %v4734 = vpop.f32.mrf.mxu0
  %v4735 = vadd.f32 0.0, %v4734
  %4736 = vmatmul.f32.gmra.mxu0 %v4669
  %v4737 = vpop.f32.mrf.mxu0
  %v4738 = vadd.f32 0.0, %v4737
  %4739 = vdwg.mxu0
  %v4740 = vadd.f32 %v4627, %v4689
  %v4741 = vadd.f32 %v4628, %v4712
  %v4742 = vadd.f32 %v4629, %v4735
  %v4743 = vadd.f32 %v4630, %v4692
  %v4744 = vadd.f32 %v4631, %v4715
  %v4745 = vadd.f32 %v4632, %v4738
  %s4746 = scalar_lea.vmem %s1, 672
  %v4747 = vld [vmem:[%s4746] sm:$0xff]
  %v4748 = vld [vmem:[%s4746 + $0x8] sm:$0x3]
  %v4749 = vld [vmem:[%s0 + $0x8] sm:$0xff]
  %v4750 = vld [vmem:[%s0 + $0x10] sm:$0xff]
  %v4751 = vld [vmem:[%s0 + $0x18] sm:$0xff]
  %v4752 = vld [vmem:[%s0 + $0x20] sm:$0xff]
  %v4753 = vld [vmem:[%s0 + $0x30] sm:$0xff]
  %v4754 = vld [vmem:[%s0 + $0x38] sm:$0xff]
  %v4755 = vld [vmem:[%s0 + $0x40] sm:$0xff]
  %v4756 = vld [vmem:[%s0 + $0x48] sm:$0xff]
  %4765 = vrot.lane.b32.xlu0 %v4749, 124
  %v4766 = vpop.permute.xlu0 %4765
  %4767 = vrot.lane.b32.xlu0 %v4750, 124
  %v4768 = vpop.permute.xlu0 %4767
  %4769 = vrot.lane.b32.xlu0 %v4751, 124
  %v4770 = vpop.permute.xlu0 %4769
  %4771 = vrot.lane.b32.xlu0 %v4752, 124
  %v4772 = vpop.permute.xlu0 %4771
  %4773 = vrot.lane.b32.xlu0 %v4753, 124
  %v4774 = vpop.permute.xlu0 %4773
  %4775 = vrot.lane.b32.xlu0 %v4754, 124
  %v4776 = vpop.permute.xlu0 %4775
  %4777 = vrot.lane.b32.xlu0 %v4755, 124
  %v4778 = vpop.permute.xlu0 %4777
  %4779 = vrot.lane.b32.xlu0 %v4756, 124
  %v4780 = vpop.permute.xlu0 %4779
  %v4781 = vsel %vm472, %v4766, %v4768
  %v4782 = vsel %vm472, %v4768, %v4770
  %v4783 = vsel %vm472, %v4770, %v4772
  %v4784 = vsel %vm472, %v4774, %v4776
  %v4785 = vsel %vm472, %v4776, %v4778
  %v4786 = vsel %vm472, %v4778, %v4780
  %v4794 = vsel %vm76, %v4747, 0
  %v4797 = vsel %vm76, %v4748, 0
  %4799 = vmatpush.msra.mxu0 0.0
  %4800 = vmatpush.msra.mxu0 0.0
  %4801 = vmatpush.msra.mxu0 0.0
  %4802 = vmatpush.msra.mxu0 0.0
  %4803 = vmatpush.msra.mxu0 0.0
  %4804 = vmatpush.msra.mxu0 0.0
  %4805 = vmatpush.msra.mxu0 0.0
  %4806 = vmatpush.msra.mxu0 0.0
  %4807 = vmatpush.msra.mxu0 0.0
  %4808 = vmatpush.msra.mxu0 0.0
  %4809 = vmatpush.msra.mxu0 0.0
  %4810 = vmatpush.msra.mxu0 0.0
  %4811 = vmatpush.msra.mxu0 0.0
  %4812 = vmatpush.msra.mxu0 0.0
  %4813 = vmatpush.msra.mxu0 %v4784
  %4814 = vmatpush.msra.mxu0 %v4781
  %4815 = vmatmul.f32.gmra.mxu0 %v4794
  %v4816 = vpop.f32.mrf.mxu0
  %v4817 = vadd.f32 0.0, %v4816
  %4818 = vmatmul.f32.gmra.mxu0 %v4797
  %v4819 = vpop.f32.mrf.mxu0
  %v4820 = vadd.f32 0.0, %v4819
  %4821 = vdwg.mxu0
  %4822 = vmatpush.msra.mxu0 0.0
  %4823 = vmatpush.msra.mxu0 0.0
  %4824 = vmatpush.msra.mxu0 0.0
  %4825 = vmatpush.msra.mxu0 0.0
  %4826 = vmatpush.msra.mxu0 0.0
  %4827 = vmatpush.msra.mxu0 0.0
  %4828 = vmatpush.msra.mxu0 0.0
  %4829 = vmatpush.msra.mxu0 0.0
  %4830 = vmatpush.msra.mxu0 0.0
  %4831 = vmatpush.msra.mxu0 0.0
  %4832 = vmatpush.msra.mxu0 0.0
  %4833 = vmatpush.msra.mxu0 0.0
  %4834 = vmatpush.msra.mxu0 0.0
  %4835 = vmatpush.msra.mxu0 0.0
  %4836 = vmatpush.msra.mxu0 %v4785
  %4837 = vmatpush.msra.mxu0 %v4782
  %4838 = vmatmul.f32.gmra.mxu0 %v4794
  %v4839 = vpop.f32.mrf.mxu0
  %v4840 = vadd.f32 0.0, %v4839
  %4841 = vmatmul.f32.gmra.mxu0 %v4797
  %v4842 = vpop.f32.mrf.mxu0
  %v4843 = vadd.f32 0.0, %v4842
  %4844 = vdwg.mxu0
  %4845 = vmatpush.msra.mxu0 0.0
  %4846 = vmatpush.msra.mxu0 0.0
  %4847 = vmatpush.msra.mxu0 0.0
  %4848 = vmatpush.msra.mxu0 0.0
  %4849 = vmatpush.msra.mxu0 0.0
  %4850 = vmatpush.msra.mxu0 0.0
  %4851 = vmatpush.msra.mxu0 0.0
  %4852 = vmatpush.msra.mxu0 0.0
  %4853 = vmatpush.msra.mxu0 0.0
  %4854 = vmatpush.msra.mxu0 0.0
  %4855 = vmatpush.msra.mxu0 0.0
  %4856 = vmatpush.msra.mxu0 0.0
  %4857 = vmatpush.msra.mxu0 0.0
  %4858 = vmatpush.msra.mxu0 0.0
  %4859 = vmatpush.msra.mxu0 %v4786
  %4860 = vmatpush.msra.mxu0 %v4783
  %4861 = vmatmul.f32.gmra.mxu0 %v4794
  %v4862 = vpop.f32.mrf.mxu0
  %v4863 = vadd.f32 0.0, %v4862
  %4864 = vmatmul.f32.gmra.mxu0 %v4797
  %v4865 = vpop.f32.mrf.mxu0
  %v4866 = vadd.f32 0.0, %v4865
  %4867 = vdwg.mxu0
  %v4868 = vadd.f32 %v4740, %v4817
  %v4869 = vadd.f32 %v4741, %v4840
  %v4870 = vadd.f32 %v4742, %v4863
  %v4871 = vadd.f32 %v4743, %v4820
  %v4872 = vadd.f32 %v4744, %v4843
  %v4873 = vadd.f32 %v4745, %v4866
  %s4874 = scalar_lea.vmem %s1, 688
  %v4875 = vld [vmem:[%s4874] sm:$0xff]
  %v4876 = vld [vmem:[%s4874 + $0x8] sm:$0x3]
  %4877 = vrot.lane.b32.xlu0 %v4749, 123
  %v4878 = vpop.permute.xlu0 %4877
  %4879 = vrot.lane.b32.xlu0 %v4750, 123
  %v4880 = vpop.permute.xlu0 %4879
  %4881 = vrot.lane.b32.xlu0 %v4751, 123
  %v4882 = vpop.permute.xlu0 %4881
  %4883 = vrot.lane.b32.xlu0 %v4752, 123
  %v4884 = vpop.permute.xlu0 %4883
  %4885 = vrot.lane.b32.xlu0 %v4753, 123
  %v4886 = vpop.permute.xlu0 %4885
  %4887 = vrot.lane.b32.xlu0 %v4754, 123
  %v4888 = vpop.permute.xlu0 %4887
  %4889 = vrot.lane.b32.xlu0 %v4755, 123
  %v4890 = vpop.permute.xlu0 %4889
  %4891 = vrot.lane.b32.xlu0 %v4756, 123
  %v4892 = vpop.permute.xlu0 %4891
  %v4893 = vsel %vm585, %v4878, %v4880
  %v4894 = vsel %vm585, %v4880, %v4882
  %v4895 = vsel %vm585, %v4882, %v4884
  %v4896 = vsel %vm585, %v4886, %v4888
  %v4897 = vsel %vm585, %v4888, %v4890
  %v4898 = vsel %vm585, %v4890, %v4892
  %v4906 = vsel %vm76, %v4875, 0
  %v4909 = vsel %vm76, %v4876, 0
  %4911 = vmatpush.msra.mxu0 0.0
  %4912 = vmatpush.msra.mxu0 0.0
  %4913 = vmatpush.msra.mxu0 0.0
  %4914 = vmatpush.msra.mxu0 0.0
  %4915 = vmatpush.msra.mxu0 0.0
  %4916 = vmatpush.msra.mxu0 0.0
  %4917 = vmatpush.msra.mxu0 0.0
  %4918 = vmatpush.msra.mxu0 0.0
  %4919 = vmatpush.msra.mxu0 0.0
  %4920 = vmatpush.msra.mxu0 0.0
  %4921 = vmatpush.msra.mxu0 0.0
  %4922 = vmatpush.msra.mxu0 0.0
  %4923 = vmatpush.msra.mxu0 0.0
  %4924 = vmatpush.msra.mxu0 0.0
  %4925 = vmatpush.msra.mxu0 %v4896
  %4926 = vmatpush.msra.mxu0 %v4893
  %4927 = vmatmul.f32.gmra.mxu0 %v4906
  %v4928 = vpop.f32.mrf.mxu0
  %v4929 = vadd.f32 0.0, %v4928
  %4930 = vmatmul.f32.gmra.mxu0 %v4909
  %v4931 = vpop.f32.mrf.mxu0
  %v4932 = vadd.f32 0.0, %v4931
  %4933 = vdwg.mxu0
  %4934 = vmatpush.msra.mxu0 0.0
  %4935 = vmatpush.msra.mxu0 0.0
  %4936 = vmatpush.msra.mxu0 0.0
  %4937 = vmatpush.msra.mxu0 0.0
  %4938 = vmatpush.msra.mxu0 0.0
  %4939 = vmatpush.msra.mxu0 0.0
  %4940 = vmatpush.msra.mxu0 0.0
  %4941 = vmatpush.msra.mxu0 0.0
  %4942 = vmatpush.msra.mxu0 0.0
  %4943 = vmatpush.msra.mxu0 0.0
  %4944 = vmatpush.msra.mxu0 0.0
  %4945 = vmatpush.msra.mxu0 0.0
  %4946 = vmatpush.msra.mxu0 0.0
  %4947 = vmatpush.msra.mxu0 0.0
  %4948 = vmatpush.msra.mxu0 %v4897
  %4949 = vmatpush.msra.mxu0 %v4894
  %4950 = vmatmul.f32.gmra.mxu0 %v4906
  %v4951 = vpop.f32.mrf.mxu0
  %v4952 = vadd.f32 0.0, %v4951
  %4953 = vmatmul.f32.gmra.mxu0 %v4909
  %v4954 = vpop.f32.mrf.mxu0
  %v4955 = vadd.f32 0.0, %v4954
  %4956 = vdwg.mxu0
  %4957 = vmatpush.msra.mxu0 0.0
  %4958 = vmatpush.msra.mxu0 0.0
  %4959 = vmatpush.msra.mxu0 0.0
  %4960 = vmatpush.msra.mxu0 0.0
  %4961 = vmatpush.msra.mxu0 0.0
  %4962 = vmatpush.msra.mxu0 0.0
  %4963 = vmatpush.msra.mxu0 0.0
  %4964 = vmatpush.msra.mxu0 0.0
  %4965 = vmatpush.msra.mxu0 0.0
  %4966 = vmatpush.msra.mxu0 0.0
  %4967 = vmatpush.msra.mxu0 0.0
  %4968 = vmatpush.msra.mxu0 0.0
  %4969 = vmatpush.msra.mxu0 0.0
  %4970 = vmatpush.msra.mxu0 0.0
  %4971 = vmatpush.msra.mxu0 %v4898
  %4972 = vmatpush.msra.mxu0 %v4895
  %4973 = vmatmul.f32.gmra.mxu0 %v4906
  %v4974 = vpop.f32.mrf.mxu0
  %v4975 = vadd.f32 0.0, %v4974
  %4976 = vmatmul.f32.gmra.mxu0 %v4909
  %v4977 = vpop.f32.mrf.mxu0
  %v4978 = vadd.f32 0.0, %v4977
  %4979 = vdwg.mxu0
  %v4980 = vadd.f32 %v4868, %v4929
  %v4981 = vadd.f32 %v4869, %v4952
  %v4982 = vadd.f32 %v4870, %v4975
  %v4983 = vadd.f32 %v4871, %v4932
  %v4984 = vadd.f32 %v4872, %v4955
  %v4985 = vadd.f32 %v4873, %v4978
  %s4986 = scalar_lea.vmem %s1, 704
  %v4987 = vld [vmem:[%s4986] sm:$0xff]
  %v4988 = vld [vmem:[%s4986 + $0x8] sm:$0x3]
  %4989 = vrot.lane.b32.xlu0 %v4749, 122
  %v4990 = vpop.permute.xlu0 %4989
  %4991 = vrot.lane.b32.xlu0 %v4750, 122
  %v4992 = vpop.permute.xlu0 %4991
  %4993 = vrot.lane.b32.xlu0 %v4751, 122
  %v4994 = vpop.permute.xlu0 %4993
  %4995 = vrot.lane.b32.xlu0 %v4752, 122
  %v4996 = vpop.permute.xlu0 %4995
  %4997 = vrot.lane.b32.xlu0 %v4753, 122
  %v4998 = vpop.permute.xlu0 %4997
  %4999 = vrot.lane.b32.xlu0 %v4754, 122
  %v5000 = vpop.permute.xlu0 %4999
  %5001 = vrot.lane.b32.xlu0 %v4755, 122
  %v5002 = vpop.permute.xlu0 %5001
  %5003 = vrot.lane.b32.xlu0 %v4756, 122
  %v5004 = vpop.permute.xlu0 %5003
  %v5005 = vsel %vm698, %v4990, %v4992
  %v5006 = vsel %vm698, %v4992, %v4994
  %v5007 = vsel %vm698, %v4994, %v4996
  %v5008 = vsel %vm698, %v4998, %v5000
  %v5009 = vsel %vm698, %v5000, %v5002
  %v5010 = vsel %vm698, %v5002, %v5004
  %v5018 = vsel %vm76, %v4987, 0
  %v5021 = vsel %vm76, %v4988, 0
  %5023 = vmatpush.msra.mxu0 0.0
  %5024 = vmatpush.msra.mxu0 0.0
  %5025 = vmatpush.msra.mxu0 0.0
  %5026 = vmatpush.msra.mxu0 0.0
  %5027 = vmatpush.msra.mxu0 0.0
  %5028 = vmatpush.msra.mxu0 0.0
  %5029 = vmatpush.msra.mxu0 0.0
  %5030 = vmatpush.msra.mxu0 0.0
  %5031 = vmatpush.msra.mxu0 0.0
  %5032 = vmatpush.msra.mxu0 0.0
  %5033 = vmatpush.msra.mxu0 0.0
  %5034 = vmatpush.msra.mxu0 0.0
  %5035 = vmatpush.msra.mxu0 0.0
  %5036 = vmatpush.msra.mxu0 0.0
  %5037 = vmatpush.msra.mxu0 %v5008
  %5038 = vmatpush.msra.mxu0 %v5005
  %5039 = vmatmul.f32.gmra.mxu0 %v5018
  %v5040 = vpop.f32.mrf.mxu0
  %v5041 = vadd.f32 0.0, %v5040
  %5042 = vmatmul.f32.gmra.mxu0 %v5021
  %v5043 = vpop.f32.mrf.mxu0
  %v5044 = vadd.f32 0.0, %v5043
  %5045 = vdwg.mxu0
  %5046 = vmatpush.msra.mxu0 0.0
  %5047 = vmatpush.msra.mxu0 0.0
  %5048 = vmatpush.msra.mxu0 0.0
  %5049 = vmatpush.msra.mxu0 0.0
  %5050 = vmatpush.msra.mxu0 0.0
  %5051 = vmatpush.msra.mxu0 0.0
  %5052 = vmatpush.msra.mxu0 0.0
  %5053 = vmatpush.msra.mxu0 0.0
  %5054 = vmatpush.msra.mxu0 0.0
  %5055 = vmatpush.msra.mxu0 0.0
  %5056 = vmatpush.msra.mxu0 0.0
  %5057 = vmatpush.msra.mxu0 0.0
  %5058 = vmatpush.msra.mxu0 0.0
  %5059 = vmatpush.msra.mxu0 0.0
  %5060 = vmatpush.msra.mxu0 %v5009
  %5061 = vmatpush.msra.mxu0 %v5006
  %5062 = vmatmul.f32.gmra.mxu0 %v5018
  %v5063 = vpop.f32.mrf.mxu0
  %v5064 = vadd.f32 0.0, %v5063
  %5065 = vmatmul.f32.gmra.mxu0 %v5021
  %v5066 = vpop.f32.mrf.mxu0
  %v5067 = vadd.f32 0.0, %v5066
  %5068 = vdwg.mxu0
  %5069 = vmatpush.msra.mxu0 0.0
  %5070 = vmatpush.msra.mxu0 0.0
  %5071 = vmatpush.msra.mxu0 0.0
  %5072 = vmatpush.msra.mxu0 0.0
  %5073 = vmatpush.msra.mxu0 0.0
  %5074 = vmatpush.msra.mxu0 0.0
  %5075 = vmatpush.msra.mxu0 0.0
  %5076 = vmatpush.msra.mxu0 0.0
  %5077 = vmatpush.msra.mxu0 0.0
  %5078 = vmatpush.msra.mxu0 0.0
  %5079 = vmatpush.msra.mxu0 0.0
  %5080 = vmatpush.msra.mxu0 0.0
  %5081 = vmatpush.msra.mxu0 0.0
  %5082 = vmatpush.msra.mxu0 0.0
  %5083 = vmatpush.msra.mxu0 %v5010
  %5084 = vmatpush.msra.mxu0 %v5007
  %5085 = vmatmul.f32.gmra.mxu0 %v5018
  %v5086 = vpop.f32.mrf.mxu0
  %v5087 = vadd.f32 0.0, %v5086
  %5088 = vmatmul.f32.gmra.mxu0 %v5021
  %v5089 = vpop.f32.mrf.mxu0
  %v5090 = vadd.f32 0.0, %v5089
  %5091 = vdwg.mxu0
  %v5092 = vadd.f32 %v4980, %v5041
  %v5093 = vadd.f32 %v4981, %v5064
  %v5094 = vadd.f32 %v4982, %v5087
  %v5095 = vadd.f32 %v4983, %v5044
  %v5096 = vadd.f32 %v4984, %v5067
  %v5097 = vadd.f32 %v4985, %v5090
  %s5098 = scalar_lea.vmem %s1, 720
  %v5099 = vld [vmem:[%s5098] sm:$0xff]
  %v5100 = vld [vmem:[%s5098 + $0x8] sm:$0x3]
  %5101 = vrot.lane.b32.xlu0 %v4749, 121
  %v5102 = vpop.permute.xlu0 %5101
  %5103 = vrot.lane.b32.xlu0 %v4750, 121
  %v5104 = vpop.permute.xlu0 %5103
  %5105 = vrot.lane.b32.xlu0 %v4751, 121
  %v5106 = vpop.permute.xlu0 %5105
  %5107 = vrot.lane.b32.xlu0 %v4752, 121
  %v5108 = vpop.permute.xlu0 %5107
  %5109 = vrot.lane.b32.xlu0 %v4753, 121
  %v5110 = vpop.permute.xlu0 %5109
  %5111 = vrot.lane.b32.xlu0 %v4754, 121
  %v5112 = vpop.permute.xlu0 %5111
  %5113 = vrot.lane.b32.xlu0 %v4755, 121
  %v5114 = vpop.permute.xlu0 %5113
  %5115 = vrot.lane.b32.xlu0 %v4756, 121
  %v5116 = vpop.permute.xlu0 %5115
  %vm5117 = vcmask 990208
  %v5118 = vsel %vm5117, %v5102, %v5104
  %v5119 = vsel %vm5117, %v5104, %v5106
  %v5120 = vsel %vm5117, %v5106, %v5108
  %v5121 = vsel %vm5117, %v5110, %v5112
  %v5122 = vsel %vm5117, %v5112, %v5114
  %v5123 = vsel %vm5117, %v5114, %v5116
  %v5131 = vsel %vm76, %v5099, 0
  %v5134 = vsel %vm76, %v5100, 0
  %5136 = vmatpush.msra.mxu0 0.0
  %5137 = vmatpush.msra.mxu0 0.0
  %5138 = vmatpush.msra.mxu0 0.0
  %5139 = vmatpush.msra.mxu0 0.0
  %5140 = vmatpush.msra.mxu0 0.0
  %5141 = vmatpush.msra.mxu0 0.0
  %5142 = vmatpush.msra.mxu0 0.0
  %5143 = vmatpush.msra.mxu0 0.0
  %5144 = vmatpush.msra.mxu0 0.0
  %5145 = vmatpush.msra.mxu0 0.0
  %5146 = vmatpush.msra.mxu0 0.0
  %5147 = vmatpush.msra.mxu0 0.0
  %5148 = vmatpush.msra.mxu0 0.0
  %5149 = vmatpush.msra.mxu0 0.0
  %5150 = vmatpush.msra.mxu0 %v5121
  %5151 = vmatpush.msra.mxu0 %v5118
  %5152 = vmatmul.f32.gmra.mxu0 %v5131
  %v5153 = vpop.f32.mrf.mxu0
  %v5154 = vadd.f32 0.0, %v5153
  %5155 = vmatmul.f32.gmra.mxu0 %v5134
  %v5156 = vpop.f32.mrf.mxu0
  %v5157 = vadd.f32 0.0, %v5156
  %5158 = vdwg.mxu0
  %5159 = vmatpush.msra.mxu0 0.0
  %5160 = vmatpush.msra.mxu0 0.0
  %5161 = vmatpush.msra.mxu0 0.0
  %5162 = vmatpush.msra.mxu0 0.0
  %5163 = vmatpush.msra.mxu0 0.0
  %5164 = vmatpush.msra.mxu0 0.0
  %5165 = vmatpush.msra.mxu0 0.0
  %5166 = vmatpush.msra.mxu0 0.0
  %5167 = vmatpush.msra.mxu0 0.0
  %5168 = vmatpush.msra.mxu0 0.0
  %5169 = vmatpush.msra.mxu0 0.0
  %5170 = vmatpush.msra.mxu0 0.0
  %5171 = vmatpush.msra.mxu0 0.0
  %5172 = vmatpush.msra.mxu0 0.0
  %5173 = vmatpush.msra.mxu0 %v5122
  %5174 = vmatpush.msra.mxu0 %v5119
  %5175 = vmatmul.f32.gmra.mxu0 %v5131
  %v5176 = vpop.f32.mrf.mxu0
  %v5177 = vadd.f32 0.0, %v5176
  %5178 = vmatmul.f32.gmra.mxu0 %v5134
  %v5179 = vpop.f32.mrf.mxu0
  %v5180 = vadd.f32 0.0, %v5179
  %5181 = vdwg.mxu0
  %5182 = vmatpush.msra.mxu0 0.0
  %5183 = vmatpush.msra.mxu0 0.0
  %5184 = vmatpush.msra.mxu0 0.0
  %5185 = vmatpush.msra.mxu0 0.0
  %5186 = vmatpush.msra.mxu0 0.0
  %5187 = vmatpush.msra.mxu0 0.0
  %5188 = vmatpush.msra.mxu0 0.0
  %5189 = vmatpush.msra.mxu0 0.0
  %5190 = vmatpush.msra.mxu0 0.0
  %5191 = vmatpush.msra.mxu0 0.0
  %5192 = vmatpush.msra.mxu0 0.0
  %5193 = vmatpush.msra.mxu0 0.0
  %5194 = vmatpush.msra.mxu0 0.0
  %5195 = vmatpush.msra.mxu0 0.0
  %5196 = vmatpush.msra.mxu0 %v5123
  %5197 = vmatpush.msra.mxu0 %v5120
  %5198 = vmatmul.f32.gmra.mxu0 %v5131
  %v5199 = vpop.f32.mrf.mxu0
  %v5200 = vadd.f32 0.0, %v5199
  %5201 = vmatmul.f32.gmra.mxu0 %v5134
  %v5202 = vpop.f32.mrf.mxu0
  %v5203 = vadd.f32 0.0, %v5202
  %5204 = vdwg.mxu0
  %v5205 = vadd.f32 %v5092, %v5154
  %v5206 = vadd.f32 %v5093, %v5177
  %v5207 = vadd.f32 %v5094, %v5200
  %v5208 = vadd.f32 %v5095, %v5157
  %v5209 = vadd.f32 %v5096, %v5180
  %v5210 = vadd.f32 %v5097, %v5203
  %s5211 = scalar_lea.vmem %s1, 736
  %v5212 = vld [vmem:[%s5211] sm:$0xff]
  %v5213 = vld [vmem:[%s5211 + $0x8] sm:$0x3]
  %5214 = vrot.lane.b32.xlu0 %v4749, 120
  %v5215 = vpop.permute.xlu0 %5214
  %5216 = vrot.lane.b32.xlu0 %v4750, 120
  %v5217 = vpop.permute.xlu0 %5216
  %5218 = vrot.lane.b32.xlu0 %v4751, 120
  %v5219 = vpop.permute.xlu0 %5218
  %5220 = vrot.lane.b32.xlu0 %v4752, 120
  %v5221 = vpop.permute.xlu0 %5220
  %5222 = vrot.lane.b32.xlu0 %v4753, 120
  %v5223 = vpop.permute.xlu0 %5222
  %5224 = vrot.lane.b32.xlu0 %v4754, 120
  %v5225 = vpop.permute.xlu0 %5224
  %5226 = vrot.lane.b32.xlu0 %v4755, 120
  %v5227 = vpop.permute.xlu0 %5226
  %5228 = vrot.lane.b32.xlu0 %v4756, 120
  %v5229 = vpop.permute.xlu0 %5228
  %vm5230 = vcmask 982016
  %v5231 = vsel %vm5230, %v5215, %v5217
  %v5232 = vsel %vm5230, %v5217, %v5219
  %v5233 = vsel %vm5230, %v5219, %v5221
  %v5234 = vsel %vm5230, %v5223, %v5225
  %v5235 = vsel %vm5230, %v5225, %v5227
  %v5236 = vsel %vm5230, %v5227, %v5229
  %v5244 = vsel %vm76, %v5212, 0
  %v5247 = vsel %vm76, %v5213, 0
  %5249 = vmatpush.msra.mxu0 0.0
  %5250 = vmatpush.msra.mxu0 0.0
  %5251 = vmatpush.msra.mxu0 0.0
  %5252 = vmatpush.msra.mxu0 0.0
  %5253 = vmatpush.msra.mxu0 0.0
  %5254 = vmatpush.msra.mxu0 0.0
  %5255 = vmatpush.msra.mxu0 0.0
  %5256 = vmatpush.msra.mxu0 0.0
  %5257 = vmatpush.msra.mxu0 0.0
  %5258 = vmatpush.msra.mxu0 0.0
  %5259 = vmatpush.msra.mxu0 0.0
  %5260 = vmatpush.msra.mxu0 0.0
  %5261 = vmatpush.msra.mxu0 0.0
  %5262 = vmatpush.msra.mxu0 0.0
  %5263 = vmatpush.msra.mxu0 %v5234
  %5264 = vmatpush.msra.mxu0 %v5231
  %5265 = vmatmul.f32.gmra.mxu0 %v5244
  %v5266 = vpop.f32.mrf.mxu0
  %v5267 = vadd.f32 0.0, %v5266
  %5268 = vmatmul.f32.gmra.mxu0 %v5247
  %v5269 = vpop.f32.mrf.mxu0
  %v5270 = vadd.f32 0.0, %v5269
  %5271 = vdwg.mxu0
  %5272 = vmatpush.msra.mxu0 0.0
  %5273 = vmatpush.msra.mxu0 0.0
  %5274 = vmatpush.msra.mxu0 0.0
  %5275 = vmatpush.msra.mxu0 0.0
  %5276 = vmatpush.msra.mxu0 0.0
  %5277 = vmatpush.msra.mxu0 0.0
  %5278 = vmatpush.msra.mxu0 0.0
  %5279 = vmatpush.msra.mxu0 0.0
  %5280 = vmatpush.msra.mxu0 0.0
  %5281 = vmatpush.msra.mxu0 0.0
  %5282 = vmatpush.msra.mxu0 0.0
  %5283 = vmatpush.msra.mxu0 0.0
  %5284 = vmatpush.msra.mxu0 0.0
  %5285 = vmatpush.msra.mxu0 0.0
  %5286 = vmatpush.msra.mxu0 %v5235
  %5287 = vmatpush.msra.mxu0 %v5232
  %5288 = vmatmul.f32.gmra.mxu0 %v5244
  %v5289 = vpop.f32.mrf.mxu0
  %v5290 = vadd.f32 0.0, %v5289
  %5291 = vmatmul.f32.gmra.mxu0 %v5247
  %v5292 = vpop.f32.mrf.mxu0
  %v5293 = vadd.f32 0.0, %v5292
  %5294 = vdwg.mxu0
  %5295 = vmatpush.msra.mxu0 0.0
  %5296 = vmatpush.msra.mxu0 0.0
  %5297 = vmatpush.msra.mxu0 0.0
  %5298 = vmatpush.msra.mxu0 0.0
  %5299 = vmatpush.msra.mxu0 0.0
  %5300 = vmatpush.msra.mxu0 0.0
  %5301 = vmatpush.msra.mxu0 0.0
  %5302 = vmatpush.msra.mxu0 0.0
  %5303 = vmatpush.msra.mxu0 0.0
  %5304 = vmatpush.msra.mxu0 0.0
  %5305 = vmatpush.msra.mxu0 0.0
  %5306 = vmatpush.msra.mxu0 0.0
  %5307 = vmatpush.msra.mxu0 0.0
  %5308 = vmatpush.msra.mxu0 0.0
  %5309 = vmatpush.msra.mxu0 %v5236
  %5310 = vmatpush.msra.mxu0 %v5233
  %5311 = vmatmul.f32.gmra.mxu0 %v5244
  %v5312 = vpop.f32.mrf.mxu0
  %v5313 = vadd.f32 0.0, %v5312
  %5314 = vmatmul.f32.gmra.mxu0 %v5247
  %v5315 = vpop.f32.mrf.mxu0
  %v5316 = vadd.f32 0.0, %v5315
  %5317 = vdwg.mxu0
  %v5318 = vadd.f32 %v5205, %v5267
  %v5319 = vadd.f32 %v5206, %v5290
  %v5320 = vadd.f32 %v5207, %v5313
  %v5321 = vadd.f32 %v5208, %v5270
  %v5322 = vadd.f32 %v5209, %v5293
  %v5323 = vadd.f32 %v5210, %v5316
  %s5324 = scalar_lea.vmem %s1, 752
  %v5325 = vld [vmem:[%s5324] sm:$0xff]
  %v5326 = vld [vmem:[%s5324 + $0x8] sm:$0x3]
  %5327 = vrot.lane.b32.xlu0 %v4749, 119
  %v5328 = vpop.permute.xlu0 %5327
  %5329 = vrot.lane.b32.xlu0 %v4750, 119
  %v5330 = vpop.permute.xlu0 %5329
  %5331 = vrot.lane.b32.xlu0 %v4751, 119
  %v5332 = vpop.permute.xlu0 %5331
  %5333 = vrot.lane.b32.xlu0 %v4752, 119
  %v5334 = vpop.permute.xlu0 %5333
  %5335 = vrot.lane.b32.xlu0 %v4753, 119
  %v5336 = vpop.permute.xlu0 %5335
  %5337 = vrot.lane.b32.xlu0 %v4754, 119
  %v5338 = vpop.permute.xlu0 %5337
  %5339 = vrot.lane.b32.xlu0 %v4755, 119
  %v5340 = vpop.permute.xlu0 %5339
  %5341 = vrot.lane.b32.xlu0 %v4756, 119
  %v5342 = vpop.permute.xlu0 %5341
  %vm5343 = vcmask 973824
  %v5344 = vsel %vm5343, %v5328, %v5330
  %v5345 = vsel %vm5343, %v5330, %v5332
  %v5346 = vsel %vm5343, %v5332, %v5334
  %v5347 = vsel %vm5343, %v5336, %v5338
  %v5348 = vsel %vm5343, %v5338, %v5340
  %v5349 = vsel %vm5343, %v5340, %v5342
  %v5357 = vsel %vm76, %v5325, 0
  %v5360 = vsel %vm76, %v5326, 0
  %5362 = vmatpush.msra.mxu0 0.0
  %5363 = vmatpush.msra.mxu0 0.0
  %5364 = vmatpush.msra.mxu0 0.0
  %5365 = vmatpush.msra.mxu0 0.0
  %5366 = vmatpush.msra.mxu0 0.0
  %5367 = vmatpush.msra.mxu0 0.0
  %5368 = vmatpush.msra.mxu0 0.0
  %5369 = vmatpush.msra.mxu0 0.0
  %5370 = vmatpush.msra.mxu0 0.0
  %5371 = vmatpush.msra.mxu0 0.0
  %5372 = vmatpush.msra.mxu0 0.0
  %5373 = vmatpush.msra.mxu0 0.0
  %5374 = vmatpush.msra.mxu0 0.0
  %5375 = vmatpush.msra.mxu0 0.0
  %5376 = vmatpush.msra.mxu0 %v5347
  %5377 = vmatpush.msra.mxu0 %v5344
  %5378 = vmatmul.f32.gmra.mxu0 %v5357
  %v5379 = vpop.f32.mrf.mxu0
  %v5380 = vadd.f32 0.0, %v5379
  %5381 = vmatmul.f32.gmra.mxu0 %v5360
  %v5382 = vpop.f32.mrf.mxu0
  %v5383 = vadd.f32 0.0, %v5382
  %5384 = vdwg.mxu0
  %5385 = vmatpush.msra.mxu0 0.0
  %5386 = vmatpush.msra.mxu0 0.0
  %5387 = vmatpush.msra.mxu0 0.0
  %5388 = vmatpush.msra.mxu0 0.0
  %5389 = vmatpush.msra.mxu0 0.0
  %5390 = vmatpush.msra.mxu0 0.0
  %5391 = vmatpush.msra.mxu0 0.0
  %5392 = vmatpush.msra.mxu0 0.0
  %5393 = vmatpush.msra.mxu0 0.0
  %5394 = vmatpush.msra.mxu0 0.0
  %5395 = vmatpush.msra.mxu0 0.0
  %5396 = vmatpush.msra.mxu0 0.0
  %5397 = vmatpush.msra.mxu0 0.0
  %5398 = vmatpush.msra.mxu0 0.0
  %5399 = vmatpush.msra.mxu0 %v5348
  %5400 = vmatpush.msra.mxu0 %v5345
  %5401 = vmatmul.f32.gmra.mxu0 %v5357
  %v5402 = vpop.f32.mrf.mxu0
  %v5403 = vadd.f32 0.0, %v5402
  %5404 = vmatmul.f32.gmra.mxu0 %v5360
  %v5405 = vpop.f32.mrf.mxu0
  %v5406 = vadd.f32 0.0, %v5405
  %5407 = vdwg.mxu0
  %5408 = vmatpush.msra.mxu0 0.0
  %5409 = vmatpush.msra.mxu0 0.0
  %5410 = vmatpush.msra.mxu0 0.0
  %5411 = vmatpush.msra.mxu0 0.0
  %5412 = vmatpush.msra.mxu0 0.0
  %5413 = vmatpush.msra.mxu0 0.0
  %5414 = vmatpush.msra.mxu0 0.0
  %5415 = vmatpush.msra.mxu0 0.0
  %5416 = vmatpush.msra.mxu0 0.0
  %5417 = vmatpush.msra.mxu0 0.0
  %5418 = vmatpush.msra.mxu0 0.0
  %5419 = vmatpush.msra.mxu0 0.0
  %5420 = vmatpush.msra.mxu0 0.0
  %5421 = vmatpush.msra.mxu0 0.0
  %5422 = vmatpush.msra.mxu0 %v5349
  %5423 = vmatpush.msra.mxu0 %v5346
  %5424 = vmatmul.f32.gmra.mxu0 %v5357
  %v5425 = vpop.f32.mrf.mxu0
  %v5426 = vadd.f32 0.0, %v5425
  %5427 = vmatmul.f32.gmra.mxu0 %v5360
  %v5428 = vpop.f32.mrf.mxu0
  %v5429 = vadd.f32 0.0, %v5428
  %5430 = vdwg.mxu0
  %v5431 = vadd.f32 %v5318, %v5380
  %v5432 = vadd.f32 %v5319, %v5403
  %v5433 = vadd.f32 %v5320, %v5426
  %v5434 = vadd.f32 %v5321, %v5383
  %v5435 = vadd.f32 %v5322, %v5406
  %v5436 = vadd.f32 %v5323, %v5429
  %s5437 = scalar_lea.vmem %s1, 768
  %v5438 = vld [vmem:[%s5437] sm:$0xff]
  %v5439 = vld [vmem:[%s5437 + $0x8] sm:$0x3]
  %5440 = vrot.lane.b32.xlu0 %v4749, 118
  %v5441 = vpop.permute.xlu0 %5440
  %5442 = vrot.lane.b32.xlu0 %v4750, 118
  %v5443 = vpop.permute.xlu0 %5442
  %5444 = vrot.lane.b32.xlu0 %v4751, 118
  %v5445 = vpop.permute.xlu0 %5444
  %5446 = vrot.lane.b32.xlu0 %v4752, 118
  %v5447 = vpop.permute.xlu0 %5446
  %5448 = vrot.lane.b32.xlu0 %v4753, 118
  %v5449 = vpop.permute.xlu0 %5448
  %5450 = vrot.lane.b32.xlu0 %v4754, 118
  %v5451 = vpop.permute.xlu0 %5450
  %5452 = vrot.lane.b32.xlu0 %v4755, 118
  %v5453 = vpop.permute.xlu0 %5452
  %5454 = vrot.lane.b32.xlu0 %v4756, 118
  %v5455 = vpop.permute.xlu0 %5454
  %vm5456 = vcmask 965632
  %v5457 = vsel %vm5456, %v5441, %v5443
  %v5458 = vsel %vm5456, %v5443, %v5445
  %v5459 = vsel %vm5456, %v5445, %v5447
  %v5460 = vsel %vm5456, %v5449, %v5451
  %v5461 = vsel %vm5456, %v5451, %v5453
  %v5462 = vsel %vm5456, %v5453, %v5455
  %v5470 = vsel %vm76, %v5438, 0
  %v5473 = vsel %vm76, %v5439, 0
  %5475 = vmatpush.msra.mxu0 0.0
  %5476 = vmatpush.msra.mxu0 0.0
  %5477 = vmatpush.msra.mxu0 0.0
  %5478 = vmatpush.msra.mxu0 0.0
  %5479 = vmatpush.msra.mxu0 0.0
  %5480 = vmatpush.msra.mxu0 0.0
  %5481 = vmatpush.msra.mxu0 0.0
  %5482 = vmatpush.msra.mxu0 0.0
  %5483 = vmatpush.msra.mxu0 0.0
  %5484 = vmatpush.msra.mxu0 0.0
  %5485 = vmatpush.msra.mxu0 0.0
  %5486 = vmatpush.msra.mxu0 0.0
  %5487 = vmatpush.msra.mxu0 0.0
  %5488 = vmatpush.msra.mxu0 0.0
  %5489 = vmatpush.msra.mxu0 %v5460
  %5490 = vmatpush.msra.mxu0 %v5457
  %5491 = vmatmul.f32.gmra.mxu0 %v5470
  %v5492 = vpop.f32.mrf.mxu0
  %v5493 = vadd.f32 0.0, %v5492
  %5494 = vmatmul.f32.gmra.mxu0 %v5473
  %v5495 = vpop.f32.mrf.mxu0
  %v5496 = vadd.f32 0.0, %v5495
  %5497 = vdwg.mxu0
  %5498 = vmatpush.msra.mxu0 0.0
  %5499 = vmatpush.msra.mxu0 0.0
  %5500 = vmatpush.msra.mxu0 0.0
  %5501 = vmatpush.msra.mxu0 0.0
  %5502 = vmatpush.msra.mxu0 0.0
  %5503 = vmatpush.msra.mxu0 0.0
  %5504 = vmatpush.msra.mxu0 0.0
  %5505 = vmatpush.msra.mxu0 0.0
  %5506 = vmatpush.msra.mxu0 0.0
  %5507 = vmatpush.msra.mxu0 0.0
  %5508 = vmatpush.msra.mxu0 0.0
  %5509 = vmatpush.msra.mxu0 0.0
  %5510 = vmatpush.msra.mxu0 0.0
  %5511 = vmatpush.msra.mxu0 0.0
  %5512 = vmatpush.msra.mxu0 %v5461
  %5513 = vmatpush.msra.mxu0 %v5458
  %5514 = vmatmul.f32.gmra.mxu0 %v5470
  %v5515 = vpop.f32.mrf.mxu0
  %v5516 = vadd.f32 0.0, %v5515
  %5517 = vmatmul.f32.gmra.mxu0 %v5473
  %v5518 = vpop.f32.mrf.mxu0
  %v5519 = vadd.f32 0.0, %v5518
  %5520 = vdwg.mxu0
  %5521 = vmatpush.msra.mxu0 0.0
  %5522 = vmatpush.msra.mxu0 0.0
  %5523 = vmatpush.msra.mxu0 0.0
  %5524 = vmatpush.msra.mxu0 0.0
  %5525 = vmatpush.msra.mxu0 0.0
  %5526 = vmatpush.msra.mxu0 0.0
  %5527 = vmatpush.msra.mxu0 0.0
  %5528 = vmatpush.msra.mxu0 0.0
  %5529 = vmatpush.msra.mxu0 0.0
  %5530 = vmatpush.msra.mxu0 0.0
  %5531 = vmatpush.msra.mxu0 0.0
  %5532 = vmatpush.msra.mxu0 0.0
  %5533 = vmatpush.msra.mxu0 0.0
  %5534 = vmatpush.msra.mxu0 0.0
  %5535 = vmatpush.msra.mxu0 %v5462
  %5536 = vmatpush.msra.mxu0 %v5459
  %5537 = vmatmul.f32.gmra.mxu0 %v5470
  %v5538 = vpop.f32.mrf.mxu0
  %v5539 = vadd.f32 0.0, %v5538
  %5540 = vmatmul.f32.gmra.mxu0 %v5473
  %v5541 = vpop.f32.mrf.mxu0
  %v5542 = vadd.f32 0.0, %v5541
  %5543 = vdwg.mxu0
  %v5544 = vadd.f32 %v5431, %v5493
  %v5545 = vadd.f32 %v5432, %v5516
  %v5546 = vadd.f32 %v5433, %v5539
  %v5547 = vadd.f32 %v5434, %v5496
  %v5548 = vadd.f32 %v5435, %v5519
  %v5549 = vadd.f32 %v5436, %v5542
  %v5550 = vadd.f32 %v5544, %v17
  %v5551 = vadd.f32 %v5545, %v18
  %v5552 = vadd.f32 %v5546, %v19
  %v5553 = vadd.f32 %v5547, %v20
  %v5554 = vadd.f32 %v5548, %v21
  %v5555 = vadd.f32 %v5549, %v22
  %v5556 = vmax.f32 %v5550, %v5552
  %v5557 = vmax.f32 %v5556, %v5551
  %5558 = vmax.xlane.f32.xlu0 %v5557
  %v5559 = vpop.xlane.xlu0 %5558
  %vm5560 = vcmask 1041408
  %v5561 = vsel %vm5560, %v5553, -inf
  %v5562 = vsel %vm5560, %v5554, -inf
  %v5563 = vsel %vm5560, %v5555, -inf
  %v5564 = vmax.f32 %v5561, %v5563
  %v5565 = vmax.f32 %v5564, %v5562
  %5566 = vmax.xlane.f32.xlu0 %v5565
  %v5567 = vpop.xlane.xlu0 %5566
  %v5568 = vsub.f32 %v5550, %v5559
  %v5569 = vsub.f32 %v5551, %v5559
  %v5570 = vsub.f32 %v5552, %v5559
  %v5571 = vsub.f32 %v5553, %v5567
  %v5572 = vsub.f32 %v5554, %v5567
  %v5573 = vsub.f32 %v5555, %v5567
  %v5574 = vmul.f32 %v5568, 1.442695
  %v5575 = vpow.pop %v5574
  %v5576 = vmul.f32 %v5569, 1.442695
  %v5577 = vpow.pop %v5576
  %v5578 = vmul.f32 %v5570, 1.442695
  %v5579 = vpow.pop %v5578
  %v5580 = vmul.f32 %v5571, 1.442695
  %v5581 = vpow.pop %v5580
  %v5582 = vmul.f32 %v5572, 1.442695
  %v5583 = vpow.pop %v5582
  %v5584 = vmul.f32 %v5573, 1.442695
  %v5585 = vpow.pop %v5584
  %v5586 = vadd.f32 %v5575, %v5577
  %v5587 = vadd.f32 %v5586, %v5579
  %5588 = vadd.xlane.f32.xlu0 %v5587
  %v5589 = vpop.xlane.xlu0 %5588
  %v5590 = vsel %vm5560, %v5581, 0.0
  %v5591 = vsel %vm5560, %v5583, 0.0
  %v5592 = vadd.f32 %v5590, %v5591
  %v5593 = vsel %vm5560, %v5585, 0.0
  %v5594 = vadd.f32 %v5592, %v5593
  %5595 = vadd.xlane.f32.xlu0 %v5594
  %v5596 = vpop.xlane.xlu0 %5595
  %v5598 = vperm.slane %v23, 0
  %v5599 = vperm.slane %v23, 1
  %v5600 = vperm.slane %v23, 2
  %v5604 = vmul.f32 %v5575, %v5598
  %v5605 = vmul.f32 %v5577, %v5599
  %v5606 = vmul.f32 %v5579, %v5600
  %v5607 = vmul.f32 %v5581, %v5598
  %v5608 = vmul.f32 %v5583, %v5599
  %v5609 = vmul.f32 %v5585, %v5600
  %v5610 = vadd.f32 %v5604, %v5605
  %v5611 = vadd.f32 %v5610, %v5606
  %5612 = vadd.xlane.f32.xlu0 %v5611
  %v5613 = vpop.xlane.xlu0 %5612
  %v5614 = vsel %vm5560, %v5607, 0.0
  %v5615 = vsel %vm5560, %v5608, 0.0
  %v5616 = vadd.f32 %v5614, %v5615
  %v5617 = vsel %vm5560, %v5609, 0.0
  %v5618 = vadd.f32 %v5616, %v5617
  %5619 = vadd.xlane.f32.xlu0 %v5618
  %v5620 = vpop.xlane.xlu0 %5619
  %v5622 = vperm.slane %v25, 0
  %v5623 = vperm.slane %v25, 1
  %v5624 = vperm.slane %v25, 2
  %v5628 = vmul.f32 %v5575, %v5622
  %v5629 = vmul.f32 %v5577, %v5623
  %v5630 = vmul.f32 %v5579, %v5624
  %v5631 = vmul.f32 %v5581, %v5622
  %v5632 = vmul.f32 %v5583, %v5623
  %v5633 = vmul.f32 %v5585, %v5624
  %v5634 = vadd.f32 %v5628, %v5629
  %v5635 = vadd.f32 %v5634, %v5630
  %5636 = vadd.xlane.f32.xlu0 %v5635
  %v5637 = vpop.xlane.xlu0 %5636
  %v5638 = vsel %vm5560, %v5631, 0.0
  %v5639 = vsel %vm5560, %v5632, 0.0
  %v5640 = vadd.f32 %v5638, %v5639
  %v5641 = vsel %vm5560, %v5633, 0.0
  %v5642 = vadd.f32 %v5640, %v5641
  %5643 = vadd.xlane.f32.xlu0 %v5642
  %v5644 = vpop.xlane.xlu0 %5643
  %vm5645 = vcmask 7168
  %v5646 = vsel %vm5645, %v5613, %v5637
  %v5647 = vsel %vm5645, %v5620, %v5644
  %v5648 = vrcp.pop %v5589
  %v5649 = vmul.f32 %v5589, %v5648
  %v5650 = vsub.f32 1.0, %v5649
  %v5651 = vmul.f32 %v5648, %v5650
  %v5652 = vadd.f32 %v5648, %v5651
  %vm5653 = vweird.f32 %v5589
  %vm5654 = vweird.f32 %v5648
  %vm5655 = vmor %vm5653, %vm5654
  %v5656 = vsel %vm5655, %v5648, %v5652
  %v5657 = vand.u32 2147483647, %v5589
  %vm5658 = vcmp.eq.f32.partialorder %v5657, 8.507059e+37
  %v5659 = vand.u32 %v5589, 2147483648
  %v5660 = vor.u32 1.1754944e-38, %v5659
  %v5661 = vsel %vm5658, %v5660, %v5656
  %v5662 = vmul.f32 %v5646, %v5661
  %v5663 = vrcp.pop %v5596
  %v5664 = vmul.f32 %v5596, %v5663
  %v5665 = vsub.f32 1.0, %v5664
  %v5666 = vmul.f32 %v5663, %v5665
  %v5667 = vadd.f32 %v5663, %v5666
  %vm5668 = vweird.f32 %v5596
  %vm5669 = vweird.f32 %v5663
  %vm5670 = vmor %vm5668, %vm5669
  %v5671 = vsel %vm5670, %v5663, %v5667
  %v5672 = vand.u32 2147483647, %v5596
  %vm5673 = vcmp.eq.f32.partialorder %v5672, 8.507059e+37
  %v5674 = vand.u32 %v5596, 2147483648
  %v5675 = vor.u32 1.1754944e-38, %v5674
  %v5676 = vsel %vm5673, %v5675, %v5671
  %v5677 = vmul.f32 %v5647, %v5676
  %vm5678 = vcmask 15360
  %5679 = vst.msk [vmem:[%s4] sm:$0xff] %vm5678, %v5662
  %vm5680 = vcmask 9216
  %5681 = vst.msk [vmem:[%s4 + $0x8] sm:$0x3] %vm5680, %v5677
  %v5682 = vld [vmem:[%s1] sm:$0xff]
  %v5683 = vld [vmem:[%s1 + $0x8] sm:$0x3]
  %s5684 = scalar_lea.vmem %s0, 80
  %v5685 = vld [vmem:[%s5684] sm:$0xff]
  %v5686 = vld [vmem:[%s5684 + $0x8] sm:$0xff]
  %v5687 = vld [vmem:[%s5684 + $0x10] sm:$0xff]
  %v5688 = vld [vmem:[%s5684 + $0x28] sm:$0xff]
  %v5689 = vld [vmem:[%s5684 + $0x30] sm:$0xff]
  %v5690 = vld [vmem:[%s5684 + $0x38] sm:$0xff]
  %v5691 = vld [vmem:[%s34] sm:$0xff]
  %v5692 = vld [vmem:[%s34 + $0x8] sm:$0x3]
  %v5693 = vld [vmem:[%s5684 + $0x18] sm:$0xff]
  %v5694 = vld [vmem:[%s5684 + $0x40] sm:$0xff]
  %5703 = vrot.lane.b32.xlu0 %v5685, 127
  %v5704 = vpop.permute.xlu0 %5703
  %5705 = vrot.lane.b32.xlu0 %v5686, 127
  %v5706 = vpop.permute.xlu0 %5705
  %5707 = vrot.lane.b32.xlu0 %v5687, 127
  %v5708 = vpop.permute.xlu0 %5707
  %5709 = vrot.lane.b32.xlu0 %v5693, 127
  %v5710 = vpop.permute.xlu0 %5709
  %5711 = vrot.lane.b32.xlu0 %v5688, 127
  %v5712 = vpop.permute.xlu0 %5711
  %5713 = vrot.lane.b32.xlu0 %v5689, 127
  %v5714 = vpop.permute.xlu0 %5713
  %5715 = vrot.lane.b32.xlu0 %v5690, 127
  %v5716 = vpop.permute.xlu0 %5715
  %5717 = vrot.lane.b32.xlu0 %v5694, 127
  %v5718 = vpop.permute.xlu0 %5717
  %v5719 = vsel %vm63, %v5704, %v5706
  %v5720 = vsel %vm63, %v5706, %v5708
  %v5721 = vsel %vm63, %v5708, %v5710
  %v5722 = vsel %vm63, %v5712, %v5714
  %v5723 = vsel %vm63, %v5714, %v5716
  %v5724 = vsel %vm63, %v5716, %v5718
  %v5732 = vsel %vm76, %v5691, 0
  %v5735 = vsel %vm76, %v5692, 0
  %5737 = vmatpush.msra.mxu0 0.0
  %5738 = vmatpush.msra.mxu0 0.0
  %5739 = vmatpush.msra.mxu0 0.0
  %5740 = vmatpush.msra.mxu0 0.0
  %5741 = vmatpush.msra.mxu0 0.0
  %5742 = vmatpush.msra.mxu0 0.0
  %5743 = vmatpush.msra.mxu0 0.0
  %5744 = vmatpush.msra.mxu0 0.0
  %5745 = vmatpush.msra.mxu0 0.0
  %5746 = vmatpush.msra.mxu0 0.0
  %5747 = vmatpush.msra.mxu0 0.0
  %5748 = vmatpush.msra.mxu0 0.0
  %5749 = vmatpush.msra.mxu0 0.0
  %5750 = vmatpush.msra.mxu0 0.0
  %5751 = vmatpush.msra.mxu0 %v5722
  %5752 = vmatpush.msra.mxu0 %v5719
  %5753 = vmatmul.f32.gmra.mxu0 %v5732
  %v5754 = vpop.f32.mrf.mxu0
  %v5755 = vadd.f32 0.0, %v5754
  %5756 = vmatmul.f32.gmra.mxu0 %v5735
  %v5757 = vpop.f32.mrf.mxu0
  %v5758 = vadd.f32 0.0, %v5757
  %5759 = vdwg.mxu0
  %5760 = vmatpush.msra.mxu0 0.0
  %5761 = vmatpush.msra.mxu0 0.0
  %5762 = vmatpush.msra.mxu0 0.0
  %5763 = vmatpush.msra.mxu0 0.0
  %5764 = vmatpush.msra.mxu0 0.0
  %5765 = vmatpush.msra.mxu0 0.0
  %5766 = vmatpush.msra.mxu0 0.0
  %5767 = vmatpush.msra.mxu0 0.0
  %5768 = vmatpush.msra.mxu0 0.0
  %5769 = vmatpush.msra.mxu0 0.0
  %5770 = vmatpush.msra.mxu0 0.0
  %5771 = vmatpush.msra.mxu0 0.0
  %5772 = vmatpush.msra.mxu0 0.0
  %5773 = vmatpush.msra.mxu0 0.0
  %5774 = vmatpush.msra.mxu0 %v5723
  %5775 = vmatpush.msra.mxu0 %v5720
  %5776 = vmatmul.f32.gmra.mxu0 %v5732
  %v5777 = vpop.f32.mrf.mxu0
  %v5778 = vadd.f32 0.0, %v5777
  %5779 = vmatmul.f32.gmra.mxu0 %v5735
  %v5780 = vpop.f32.mrf.mxu0
  %v5781 = vadd.f32 0.0, %v5780
  %5782 = vdwg.mxu0
  %5783 = vmatpush.msra.mxu0 0.0
  %5784 = vmatpush.msra.mxu0 0.0
  %5785 = vmatpush.msra.mxu0 0.0
  %5786 = vmatpush.msra.mxu0 0.0
  %5787 = vmatpush.msra.mxu0 0.0
  %5788 = vmatpush.msra.mxu0 0.0
  %5789 = vmatpush.msra.mxu0 0.0
  %5790 = vmatpush.msra.mxu0 0.0
  %5791 = vmatpush.msra.mxu0 0.0
  %5792 = vmatpush.msra.mxu0 0.0
  %5793 = vmatpush.msra.mxu0 0.0
  %5794 = vmatpush.msra.mxu0 0.0
  %5795 = vmatpush.msra.mxu0 0.0
  %5796 = vmatpush.msra.mxu0 0.0
  %5797 = vmatpush.msra.mxu0 %v5724
  %5798 = vmatpush.msra.mxu0 %v5721
  %5799 = vmatmul.f32.gmra.mxu0 %v5732
  %v5800 = vpop.f32.mrf.mxu0
  %v5801 = vadd.f32 0.0, %v5800
  %5802 = vmatmul.f32.gmra.mxu0 %v5735
  %v5803 = vpop.f32.mrf.mxu0
  %v5804 = vadd.f32 0.0, %v5803
  %5805 = vdwg.mxu0
  %v5807 = vsel %vm76, %v5682, 0
  %v5810 = vsel %vm76, %v5683, 0
  %5812 = vmatpush.msra.mxu0 0.0
  %5813 = vmatpush.msra.mxu0 0.0
  %5814 = vmatpush.msra.mxu0 0.0
  %5815 = vmatpush.msra.mxu0 0.0
  %5816 = vmatpush.msra.mxu0 0.0
  %5817 = vmatpush.msra.mxu0 0.0
  %5818 = vmatpush.msra.mxu0 0.0
  %5819 = vmatpush.msra.mxu0 0.0
  %5820 = vmatpush.msra.mxu0 0.0
  %5821 = vmatpush.msra.mxu0 0.0
  %5822 = vmatpush.msra.mxu0 0.0
  %5823 = vmatpush.msra.mxu0 0.0
  %5824 = vmatpush.msra.mxu0 0.0
  %5825 = vmatpush.msra.mxu0 0.0
  %5826 = vmatpush.msra.mxu0 %v5688
  %5827 = vmatpush.msra.mxu0 %v5685
  %5828 = vmatmul.f32.gmra.mxu0 %v5807
  %v5829 = vpop.f32.mrf.mxu0
  %v5830 = vadd.f32 %v5755, %v5829
  %5831 = vmatmul.f32.gmra.mxu0 %v5810
  %v5832 = vpop.f32.mrf.mxu0
  %v5833 = vadd.f32 %v5758, %v5832
  %5834 = vdwg.mxu0
  %5835 = vmatpush.msra.mxu0 0.0
  %5836 = vmatpush.msra.mxu0 0.0
  %5837 = vmatpush.msra.mxu0 0.0
  %5838 = vmatpush.msra.mxu0 0.0
  %5839 = vmatpush.msra.mxu0 0.0
  %5840 = vmatpush.msra.mxu0 0.0
  %5841 = vmatpush.msra.mxu0 0.0
  %5842 = vmatpush.msra.mxu0 0.0
  %5843 = vmatpush.msra.mxu0 0.0
  %5844 = vmatpush.msra.mxu0 0.0
  %5845 = vmatpush.msra.mxu0 0.0
  %5846 = vmatpush.msra.mxu0 0.0
  %5847 = vmatpush.msra.mxu0 0.0
  %5848 = vmatpush.msra.mxu0 0.0
  %5849 = vmatpush.msra.mxu0 %v5689
  %5850 = vmatpush.msra.mxu0 %v5686
  %5851 = vmatmul.f32.gmra.mxu0 %v5807
  %v5852 = vpop.f32.mrf.mxu0
  %v5853 = vadd.f32 %v5778, %v5852
  %5854 = vmatmul.f32.gmra.mxu0 %v5810
  %v5855 = vpop.f32.mrf.mxu0
  %v5856 = vadd.f32 %v5781, %v5855
  %5857 = vdwg.mxu0
  %5858 = vmatpush.msra.mxu0 0.0
  %5859 = vmatpush.msra.mxu0 0.0
  %5860 = vmatpush.msra.mxu0 0.0
  %5861 = vmatpush.msra.mxu0 0.0
  %5862 = vmatpush.msra.mxu0 0.0
  %5863 = vmatpush.msra.mxu0 0.0
  %5864 = vmatpush.msra.mxu0 0.0
  %5865 = vmatpush.msra.mxu0 0.0
  %5866 = vmatpush.msra.mxu0 0.0
  %5867 = vmatpush.msra.mxu0 0.0
  %5868 = vmatpush.msra.mxu0 0.0
  %5869 = vmatpush.msra.mxu0 0.0
  %5870 = vmatpush.msra.mxu0 0.0
  %5871 = vmatpush.msra.mxu0 0.0
  %5872 = vmatpush.msra.mxu0 %v5690
  %5873 = vmatpush.msra.mxu0 %v5687
  %5874 = vmatmul.f32.gmra.mxu0 %v5807
  %v5875 = vpop.f32.mrf.mxu0
  %v5876 = vadd.f32 %v5801, %v5875
  %5877 = vmatmul.f32.gmra.mxu0 %v5810
  %v5878 = vpop.f32.mrf.mxu0
  %v5879 = vadd.f32 %v5804, %v5878
  %5880 = vdwg.mxu0
  %v5881 = vld [vmem:[%s227] sm:$0xff]
  %v5882 = vld [vmem:[%s227 + $0x8] sm:$0x3]
  %5883 = vrot.lane.b32.xlu0 %v5685, 126
  %v5884 = vpop.permute.xlu0 %5883
  %5885 = vrot.lane.b32.xlu0 %v5686, 126
  %v5886 = vpop.permute.xlu0 %5885
  %5887 = vrot.lane.b32.xlu0 %v5687, 126
  %v5888 = vpop.permute.xlu0 %5887
  %5889 = vrot.lane.b32.xlu0 %v5693, 126
  %v5890 = vpop.permute.xlu0 %5889
  %5891 = vrot.lane.b32.xlu0 %v5688, 126
  %v5892 = vpop.permute.xlu0 %5891
  %5893 = vrot.lane.b32.xlu0 %v5689, 126
  %v5894 = vpop.permute.xlu0 %5893
  %5895 = vrot.lane.b32.xlu0 %v5690, 126
  %v5896 = vpop.permute.xlu0 %5895
  %5897 = vrot.lane.b32.xlu0 %v5694, 126
  %v5898 = vpop.permute.xlu0 %5897
  %v5899 = vsel %vm246, %v5884, %v5886
  %v5900 = vsel %vm246, %v5886, %v5888
  %v5901 = vsel %vm246, %v5888, %v5890
  %v5902 = vsel %vm246, %v5892, %v5894
  %v5903 = vsel %vm246, %v5894, %v5896
  %v5904 = vsel %vm246, %v5896, %v5898
  %v5912 = vsel %vm76, %v5881, 0
  %v5915 = vsel %vm76, %v5882, 0
  %5917 = vmatpush.msra.mxu0 0.0
  %5918 = vmatpush.msra.mxu0 0.0
  %5919 = vmatpush.msra.mxu0 0.0
  %5920 = vmatpush.msra.mxu0 0.0
  %5921 = vmatpush.msra.mxu0 0.0
  %5922 = vmatpush.msra.mxu0 0.0
  %5923 = vmatpush.msra.mxu0 0.0
  %5924 = vmatpush.msra.mxu0 0.0
  %5925 = vmatpush.msra.mxu0 0.0
  %5926 = vmatpush.msra.mxu0 0.0
  %5927 = vmatpush.msra.mxu0 0.0
  %5928 = vmatpush.msra.mxu0 0.0
  %5929 = vmatpush.msra.mxu0 0.0
  %5930 = vmatpush.msra.mxu0 0.0
  %5931 = vmatpush.msra.mxu0 %v5902
  %5932 = vmatpush.msra.mxu0 %v5899
  %5933 = vmatmul.f32.gmra.mxu0 %v5912
  %v5934 = vpop.f32.mrf.mxu0
  %v5935 = vadd.f32 0.0, %v5934
  %5936 = vmatmul.f32.gmra.mxu0 %v5915
  %v5937 = vpop.f32.mrf.mxu0
  %v5938 = vadd.f32 0.0, %v5937
  %5939 = vdwg.mxu0
  %5940 = vmatpush.msra.mxu0 0.0
  %5941 = vmatpush.msra.mxu0 0.0
  %5942 = vmatpush.msra.mxu0 0.0
  %5943 = vmatpush.msra.mxu0 0.0
  %5944 = vmatpush.msra.mxu0 0.0
  %5945 = vmatpush.msra.mxu0 0.0
  %5946 = vmatpush.msra.mxu0 0.0
  %5947 = vmatpush.msra.mxu0 0.0
  %5948 = vmatpush.msra.mxu0 0.0
  %5949 = vmatpush.msra.mxu0 0.0
  %5950 = vmatpush.msra.mxu0 0.0
  %5951 = vmatpush.msra.mxu0 0.0
  %5952 = vmatpush.msra.mxu0 0.0
  %5953 = vmatpush.msra.mxu0 0.0
  %5954 = vmatpush.msra.mxu0 %v5903
  %5955 = vmatpush.msra.mxu0 %v5900
  %5956 = vmatmul.f32.gmra.mxu0 %v5912
  %v5957 = vpop.f32.mrf.mxu0
  %v5958 = vadd.f32 0.0, %v5957
  %5959 = vmatmul.f32.gmra.mxu0 %v5915
  %v5960 = vpop.f32.mrf.mxu0
  %v5961 = vadd.f32 0.0, %v5960
  %5962 = vdwg.mxu0
  %5963 = vmatpush.msra.mxu0 0.0
  %5964 = vmatpush.msra.mxu0 0.0
  %5965 = vmatpush.msra.mxu0 0.0
  %5966 = vmatpush.msra.mxu0 0.0
  %5967 = vmatpush.msra.mxu0 0.0
  %5968 = vmatpush.msra.mxu0 0.0
  %5969 = vmatpush.msra.mxu0 0.0
  %5970 = vmatpush.msra.mxu0 0.0
  %5971 = vmatpush.msra.mxu0 0.0
  %5972 = vmatpush.msra.mxu0 0.0
  %5973 = vmatpush.msra.mxu0 0.0
  %5974 = vmatpush.msra.mxu0 0.0
  %5975 = vmatpush.msra.mxu0 0.0
  %5976 = vmatpush.msra.mxu0 0.0
  %5977 = vmatpush.msra.mxu0 %v5904
  %5978 = vmatpush.msra.mxu0 %v5901
  %5979 = vmatmul.f32.gmra.mxu0 %v5912
  %v5980 = vpop.f32.mrf.mxu0
  %v5981 = vadd.f32 0.0, %v5980
  %5982 = vmatmul.f32.gmra.mxu0 %v5915
  %v5983 = vpop.f32.mrf.mxu0
  %v5984 = vadd.f32 0.0, %v5983
  %5985 = vdwg.mxu0
  %v5986 = vadd.f32 %v5830, %v5935
  %v5987 = vadd.f32 %v5853, %v5958
  %v5988 = vadd.f32 %v5876, %v5981
  %v5989 = vadd.f32 %v5833, %v5938
  %v5990 = vadd.f32 %v5856, %v5961
  %v5991 = vadd.f32 %v5879, %v5984
  %v5992 = vld [vmem:[%s340] sm:$0xff]
  %v5993 = vld [vmem:[%s340 + $0x8] sm:$0x3]
  %5994 = vrot.lane.b32.xlu0 %v5685, 125
  %v5995 = vpop.permute.xlu0 %5994
  %5996 = vrot.lane.b32.xlu0 %v5686, 125
  %v5997 = vpop.permute.xlu0 %5996
  %5998 = vrot.lane.b32.xlu0 %v5687, 125
  %v5999 = vpop.permute.xlu0 %5998
  %6000 = vrot.lane.b32.xlu0 %v5693, 125
  %v6001 = vpop.permute.xlu0 %6000
  %6002 = vrot.lane.b32.xlu0 %v5688, 125
  %v6003 = vpop.permute.xlu0 %6002
  %6004 = vrot.lane.b32.xlu0 %v5689, 125
  %v6005 = vpop.permute.xlu0 %6004
  %6006 = vrot.lane.b32.xlu0 %v5690, 125
  %v6007 = vpop.permute.xlu0 %6006
  %6008 = vrot.lane.b32.xlu0 %v5694, 125
  %v6009 = vpop.permute.xlu0 %6008
  %v6010 = vsel %vm359, %v5995, %v5997
  %v6011 = vsel %vm359, %v5997, %v5999
  %v6012 = vsel %vm359, %v5999, %v6001
  %v6013 = vsel %vm359, %v6003, %v6005
  %v6014 = vsel %vm359, %v6005, %v6007
  %v6015 = vsel %vm359, %v6007, %v6009
  %v6023 = vsel %vm76, %v5992, 0
  %v6026 = vsel %vm76, %v5993, 0
  %6028 = vmatpush.msra.mxu0 0.0
  %6029 = vmatpush.msra.mxu0 0.0
  %6030 = vmatpush.msra.mxu0 0.0
  %6031 = vmatpush.msra.mxu0 0.0
  %6032 = vmatpush.msra.mxu0 0.0
  %6033 = vmatpush.msra.mxu0 0.0
  %6034 = vmatpush.msra.mxu0 0.0
  %6035 = vmatpush.msra.mxu0 0.0
  %6036 = vmatpush.msra.mxu0 0.0
  %6037 = vmatpush.msra.mxu0 0.0
  %6038 = vmatpush.msra.mxu0 0.0
  %6039 = vmatpush.msra.mxu0 0.0
  %6040 = vmatpush.msra.mxu0 0.0
  %6041 = vmatpush.msra.mxu0 0.0
  %6042 = vmatpush.msra.mxu0 %v6013
  %6043 = vmatpush.msra.mxu0 %v6010
  %6044 = vmatmul.f32.gmra.mxu0 %v6023
  %v6045 = vpop.f32.mrf.mxu0
  %v6046 = vadd.f32 0.0, %v6045
  %6047 = vmatmul.f32.gmra.mxu0 %v6026
  %v6048 = vpop.f32.mrf.mxu0
  %v6049 = vadd.f32 0.0, %v6048
  %6050 = vdwg.mxu0
  %6051 = vmatpush.msra.mxu0 0.0
  %6052 = vmatpush.msra.mxu0 0.0
  %6053 = vmatpush.msra.mxu0 0.0
  %6054 = vmatpush.msra.mxu0 0.0
  %6055 = vmatpush.msra.mxu0 0.0
  %6056 = vmatpush.msra.mxu0 0.0
  %6057 = vmatpush.msra.mxu0 0.0
  %6058 = vmatpush.msra.mxu0 0.0
  %6059 = vmatpush.msra.mxu0 0.0
  %6060 = vmatpush.msra.mxu0 0.0
  %6061 = vmatpush.msra.mxu0 0.0
  %6062 = vmatpush.msra.mxu0 0.0
  %6063 = vmatpush.msra.mxu0 0.0
  %6064 = vmatpush.msra.mxu0 0.0
  %6065 = vmatpush.msra.mxu0 %v6014
  %6066 = vmatpush.msra.mxu0 %v6011
  %6067 = vmatmul.f32.gmra.mxu0 %v6023
  %v6068 = vpop.f32.mrf.mxu0
  %v6069 = vadd.f32 0.0, %v6068
  %6070 = vmatmul.f32.gmra.mxu0 %v6026
  %v6071 = vpop.f32.mrf.mxu0
  %v6072 = vadd.f32 0.0, %v6071
  %6073 = vdwg.mxu0
  %6074 = vmatpush.msra.mxu0 0.0
  %6075 = vmatpush.msra.mxu0 0.0
  %6076 = vmatpush.msra.mxu0 0.0
  %6077 = vmatpush.msra.mxu0 0.0
  %6078 = vmatpush.msra.mxu0 0.0
  %6079 = vmatpush.msra.mxu0 0.0
  %6080 = vmatpush.msra.mxu0 0.0
  %6081 = vmatpush.msra.mxu0 0.0
  %6082 = vmatpush.msra.mxu0 0.0
  %6083 = vmatpush.msra.mxu0 0.0
  %6084 = vmatpush.msra.mxu0 0.0
  %6085 = vmatpush.msra.mxu0 0.0
  %6086 = vmatpush.msra.mxu0 0.0
  %6087 = vmatpush.msra.mxu0 0.0
  %6088 = vmatpush.msra.mxu0 %v6015
  %6089 = vmatpush.msra.mxu0 %v6012
  %6090 = vmatmul.f32.gmra.mxu0 %v6023
  %v6091 = vpop.f32.mrf.mxu0
  %v6092 = vadd.f32 0.0, %v6091
  %6093 = vmatmul.f32.gmra.mxu0 %v6026
  %v6094 = vpop.f32.mrf.mxu0
  %v6095 = vadd.f32 0.0, %v6094
  %6096 = vdwg.mxu0
  %v6097 = vadd.f32 %v5986, %v6046
  %v6098 = vadd.f32 %v5987, %v6069
  %v6099 = vadd.f32 %v5988, %v6092
  %v6100 = vadd.f32 %v5989, %v6049
  %v6101 = vadd.f32 %v5990, %v6072
  %v6102 = vadd.f32 %v5991, %v6095
  %v6103 = vld [vmem:[%s453] sm:$0xff]
  %v6104 = vld [vmem:[%s453 + $0x8] sm:$0x3]
  %6105 = vrot.lane.b32.xlu0 %v5685, 124
  %v6106 = vpop.permute.xlu0 %6105
  %6107 = vrot.lane.b32.xlu0 %v5686, 124
  %v6108 = vpop.permute.xlu0 %6107
  %6109 = vrot.lane.b32.xlu0 %v5687, 124
  %v6110 = vpop.permute.xlu0 %6109
  %6111 = vrot.lane.b32.xlu0 %v5693, 124
  %v6112 = vpop.permute.xlu0 %6111
  %6113 = vrot.lane.b32.xlu0 %v5688, 124
  %v6114 = vpop.permute.xlu0 %6113
  %6115 = vrot.lane.b32.xlu0 %v5689, 124
  %v6116 = vpop.permute.xlu0 %6115
  %6117 = vrot.lane.b32.xlu0 %v5690, 124
  %v6118 = vpop.permute.xlu0 %6117
  %6119 = vrot.lane.b32.xlu0 %v5694, 124
  %v6120 = vpop.permute.xlu0 %6119
  %v6121 = vsel %vm472, %v6106, %v6108
  %v6122 = vsel %vm472, %v6108, %v6110
  %v6123 = vsel %vm472, %v6110, %v6112
  %v6124 = vsel %vm472, %v6114, %v6116
  %v6125 = vsel %vm472, %v6116, %v6118
  %v6126 = vsel %vm472, %v6118, %v6120
  %v6134 = vsel %vm76, %v6103, 0
  %v6137 = vsel %vm76, %v6104, 0
  %6139 = vmatpush.msra.mxu0 0.0
  %6140 = vmatpush.msra.mxu0 0.0
  %6141 = vmatpush.msra.mxu0 0.0
  %6142 = vmatpush.msra.mxu0 0.0
  %6143 = vmatpush.msra.mxu0 0.0
  %6144 = vmatpush.msra.mxu0 0.0
  %6145 = vmatpush.msra.mxu0 0.0
  %6146 = vmatpush.msra.mxu0 0.0
  %6147 = vmatpush.msra.mxu0 0.0
  %6148 = vmatpush.msra.mxu0 0.0
  %6149 = vmatpush.msra.mxu0 0.0
  %6150 = vmatpush.msra.mxu0 0.0
  %6151 = vmatpush.msra.mxu0 0.0
  %6152 = vmatpush.msra.mxu0 0.0
  %6153 = vmatpush.msra.mxu0 %v6124
  %6154 = vmatpush.msra.mxu0 %v6121
  %6155 = vmatmul.f32.gmra.mxu0 %v6134
  %v6156 = vpop.f32.mrf.mxu0
  %v6157 = vadd.f32 0.0, %v6156
  %6158 = vmatmul.f32.gmra.mxu0 %v6137
  %v6159 = vpop.f32.mrf.mxu0
  %v6160 = vadd.f32 0.0, %v6159
  %6161 = vdwg.mxu0
  %6162 = vmatpush.msra.mxu0 0.0
  %6163 = vmatpush.msra.mxu0 0.0
  %6164 = vmatpush.msra.mxu0 0.0
  %6165 = vmatpush.msra.mxu0 0.0
  %6166 = vmatpush.msra.mxu0 0.0
  %6167 = vmatpush.msra.mxu0 0.0
  %6168 = vmatpush.msra.mxu0 0.0
  %6169 = vmatpush.msra.mxu0 0.0
  %6170 = vmatpush.msra.mxu0 0.0
  %6171 = vmatpush.msra.mxu0 0.0
  %6172 = vmatpush.msra.mxu0 0.0
  %6173 = vmatpush.msra.mxu0 0.0
  %6174 = vmatpush.msra.mxu0 0.0
  %6175 = vmatpush.msra.mxu0 0.0
  %6176 = vmatpush.msra.mxu0 %v6125
  %6177 = vmatpush.msra.mxu0 %v6122
  %6178 = vmatmul.f32.gmra.mxu0 %v6134
  %v6179 = vpop.f32.mrf.mxu0
  %v6180 = vadd.f32 0.0, %v6179
  %6181 = vmatmul.f32.gmra.mxu0 %v6137
  %v6182 = vpop.f32.mrf.mxu0
  %v6183 = vadd.f32 0.0, %v6182
  %6184 = vdwg.mxu0
  %6185 = vmatpush.msra.mxu0 0.0
  %6186 = vmatpush.msra.mxu0 0.0
  %6187 = vmatpush.msra.mxu0 0.0
  %6188 = vmatpush.msra.mxu0 0.0
  %6189 = vmatpush.msra.mxu0 0.0
  %6190 = vmatpush.msra.mxu0 0.0
  %6191 = vmatpush.msra.mxu0 0.0
  %6192 = vmatpush.msra.mxu0 0.0
  %6193 = vmatpush.msra.mxu0 0.0
  %6194 = vmatpush.msra.mxu0 0.0
  %6195 = vmatpush.msra.mxu0 0.0
  %6196 = vmatpush.msra.mxu0 0.0
  %6197 = vmatpush.msra.mxu0 0.0
  %6198 = vmatpush.msra.mxu0 0.0
  %6199 = vmatpush.msra.mxu0 %v6126
  %6200 = vmatpush.msra.mxu0 %v6123
  %6201 = vmatmul.f32.gmra.mxu0 %v6134
  %v6202 = vpop.f32.mrf.mxu0
  %v6203 = vadd.f32 0.0, %v6202
  %6204 = vmatmul.f32.gmra.mxu0 %v6137
  %v6205 = vpop.f32.mrf.mxu0
  %v6206 = vadd.f32 0.0, %v6205
  %6207 = vdwg.mxu0
  %v6208 = vadd.f32 %v6097, %v6157
  %v6209 = vadd.f32 %v6098, %v6180
  %v6210 = vadd.f32 %v6099, %v6203
  %v6211 = vadd.f32 %v6100, %v6160
  %v6212 = vadd.f32 %v6101, %v6183
  %v6213 = vadd.f32 %v6102, %v6206
  %v6214 = vld [vmem:[%s566] sm:$0xff]
  %v6215 = vld [vmem:[%s566 + $0x8] sm:$0x3]
  %6216 = vrot.lane.b32.xlu0 %v5685, 123
  %v6217 = vpop.permute.xlu0 %6216
  %6218 = vrot.lane.b32.xlu0 %v5686, 123
  %v6219 = vpop.permute.xlu0 %6218
  %6220 = vrot.lane.b32.xlu0 %v5687, 123
  %v6221 = vpop.permute.xlu0 %6220
  %6222 = vrot.lane.b32.xlu0 %v5693, 123
  %v6223 = vpop.permute.xlu0 %6222
  %6224 = vrot.lane.b32.xlu0 %v5688, 123
  %v6225 = vpop.permute.xlu0 %6224
  %6226 = vrot.lane.b32.xlu0 %v5689, 123
  %v6227 = vpop.permute.xlu0 %6226
  %6228 = vrot.lane.b32.xlu0 %v5690, 123
  %v6229 = vpop.permute.xlu0 %6228
  %6230 = vrot.lane.b32.xlu0 %v5694, 123
  %v6231 = vpop.permute.xlu0 %6230
  %v6232 = vsel %vm585, %v6217, %v6219
  %v6233 = vsel %vm585, %v6219, %v6221
  %v6234 = vsel %vm585, %v6221, %v6223
  %v6235 = vsel %vm585, %v6225, %v6227
  %v6236 = vsel %vm585, %v6227, %v6229
  %v6237 = vsel %vm585, %v6229, %v6231
  %v6245 = vsel %vm76, %v6214, 0
  %v6248 = vsel %vm76, %v6215, 0
  %6250 = vmatpush.msra.mxu0 0.0
  %6251 = vmatpush.msra.mxu0 0.0
  %6252 = vmatpush.msra.mxu0 0.0
  %6253 = vmatpush.msra.mxu0 0.0
  %6254 = vmatpush.msra.mxu0 0.0
  %6255 = vmatpush.msra.mxu0 0.0
  %6256 = vmatpush.msra.mxu0 0.0
  %6257 = vmatpush.msra.mxu0 0.0
  %6258 = vmatpush.msra.mxu0 0.0
  %6259 = vmatpush.msra.mxu0 0.0
  %6260 = vmatpush.msra.mxu0 0.0
  %6261 = vmatpush.msra.mxu0 0.0
  %6262 = vmatpush.msra.mxu0 0.0
  %6263 = vmatpush.msra.mxu0 0.0
  %6264 = vmatpush.msra.mxu0 %v6235
  %6265 = vmatpush.msra.mxu0 %v6232
  %6266 = vmatmul.f32.gmra.mxu0 %v6245
  %v6267 = vpop.f32.mrf.mxu0
  %v6268 = vadd.f32 0.0, %v6267
  %6269 = vmatmul.f32.gmra.mxu0 %v6248
  %v6270 = vpop.f32.mrf.mxu0
  %v6271 = vadd.f32 0.0, %v6270
  %6272 = vdwg.mxu0
  %6273 = vmatpush.msra.mxu0 0.0
  %6274 = vmatpush.msra.mxu0 0.0
  %6275 = vmatpush.msra.mxu0 0.0
  %6276 = vmatpush.msra.mxu0 0.0
  %6277 = vmatpush.msra.mxu0 0.0
  %6278 = vmatpush.msra.mxu0 0.0
  %6279 = vmatpush.msra.mxu0 0.0
  %6280 = vmatpush.msra.mxu0 0.0
  %6281 = vmatpush.msra.mxu0 0.0
  %6282 = vmatpush.msra.mxu0 0.0
  %6283 = vmatpush.msra.mxu0 0.0
  %6284 = vmatpush.msra.mxu0 0.0
  %6285 = vmatpush.msra.mxu0 0.0
  %6286 = vmatpush.msra.mxu0 0.0
  %6287 = vmatpush.msra.mxu0 %v6236
  %6288 = vmatpush.msra.mxu0 %v6233
  %6289 = vmatmul.f32.gmra.mxu0 %v6245
  %v6290 = vpop.f32.mrf.mxu0
  %v6291 = vadd.f32 0.0, %v6290
  %6292 = vmatmul.f32.gmra.mxu0 %v6248
  %v6293 = vpop.f32.mrf.mxu0
  %v6294 = vadd.f32 0.0, %v6293
  %6295 = vdwg.mxu0
  %6296 = vmatpush.msra.mxu0 0.0
  %6297 = vmatpush.msra.mxu0 0.0
  %6298 = vmatpush.msra.mxu0 0.0
  %6299 = vmatpush.msra.mxu0 0.0
  %6300 = vmatpush.msra.mxu0 0.0
  %6301 = vmatpush.msra.mxu0 0.0
  %6302 = vmatpush.msra.mxu0 0.0
  %6303 = vmatpush.msra.mxu0 0.0
  %6304 = vmatpush.msra.mxu0 0.0
  %6305 = vmatpush.msra.mxu0 0.0
  %6306 = vmatpush.msra.mxu0 0.0
  %6307 = vmatpush.msra.mxu0 0.0
  %6308 = vmatpush.msra.mxu0 0.0
  %6309 = vmatpush.msra.mxu0 0.0
  %6310 = vmatpush.msra.mxu0 %v6237
  %6311 = vmatpush.msra.mxu0 %v6234
  %6312 = vmatmul.f32.gmra.mxu0 %v6245
  %v6313 = vpop.f32.mrf.mxu0
  %v6314 = vadd.f32 0.0, %v6313
  %6315 = vmatmul.f32.gmra.mxu0 %v6248
  %v6316 = vpop.f32.mrf.mxu0
  %v6317 = vadd.f32 0.0, %v6316
  %6318 = vdwg.mxu0
  %v6319 = vadd.f32 %v6208, %v6268
  %v6320 = vadd.f32 %v6209, %v6291
  %v6321 = vadd.f32 %v6210, %v6314
  %v6322 = vadd.f32 %v6211, %v6271
  %v6323 = vadd.f32 %v6212, %v6294
  %v6324 = vadd.f32 %v6213, %v6317
  %v6325 = vld [vmem:[%s679] sm:$0xff]
  %v6326 = vld [vmem:[%s679 + $0x8] sm:$0x3]
  %6327 = vrot.lane.b32.xlu0 %v5685, 122
  %v6328 = vpop.permute.xlu0 %6327
  %6329 = vrot.lane.b32.xlu0 %v5686, 122
  %v6330 = vpop.permute.xlu0 %6329
  %6331 = vrot.lane.b32.xlu0 %v5687, 122
  %v6332 = vpop.permute.xlu0 %6331
  %6333 = vrot.lane.b32.xlu0 %v5693, 122
  %v6334 = vpop.permute.xlu0 %6333
  %6335 = vrot.lane.b32.xlu0 %v5688, 122
  %v6336 = vpop.permute.xlu0 %6335
  %6337 = vrot.lane.b32.xlu0 %v5689, 122
  %v6338 = vpop.permute.xlu0 %6337
  %6339 = vrot.lane.b32.xlu0 %v5690, 122
  %v6340 = vpop.permute.xlu0 %6339
  %6341 = vrot.lane.b32.xlu0 %v5694, 122
  %v6342 = vpop.permute.xlu0 %6341
  %v6343 = vsel %vm698, %v6328, %v6330
  %v6344 = vsel %vm698, %v6330, %v6332
  %v6345 = vsel %vm698, %v6332, %v6334
  %v6346 = vsel %vm698, %v6336, %v6338
  %v6347 = vsel %vm698, %v6338, %v6340
  %v6348 = vsel %vm698, %v6340, %v6342
  %v6356 = vsel %vm76, %v6325, 0
  %v6359 = vsel %vm76, %v6326, 0
  %6361 = vmatpush.msra.mxu0 0.0
  %6362 = vmatpush.msra.mxu0 0.0
  %6363 = vmatpush.msra.mxu0 0.0
  %6364 = vmatpush.msra.mxu0 0.0
  %6365 = vmatpush.msra.mxu0 0.0
  %6366 = vmatpush.msra.mxu0 0.0
  %6367 = vmatpush.msra.mxu0 0.0
  %6368 = vmatpush.msra.mxu0 0.0
  %6369 = vmatpush.msra.mxu0 0.0
  %6370 = vmatpush.msra.mxu0 0.0
  %6371 = vmatpush.msra.mxu0 0.0
  %6372 = vmatpush.msra.mxu0 0.0
  %6373 = vmatpush.msra.mxu0 0.0
  %6374 = vmatpush.msra.mxu0 0.0
  %6375 = vmatpush.msra.mxu0 %v6346
  %6376 = vmatpush.msra.mxu0 %v6343
  %6377 = vmatmul.f32.gmra.mxu0 %v6356
  %v6378 = vpop.f32.mrf.mxu0
  %v6379 = vadd.f32 0.0, %v6378
  %6380 = vmatmul.f32.gmra.mxu0 %v6359
  %v6381 = vpop.f32.mrf.mxu0
  %v6382 = vadd.f32 0.0, %v6381
  %6383 = vdwg.mxu0
  %6384 = vmatpush.msra.mxu0 0.0
  %6385 = vmatpush.msra.mxu0 0.0
  %6386 = vmatpush.msra.mxu0 0.0
  %6387 = vmatpush.msra.mxu0 0.0
  %6388 = vmatpush.msra.mxu0 0.0
  %6389 = vmatpush.msra.mxu0 0.0
  %6390 = vmatpush.msra.mxu0 0.0
  %6391 = vmatpush.msra.mxu0 0.0
  %6392 = vmatpush.msra.mxu0 0.0
  %6393 = vmatpush.msra.mxu0 0.0
  %6394 = vmatpush.msra.mxu0 0.0
  %6395 = vmatpush.msra.mxu0 0.0
  %6396 = vmatpush.msra.mxu0 0.0
  %6397 = vmatpush.msra.mxu0 0.0
  %6398 = vmatpush.msra.mxu0 %v6347
  %6399 = vmatpush.msra.mxu0 %v6344
  %6400 = vmatmul.f32.gmra.mxu0 %v6356
  %v6401 = vpop.f32.mrf.mxu0
  %v6402 = vadd.f32 0.0, %v6401
  %6403 = vmatmul.f32.gmra.mxu0 %v6359
  %v6404 = vpop.f32.mrf.mxu0
  %v6405 = vadd.f32 0.0, %v6404
  %6406 = vdwg.mxu0
  %6407 = vmatpush.msra.mxu0 0.0
  %6408 = vmatpush.msra.mxu0 0.0
  %6409 = vmatpush.msra.mxu0 0.0
  %6410 = vmatpush.msra.mxu0 0.0
  %6411 = vmatpush.msra.mxu0 0.0
  %6412 = vmatpush.msra.mxu0 0.0
  %6413 = vmatpush.msra.mxu0 0.0
  %6414 = vmatpush.msra.mxu0 0.0
  %6415 = vmatpush.msra.mxu0 0.0
  %6416 = vmatpush.msra.mxu0 0.0
  %6417 = vmatpush.msra.mxu0 0.0
  %6418 = vmatpush.msra.mxu0 0.0
  %6419 = vmatpush.msra.mxu0 0.0
  %6420 = vmatpush.msra.mxu0 0.0
  %6421 = vmatpush.msra.mxu0 %v6348
  %6422 = vmatpush.msra.mxu0 %v6345
  %6423 = vmatmul.f32.gmra.mxu0 %v6356
  %v6424 = vpop.f32.mrf.mxu0
  %v6425 = vadd.f32 0.0, %v6424
  %6426 = vmatmul.f32.gmra.mxu0 %v6359
  %v6427 = vpop.f32.mrf.mxu0
  %v6428 = vadd.f32 0.0, %v6427
  %6429 = vdwg.mxu0
  %v6430 = vadd.f32 %v6319, %v6379
  %v6431 = vadd.f32 %v6320, %v6402
  %v6432 = vadd.f32 %v6321, %v6425
  %v6433 = vadd.f32 %v6322, %v6382
  %v6434 = vadd.f32 %v6323, %v6405
  %v6435 = vadd.f32 %v6324, %v6428
  %v6436 = vld [vmem:[%s792] sm:$0xff]
  %v6437 = vld [vmem:[%s792 + $0x8] sm:$0x3]
  %6438 = vrot.lane.b32.xlu0 %v5685, 106
  %v6439 = vpop.permute.xlu0 %6438
  %6440 = vrot.lane.b32.xlu0 %v5686, 106
  %v6441 = vpop.permute.xlu0 %6440
  %6442 = vrot.lane.b32.xlu0 %v5687, 106
  %v6443 = vpop.permute.xlu0 %6442
  %6444 = vrot.lane.b32.xlu0 %v5693, 106
  %v6445 = vpop.permute.xlu0 %6444
  %6446 = vrot.lane.b32.xlu0 %v5688, 106
  %v6447 = vpop.permute.xlu0 %6446
  %6448 = vrot.lane.b32.xlu0 %v5689, 106
  %v6449 = vpop.permute.xlu0 %6448
  %6450 = vrot.lane.b32.xlu0 %v5690, 106
  %v6451 = vpop.permute.xlu0 %6450
  %6452 = vrot.lane.b32.xlu0 %v5694, 106
  %v6453 = vpop.permute.xlu0 %6452
  %v6454 = vsel %vm811, %v6439, %v6441
  %v6455 = vsel %vm811, %v6441, %v6443
  %v6456 = vsel %vm811, %v6443, %v6445
  %v6457 = vsel %vm811, %v6447, %v6449
  %v6458 = vsel %vm811, %v6449, %v6451
  %v6459 = vsel %vm811, %v6451, %v6453
  %v6467 = vsel %vm76, %v6436, 0
  %v6470 = vsel %vm76, %v6437, 0
  %6472 = vmatpush.msra.mxu0 0.0
  %6473 = vmatpush.msra.mxu0 0.0
  %6474 = vmatpush.msra.mxu0 0.0
  %6475 = vmatpush.msra.mxu0 0.0
  %6476 = vmatpush.msra.mxu0 0.0
  %6477 = vmatpush.msra.mxu0 0.0
  %6478 = vmatpush.msra.mxu0 0.0
  %6479 = vmatpush.msra.mxu0 0.0
  %6480 = vmatpush.msra.mxu0 0.0
  %6481 = vmatpush.msra.mxu0 0.0
  %6482 = vmatpush.msra.mxu0 0.0
  %6483 = vmatpush.msra.mxu0 0.0
  %6484 = vmatpush.msra.mxu0 0.0
  %6485 = vmatpush.msra.mxu0 0.0
  %6486 = vmatpush.msra.mxu0 %v6457
  %6487 = vmatpush.msra.mxu0 %v6454
  %6488 = vmatmul.f32.gmra.mxu0 %v6467
  %v6489 = vpop.f32.mrf.mxu0
  %v6490 = vadd.f32 0.0, %v6489
  %6491 = vmatmul.f32.gmra.mxu0 %v6470
  %v6492 = vpop.f32.mrf.mxu0
  %v6493 = vadd.f32 0.0, %v6492
  %6494 = vdwg.mxu0
  %6495 = vmatpush.msra.mxu0 0.0
  %6496 = vmatpush.msra.mxu0 0.0
  %6497 = vmatpush.msra.mxu0 0.0
  %6498 = vmatpush.msra.mxu0 0.0
  %6499 = vmatpush.msra.mxu0 0.0
  %6500 = vmatpush.msra.mxu0 0.0
  %6501 = vmatpush.msra.mxu0 0.0
  %6502 = vmatpush.msra.mxu0 0.0
  %6503 = vmatpush.msra.mxu0 0.0
  %6504 = vmatpush.msra.mxu0 0.0
  %6505 = vmatpush.msra.mxu0 0.0
  %6506 = vmatpush.msra.mxu0 0.0
  %6507 = vmatpush.msra.mxu0 0.0
  %6508 = vmatpush.msra.mxu0 0.0
  %6509 = vmatpush.msra.mxu0 %v6458
  %6510 = vmatpush.msra.mxu0 %v6455
  %6511 = vmatmul.f32.gmra.mxu0 %v6467
  %v6512 = vpop.f32.mrf.mxu0
  %v6513 = vadd.f32 0.0, %v6512
  %6514 = vmatmul.f32.gmra.mxu0 %v6470
  %v6515 = vpop.f32.mrf.mxu0
  %v6516 = vadd.f32 0.0, %v6515
  %6517 = vdwg.mxu0
  %6518 = vmatpush.msra.mxu0 0.0
  %6519 = vmatpush.msra.mxu0 0.0
  %6520 = vmatpush.msra.mxu0 0.0
  %6521 = vmatpush.msra.mxu0 0.0
  %6522 = vmatpush.msra.mxu0 0.0
  %6523 = vmatpush.msra.mxu0 0.0
  %6524 = vmatpush.msra.mxu0 0.0
  %6525 = vmatpush.msra.mxu0 0.0
  %6526 = vmatpush.msra.mxu0 0.0
  %6527 = vmatpush.msra.mxu0 0.0
  %6528 = vmatpush.msra.mxu0 0.0
  %6529 = vmatpush.msra.mxu0 0.0
  %6530 = vmatpush.msra.mxu0 0.0
  %6531 = vmatpush.msra.mxu0 0.0
  %6532 = vmatpush.msra.mxu0 %v6459
  %6533 = vmatpush.msra.mxu0 %v6456
  %6534 = vmatmul.f32.gmra.mxu0 %v6467
  %v6535 = vpop.f32.mrf.mxu0
  %v6536 = vadd.f32 0.0, %v6535
  %6537 = vmatmul.f32.gmra.mxu0 %v6470
  %v6538 = vpop.f32.mrf.mxu0
  %v6539 = vadd.f32 0.0, %v6538
  %6540 = vdwg.mxu0
  %v6541 = vadd.f32 %v6430, %v6490
  %v6542 = vadd.f32 %v6431, %v6513
  %v6543 = vadd.f32 %v6432, %v6536
  %v6544 = vadd.f32 %v6433, %v6493
  %v6545 = vadd.f32 %v6434, %v6516
  %v6546 = vadd.f32 %v6435, %v6539
  %v6547 = vld [vmem:[%s905] sm:$0xff]
  %v6548 = vld [vmem:[%s905 + $0x8] sm:$0x3]
  %6549 = vrot.lane.b32.xlu0 %v5685, 105
  %v6550 = vpop.permute.xlu0 %6549
  %6551 = vrot.lane.b32.xlu0 %v5686, 105
  %v6552 = vpop.permute.xlu0 %6551
  %6553 = vrot.lane.b32.xlu0 %v5687, 105
  %v6554 = vpop.permute.xlu0 %6553
  %6555 = vrot.lane.b32.xlu0 %v5693, 105
  %v6556 = vpop.permute.xlu0 %6555
  %6557 = vrot.lane.b32.xlu0 %v5688, 105
  %v6558 = vpop.permute.xlu0 %6557
  %6559 = vrot.lane.b32.xlu0 %v5689, 105
  %v6560 = vpop.permute.xlu0 %6559
  %6561 = vrot.lane.b32.xlu0 %v5690, 105
  %v6562 = vpop.permute.xlu0 %6561
  %6563 = vrot.lane.b32.xlu0 %v5694, 105
  %v6564 = vpop.permute.xlu0 %6563
  %v6565 = vsel %vm924, %v6550, %v6552
  %v6566 = vsel %vm924, %v6552, %v6554
  %v6567 = vsel %vm924, %v6554, %v6556
  %v6568 = vsel %vm924, %v6558, %v6560
  %v6569 = vsel %vm924, %v6560, %v6562
  %v6570 = vsel %vm924, %v6562, %v6564
  %v6578 = vsel %vm76, %v6547, 0
  %v6581 = vsel %vm76, %v6548, 0
  %6583 = vmatpush.msra.mxu0 0.0
  %6584 = vmatpush.msra.mxu0 0.0
  %6585 = vmatpush.msra.mxu0 0.0
  %6586 = vmatpush.msra.mxu0 0.0
  %6587 = vmatpush.msra.mxu0 0.0
  %6588 = vmatpush.msra.mxu0 0.0
  %6589 = vmatpush.msra.mxu0 0.0
  %6590 = vmatpush.msra.mxu0 0.0
  %6591 = vmatpush.msra.mxu0 0.0
  %6592 = vmatpush.msra.mxu0 0.0
  %6593 = vmatpush.msra.mxu0 0.0
  %6594 = vmatpush.msra.mxu0 0.0
  %6595 = vmatpush.msra.mxu0 0.0
  %6596 = vmatpush.msra.mxu0 0.0
  %6597 = vmatpush.msra.mxu0 %v6568
  %6598 = vmatpush.msra.mxu0 %v6565
  %6599 = vmatmul.f32.gmra.mxu0 %v6578
  %v6600 = vpop.f32.mrf.mxu0
  %v6601 = vadd.f32 0.0, %v6600
  %6602 = vmatmul.f32.gmra.mxu0 %v6581
  %v6603 = vpop.f32.mrf.mxu0
  %v6604 = vadd.f32 0.0, %v6603
  %6605 = vdwg.mxu0
  %6606 = vmatpush.msra.mxu0 0.0
  %6607 = vmatpush.msra.mxu0 0.0
  %6608 = vmatpush.msra.mxu0 0.0
  %6609 = vmatpush.msra.mxu0 0.0
  %6610 = vmatpush.msra.mxu0 0.0
  %6611 = vmatpush.msra.mxu0 0.0
  %6612 = vmatpush.msra.mxu0 0.0
  %6613 = vmatpush.msra.mxu0 0.0
  %6614 = vmatpush.msra.mxu0 0.0
  %6615 = vmatpush.msra.mxu0 0.0
  %6616 = vmatpush.msra.mxu0 0.0
  %6617 = vmatpush.msra.mxu0 0.0
  %6618 = vmatpush.msra.mxu0 0.0
  %6619 = vmatpush.msra.mxu0 0.0
  %6620 = vmatpush.msra.mxu0 %v6569
  %6621 = vmatpush.msra.mxu0 %v6566
  %6622 = vmatmul.f32.gmra.mxu0 %v6578
  %v6623 = vpop.f32.mrf.mxu0
  %v6624 = vadd.f32 0.0, %v6623
  %6625 = vmatmul.f32.gmra.mxu0 %v6581
  %v6626 = vpop.f32.mrf.mxu0
  %v6627 = vadd.f32 0.0, %v6626
  %6628 = vdwg.mxu0
  %6629 = vmatpush.msra.mxu0 0.0
  %6630 = vmatpush.msra.mxu0 0.0
  %6631 = vmatpush.msra.mxu0 0.0
  %6632 = vmatpush.msra.mxu0 0.0
  %6633 = vmatpush.msra.mxu0 0.0
  %6634 = vmatpush.msra.mxu0 0.0
  %6635 = vmatpush.msra.mxu0 0.0
  %6636 = vmatpush.msra.mxu0 0.0
  %6637 = vmatpush.msra.mxu0 0.0
  %6638 = vmatpush.msra.mxu0 0.0
  %6639 = vmatpush.msra.mxu0 0.0
  %6640 = vmatpush.msra.mxu0 0.0
  %6641 = vmatpush.msra.mxu0 0.0
  %6642 = vmatpush.msra.mxu0 0.0
  %6643 = vmatpush.msra.mxu0 %v6570
  %6644 = vmatpush.msra.mxu0 %v6567
  %6645 = vmatmul.f32.gmra.mxu0 %v6578
  %v6646 = vpop.f32.mrf.mxu0
  %v6647 = vadd.f32 0.0, %v6646
  %6648 = vmatmul.f32.gmra.mxu0 %v6581
  %v6649 = vpop.f32.mrf.mxu0
  %v6650 = vadd.f32 0.0, %v6649
  %6651 = vdwg.mxu0
  %v6652 = vadd.f32 %v6541, %v6601
  %v6653 = vadd.f32 %v6542, %v6624
  %v6654 = vadd.f32 %v6543, %v6647
  %v6655 = vadd.f32 %v6544, %v6604
  %v6656 = vadd.f32 %v6545, %v6627
  %v6657 = vadd.f32 %v6546, %v6650
  %v6658 = vld [vmem:[%s1018] sm:$0xff]
  %v6659 = vld [vmem:[%s1018 + $0x8] sm:$0x3]
  %6660 = vrot.lane.b32.xlu0 %v5685, 104
  %v6661 = vpop.permute.xlu0 %6660
  %6662 = vrot.lane.b32.xlu0 %v5686, 104
  %v6663 = vpop.permute.xlu0 %6662
  %6664 = vrot.lane.b32.xlu0 %v5687, 104
  %v6665 = vpop.permute.xlu0 %6664
  %6666 = vrot.lane.b32.xlu0 %v5693, 104
  %v6667 = vpop.permute.xlu0 %6666
  %6668 = vrot.lane.b32.xlu0 %v5688, 104
  %v6669 = vpop.permute.xlu0 %6668
  %6670 = vrot.lane.b32.xlu0 %v5689, 104
  %v6671 = vpop.permute.xlu0 %6670
  %6672 = vrot.lane.b32.xlu0 %v5690, 104
  %v6673 = vpop.permute.xlu0 %6672
  %6674 = vrot.lane.b32.xlu0 %v5694, 104
  %v6675 = vpop.permute.xlu0 %6674
  %v6676 = vsel %vm1037, %v6661, %v6663
  %v6677 = vsel %vm1037, %v6663, %v6665
  %v6678 = vsel %vm1037, %v6665, %v6667
  %v6679 = vsel %vm1037, %v6669, %v6671
  %v6680 = vsel %vm1037, %v6671, %v6673
  %v6681 = vsel %vm1037, %v6673, %v6675
  %v6689 = vsel %vm76, %v6658, 0
  %v6692 = vsel %vm76, %v6659, 0
  %6694 = vmatpush.msra.mxu0 0.0
  %6695 = vmatpush.msra.mxu0 0.0
  %6696 = vmatpush.msra.mxu0 0.0
  %6697 = vmatpush.msra.mxu0 0.0
  %6698 = vmatpush.msra.mxu0 0.0
  %6699 = vmatpush.msra.mxu0 0.0
  %6700 = vmatpush.msra.mxu0 0.0
  %6701 = vmatpush.msra.mxu0 0.0
  %6702 = vmatpush.msra.mxu0 0.0
  %6703 = vmatpush.msra.mxu0 0.0
  %6704 = vmatpush.msra.mxu0 0.0
  %6705 = vmatpush.msra.mxu0 0.0
  %6706 = vmatpush.msra.mxu0 0.0
  %6707 = vmatpush.msra.mxu0 0.0
  %6708 = vmatpush.msra.mxu0 %v6679
  %6709 = vmatpush.msra.mxu0 %v6676
  %6710 = vmatmul.f32.gmra.mxu0 %v6689
  %v6711 = vpop.f32.mrf.mxu0
  %v6712 = vadd.f32 0.0, %v6711
  %6713 = vmatmul.f32.gmra.mxu0 %v6692
  %v6714 = vpop.f32.mrf.mxu0
  %v6715 = vadd.f32 0.0, %v6714
  %6716 = vdwg.mxu0
  %6717 = vmatpush.msra.mxu0 0.0
  %6718 = vmatpush.msra.mxu0 0.0
  %6719 = vmatpush.msra.mxu0 0.0
  %6720 = vmatpush.msra.mxu0 0.0
  %6721 = vmatpush.msra.mxu0 0.0
  %6722 = vmatpush.msra.mxu0 0.0
  %6723 = vmatpush.msra.mxu0 0.0
  %6724 = vmatpush.msra.mxu0 0.0
  %6725 = vmatpush.msra.mxu0 0.0
  %6726 = vmatpush.msra.mxu0 0.0
  %6727 = vmatpush.msra.mxu0 0.0
  %6728 = vmatpush.msra.mxu0 0.0
  %6729 = vmatpush.msra.mxu0 0.0
  %6730 = vmatpush.msra.mxu0 0.0
  %6731 = vmatpush.msra.mxu0 %v6680
  %6732 = vmatpush.msra.mxu0 %v6677
  %6733 = vmatmul.f32.gmra.mxu0 %v6689
  %v6734 = vpop.f32.mrf.mxu0
  %v6735 = vadd.f32 0.0, %v6734
  %6736 = vmatmul.f32.gmra.mxu0 %v6692
  %v6737 = vpop.f32.mrf.mxu0
  %v6738 = vadd.f32 0.0, %v6737
  %6739 = vdwg.mxu0
  %6740 = vmatpush.msra.mxu0 0.0
  %6741 = vmatpush.msra.mxu0 0.0
  %6742 = vmatpush.msra.mxu0 0.0
  %6743 = vmatpush.msra.mxu0 0.0
  %6744 = vmatpush.msra.mxu0 0.0
  %6745 = vmatpush.msra.mxu0 0.0
  %6746 = vmatpush.msra.mxu0 0.0
  %6747 = vmatpush.msra.mxu0 0.0
  %6748 = vmatpush.msra.mxu0 0.0
  %6749 = vmatpush.msra.mxu0 0.0
  %6750 = vmatpush.msra.mxu0 0.0
  %6751 = vmatpush.msra.mxu0 0.0
  %6752 = vmatpush.msra.mxu0 0.0
  %6753 = vmatpush.msra.mxu0 0.0
  %6754 = vmatpush.msra.mxu0 %v6681
  %6755 = vmatpush.msra.mxu0 %v6678
  %6756 = vmatmul.f32.gmra.mxu0 %v6689
  %v6757 = vpop.f32.mrf.mxu0
  %v6758 = vadd.f32 0.0, %v6757
  %6759 = vmatmul.f32.gmra.mxu0 %v6692
  %v6760 = vpop.f32.mrf.mxu0
  %v6761 = vadd.f32 0.0, %v6760
  %6762 = vdwg.mxu0
  %v6763 = vadd.f32 %v6652, %v6712
  %v6764 = vadd.f32 %v6653, %v6735
  %v6765 = vadd.f32 %v6654, %v6758
  %v6766 = vadd.f32 %v6655, %v6715
  %v6767 = vadd.f32 %v6656, %v6738
  %v6768 = vadd.f32 %v6657, %v6761
  %v6769 = vld [vmem:[%s1131] sm:$0xff]
  %v6770 = vld [vmem:[%s1131 + $0x8] sm:$0x3]
  %6771 = vrot.lane.b32.xlu0 %v5685, 103
  %v6772 = vpop.permute.xlu0 %6771
  %6773 = vrot.lane.b32.xlu0 %v5686, 103
  %v6774 = vpop.permute.xlu0 %6773
  %6775 = vrot.lane.b32.xlu0 %v5687, 103
  %v6776 = vpop.permute.xlu0 %6775
  %6777 = vrot.lane.b32.xlu0 %v5693, 103
  %v6778 = vpop.permute.xlu0 %6777
  %6779 = vrot.lane.b32.xlu0 %v5688, 103
  %v6780 = vpop.permute.xlu0 %6779
  %6781 = vrot.lane.b32.xlu0 %v5689, 103
  %v6782 = vpop.permute.xlu0 %6781
  %6783 = vrot.lane.b32.xlu0 %v5690, 103
  %v6784 = vpop.permute.xlu0 %6783
  %6785 = vrot.lane.b32.xlu0 %v5694, 103
  %v6786 = vpop.permute.xlu0 %6785
  %v6787 = vsel %vm1150, %v6772, %v6774
  %v6788 = vsel %vm1150, %v6774, %v6776
  %v6789 = vsel %vm1150, %v6776, %v6778
  %v6790 = vsel %vm1150, %v6780, %v6782
  %v6791 = vsel %vm1150, %v6782, %v6784
  %v6792 = vsel %vm1150, %v6784, %v6786
  %v6800 = vsel %vm76, %v6769, 0
  %v6803 = vsel %vm76, %v6770, 0
  %6805 = vmatpush.msra.mxu0 0.0
  %6806 = vmatpush.msra.mxu0 0.0
  %6807 = vmatpush.msra.mxu0 0.0
  %6808 = vmatpush.msra.mxu0 0.0
  %6809 = vmatpush.msra.mxu0 0.0
  %6810 = vmatpush.msra.mxu0 0.0
  %6811 = vmatpush.msra.mxu0 0.0
  %6812 = vmatpush.msra.mxu0 0.0
  %6813 = vmatpush.msra.mxu0 0.0
  %6814 = vmatpush.msra.mxu0 0.0
  %6815 = vmatpush.msra.mxu0 0.0
  %6816 = vmatpush.msra.mxu0 0.0
  %6817 = vmatpush.msra.mxu0 0.0
  %6818 = vmatpush.msra.mxu0 0.0
  %6819 = vmatpush.msra.mxu0 %v6790
  %6820 = vmatpush.msra.mxu0 %v6787
  %6821 = vmatmul.f32.gmra.mxu0 %v6800
  %v6822 = vpop.f32.mrf.mxu0
  %v6823 = vadd.f32 0.0, %v6822
  %6824 = vmatmul.f32.gmra.mxu0 %v6803
  %v6825 = vpop.f32.mrf.mxu0
  %v6826 = vadd.f32 0.0, %v6825
  %6827 = vdwg.mxu0
  %6828 = vmatpush.msra.mxu0 0.0
  %6829 = vmatpush.msra.mxu0 0.0
  %6830 = vmatpush.msra.mxu0 0.0
  %6831 = vmatpush.msra.mxu0 0.0
  %6832 = vmatpush.msra.mxu0 0.0
  %6833 = vmatpush.msra.mxu0 0.0
  %6834 = vmatpush.msra.mxu0 0.0
  %6835 = vmatpush.msra.mxu0 0.0
  %6836 = vmatpush.msra.mxu0 0.0
  %6837 = vmatpush.msra.mxu0 0.0
  %6838 = vmatpush.msra.mxu0 0.0
  %6839 = vmatpush.msra.mxu0 0.0
  %6840 = vmatpush.msra.mxu0 0.0
  %6841 = vmatpush.msra.mxu0 0.0
  %6842 = vmatpush.msra.mxu0 %v6791
  %6843 = vmatpush.msra.mxu0 %v6788
  %6844 = vmatmul.f32.gmra.mxu0 %v6800
  %v6845 = vpop.f32.mrf.mxu0
  %v6846 = vadd.f32 0.0, %v6845
  %6847 = vmatmul.f32.gmra.mxu0 %v6803
  %v6848 = vpop.f32.mrf.mxu0
  %v6849 = vadd.f32 0.0, %v6848
  %6850 = vdwg.mxu0
  %6851 = vmatpush.msra.mxu0 0.0
  %6852 = vmatpush.msra.mxu0 0.0
  %6853 = vmatpush.msra.mxu0 0.0
  %6854 = vmatpush.msra.mxu0 0.0
  %6855 = vmatpush.msra.mxu0 0.0
  %6856 = vmatpush.msra.mxu0 0.0
  %6857 = vmatpush.msra.mxu0 0.0
  %6858 = vmatpush.msra.mxu0 0.0
  %6859 = vmatpush.msra.mxu0 0.0
  %6860 = vmatpush.msra.mxu0 0.0
  %6861 = vmatpush.msra.mxu0 0.0
  %6862 = vmatpush.msra.mxu0 0.0
  %6863 = vmatpush.msra.mxu0 0.0
  %6864 = vmatpush.msra.mxu0 0.0
  %6865 = vmatpush.msra.mxu0 %v6792
  %6866 = vmatpush.msra.mxu0 %v6789
  %6867 = vmatmul.f32.gmra.mxu0 %v6800
  %v6868 = vpop.f32.mrf.mxu0
  %v6869 = vadd.f32 0.0, %v6868
  %6870 = vmatmul.f32.gmra.mxu0 %v6803
  %v6871 = vpop.f32.mrf.mxu0
  %v6872 = vadd.f32 0.0, %v6871
  %6873 = vdwg.mxu0
  %v6874 = vadd.f32 %v6763, %v6823
  %v6875 = vadd.f32 %v6764, %v6846
  %v6876 = vadd.f32 %v6765, %v6869
  %v6877 = vadd.f32 %v6766, %v6826
  %v6878 = vadd.f32 %v6767, %v6849
  %v6879 = vadd.f32 %v6768, %v6872
  %v6880 = vld [vmem:[%s1244] sm:$0xff]
  %v6881 = vld [vmem:[%s1244 + $0x8] sm:$0x3]
  %6882 = vrot.lane.b32.xlu0 %v5685, 102
  %v6883 = vpop.permute.xlu0 %6882
  %6884 = vrot.lane.b32.xlu0 %v5686, 102
  %v6885 = vpop.permute.xlu0 %6884
  %6886 = vrot.lane.b32.xlu0 %v5687, 102
  %v6887 = vpop.permute.xlu0 %6886
  %6888 = vrot.lane.b32.xlu0 %v5693, 102
  %v6889 = vpop.permute.xlu0 %6888
  %6890 = vrot.lane.b32.xlu0 %v5688, 102
  %v6891 = vpop.permute.xlu0 %6890
  %6892 = vrot.lane.b32.xlu0 %v5689, 102
  %v6893 = vpop.permute.xlu0 %6892
  %6894 = vrot.lane.b32.xlu0 %v5690, 102
  %v6895 = vpop.permute.xlu0 %6894
  %6896 = vrot.lane.b32.xlu0 %v5694, 102
  %v6897 = vpop.permute.xlu0 %6896
  %v6898 = vsel %vm1263, %v6883, %v6885
  %v6899 = vsel %vm1263, %v6885, %v6887
  %v6900 = vsel %vm1263, %v6887, %v6889
  %v6901 = vsel %vm1263, %v6891, %v6893
  %v6902 = vsel %vm1263, %v6893, %v6895
  %v6903 = vsel %vm1263, %v6895, %v6897
  %v6911 = vsel %vm76, %v6880, 0
  %v6914 = vsel %vm76, %v6881, 0
  %6916 = vmatpush.msra.mxu0 0.0
  %6917 = vmatpush.msra.mxu0 0.0
  %6918 = vmatpush.msra.mxu0 0.0
  %6919 = vmatpush.msra.mxu0 0.0
  %6920 = vmatpush.msra.mxu0 0.0
  %6921 = vmatpush.msra.mxu0 0.0
  %6922 = vmatpush.msra.mxu0 0.0
  %6923 = vmatpush.msra.mxu0 0.0
  %6924 = vmatpush.msra.mxu0 0.0
  %6925 = vmatpush.msra.mxu0 0.0
  %6926 = vmatpush.msra.mxu0 0.0
  %6927 = vmatpush.msra.mxu0 0.0
  %6928 = vmatpush.msra.mxu0 0.0
  %6929 = vmatpush.msra.mxu0 0.0
  %6930 = vmatpush.msra.mxu0 %v6901
  %6931 = vmatpush.msra.mxu0 %v6898
  %6932 = vmatmul.f32.gmra.mxu0 %v6911
  %v6933 = vpop.f32.mrf.mxu0
  %v6934 = vadd.f32 0.0, %v6933
  %6935 = vmatmul.f32.gmra.mxu0 %v6914
  %v6936 = vpop.f32.mrf.mxu0
  %v6937 = vadd.f32 0.0, %v6936
  %6938 = vdwg.mxu0
  %6939 = vmatpush.msra.mxu0 0.0
  %6940 = vmatpush.msra.mxu0 0.0
  %6941 = vmatpush.msra.mxu0 0.0
  %6942 = vmatpush.msra.mxu0 0.0
  %6943 = vmatpush.msra.mxu0 0.0
  %6944 = vmatpush.msra.mxu0 0.0
  %6945 = vmatpush.msra.mxu0 0.0
  %6946 = vmatpush.msra.mxu0 0.0
  %6947 = vmatpush.msra.mxu0 0.0
  %6948 = vmatpush.msra.mxu0 0.0
  %6949 = vmatpush.msra.mxu0 0.0
  %6950 = vmatpush.msra.mxu0 0.0
  %6951 = vmatpush.msra.mxu0 0.0
  %6952 = vmatpush.msra.mxu0 0.0
  %6953 = vmatpush.msra.mxu0 %v6902
  %6954 = vmatpush.msra.mxu0 %v6899
  %6955 = vmatmul.f32.gmra.mxu0 %v6911
  %v6956 = vpop.f32.mrf.mxu0
  %v6957 = vadd.f32 0.0, %v6956
  %6958 = vmatmul.f32.gmra.mxu0 %v6914
  %v6959 = vpop.f32.mrf.mxu0
  %v6960 = vadd.f32 0.0, %v6959
  %6961 = vdwg.mxu0
  %6962 = vmatpush.msra.mxu0 0.0
  %6963 = vmatpush.msra.mxu0 0.0
  %6964 = vmatpush.msra.mxu0 0.0
  %6965 = vmatpush.msra.mxu0 0.0
  %6966 = vmatpush.msra.mxu0 0.0
  %6967 = vmatpush.msra.mxu0 0.0
  %6968 = vmatpush.msra.mxu0 0.0
  %6969 = vmatpush.msra.mxu0 0.0
  %6970 = vmatpush.msra.mxu0 0.0
  %6971 = vmatpush.msra.mxu0 0.0
  %6972 = vmatpush.msra.mxu0 0.0
  %6973 = vmatpush.msra.mxu0 0.0
  %6974 = vmatpush.msra.mxu0 0.0
  %6975 = vmatpush.msra.mxu0 0.0
  %6976 = vmatpush.msra.mxu0 %v6903
  %6977 = vmatpush.msra.mxu0 %v6900
  %6978 = vmatmul.f32.gmra.mxu0 %v6911
  %v6979 = vpop.f32.mrf.mxu0
  %v6980 = vadd.f32 0.0, %v6979
  %6981 = vmatmul.f32.gmra.mxu0 %v6914
  %v6982 = vpop.f32.mrf.mxu0
  %v6983 = vadd.f32 0.0, %v6982
  %6984 = vdwg.mxu0
  %v6985 = vadd.f32 %v6874, %v6934
  %v6986 = vadd.f32 %v6875, %v6957
  %v6987 = vadd.f32 %v6876, %v6980
  %v6988 = vadd.f32 %v6877, %v6937
  %v6989 = vadd.f32 %v6878, %v6960
  %v6990 = vadd.f32 %v6879, %v6983
  %v6991 = vld [vmem:[%s1357] sm:$0xff]
  %v6992 = vld [vmem:[%s1357 + $0x8] sm:$0x3]
  %6993 = vrot.lane.b32.xlu0 %v5685, 101
  %v6994 = vpop.permute.xlu0 %6993
  %6995 = vrot.lane.b32.xlu0 %v5686, 101
  %v6996 = vpop.permute.xlu0 %6995
  %6997 = vrot.lane.b32.xlu0 %v5687, 101
  %v6998 = vpop.permute.xlu0 %6997
  %6999 = vrot.lane.b32.xlu0 %v5693, 101
  %v7000 = vpop.permute.xlu0 %6999
  %7001 = vrot.lane.b32.xlu0 %v5688, 101
  %v7002 = vpop.permute.xlu0 %7001
  %7003 = vrot.lane.b32.xlu0 %v5689, 101
  %v7004 = vpop.permute.xlu0 %7003
  %7005 = vrot.lane.b32.xlu0 %v5690, 101
  %v7006 = vpop.permute.xlu0 %7005
  %7007 = vrot.lane.b32.xlu0 %v5694, 101
  %v7008 = vpop.permute.xlu0 %7007
  %v7009 = vsel %vm1376, %v6994, %v6996
  %v7010 = vsel %vm1376, %v6996, %v6998
  %v7011 = vsel %vm1376, %v6998, %v7000
  %v7012 = vsel %vm1376, %v7002, %v7004
  %v7013 = vsel %vm1376, %v7004, %v7006
  %v7014 = vsel %vm1376, %v7006, %v7008
  %v7022 = vsel %vm76, %v6991, 0
  %v7025 = vsel %vm76, %v6992, 0
  %7027 = vmatpush.msra.mxu0 0.0
  %7028 = vmatpush.msra.mxu0 0.0
  %7029 = vmatpush.msra.mxu0 0.0
  %7030 = vmatpush.msra.mxu0 0.0
  %7031 = vmatpush.msra.mxu0 0.0
  %7032 = vmatpush.msra.mxu0 0.0
  %7033 = vmatpush.msra.mxu0 0.0
  %7034 = vmatpush.msra.mxu0 0.0
  %7035 = vmatpush.msra.mxu0 0.0
  %7036 = vmatpush.msra.mxu0 0.0
  %7037 = vmatpush.msra.mxu0 0.0
  %7038 = vmatpush.msra.mxu0 0.0
  %7039 = vmatpush.msra.mxu0 0.0
  %7040 = vmatpush.msra.mxu0 0.0
  %7041 = vmatpush.msra.mxu0 %v7012
  %7042 = vmatpush.msra.mxu0 %v7009
  %7043 = vmatmul.f32.gmra.mxu0 %v7022
  %v7044 = vpop.f32.mrf.mxu0
  %v7045 = vadd.f32 0.0, %v7044
  %7046 = vmatmul.f32.gmra.mxu0 %v7025
  %v7047 = vpop.f32.mrf.mxu0
  %v7048 = vadd.f32 0.0, %v7047
  %7049 = vdwg.mxu0
  %7050 = vmatpush.msra.mxu0 0.0
  %7051 = vmatpush.msra.mxu0 0.0
  %7052 = vmatpush.msra.mxu0 0.0
  %7053 = vmatpush.msra.mxu0 0.0
  %7054 = vmatpush.msra.mxu0 0.0
  %7055 = vmatpush.msra.mxu0 0.0
  %7056 = vmatpush.msra.mxu0 0.0
  %7057 = vmatpush.msra.mxu0 0.0
  %7058 = vmatpush.msra.mxu0 0.0
  %7059 = vmatpush.msra.mxu0 0.0
  %7060 = vmatpush.msra.mxu0 0.0
  %7061 = vmatpush.msra.mxu0 0.0
  %7062 = vmatpush.msra.mxu0 0.0
  %7063 = vmatpush.msra.mxu0 0.0
  %7064 = vmatpush.msra.mxu0 %v7013
  %7065 = vmatpush.msra.mxu0 %v7010
  %7066 = vmatmul.f32.gmra.mxu0 %v7022
  %v7067 = vpop.f32.mrf.mxu0
  %v7068 = vadd.f32 0.0, %v7067
  %7069 = vmatmul.f32.gmra.mxu0 %v7025
  %v7070 = vpop.f32.mrf.mxu0
  %v7071 = vadd.f32 0.0, %v7070
  %7072 = vdwg.mxu0
  %7073 = vmatpush.msra.mxu0 0.0
  %7074 = vmatpush.msra.mxu0 0.0
  %7075 = vmatpush.msra.mxu0 0.0
  %7076 = vmatpush.msra.mxu0 0.0
  %7077 = vmatpush.msra.mxu0 0.0
  %7078 = vmatpush.msra.mxu0 0.0
  %7079 = vmatpush.msra.mxu0 0.0
  %7080 = vmatpush.msra.mxu0 0.0
  %7081 = vmatpush.msra.mxu0 0.0
  %7082 = vmatpush.msra.mxu0 0.0
  %7083 = vmatpush.msra.mxu0 0.0
  %7084 = vmatpush.msra.mxu0 0.0
  %7085 = vmatpush.msra.mxu0 0.0
  %7086 = vmatpush.msra.mxu0 0.0
  %7087 = vmatpush.msra.mxu0 %v7014
  %7088 = vmatpush.msra.mxu0 %v7011
  %7089 = vmatmul.f32.gmra.mxu0 %v7022
  %v7090 = vpop.f32.mrf.mxu0
  %v7091 = vadd.f32 0.0, %v7090
  %7092 = vmatmul.f32.gmra.mxu0 %v7025
  %v7093 = vpop.f32.mrf.mxu0
  %v7094 = vadd.f32 0.0, %v7093
  %7095 = vdwg.mxu0
  %v7096 = vadd.f32 %v6985, %v7045
  %v7097 = vadd.f32 %v6986, %v7068
  %v7098 = vadd.f32 %v6987, %v7091
  %v7099 = vadd.f32 %v6988, %v7048
  %v7100 = vadd.f32 %v6989, %v7071
  %v7101 = vadd.f32 %v6990, %v7094
  %v7102 = vld [vmem:[%s1470] sm:$0xff]
  %v7103 = vld [vmem:[%s1470 + $0x8] sm:$0x3]
  %7104 = vrot.lane.b32.xlu0 %v5685, 100
  %v7105 = vpop.permute.xlu0 %7104
  %7106 = vrot.lane.b32.xlu0 %v5686, 100
  %v7107 = vpop.permute.xlu0 %7106
  %7108 = vrot.lane.b32.xlu0 %v5687, 100
  %v7109 = vpop.permute.xlu0 %7108
  %7110 = vrot.lane.b32.xlu0 %v5693, 100
  %v7111 = vpop.permute.xlu0 %7110
  %7112 = vrot.lane.b32.xlu0 %v5688, 100
  %v7113 = vpop.permute.xlu0 %7112
  %7114 = vrot.lane.b32.xlu0 %v5689, 100
  %v7115 = vpop.permute.xlu0 %7114
  %7116 = vrot.lane.b32.xlu0 %v5690, 100
  %v7117 = vpop.permute.xlu0 %7116
  %7118 = vrot.lane.b32.xlu0 %v5694, 100
  %v7119 = vpop.permute.xlu0 %7118
  %v7120 = vsel %vm1489, %v7105, %v7107
  %v7121 = vsel %vm1489, %v7107, %v7109
  %v7122 = vsel %vm1489, %v7109, %v7111
  %v7123 = vsel %vm1489, %v7113, %v7115
  %v7124 = vsel %vm1489, %v7115, %v7117
  %v7125 = vsel %vm1489, %v7117, %v7119
  %v7133 = vsel %vm76, %v7102, 0
  %v7136 = vsel %vm76, %v7103, 0
  %7138 = vmatpush.msra.mxu0 0.0
  %7139 = vmatpush.msra.mxu0 0.0
  %7140 = vmatpush.msra.mxu0 0.0
  %7141 = vmatpush.msra.mxu0 0.0
  %7142 = vmatpush.msra.mxu0 0.0
  %7143 = vmatpush.msra.mxu0 0.0
  %7144 = vmatpush.msra.mxu0 0.0
  %7145 = vmatpush.msra.mxu0 0.0
  %7146 = vmatpush.msra.mxu0 0.0
  %7147 = vmatpush.msra.mxu0 0.0
  %7148 = vmatpush.msra.mxu0 0.0
  %7149 = vmatpush.msra.mxu0 0.0
  %7150 = vmatpush.msra.mxu0 0.0
  %7151 = vmatpush.msra.mxu0 0.0
  %7152 = vmatpush.msra.mxu0 %v7123
  %7153 = vmatpush.msra.mxu0 %v7120
  %7154 = vmatmul.f32.gmra.mxu0 %v7133
  %v7155 = vpop.f32.mrf.mxu0
  %v7156 = vadd.f32 0.0, %v7155
  %7157 = vmatmul.f32.gmra.mxu0 %v7136
  %v7158 = vpop.f32.mrf.mxu0
  %v7159 = vadd.f32 0.0, %v7158
  %7160 = vdwg.mxu0
  %7161 = vmatpush.msra.mxu0 0.0
  %7162 = vmatpush.msra.mxu0 0.0
  %7163 = vmatpush.msra.mxu0 0.0
  %7164 = vmatpush.msra.mxu0 0.0
  %7165 = vmatpush.msra.mxu0 0.0
  %7166 = vmatpush.msra.mxu0 0.0
  %7167 = vmatpush.msra.mxu0 0.0
  %7168 = vmatpush.msra.mxu0 0.0
  %7169 = vmatpush.msra.mxu0 0.0
  %7170 = vmatpush.msra.mxu0 0.0
  %7171 = vmatpush.msra.mxu0 0.0
  %7172 = vmatpush.msra.mxu0 0.0
  %7173 = vmatpush.msra.mxu0 0.0
  %7174 = vmatpush.msra.mxu0 0.0
  %7175 = vmatpush.msra.mxu0 %v7124
  %7176 = vmatpush.msra.mxu0 %v7121
  %7177 = vmatmul.f32.gmra.mxu0 %v7133
  %v7178 = vpop.f32.mrf.mxu0
  %v7179 = vadd.f32 0.0, %v7178
  %7180 = vmatmul.f32.gmra.mxu0 %v7136
  %v7181 = vpop.f32.mrf.mxu0
  %v7182 = vadd.f32 0.0, %v7181
  %7183 = vdwg.mxu0
  %7184 = vmatpush.msra.mxu0 0.0
  %7185 = vmatpush.msra.mxu0 0.0
  %7186 = vmatpush.msra.mxu0 0.0
  %7187 = vmatpush.msra.mxu0 0.0
  %7188 = vmatpush.msra.mxu0 0.0
  %7189 = vmatpush.msra.mxu0 0.0
  %7190 = vmatpush.msra.mxu0 0.0
  %7191 = vmatpush.msra.mxu0 0.0
  %7192 = vmatpush.msra.mxu0 0.0
  %7193 = vmatpush.msra.mxu0 0.0
  %7194 = vmatpush.msra.mxu0 0.0
  %7195 = vmatpush.msra.mxu0 0.0
  %7196 = vmatpush.msra.mxu0 0.0
  %7197 = vmatpush.msra.mxu0 0.0
  %7198 = vmatpush.msra.mxu0 %v7125
  %7199 = vmatpush.msra.mxu0 %v7122
  %7200 = vmatmul.f32.gmra.mxu0 %v7133
  %v7201 = vpop.f32.mrf.mxu0
  %v7202 = vadd.f32 0.0, %v7201
  %7203 = vmatmul.f32.gmra.mxu0 %v7136
  %v7204 = vpop.f32.mrf.mxu0
  %v7205 = vadd.f32 0.0, %v7204
  %7206 = vdwg.mxu0
  %v7207 = vadd.f32 %v7096, %v7156
  %v7208 = vadd.f32 %v7097, %v7179
  %v7209 = vadd.f32 %v7098, %v7202
  %v7210 = vadd.f32 %v7099, %v7159
  %v7211 = vadd.f32 %v7100, %v7182
  %v7212 = vadd.f32 %v7101, %v7205
  %v7213 = vld [vmem:[%s1583] sm:$0xff]
  %v7214 = vld [vmem:[%s1583 + $0x8] sm:$0x3]
  %7215 = vrot.lane.b32.xlu0 %v5685, 84
  %v7216 = vpop.permute.xlu0 %7215
  %7217 = vrot.lane.b32.xlu0 %v5686, 84
  %v7218 = vpop.permute.xlu0 %7217
  %7219 = vrot.lane.b32.xlu0 %v5687, 84
  %v7220 = vpop.permute.xlu0 %7219
  %7221 = vrot.lane.b32.xlu0 %v5693, 84
  %v7222 = vpop.permute.xlu0 %7221
  %7223 = vrot.lane.b32.xlu0 %v5688, 84
  %v7224 = vpop.permute.xlu0 %7223
  %7225 = vrot.lane.b32.xlu0 %v5689, 84
  %v7226 = vpop.permute.xlu0 %7225
  %7227 = vrot.lane.b32.xlu0 %v5690, 84
  %v7228 = vpop.permute.xlu0 %7227
  %7229 = vrot.lane.b32.xlu0 %v5694, 84
  %v7230 = vpop.permute.xlu0 %7229
  %v7231 = vsel %vm1602, %v7216, %v7218
  %v7232 = vsel %vm1602, %v7218, %v7220
  %v7233 = vsel %vm1602, %v7220, %v7222
  %v7234 = vsel %vm1602, %v7224, %v7226
  %v7235 = vsel %vm1602, %v7226, %v7228
  %v7236 = vsel %vm1602, %v7228, %v7230
  %v7244 = vsel %vm76, %v7213, 0
  %v7247 = vsel %vm76, %v7214, 0
  %7249 = vmatpush.msra.mxu0 0.0
  %7250 = vmatpush.msra.mxu0 0.0
  %7251 = vmatpush.msra.mxu0 0.0
  %7252 = vmatpush.msra.mxu0 0.0
  %7253 = vmatpush.msra.mxu0 0.0
  %7254 = vmatpush.msra.mxu0 0.0
  %7255 = vmatpush.msra.mxu0 0.0
  %7256 = vmatpush.msra.mxu0 0.0
  %7257 = vmatpush.msra.mxu0 0.0
  %7258 = vmatpush.msra.mxu0 0.0
  %7259 = vmatpush.msra.mxu0 0.0
  %7260 = vmatpush.msra.mxu0 0.0
  %7261 = vmatpush.msra.mxu0 0.0
  %7262 = vmatpush.msra.mxu0 0.0
  %7263 = vmatpush.msra.mxu0 %v7234
  %7264 = vmatpush.msra.mxu0 %v7231
  %7265 = vmatmul.f32.gmra.mxu0 %v7244
  %v7266 = vpop.f32.mrf.mxu0
  %v7267 = vadd.f32 0.0, %v7266
  %7268 = vmatmul.f32.gmra.mxu0 %v7247
  %v7269 = vpop.f32.mrf.mxu0
  %v7270 = vadd.f32 0.0, %v7269
  %7271 = vdwg.mxu0
  %7272 = vmatpush.msra.mxu0 0.0
  %7273 = vmatpush.msra.mxu0 0.0
  %7274 = vmatpush.msra.mxu0 0.0
  %7275 = vmatpush.msra.mxu0 0.0
  %7276 = vmatpush.msra.mxu0 0.0
  %7277 = vmatpush.msra.mxu0 0.0
  %7278 = vmatpush.msra.mxu0 0.0
  %7279 = vmatpush.msra.mxu0 0.0
  %7280 = vmatpush.msra.mxu0 0.0
  %7281 = vmatpush.msra.mxu0 0.0
  %7282 = vmatpush.msra.mxu0 0.0
  %7283 = vmatpush.msra.mxu0 0.0
  %7284 = vmatpush.msra.mxu0 0.0
  %7285 = vmatpush.msra.mxu0 0.0
  %7286 = vmatpush.msra.mxu0 %v7235
  %7287 = vmatpush.msra.mxu0 %v7232
  %7288 = vmatmul.f32.gmra.mxu0 %v7244
  %v7289 = vpop.f32.mrf.mxu0
  %v7290 = vadd.f32 0.0, %v7289
  %7291 = vmatmul.f32.gmra.mxu0 %v7247
  %v7292 = vpop.f32.mrf.mxu0
  %v7293 = vadd.f32 0.0, %v7292
  %7294 = vdwg.mxu0
  %7295 = vmatpush.msra.mxu0 0.0
  %7296 = vmatpush.msra.mxu0 0.0
  %7297 = vmatpush.msra.mxu0 0.0
  %7298 = vmatpush.msra.mxu0 0.0
  %7299 = vmatpush.msra.mxu0 0.0
  %7300 = vmatpush.msra.mxu0 0.0
  %7301 = vmatpush.msra.mxu0 0.0
  %7302 = vmatpush.msra.mxu0 0.0
  %7303 = vmatpush.msra.mxu0 0.0
  %7304 = vmatpush.msra.mxu0 0.0
  %7305 = vmatpush.msra.mxu0 0.0
  %7306 = vmatpush.msra.mxu0 0.0
  %7307 = vmatpush.msra.mxu0 0.0
  %7308 = vmatpush.msra.mxu0 0.0
  %7309 = vmatpush.msra.mxu0 %v7236
  %7310 = vmatpush.msra.mxu0 %v7233
  %7311 = vmatmul.f32.gmra.mxu0 %v7244
  %v7312 = vpop.f32.mrf.mxu0
  %v7313 = vadd.f32 0.0, %v7312
  %7314 = vmatmul.f32.gmra.mxu0 %v7247
  %v7315 = vpop.f32.mrf.mxu0
  %v7316 = vadd.f32 0.0, %v7315
  %7317 = vdwg.mxu0
  %v7318 = vadd.f32 %v7207, %v7267
  %v7319 = vadd.f32 %v7208, %v7290
  %v7320 = vadd.f32 %v7209, %v7313
  %v7321 = vadd.f32 %v7210, %v7270
  %v7322 = vadd.f32 %v7211, %v7293
  %v7323 = vadd.f32 %v7212, %v7316
  %v7324 = vld [vmem:[%s1696] sm:$0xff]
  %v7325 = vld [vmem:[%s1696 + $0x8] sm:$0x3]
  %7326 = vrot.lane.b32.xlu0 %v5685, 83
  %v7327 = vpop.permute.xlu0 %7326
  %7328 = vrot.lane.b32.xlu0 %v5686, 83
  %v7329 = vpop.permute.xlu0 %7328
  %7330 = vrot.lane.b32.xlu0 %v5687, 83
  %v7331 = vpop.permute.xlu0 %7330
  %7332 = vrot.lane.b32.xlu0 %v5693, 83
  %v7333 = vpop.permute.xlu0 %7332
  %7334 = vrot.lane.b32.xlu0 %v5688, 83
  %v7335 = vpop.permute.xlu0 %7334
  %7336 = vrot.lane.b32.xlu0 %v5689, 83
  %v7337 = vpop.permute.xlu0 %7336
  %7338 = vrot.lane.b32.xlu0 %v5690, 83
  %v7339 = vpop.permute.xlu0 %7338
  %7340 = vrot.lane.b32.xlu0 %v5694, 83
  %v7341 = vpop.permute.xlu0 %7340
  %v7342 = vsel %vm1715, %v7327, %v7329
  %v7343 = vsel %vm1715, %v7329, %v7331
  %v7344 = vsel %vm1715, %v7331, %v7333
  %v7345 = vsel %vm1715, %v7335, %v7337
  %v7346 = vsel %vm1715, %v7337, %v7339
  %v7347 = vsel %vm1715, %v7339, %v7341
  %v7355 = vsel %vm76, %v7324, 0
  %v7358 = vsel %vm76, %v7325, 0
  %7360 = vmatpush.msra.mxu0 0.0
  %7361 = vmatpush.msra.mxu0 0.0
  %7362 = vmatpush.msra.mxu0 0.0
  %7363 = vmatpush.msra.mxu0 0.0
  %7364 = vmatpush.msra.mxu0 0.0
  %7365 = vmatpush.msra.mxu0 0.0
  %7366 = vmatpush.msra.mxu0 0.0
  %7367 = vmatpush.msra.mxu0 0.0
  %7368 = vmatpush.msra.mxu0 0.0
  %7369 = vmatpush.msra.mxu0 0.0
  %7370 = vmatpush.msra.mxu0 0.0
  %7371 = vmatpush.msra.mxu0 0.0
  %7372 = vmatpush.msra.mxu0 0.0
  %7373 = vmatpush.msra.mxu0 0.0
  %7374 = vmatpush.msra.mxu0 %v7345
  %7375 = vmatpush.msra.mxu0 %v7342
  %7376 = vmatmul.f32.gmra.mxu0 %v7355
  %v7377 = vpop.f32.mrf.mxu0
  %v7378 = vadd.f32 0.0, %v7377
  %7379 = vmatmul.f32.gmra.mxu0 %v7358
  %v7380 = vpop.f32.mrf.mxu0
  %v7381 = vadd.f32 0.0, %v7380
  %7382 = vdwg.mxu0
  %7383 = vmatpush.msra.mxu0 0.0
  %7384 = vmatpush.msra.mxu0 0.0
  %7385 = vmatpush.msra.mxu0 0.0
  %7386 = vmatpush.msra.mxu0 0.0
  %7387 = vmatpush.msra.mxu0 0.0
  %7388 = vmatpush.msra.mxu0 0.0
  %7389 = vmatpush.msra.mxu0 0.0
  %7390 = vmatpush.msra.mxu0 0.0
  %7391 = vmatpush.msra.mxu0 0.0
  %7392 = vmatpush.msra.mxu0 0.0
  %7393 = vmatpush.msra.mxu0 0.0
  %7394 = vmatpush.msra.mxu0 0.0
  %7395 = vmatpush.msra.mxu0 0.0
  %7396 = vmatpush.msra.mxu0 0.0
  %7397 = vmatpush.msra.mxu0 %v7346
  %7398 = vmatpush.msra.mxu0 %v7343
  %7399 = vmatmul.f32.gmra.mxu0 %v7355
  %v7400 = vpop.f32.mrf.mxu0
  %v7401 = vadd.f32 0.0, %v7400
  %7402 = vmatmul.f32.gmra.mxu0 %v7358
  %v7403 = vpop.f32.mrf.mxu0
  %v7404 = vadd.f32 0.0, %v7403
  %7405 = vdwg.mxu0
  %7406 = vmatpush.msra.mxu0 0.0
  %7407 = vmatpush.msra.mxu0 0.0
  %7408 = vmatpush.msra.mxu0 0.0
  %7409 = vmatpush.msra.mxu0 0.0
  %7410 = vmatpush.msra.mxu0 0.0
  %7411 = vmatpush.msra.mxu0 0.0
  %7412 = vmatpush.msra.mxu0 0.0
  %7413 = vmatpush.msra.mxu0 0.0
  %7414 = vmatpush.msra.mxu0 0.0
  %7415 = vmatpush.msra.mxu0 0.0
  %7416 = vmatpush.msra.mxu0 0.0
  %7417 = vmatpush.msra.mxu0 0.0
  %7418 = vmatpush.msra.mxu0 0.0
  %7419 = vmatpush.msra.mxu0 0.0
  %7420 = vmatpush.msra.mxu0 %v7347
  %7421 = vmatpush.msra.mxu0 %v7344
  %7422 = vmatmul.f32.gmra.mxu0 %v7355
  %v7423 = vpop.f32.mrf.mxu0
  %v7424 = vadd.f32 0.0, %v7423
  %7425 = vmatmul.f32.gmra.mxu0 %v7358
  %v7426 = vpop.f32.mrf.mxu0
  %v7427 = vadd.f32 0.0, %v7426
  %7428 = vdwg.mxu0
  %v7429 = vadd.f32 %v7318, %v7378
  %v7430 = vadd.f32 %v7319, %v7401
  %v7431 = vadd.f32 %v7320, %v7424
  %v7432 = vadd.f32 %v7321, %v7381
  %v7433 = vadd.f32 %v7322, %v7404
  %v7434 = vadd.f32 %v7323, %v7427
  %v7435 = vld [vmem:[%s1809] sm:$0xff]
  %v7436 = vld [vmem:[%s1809 + $0x8] sm:$0x3]
  %7437 = vrot.lane.b32.xlu0 %v5685, 82
  %v7438 = vpop.permute.xlu0 %7437
  %7439 = vrot.lane.b32.xlu0 %v5686, 82
  %v7440 = vpop.permute.xlu0 %7439
  %7441 = vrot.lane.b32.xlu0 %v5687, 82
  %v7442 = vpop.permute.xlu0 %7441
  %7443 = vrot.lane.b32.xlu0 %v5693, 82
  %v7444 = vpop.permute.xlu0 %7443
  %7445 = vrot.lane.b32.xlu0 %v5688, 82
  %v7446 = vpop.permute.xlu0 %7445
  %7447 = vrot.lane.b32.xlu0 %v5689, 82
  %v7448 = vpop.permute.xlu0 %7447
  %7449 = vrot.lane.b32.xlu0 %v5690, 82
  %v7450 = vpop.permute.xlu0 %7449
  %7451 = vrot.lane.b32.xlu0 %v5694, 82
  %v7452 = vpop.permute.xlu0 %7451
  %v7453 = vsel %vm1828, %v7438, %v7440
  %v7454 = vsel %vm1828, %v7440, %v7442
  %v7455 = vsel %vm1828, %v7442, %v7444
  %v7456 = vsel %vm1828, %v7446, %v7448
  %v7457 = vsel %vm1828, %v7448, %v7450
  %v7458 = vsel %vm1828, %v7450, %v7452
  %v7466 = vsel %vm76, %v7435, 0
  %v7469 = vsel %vm76, %v7436, 0
  %7471 = vmatpush.msra.mxu0 0.0
  %7472 = vmatpush.msra.mxu0 0.0
  %7473 = vmatpush.msra.mxu0 0.0
  %7474 = vmatpush.msra.mxu0 0.0
  %7475 = vmatpush.msra.mxu0 0.0
  %7476 = vmatpush.msra.mxu0 0.0
  %7477 = vmatpush.msra.mxu0 0.0
  %7478 = vmatpush.msra.mxu0 0.0
  %7479 = vmatpush.msra.mxu0 0.0
  %7480 = vmatpush.msra.mxu0 0.0
  %7481 = vmatpush.msra.mxu0 0.0
  %7482 = vmatpush.msra.mxu0 0.0
  %7483 = vmatpush.msra.mxu0 0.0
  %7484 = vmatpush.msra.mxu0 0.0
  %7485 = vmatpush.msra.mxu0 %v7456
  %7486 = vmatpush.msra.mxu0 %v7453
  %7487 = vmatmul.f32.gmra.mxu0 %v7466
  %v7488 = vpop.f32.mrf.mxu0
  %v7489 = vadd.f32 0.0, %v7488
  %7490 = vmatmul.f32.gmra.mxu0 %v7469
  %v7491 = vpop.f32.mrf.mxu0
  %v7492 = vadd.f32 0.0, %v7491
  %7493 = vdwg.mxu0
  %7494 = vmatpush.msra.mxu0 0.0
  %7495 = vmatpush.msra.mxu0 0.0
  %7496 = vmatpush.msra.mxu0 0.0
  %7497 = vmatpush.msra.mxu0 0.0
  %7498 = vmatpush.msra.mxu0 0.0
  %7499 = vmatpush.msra.mxu0 0.0
  %7500 = vmatpush.msra.mxu0 0.0
  %7501 = vmatpush.msra.mxu0 0.0
  %7502 = vmatpush.msra.mxu0 0.0
  %7503 = vmatpush.msra.mxu0 0.0
  %7504 = vmatpush.msra.mxu0 0.0
  %7505 = vmatpush.msra.mxu0 0.0
  %7506 = vmatpush.msra.mxu0 0.0
  %7507 = vmatpush.msra.mxu0 0.0
  %7508 = vmatpush.msra.mxu0 %v7457
  %7509 = vmatpush.msra.mxu0 %v7454
  %7510 = vmatmul.f32.gmra.mxu0 %v7466
  %v7511 = vpop.f32.mrf.mxu0
  %v7512 = vadd.f32 0.0, %v7511
  %7513 = vmatmul.f32.gmra.mxu0 %v7469
  %v7514 = vpop.f32.mrf.mxu0
  %v7515 = vadd.f32 0.0, %v7514
  %7516 = vdwg.mxu0
  %7517 = vmatpush.msra.mxu0 0.0
  %7518 = vmatpush.msra.mxu0 0.0
  %7519 = vmatpush.msra.mxu0 0.0
  %7520 = vmatpush.msra.mxu0 0.0
  %7521 = vmatpush.msra.mxu0 0.0
  %7522 = vmatpush.msra.mxu0 0.0
  %7523 = vmatpush.msra.mxu0 0.0
  %7524 = vmatpush.msra.mxu0 0.0
  %7525 = vmatpush.msra.mxu0 0.0
  %7526 = vmatpush.msra.mxu0 0.0
  %7527 = vmatpush.msra.mxu0 0.0
  %7528 = vmatpush.msra.mxu0 0.0
  %7529 = vmatpush.msra.mxu0 0.0
  %7530 = vmatpush.msra.mxu0 0.0
  %7531 = vmatpush.msra.mxu0 %v7458
  %7532 = vmatpush.msra.mxu0 %v7455
  %7533 = vmatmul.f32.gmra.mxu0 %v7466
  %v7534 = vpop.f32.mrf.mxu0
  %v7535 = vadd.f32 0.0, %v7534
  %7536 = vmatmul.f32.gmra.mxu0 %v7469
  %v7537 = vpop.f32.mrf.mxu0
  %v7538 = vadd.f32 0.0, %v7537
  %7539 = vdwg.mxu0
  %v7540 = vadd.f32 %v7429, %v7489
  %v7541 = vadd.f32 %v7430, %v7512
  %v7542 = vadd.f32 %v7431, %v7535
  %v7543 = vadd.f32 %v7432, %v7492
  %v7544 = vadd.f32 %v7433, %v7515
  %v7545 = vadd.f32 %v7434, %v7538
  %v7546 = vld [vmem:[%s1922] sm:$0xff]
  %v7547 = vld [vmem:[%s1922 + $0x8] sm:$0x3]
  %7548 = vrot.lane.b32.xlu0 %v5685, 81
  %v7549 = vpop.permute.xlu0 %7548
  %7550 = vrot.lane.b32.xlu0 %v5686, 81
  %v7551 = vpop.permute.xlu0 %7550
  %7552 = vrot.lane.b32.xlu0 %v5687, 81
  %v7553 = vpop.permute.xlu0 %7552
  %7554 = vrot.lane.b32.xlu0 %v5693, 81
  %v7555 = vpop.permute.xlu0 %7554
  %7556 = vrot.lane.b32.xlu0 %v5688, 81
  %v7557 = vpop.permute.xlu0 %7556
  %7558 = vrot.lane.b32.xlu0 %v5689, 81
  %v7559 = vpop.permute.xlu0 %7558
  %7560 = vrot.lane.b32.xlu0 %v5690, 81
  %v7561 = vpop.permute.xlu0 %7560
  %7562 = vrot.lane.b32.xlu0 %v5694, 81
  %v7563 = vpop.permute.xlu0 %7562
  %v7564 = vsel %vm1941, %v7549, %v7551
  %v7565 = vsel %vm1941, %v7551, %v7553
  %v7566 = vsel %vm1941, %v7553, %v7555
  %v7567 = vsel %vm1941, %v7557, %v7559
  %v7568 = vsel %vm1941, %v7559, %v7561
  %v7569 = vsel %vm1941, %v7561, %v7563
  %v7577 = vsel %vm76, %v7546, 0
  %v7580 = vsel %vm76, %v7547, 0
  %7582 = vmatpush.msra.mxu0 0.0
  %7583 = vmatpush.msra.mxu0 0.0
  %7584 = vmatpush.msra.mxu0 0.0
  %7585 = vmatpush.msra.mxu0 0.0
  %7586 = vmatpush.msra.mxu0 0.0
  %7587 = vmatpush.msra.mxu0 0.0
  %7588 = vmatpush.msra.mxu0 0.0
  %7589 = vmatpush.msra.mxu0 0.0
  %7590 = vmatpush.msra.mxu0 0.0
  %7591 = vmatpush.msra.mxu0 0.0
  %7592 = vmatpush.msra.mxu0 0.0
  %7593 = vmatpush.msra.mxu0 0.0
  %7594 = vmatpush.msra.mxu0 0.0
  %7595 = vmatpush.msra.mxu0 0.0
  %7596 = vmatpush.msra.mxu0 %v7567
  %7597 = vmatpush.msra.mxu0 %v7564
  %7598 = vmatmul.f32.gmra.mxu0 %v7577
  %v7599 = vpop.f32.mrf.mxu0
  %v7600 = vadd.f32 0.0, %v7599
  %7601 = vmatmul.f32.gmra.mxu0 %v7580
  %v7602 = vpop.f32.mrf.mxu0
  %v7603 = vadd.f32 0.0, %v7602
  %7604 = vdwg.mxu0
  %7605 = vmatpush.msra.mxu0 0.0
  %7606 = vmatpush.msra.mxu0 0.0
  %7607 = vmatpush.msra.mxu0 0.0
  %7608 = vmatpush.msra.mxu0 0.0
  %7609 = vmatpush.msra.mxu0 0.0
  %7610 = vmatpush.msra.mxu0 0.0
  %7611 = vmatpush.msra.mxu0 0.0
  %7612 = vmatpush.msra.mxu0 0.0
  %7613 = vmatpush.msra.mxu0 0.0
  %7614 = vmatpush.msra.mxu0 0.0
  %7615 = vmatpush.msra.mxu0 0.0
  %7616 = vmatpush.msra.mxu0 0.0
  %7617 = vmatpush.msra.mxu0 0.0
  %7618 = vmatpush.msra.mxu0 0.0
  %7619 = vmatpush.msra.mxu0 %v7568
  %7620 = vmatpush.msra.mxu0 %v7565
  %7621 = vmatmul.f32.gmra.mxu0 %v7577
  %v7622 = vpop.f32.mrf.mxu0
  %v7623 = vadd.f32 0.0, %v7622
  %7624 = vmatmul.f32.gmra.mxu0 %v7580
  %v7625 = vpop.f32.mrf.mxu0
  %v7626 = vadd.f32 0.0, %v7625
  %7627 = vdwg.mxu0
  %7628 = vmatpush.msra.mxu0 0.0
  %7629 = vmatpush.msra.mxu0 0.0
  %7630 = vmatpush.msra.mxu0 0.0
  %7631 = vmatpush.msra.mxu0 0.0
  %7632 = vmatpush.msra.mxu0 0.0
  %7633 = vmatpush.msra.mxu0 0.0
  %7634 = vmatpush.msra.mxu0 0.0
  %7635 = vmatpush.msra.mxu0 0.0
  %7636 = vmatpush.msra.mxu0 0.0
  %7637 = vmatpush.msra.mxu0 0.0
  %7638 = vmatpush.msra.mxu0 0.0
  %7639 = vmatpush.msra.mxu0 0.0
  %7640 = vmatpush.msra.mxu0 0.0
  %7641 = vmatpush.msra.mxu0 0.0
  %7642 = vmatpush.msra.mxu0 %v7569
  %7643 = vmatpush.msra.mxu0 %v7566
  %7644 = vmatmul.f32.gmra.mxu0 %v7577
  %v7645 = vpop.f32.mrf.mxu0
  %v7646 = vadd.f32 0.0, %v7645
  %7647 = vmatmul.f32.gmra.mxu0 %v7580
  %v7648 = vpop.f32.mrf.mxu0
  %v7649 = vadd.f32 0.0, %v7648
  %7650 = vdwg.mxu0
  %v7651 = vadd.f32 %v7540, %v7600
  %v7652 = vadd.f32 %v7541, %v7623
  %v7653 = vadd.f32 %v7542, %v7646
  %v7654 = vadd.f32 %v7543, %v7603
  %v7655 = vadd.f32 %v7544, %v7626
  %v7656 = vadd.f32 %v7545, %v7649
  %v7657 = vld [vmem:[%s2035] sm:$0xff]
  %v7658 = vld [vmem:[%s2035 + $0x8] sm:$0x3]
  %7659 = vrot.lane.b32.xlu0 %v5685, 80
  %v7660 = vpop.permute.xlu0 %7659
  %7661 = vrot.lane.b32.xlu0 %v5686, 80
  %v7662 = vpop.permute.xlu0 %7661
  %7663 = vrot.lane.b32.xlu0 %v5687, 80
  %v7664 = vpop.permute.xlu0 %7663
  %7665 = vrot.lane.b32.xlu0 %v5693, 80
  %v7666 = vpop.permute.xlu0 %7665
  %7667 = vrot.lane.b32.xlu0 %v5688, 80
  %v7668 = vpop.permute.xlu0 %7667
  %7669 = vrot.lane.b32.xlu0 %v5689, 80
  %v7670 = vpop.permute.xlu0 %7669
  %7671 = vrot.lane.b32.xlu0 %v5690, 80
  %v7672 = vpop.permute.xlu0 %7671
  %7673 = vrot.lane.b32.xlu0 %v5694, 80
  %v7674 = vpop.permute.xlu0 %7673
  %v7675 = vsel %vm2054, %v7660, %v7662
  %v7676 = vsel %vm2054, %v7662, %v7664
  %v7677 = vsel %vm2054, %v7664, %v7666
  %v7678 = vsel %vm2054, %v7668, %v7670
  %v7679 = vsel %vm2054, %v7670, %v7672
  %v7680 = vsel %vm2054, %v7672, %v7674
  %v7688 = vsel %vm76, %v7657, 0
  %v7691 = vsel %vm76, %v7658, 0
  %7693 = vmatpush.msra.mxu0 0.0
  %7694 = vmatpush.msra.mxu0 0.0
  %7695 = vmatpush.msra.mxu0 0.0
  %7696 = vmatpush.msra.mxu0 0.0
  %7697 = vmatpush.msra.mxu0 0.0
  %7698 = vmatpush.msra.mxu0 0.0
  %7699 = vmatpush.msra.mxu0 0.0
  %7700 = vmatpush.msra.mxu0 0.0
  %7701 = vmatpush.msra.mxu0 0.0
  %7702 = vmatpush.msra.mxu0 0.0
  %7703 = vmatpush.msra.mxu0 0.0
  %7704 = vmatpush.msra.mxu0 0.0
  %7705 = vmatpush.msra.mxu0 0.0
  %7706 = vmatpush.msra.mxu0 0.0
  %7707 = vmatpush.msra.mxu0 %v7678
  %7708 = vmatpush.msra.mxu0 %v7675
  %7709 = vmatmul.f32.gmra.mxu0 %v7688
  %v7710 = vpop.f32.mrf.mxu0
  %v7711 = vadd.f32 0.0, %v7710
  %7712 = vmatmul.f32.gmra.mxu0 %v7691
  %v7713 = vpop.f32.mrf.mxu0
  %v7714 = vadd.f32 0.0, %v7713
  %7715 = vdwg.mxu0
  %7716 = vmatpush.msra.mxu0 0.0
  %7717 = vmatpush.msra.mxu0 0.0
  %7718 = vmatpush.msra.mxu0 0.0
  %7719 = vmatpush.msra.mxu0 0.0
  %7720 = vmatpush.msra.mxu0 0.0
  %7721 = vmatpush.msra.mxu0 0.0
  %7722 = vmatpush.msra.mxu0 0.0
  %7723 = vmatpush.msra.mxu0 0.0
  %7724 = vmatpush.msra.mxu0 0.0
  %7725 = vmatpush.msra.mxu0 0.0
  %7726 = vmatpush.msra.mxu0 0.0
  %7727 = vmatpush.msra.mxu0 0.0
  %7728 = vmatpush.msra.mxu0 0.0
  %7729 = vmatpush.msra.mxu0 0.0
  %7730 = vmatpush.msra.mxu0 %v7679
  %7731 = vmatpush.msra.mxu0 %v7676
  %7732 = vmatmul.f32.gmra.mxu0 %v7688
  %v7733 = vpop.f32.mrf.mxu0
  %v7734 = vadd.f32 0.0, %v7733
  %7735 = vmatmul.f32.gmra.mxu0 %v7691
  %v7736 = vpop.f32.mrf.mxu0
  %v7737 = vadd.f32 0.0, %v7736
  %7738 = vdwg.mxu0
  %7739 = vmatpush.msra.mxu0 0.0
  %7740 = vmatpush.msra.mxu0 0.0
  %7741 = vmatpush.msra.mxu0 0.0
  %7742 = vmatpush.msra.mxu0 0.0
  %7743 = vmatpush.msra.mxu0 0.0
  %7744 = vmatpush.msra.mxu0 0.0
  %7745 = vmatpush.msra.mxu0 0.0
  %7746 = vmatpush.msra.mxu0 0.0
  %7747 = vmatpush.msra.mxu0 0.0
  %7748 = vmatpush.msra.mxu0 0.0
  %7749 = vmatpush.msra.mxu0 0.0
  %7750 = vmatpush.msra.mxu0 0.0
  %7751 = vmatpush.msra.mxu0 0.0
  %7752 = vmatpush.msra.mxu0 0.0
  %7753 = vmatpush.msra.mxu0 %v7680
  %7754 = vmatpush.msra.mxu0 %v7677
  %7755 = vmatmul.f32.gmra.mxu0 %v7688
  %v7756 = vpop.f32.mrf.mxu0
  %v7757 = vadd.f32 0.0, %v7756
  %7758 = vmatmul.f32.gmra.mxu0 %v7691
  %v7759 = vpop.f32.mrf.mxu0
  %v7760 = vadd.f32 0.0, %v7759
  %7761 = vdwg.mxu0
  %v7762 = vadd.f32 %v7651, %v7711
  %v7763 = vadd.f32 %v7652, %v7734
  %v7764 = vadd.f32 %v7653, %v7757
  %v7765 = vadd.f32 %v7654, %v7714
  %v7766 = vadd.f32 %v7655, %v7737
  %v7767 = vadd.f32 %v7656, %v7760
  %v7768 = vld [vmem:[%s2148] sm:$0xff]
  %v7769 = vld [vmem:[%s2148 + $0x8] sm:$0x3]
  %7770 = vrot.lane.b32.xlu0 %v5685, 79
  %v7771 = vpop.permute.xlu0 %7770
  %7772 = vrot.lane.b32.xlu0 %v5686, 79
  %v7773 = vpop.permute.xlu0 %7772
  %7774 = vrot.lane.b32.xlu0 %v5687, 79
  %v7775 = vpop.permute.xlu0 %7774
  %7776 = vrot.lane.b32.xlu0 %v5693, 79
  %v7777 = vpop.permute.xlu0 %7776
  %7778 = vrot.lane.b32.xlu0 %v5688, 79
  %v7779 = vpop.permute.xlu0 %7778
  %7780 = vrot.lane.b32.xlu0 %v5689, 79
  %v7781 = vpop.permute.xlu0 %7780
  %7782 = vrot.lane.b32.xlu0 %v5690, 79
  %v7783 = vpop.permute.xlu0 %7782
  %7784 = vrot.lane.b32.xlu0 %v5694, 79
  %v7785 = vpop.permute.xlu0 %7784
  %v7786 = vsel %vm2167, %v7771, %v7773
  %v7787 = vsel %vm2167, %v7773, %v7775
  %v7788 = vsel %vm2167, %v7775, %v7777
  %v7789 = vsel %vm2167, %v7779, %v7781
  %v7790 = vsel %vm2167, %v7781, %v7783
  %v7791 = vsel %vm2167, %v7783, %v7785
  %v7799 = vsel %vm76, %v7768, 0
  %v7802 = vsel %vm76, %v7769, 0
  %7804 = vmatpush.msra.mxu0 0.0
  %7805 = vmatpush.msra.mxu0 0.0
  %7806 = vmatpush.msra.mxu0 0.0
  %7807 = vmatpush.msra.mxu0 0.0
  %7808 = vmatpush.msra.mxu0 0.0
  %7809 = vmatpush.msra.mxu0 0.0
  %7810 = vmatpush.msra.mxu0 0.0
  %7811 = vmatpush.msra.mxu0 0.0
  %7812 = vmatpush.msra.mxu0 0.0
  %7813 = vmatpush.msra.mxu0 0.0
  %7814 = vmatpush.msra.mxu0 0.0
  %7815 = vmatpush.msra.mxu0 0.0
  %7816 = vmatpush.msra.mxu0 0.0
  %7817 = vmatpush.msra.mxu0 0.0
  %7818 = vmatpush.msra.mxu0 %v7789
  %7819 = vmatpush.msra.mxu0 %v7786
  %7820 = vmatmul.f32.gmra.mxu0 %v7799
  %v7821 = vpop.f32.mrf.mxu0
  %v7822 = vadd.f32 0.0, %v7821
  %7823 = vmatmul.f32.gmra.mxu0 %v7802
  %v7824 = vpop.f32.mrf.mxu0
  %v7825 = vadd.f32 0.0, %v7824
  %7826 = vdwg.mxu0
  %7827 = vmatpush.msra.mxu0 0.0
  %7828 = vmatpush.msra.mxu0 0.0
  %7829 = vmatpush.msra.mxu0 0.0
  %7830 = vmatpush.msra.mxu0 0.0
  %7831 = vmatpush.msra.mxu0 0.0
  %7832 = vmatpush.msra.mxu0 0.0
  %7833 = vmatpush.msra.mxu0 0.0
  %7834 = vmatpush.msra.mxu0 0.0
  %7835 = vmatpush.msra.mxu0 0.0
  %7836 = vmatpush.msra.mxu0 0.0
  %7837 = vmatpush.msra.mxu0 0.0
  %7838 = vmatpush.msra.mxu0 0.0
  %7839 = vmatpush.msra.mxu0 0.0
  %7840 = vmatpush.msra.mxu0 0.0
  %7841 = vmatpush.msra.mxu0 %v7790
  %7842 = vmatpush.msra.mxu0 %v7787
  %7843 = vmatmul.f32.gmra.mxu0 %v7799
  %v7844 = vpop.f32.mrf.mxu0
  %v7845 = vadd.f32 0.0, %v7844
  %7846 = vmatmul.f32.gmra.mxu0 %v7802
  %v7847 = vpop.f32.mrf.mxu0
  %v7848 = vadd.f32 0.0, %v7847
  %7849 = vdwg.mxu0
  %7850 = vmatpush.msra.mxu0 0.0
  %7851 = vmatpush.msra.mxu0 0.0
  %7852 = vmatpush.msra.mxu0 0.0
  %7853 = vmatpush.msra.mxu0 0.0
  %7854 = vmatpush.msra.mxu0 0.0
  %7855 = vmatpush.msra.mxu0 0.0
  %7856 = vmatpush.msra.mxu0 0.0
  %7857 = vmatpush.msra.mxu0 0.0
  %7858 = vmatpush.msra.mxu0 0.0
  %7859 = vmatpush.msra.mxu0 0.0
  %7860 = vmatpush.msra.mxu0 0.0
  %7861 = vmatpush.msra.mxu0 0.0
  %7862 = vmatpush.msra.mxu0 0.0
  %7863 = vmatpush.msra.mxu0 0.0
  %7864 = vmatpush.msra.mxu0 %v7791
  %7865 = vmatpush.msra.mxu0 %v7788
  %7866 = vmatmul.f32.gmra.mxu0 %v7799
  %v7867 = vpop.f32.mrf.mxu0
  %v7868 = vadd.f32 0.0, %v7867
  %7869 = vmatmul.f32.gmra.mxu0 %v7802
  %v7870 = vpop.f32.mrf.mxu0
  %v7871 = vadd.f32 0.0, %v7870
  %7872 = vdwg.mxu0
  %v7873 = vadd.f32 %v7762, %v7822
  %v7874 = vadd.f32 %v7763, %v7845
  %v7875 = vadd.f32 %v7764, %v7868
  %v7876 = vadd.f32 %v7765, %v7825
  %v7877 = vadd.f32 %v7766, %v7848
  %v7878 = vadd.f32 %v7767, %v7871
  %v7879 = vld [vmem:[%s2261] sm:$0xff]
  %v7880 = vld [vmem:[%s2261 + $0x8] sm:$0x3]
  %7881 = vrot.lane.b32.xlu0 %v5685, 78
  %v7882 = vpop.permute.xlu0 %7881
  %7883 = vrot.lane.b32.xlu0 %v5686, 78
  %v7884 = vpop.permute.xlu0 %7883
  %7885 = vrot.lane.b32.xlu0 %v5687, 78
  %v7886 = vpop.permute.xlu0 %7885
  %7887 = vrot.lane.b32.xlu0 %v5693, 78
  %v7888 = vpop.permute.xlu0 %7887
  %7889 = vrot.lane.b32.xlu0 %v5688, 78
  %v7890 = vpop.permute.xlu0 %7889
  %7891 = vrot.lane.b32.xlu0 %v5689, 78
  %v7892 = vpop.permute.xlu0 %7891
  %7893 = vrot.lane.b32.xlu0 %v5690, 78
  %v7894 = vpop.permute.xlu0 %7893
  %7895 = vrot.lane.b32.xlu0 %v5694, 78
  %v7896 = vpop.permute.xlu0 %7895
  %v7897 = vsel %vm2280, %v7882, %v7884
  %v7898 = vsel %vm2280, %v7884, %v7886
  %v7899 = vsel %vm2280, %v7886, %v7888
  %v7900 = vsel %vm2280, %v7890, %v7892
  %v7901 = vsel %vm2280, %v7892, %v7894
  %v7902 = vsel %vm2280, %v7894, %v7896
  %v7910 = vsel %vm76, %v7879, 0
  %v7913 = vsel %vm76, %v7880, 0
  %7915 = vmatpush.msra.mxu0 0.0
  %7916 = vmatpush.msra.mxu0 0.0
  %7917 = vmatpush.msra.mxu0 0.0
  %7918 = vmatpush.msra.mxu0 0.0
  %7919 = vmatpush.msra.mxu0 0.0
  %7920 = vmatpush.msra.mxu0 0.0
  %7921 = vmatpush.msra.mxu0 0.0
  %7922 = vmatpush.msra.mxu0 0.0
  %7923 = vmatpush.msra.mxu0 0.0
  %7924 = vmatpush.msra.mxu0 0.0
  %7925 = vmatpush.msra.mxu0 0.0
  %7926 = vmatpush.msra.mxu0 0.0
  %7927 = vmatpush.msra.mxu0 0.0
  %7928 = vmatpush.msra.mxu0 0.0
  %7929 = vmatpush.msra.mxu0 %v7900
  %7930 = vmatpush.msra.mxu0 %v7897
  %7931 = vmatmul.f32.gmra.mxu0 %v7910
  %v7932 = vpop.f32.mrf.mxu0
  %v7933 = vadd.f32 0.0, %v7932
  %7934 = vmatmul.f32.gmra.mxu0 %v7913
  %v7935 = vpop.f32.mrf.mxu0
  %v7936 = vadd.f32 0.0, %v7935
  %7937 = vdwg.mxu0
  %7938 = vmatpush.msra.mxu0 0.0
  %7939 = vmatpush.msra.mxu0 0.0
  %7940 = vmatpush.msra.mxu0 0.0
  %7941 = vmatpush.msra.mxu0 0.0
  %7942 = vmatpush.msra.mxu0 0.0
  %7943 = vmatpush.msra.mxu0 0.0
  %7944 = vmatpush.msra.mxu0 0.0
  %7945 = vmatpush.msra.mxu0 0.0
  %7946 = vmatpush.msra.mxu0 0.0
  %7947 = vmatpush.msra.mxu0 0.0
  %7948 = vmatpush.msra.mxu0 0.0
  %7949 = vmatpush.msra.mxu0 0.0
  %7950 = vmatpush.msra.mxu0 0.0
  %7951 = vmatpush.msra.mxu0 0.0
  %7952 = vmatpush.msra.mxu0 %v7901
  %7953 = vmatpush.msra.mxu0 %v7898
  %7954 = vmatmul.f32.gmra.mxu0 %v7910
  %v7955 = vpop.f32.mrf.mxu0
  %v7956 = vadd.f32 0.0, %v7955
  %7957 = vmatmul.f32.gmra.mxu0 %v7913
  %v7958 = vpop.f32.mrf.mxu0
  %v7959 = vadd.f32 0.0, %v7958
  %7960 = vdwg.mxu0
  %7961 = vmatpush.msra.mxu0 0.0
  %7962 = vmatpush.msra.mxu0 0.0
  %7963 = vmatpush.msra.mxu0 0.0
  %7964 = vmatpush.msra.mxu0 0.0
  %7965 = vmatpush.msra.mxu0 0.0
  %7966 = vmatpush.msra.mxu0 0.0
  %7967 = vmatpush.msra.mxu0 0.0
  %7968 = vmatpush.msra.mxu0 0.0
  %7969 = vmatpush.msra.mxu0 0.0
  %7970 = vmatpush.msra.mxu0 0.0
  %7971 = vmatpush.msra.mxu0 0.0
  %7972 = vmatpush.msra.mxu0 0.0
  %7973 = vmatpush.msra.mxu0 0.0
  %7974 = vmatpush.msra.mxu0 0.0
  %7975 = vmatpush.msra.mxu0 %v7902
  %7976 = vmatpush.msra.mxu0 %v7899
  %7977 = vmatmul.f32.gmra.mxu0 %v7910
  %v7978 = vpop.f32.mrf.mxu0
  %v7979 = vadd.f32 0.0, %v7978
  %7980 = vmatmul.f32.gmra.mxu0 %v7913
  %v7981 = vpop.f32.mrf.mxu0
  %v7982 = vadd.f32 0.0, %v7981
  %7983 = vdwg.mxu0
  %v7984 = vadd.f32 %v7873, %v7933
  %v7985 = vadd.f32 %v7874, %v7956
  %v7986 = vadd.f32 %v7875, %v7979
  %v7987 = vadd.f32 %v7876, %v7936
  %v7988 = vadd.f32 %v7877, %v7959
  %v7989 = vadd.f32 %v7878, %v7982
  %v7990 = vld [vmem:[%s2374] sm:$0xff]
  %v7991 = vld [vmem:[%s2374 + $0x8] sm:$0x3]
  %7992 = vrot.lane.b32.xlu0 %v5685, 62
  %v7993 = vpop.permute.xlu0 %7992
  %7994 = vrot.lane.b32.xlu0 %v5686, 62
  %v7995 = vpop.permute.xlu0 %7994
  %7996 = vrot.lane.b32.xlu0 %v5687, 62
  %v7997 = vpop.permute.xlu0 %7996
  %7998 = vrot.lane.b32.xlu0 %v5693, 62
  %v7999 = vpop.permute.xlu0 %7998
  %8000 = vrot.lane.b32.xlu0 %v5688, 62
  %v8001 = vpop.permute.xlu0 %8000
  %8002 = vrot.lane.b32.xlu0 %v5689, 62
  %v8003 = vpop.permute.xlu0 %8002
  %8004 = vrot.lane.b32.xlu0 %v5690, 62
  %v8005 = vpop.permute.xlu0 %8004
  %8006 = vrot.lane.b32.xlu0 %v5694, 62
  %v8007 = vpop.permute.xlu0 %8006
  %v8008 = vsel %vm2393, %v7993, %v7995
  %v8009 = vsel %vm2393, %v7995, %v7997
  %v8010 = vsel %vm2393, %v7997, %v7999
  %v8011 = vsel %vm2393, %v8001, %v8003
  %v8012 = vsel %vm2393, %v8003, %v8005
  %v8013 = vsel %vm2393, %v8005, %v8007
  %v8021 = vsel %vm76, %v7990, 0
  %v8024 = vsel %vm76, %v7991, 0
  %8026 = vmatpush.msra.mxu0 0.0
  %8027 = vmatpush.msra.mxu0 0.0
  %8028 = vmatpush.msra.mxu0 0.0
  %8029 = vmatpush.msra.mxu0 0.0
  %8030 = vmatpush.msra.mxu0 0.0
  %8031 = vmatpush.msra.mxu0 0.0
  %8032 = vmatpush.msra.mxu0 0.0
  %8033 = vmatpush.msra.mxu0 0.0
  %8034 = vmatpush.msra.mxu0 0.0
  %8035 = vmatpush.msra.mxu0 0.0
  %8036 = vmatpush.msra.mxu0 0.0
  %8037 = vmatpush.msra.mxu0 0.0
  %8038 = vmatpush.msra.mxu0 0.0
  %8039 = vmatpush.msra.mxu0 0.0
  %8040 = vmatpush.msra.mxu0 %v8011
  %8041 = vmatpush.msra.mxu0 %v8008
  %8042 = vmatmul.f32.gmra.mxu0 %v8021
  %v8043 = vpop.f32.mrf.mxu0
  %v8044 = vadd.f32 0.0, %v8043
  %8045 = vmatmul.f32.gmra.mxu0 %v8024
  %v8046 = vpop.f32.mrf.mxu0
  %v8047 = vadd.f32 0.0, %v8046
  %8048 = vdwg.mxu0
  %8049 = vmatpush.msra.mxu0 0.0
  %8050 = vmatpush.msra.mxu0 0.0
  %8051 = vmatpush.msra.mxu0 0.0
  %8052 = vmatpush.msra.mxu0 0.0
  %8053 = vmatpush.msra.mxu0 0.0
  %8054 = vmatpush.msra.mxu0 0.0
  %8055 = vmatpush.msra.mxu0 0.0
  %8056 = vmatpush.msra.mxu0 0.0
  %8057 = vmatpush.msra.mxu0 0.0
  %8058 = vmatpush.msra.mxu0 0.0
  %8059 = vmatpush.msra.mxu0 0.0
  %8060 = vmatpush.msra.mxu0 0.0
  %8061 = vmatpush.msra.mxu0 0.0
  %8062 = vmatpush.msra.mxu0 0.0
  %8063 = vmatpush.msra.mxu0 %v8012
  %8064 = vmatpush.msra.mxu0 %v8009
  %8065 = vmatmul.f32.gmra.mxu0 %v8021
  %v8066 = vpop.f32.mrf.mxu0
  %v8067 = vadd.f32 0.0, %v8066
  %8068 = vmatmul.f32.gmra.mxu0 %v8024
  %v8069 = vpop.f32.mrf.mxu0
  %v8070 = vadd.f32 0.0, %v8069
  %8071 = vdwg.mxu0
  %8072 = vmatpush.msra.mxu0 0.0
  %8073 = vmatpush.msra.mxu0 0.0
  %8074 = vmatpush.msra.mxu0 0.0
  %8075 = vmatpush.msra.mxu0 0.0
  %8076 = vmatpush.msra.mxu0 0.0
  %8077 = vmatpush.msra.mxu0 0.0
  %8078 = vmatpush.msra.mxu0 0.0
  %8079 = vmatpush.msra.mxu0 0.0
  %8080 = vmatpush.msra.mxu0 0.0
  %8081 = vmatpush.msra.mxu0 0.0
  %8082 = vmatpush.msra.mxu0 0.0
  %8083 = vmatpush.msra.mxu0 0.0
  %8084 = vmatpush.msra.mxu0 0.0
  %8085 = vmatpush.msra.mxu0 0.0
  %8086 = vmatpush.msra.mxu0 %v8013
  %8087 = vmatpush.msra.mxu0 %v8010
  %8088 = vmatmul.f32.gmra.mxu0 %v8021
  %v8089 = vpop.f32.mrf.mxu0
  %v8090 = vadd.f32 0.0, %v8089
  %8091 = vmatmul.f32.gmra.mxu0 %v8024
  %v8092 = vpop.f32.mrf.mxu0
  %v8093 = vadd.f32 0.0, %v8092
  %8094 = vdwg.mxu0
  %v8095 = vadd.f32 %v7984, %v8044
  %v8096 = vadd.f32 %v7985, %v8067
  %v8097 = vadd.f32 %v7986, %v8090
  %v8098 = vadd.f32 %v7987, %v8047
  %v8099 = vadd.f32 %v7988, %v8070
  %v8100 = vadd.f32 %v7989, %v8093
  %v8101 = vld [vmem:[%s2487] sm:$0xff]
  %v8102 = vld [vmem:[%s2487 + $0x8] sm:$0x3]
  %8103 = vrot.lane.b32.xlu0 %v5685, 61
  %v8104 = vpop.permute.xlu0 %8103
  %8105 = vrot.lane.b32.xlu0 %v5686, 61
  %v8106 = vpop.permute.xlu0 %8105
  %8107 = vrot.lane.b32.xlu0 %v5687, 61
  %v8108 = vpop.permute.xlu0 %8107
  %8109 = vrot.lane.b32.xlu0 %v5693, 61
  %v8110 = vpop.permute.xlu0 %8109
  %8111 = vrot.lane.b32.xlu0 %v5688, 61
  %v8112 = vpop.permute.xlu0 %8111
  %8113 = vrot.lane.b32.xlu0 %v5689, 61
  %v8114 = vpop.permute.xlu0 %8113
  %8115 = vrot.lane.b32.xlu0 %v5690, 61
  %v8116 = vpop.permute.xlu0 %8115
  %8117 = vrot.lane.b32.xlu0 %v5694, 61
  %v8118 = vpop.permute.xlu0 %8117
  %v8119 = vsel %vm2506, %v8104, %v8106
  %v8120 = vsel %vm2506, %v8106, %v8108
  %v8121 = vsel %vm2506, %v8108, %v8110
  %v8122 = vsel %vm2506, %v8112, %v8114
  %v8123 = vsel %vm2506, %v8114, %v8116
  %v8124 = vsel %vm2506, %v8116, %v8118
  %v8132 = vsel %vm76, %v8101, 0
  %v8135 = vsel %vm76, %v8102, 0
  %8137 = vmatpush.msra.mxu0 0.0
  %8138 = vmatpush.msra.mxu0 0.0
  %8139 = vmatpush.msra.mxu0 0.0
  %8140 = vmatpush.msra.mxu0 0.0
  %8141 = vmatpush.msra.mxu0 0.0
  %8142 = vmatpush.msra.mxu0 0.0
  %8143 = vmatpush.msra.mxu0 0.0
  %8144 = vmatpush.msra.mxu0 0.0
  %8145 = vmatpush.msra.mxu0 0.0
  %8146 = vmatpush.msra.mxu0 0.0
  %8147 = vmatpush.msra.mxu0 0.0
  %8148 = vmatpush.msra.mxu0 0.0
  %8149 = vmatpush.msra.mxu0 0.0
  %8150 = vmatpush.msra.mxu0 0.0
  %8151 = vmatpush.msra.mxu0 %v8122
  %8152 = vmatpush.msra.mxu0 %v8119
  %8153 = vmatmul.f32.gmra.mxu0 %v8132
  %v8154 = vpop.f32.mrf.mxu0
  %v8155 = vadd.f32 0.0, %v8154
  %8156 = vmatmul.f32.gmra.mxu0 %v8135
  %v8157 = vpop.f32.mrf.mxu0
  %v8158 = vadd.f32 0.0, %v8157
  %8159 = vdwg.mxu0
  %8160 = vmatpush.msra.mxu0 0.0
  %8161 = vmatpush.msra.mxu0 0.0
  %8162 = vmatpush.msra.mxu0 0.0
  %8163 = vmatpush.msra.mxu0 0.0
  %8164 = vmatpush.msra.mxu0 0.0
  %8165 = vmatpush.msra.mxu0 0.0
  %8166 = vmatpush.msra.mxu0 0.0
  %8167 = vmatpush.msra.mxu0 0.0
  %8168 = vmatpush.msra.mxu0 0.0
  %8169 = vmatpush.msra.mxu0 0.0
  %8170 = vmatpush.msra.mxu0 0.0
  %8171 = vmatpush.msra.mxu0 0.0
  %8172 = vmatpush.msra.mxu0 0.0
  %8173 = vmatpush.msra.mxu0 0.0
  %8174 = vmatpush.msra.mxu0 %v8123
  %8175 = vmatpush.msra.mxu0 %v8120
  %8176 = vmatmul.f32.gmra.mxu0 %v8132
  %v8177 = vpop.f32.mrf.mxu0
  %v8178 = vadd.f32 0.0, %v8177
  %8179 = vmatmul.f32.gmra.mxu0 %v8135
  %v8180 = vpop.f32.mrf.mxu0
  %v8181 = vadd.f32 0.0, %v8180
  %8182 = vdwg.mxu0
  %8183 = vmatpush.msra.mxu0 0.0
  %8184 = vmatpush.msra.mxu0 0.0
  %8185 = vmatpush.msra.mxu0 0.0
  %8186 = vmatpush.msra.mxu0 0.0
  %8187 = vmatpush.msra.mxu0 0.0
  %8188 = vmatpush.msra.mxu0 0.0
  %8189 = vmatpush.msra.mxu0 0.0
  %8190 = vmatpush.msra.mxu0 0.0
  %8191 = vmatpush.msra.mxu0 0.0
  %8192 = vmatpush.msra.mxu0 0.0
  %8193 = vmatpush.msra.mxu0 0.0
  %8194 = vmatpush.msra.mxu0 0.0
  %8195 = vmatpush.msra.mxu0 0.0
  %8196 = vmatpush.msra.mxu0 0.0
  %8197 = vmatpush.msra.mxu0 %v8124
  %8198 = vmatpush.msra.mxu0 %v8121
  %8199 = vmatmul.f32.gmra.mxu0 %v8132
  %v8200 = vpop.f32.mrf.mxu0
  %v8201 = vadd.f32 0.0, %v8200
  %8202 = vmatmul.f32.gmra.mxu0 %v8135
  %v8203 = vpop.f32.mrf.mxu0
  %v8204 = vadd.f32 0.0, %v8203
  %8205 = vdwg.mxu0
  %v8206 = vadd.f32 %v8095, %v8155
  %v8207 = vadd.f32 %v8096, %v8178
  %v8208 = vadd.f32 %v8097, %v8201
  %v8209 = vadd.f32 %v8098, %v8158
  %v8210 = vadd.f32 %v8099, %v8181
  %v8211 = vadd.f32 %v8100, %v8204
  %v8212 = vld [vmem:[%s2600] sm:$0xff]
  %v8213 = vld [vmem:[%s2600 + $0x8] sm:$0x3]
  %8214 = vrot.lane.b32.xlu0 %v5685, 60
  %v8215 = vpop.permute.xlu0 %8214
  %8216 = vrot.lane.b32.xlu0 %v5686, 60
  %v8217 = vpop.permute.xlu0 %8216
  %8218 = vrot.lane.b32.xlu0 %v5687, 60
  %v8219 = vpop.permute.xlu0 %8218
  %8220 = vrot.lane.b32.xlu0 %v5693, 60
  %v8221 = vpop.permute.xlu0 %8220
  %8222 = vrot.lane.b32.xlu0 %v5688, 60
  %v8223 = vpop.permute.xlu0 %8222
  %8224 = vrot.lane.b32.xlu0 %v5689, 60
  %v8225 = vpop.permute.xlu0 %8224
  %8226 = vrot.lane.b32.xlu0 %v5690, 60
  %v8227 = vpop.permute.xlu0 %8226
  %8228 = vrot.lane.b32.xlu0 %v5694, 60
  %v8229 = vpop.permute.xlu0 %8228
  %v8230 = vsel %vm2619, %v8215, %v8217
  %v8231 = vsel %vm2619, %v8217, %v8219
  %v8232 = vsel %vm2619, %v8219, %v8221
  %v8233 = vsel %vm2619, %v8223, %v8225
  %v8234 = vsel %vm2619, %v8225, %v8227
  %v8235 = vsel %vm2619, %v8227, %v8229
  %v8243 = vsel %vm76, %v8212, 0
  %v8246 = vsel %vm76, %v8213, 0
  %8248 = vmatpush.msra.mxu0 0.0
  %8249 = vmatpush.msra.mxu0 0.0
  %8250 = vmatpush.msra.mxu0 0.0
  %8251 = vmatpush.msra.mxu0 0.0
  %8252 = vmatpush.msra.mxu0 0.0
  %8253 = vmatpush.msra.mxu0 0.0
  %8254 = vmatpush.msra.mxu0 0.0
  %8255 = vmatpush.msra.mxu0 0.0
  %8256 = vmatpush.msra.mxu0 0.0
  %8257 = vmatpush.msra.mxu0 0.0
  %8258 = vmatpush.msra.mxu0 0.0
  %8259 = vmatpush.msra.mxu0 0.0
  %8260 = vmatpush.msra.mxu0 0.0
  %8261 = vmatpush.msra.mxu0 0.0
  %8262 = vmatpush.msra.mxu0 %v8233
  %8263 = vmatpush.msra.mxu0 %v8230
  %8264 = vmatmul.f32.gmra.mxu0 %v8243
  %v8265 = vpop.f32.mrf.mxu0
  %v8266 = vadd.f32 0.0, %v8265
  %8267 = vmatmul.f32.gmra.mxu0 %v8246
  %v8268 = vpop.f32.mrf.mxu0
  %v8269 = vadd.f32 0.0, %v8268
  %8270 = vdwg.mxu0
  %8271 = vmatpush.msra.mxu0 0.0
  %8272 = vmatpush.msra.mxu0 0.0
  %8273 = vmatpush.msra.mxu0 0.0
  %8274 = vmatpush.msra.mxu0 0.0
  %8275 = vmatpush.msra.mxu0 0.0
  %8276 = vmatpush.msra.mxu0 0.0
  %8277 = vmatpush.msra.mxu0 0.0
  %8278 = vmatpush.msra.mxu0 0.0
  %8279 = vmatpush.msra.mxu0 0.0
  %8280 = vmatpush.msra.mxu0 0.0
  %8281 = vmatpush.msra.mxu0 0.0
  %8282 = vmatpush.msra.mxu0 0.0
  %8283 = vmatpush.msra.mxu0 0.0
  %8284 = vmatpush.msra.mxu0 0.0
  %8285 = vmatpush.msra.mxu0 %v8234
  %8286 = vmatpush.msra.mxu0 %v8231
  %8287 = vmatmul.f32.gmra.mxu0 %v8243
  %v8288 = vpop.f32.mrf.mxu0
  %v8289 = vadd.f32 0.0, %v8288
  %8290 = vmatmul.f32.gmra.mxu0 %v8246
  %v8291 = vpop.f32.mrf.mxu0
  %v8292 = vadd.f32 0.0, %v8291
  %8293 = vdwg.mxu0
  %8294 = vmatpush.msra.mxu0 0.0
  %8295 = vmatpush.msra.mxu0 0.0
  %8296 = vmatpush.msra.mxu0 0.0
  %8297 = vmatpush.msra.mxu0 0.0
  %8298 = vmatpush.msra.mxu0 0.0
  %8299 = vmatpush.msra.mxu0 0.0
  %8300 = vmatpush.msra.mxu0 0.0
  %8301 = vmatpush.msra.mxu0 0.0
  %8302 = vmatpush.msra.mxu0 0.0
  %8303 = vmatpush.msra.mxu0 0.0
  %8304 = vmatpush.msra.mxu0 0.0
  %8305 = vmatpush.msra.mxu0 0.0
  %8306 = vmatpush.msra.mxu0 0.0
  %8307 = vmatpush.msra.mxu0 0.0
  %8308 = vmatpush.msra.mxu0 %v8235
  %8309 = vmatpush.msra.mxu0 %v8232
  %8310 = vmatmul.f32.gmra.mxu0 %v8243
  %v8311 = vpop.f32.mrf.mxu0
  %v8312 = vadd.f32 0.0, %v8311
  %8313 = vmatmul.f32.gmra.mxu0 %v8246
  %v8314 = vpop.f32.mrf.mxu0
  %v8315 = vadd.f32 0.0, %v8314
  %8316 = vdwg.mxu0
  %v8317 = vadd.f32 %v8206, %v8266
  %v8318 = vadd.f32 %v8207, %v8289
  %v8319 = vadd.f32 %v8208, %v8312
  %v8320 = vadd.f32 %v8209, %v8269
  %v8321 = vadd.f32 %v8210, %v8292
  %v8322 = vadd.f32 %v8211, %v8315
  %v8323 = vld [vmem:[%s2713] sm:$0xff]
  %v8324 = vld [vmem:[%s2713 + $0x8] sm:$0x3]
  %8325 = vrot.lane.b32.xlu0 %v5685, 59
  %v8326 = vpop.permute.xlu0 %8325
  %8327 = vrot.lane.b32.xlu0 %v5686, 59
  %v8328 = vpop.permute.xlu0 %8327
  %8329 = vrot.lane.b32.xlu0 %v5687, 59
  %v8330 = vpop.permute.xlu0 %8329
  %8331 = vrot.lane.b32.xlu0 %v5693, 59
  %v8332 = vpop.permute.xlu0 %8331
  %8333 = vrot.lane.b32.xlu0 %v5688, 59
  %v8334 = vpop.permute.xlu0 %8333
  %8335 = vrot.lane.b32.xlu0 %v5689, 59
  %v8336 = vpop.permute.xlu0 %8335
  %8337 = vrot.lane.b32.xlu0 %v5690, 59
  %v8338 = vpop.permute.xlu0 %8337
  %8339 = vrot.lane.b32.xlu0 %v5694, 59
  %v8340 = vpop.permute.xlu0 %8339
  %v8341 = vsel %vm2732, %v8326, %v8328
  %v8342 = vsel %vm2732, %v8328, %v8330
  %v8343 = vsel %vm2732, %v8330, %v8332
  %v8344 = vsel %vm2732, %v8334, %v8336
  %v8345 = vsel %vm2732, %v8336, %v8338
  %v8346 = vsel %vm2732, %v8338, %v8340
  %v8354 = vsel %vm76, %v8323, 0
  %v8357 = vsel %vm76, %v8324, 0
  %8359 = vmatpush.msra.mxu0 0.0
  %8360 = vmatpush.msra.mxu0 0.0
  %8361 = vmatpush.msra.mxu0 0.0
  %8362 = vmatpush.msra.mxu0 0.0
  %8363 = vmatpush.msra.mxu0 0.0
  %8364 = vmatpush.msra.mxu0 0.0
  %8365 = vmatpush.msra.mxu0 0.0
  %8366 = vmatpush.msra.mxu0 0.0
  %8367 = vmatpush.msra.mxu0 0.0
  %8368 = vmatpush.msra.mxu0 0.0
  %8369 = vmatpush.msra.mxu0 0.0
  %8370 = vmatpush.msra.mxu0 0.0
  %8371 = vmatpush.msra.mxu0 0.0
  %8372 = vmatpush.msra.mxu0 0.0
  %8373 = vmatpush.msra.mxu0 %v8344
  %8374 = vmatpush.msra.mxu0 %v8341
  %8375 = vmatmul.f32.gmra.mxu0 %v8354
  %v8376 = vpop.f32.mrf.mxu0
  %v8377 = vadd.f32 0.0, %v8376
  %8378 = vmatmul.f32.gmra.mxu0 %v8357
  %v8379 = vpop.f32.mrf.mxu0
  %v8380 = vadd.f32 0.0, %v8379
  %8381 = vdwg.mxu0
  %8382 = vmatpush.msra.mxu0 0.0
  %8383 = vmatpush.msra.mxu0 0.0
  %8384 = vmatpush.msra.mxu0 0.0
  %8385 = vmatpush.msra.mxu0 0.0
  %8386 = vmatpush.msra.mxu0 0.0
  %8387 = vmatpush.msra.mxu0 0.0
  %8388 = vmatpush.msra.mxu0 0.0
  %8389 = vmatpush.msra.mxu0 0.0
  %8390 = vmatpush.msra.mxu0 0.0
  %8391 = vmatpush.msra.mxu0 0.0
  %8392 = vmatpush.msra.mxu0 0.0
  %8393 = vmatpush.msra.mxu0 0.0
  %8394 = vmatpush.msra.mxu0 0.0
  %8395 = vmatpush.msra.mxu0 0.0
  %8396 = vmatpush.msra.mxu0 %v8345
  %8397 = vmatpush.msra.mxu0 %v8342
  %8398 = vmatmul.f32.gmra.mxu0 %v8354
  %v8399 = vpop.f32.mrf.mxu0
  %v8400 = vadd.f32 0.0, %v8399
  %8401 = vmatmul.f32.gmra.mxu0 %v8357
  %v8402 = vpop.f32.mrf.mxu0
  %v8403 = vadd.f32 0.0, %v8402
  %8404 = vdwg.mxu0
  %8405 = vmatpush.msra.mxu0 0.0
  %8406 = vmatpush.msra.mxu0 0.0
  %8407 = vmatpush.msra.mxu0 0.0
  %8408 = vmatpush.msra.mxu0 0.0
  %8409 = vmatpush.msra.mxu0 0.0
  %8410 = vmatpush.msra.mxu0 0.0
  %8411 = vmatpush.msra.mxu0 0.0
  %8412 = vmatpush.msra.mxu0 0.0
  %8413 = vmatpush.msra.mxu0 0.0
  %8414 = vmatpush.msra.mxu0 0.0
  %8415 = vmatpush.msra.mxu0 0.0
  %8416 = vmatpush.msra.mxu0 0.0
  %8417 = vmatpush.msra.mxu0 0.0
  %8418 = vmatpush.msra.mxu0 0.0
  %8419 = vmatpush.msra.mxu0 %v8346
  %8420 = vmatpush.msra.mxu0 %v8343
  %8421 = vmatmul.f32.gmra.mxu0 %v8354
  %v8422 = vpop.f32.mrf.mxu0
  %v8423 = vadd.f32 0.0, %v8422
  %8424 = vmatmul.f32.gmra.mxu0 %v8357
  %v8425 = vpop.f32.mrf.mxu0
  %v8426 = vadd.f32 0.0, %v8425
  %8427 = vdwg.mxu0
  %v8428 = vadd.f32 %v8317, %v8377
  %v8429 = vadd.f32 %v8318, %v8400
  %v8430 = vadd.f32 %v8319, %v8423
  %v8431 = vadd.f32 %v8320, %v8380
  %v8432 = vadd.f32 %v8321, %v8403
  %v8433 = vadd.f32 %v8322, %v8426
  %v8434 = vld [vmem:[%s2826] sm:$0xff]
  %v8435 = vld [vmem:[%s2826 + $0x8] sm:$0x3]
  %8436 = vrot.lane.b32.xlu0 %v5685, 58
  %v8437 = vpop.permute.xlu0 %8436
  %8438 = vrot.lane.b32.xlu0 %v5686, 58
  %v8439 = vpop.permute.xlu0 %8438
  %8440 = vrot.lane.b32.xlu0 %v5687, 58
  %v8441 = vpop.permute.xlu0 %8440
  %8442 = vrot.lane.b32.xlu0 %v5693, 58
  %v8443 = vpop.permute.xlu0 %8442
  %8444 = vrot.lane.b32.xlu0 %v5688, 58
  %v8445 = vpop.permute.xlu0 %8444
  %8446 = vrot.lane.b32.xlu0 %v5689, 58
  %v8447 = vpop.permute.xlu0 %8446
  %8448 = vrot.lane.b32.xlu0 %v5690, 58
  %v8449 = vpop.permute.xlu0 %8448
  %8450 = vrot.lane.b32.xlu0 %v5694, 58
  %v8451 = vpop.permute.xlu0 %8450
  %v8452 = vsel %vm2845, %v8437, %v8439
  %v8453 = vsel %vm2845, %v8439, %v8441
  %v8454 = vsel %vm2845, %v8441, %v8443
  %v8455 = vsel %vm2845, %v8445, %v8447
  %v8456 = vsel %vm2845, %v8447, %v8449
  %v8457 = vsel %vm2845, %v8449, %v8451
  %v8465 = vsel %vm76, %v8434, 0
  %v8468 = vsel %vm76, %v8435, 0
  %8470 = vmatpush.msra.mxu0 0.0
  %8471 = vmatpush.msra.mxu0 0.0
  %8472 = vmatpush.msra.mxu0 0.0
  %8473 = vmatpush.msra.mxu0 0.0
  %8474 = vmatpush.msra.mxu0 0.0
  %8475 = vmatpush.msra.mxu0 0.0
  %8476 = vmatpush.msra.mxu0 0.0
  %8477 = vmatpush.msra.mxu0 0.0
  %8478 = vmatpush.msra.mxu0 0.0
  %8479 = vmatpush.msra.mxu0 0.0
  %8480 = vmatpush.msra.mxu0 0.0
  %8481 = vmatpush.msra.mxu0 0.0
  %8482 = vmatpush.msra.mxu0 0.0
  %8483 = vmatpush.msra.mxu0 0.0
  %8484 = vmatpush.msra.mxu0 %v8455
  %8485 = vmatpush.msra.mxu0 %v8452
  %8486 = vmatmul.f32.gmra.mxu0 %v8465
  %v8487 = vpop.f32.mrf.mxu0
  %v8488 = vadd.f32 0.0, %v8487
  %8489 = vmatmul.f32.gmra.mxu0 %v8468
  %v8490 = vpop.f32.mrf.mxu0
  %v8491 = vadd.f32 0.0, %v8490
  %8492 = vdwg.mxu0
  %8493 = vmatpush.msra.mxu0 0.0
  %8494 = vmatpush.msra.mxu0 0.0
  %8495 = vmatpush.msra.mxu0 0.0
  %8496 = vmatpush.msra.mxu0 0.0
  %8497 = vmatpush.msra.mxu0 0.0
  %8498 = vmatpush.msra.mxu0 0.0
  %8499 = vmatpush.msra.mxu0 0.0
  %8500 = vmatpush.msra.mxu0 0.0
  %8501 = vmatpush.msra.mxu0 0.0
  %8502 = vmatpush.msra.mxu0 0.0
  %8503 = vmatpush.msra.mxu0 0.0
  %8504 = vmatpush.msra.mxu0 0.0
  %8505 = vmatpush.msra.mxu0 0.0
  %8506 = vmatpush.msra.mxu0 0.0
  %8507 = vmatpush.msra.mxu0 %v8456
  %8508 = vmatpush.msra.mxu0 %v8453
  %8509 = vmatmul.f32.gmra.mxu0 %v8465
  %v8510 = vpop.f32.mrf.mxu0
  %v8511 = vadd.f32 0.0, %v8510
  %8512 = vmatmul.f32.gmra.mxu0 %v8468
  %v8513 = vpop.f32.mrf.mxu0
  %v8514 = vadd.f32 0.0, %v8513
  %8515 = vdwg.mxu0
  %8516 = vmatpush.msra.mxu0 0.0
  %8517 = vmatpush.msra.mxu0 0.0
  %8518 = vmatpush.msra.mxu0 0.0
  %8519 = vmatpush.msra.mxu0 0.0
  %8520 = vmatpush.msra.mxu0 0.0
  %8521 = vmatpush.msra.mxu0 0.0
  %8522 = vmatpush.msra.mxu0 0.0
  %8523 = vmatpush.msra.mxu0 0.0
  %8524 = vmatpush.msra.mxu0 0.0
  %8525 = vmatpush.msra.mxu0 0.0
  %8526 = vmatpush.msra.mxu0 0.0
  %8527 = vmatpush.msra.mxu0 0.0
  %8528 = vmatpush.msra.mxu0 0.0
  %8529 = vmatpush.msra.mxu0 0.0
  %8530 = vmatpush.msra.mxu0 %v8457
  %8531 = vmatpush.msra.mxu0 %v8454
  %8532 = vmatmul.f32.gmra.mxu0 %v8465
  %v8533 = vpop.f32.mrf.mxu0
  %v8534 = vadd.f32 0.0, %v8533
  %8535 = vmatmul.f32.gmra.mxu0 %v8468
  %v8536 = vpop.f32.mrf.mxu0
  %v8537 = vadd.f32 0.0, %v8536
  %8538 = vdwg.mxu0
  %v8539 = vadd.f32 %v8428, %v8488
  %v8540 = vadd.f32 %v8429, %v8511
  %v8541 = vadd.f32 %v8430, %v8534
  %v8542 = vadd.f32 %v8431, %v8491
  %v8543 = vadd.f32 %v8432, %v8514
  %v8544 = vadd.f32 %v8433, %v8537
  %v8545 = vld [vmem:[%s2939] sm:$0xff]
  %v8546 = vld [vmem:[%s2939 + $0x8] sm:$0x3]
  %8547 = vrot.lane.b32.xlu0 %v5685, 57
  %v8548 = vpop.permute.xlu0 %8547
  %8549 = vrot.lane.b32.xlu0 %v5686, 57
  %v8550 = vpop.permute.xlu0 %8549
  %8551 = vrot.lane.b32.xlu0 %v5687, 57
  %v8552 = vpop.permute.xlu0 %8551
  %8553 = vrot.lane.b32.xlu0 %v5693, 57
  %v8554 = vpop.permute.xlu0 %8553
  %8555 = vrot.lane.b32.xlu0 %v5688, 57
  %v8556 = vpop.permute.xlu0 %8555
  %8557 = vrot.lane.b32.xlu0 %v5689, 57
  %v8558 = vpop.permute.xlu0 %8557
  %8559 = vrot.lane.b32.xlu0 %v5690, 57
  %v8560 = vpop.permute.xlu0 %8559
  %8561 = vrot.lane.b32.xlu0 %v5694, 57
  %v8562 = vpop.permute.xlu0 %8561
  %v8563 = vsel %vm2958, %v8548, %v8550
  %v8564 = vsel %vm2958, %v8550, %v8552
  %v8565 = vsel %vm2958, %v8552, %v8554
  %v8566 = vsel %vm2958, %v8556, %v8558
  %v8567 = vsel %vm2958, %v8558, %v8560
  %v8568 = vsel %vm2958, %v8560, %v8562
  %v8576 = vsel %vm76, %v8545, 0
  %v8579 = vsel %vm76, %v8546, 0
  %8581 = vmatpush.msra.mxu0 0.0
  %8582 = vmatpush.msra.mxu0 0.0
  %8583 = vmatpush.msra.mxu0 0.0
  %8584 = vmatpush.msra.mxu0 0.0
  %8585 = vmatpush.msra.mxu0 0.0
  %8586 = vmatpush.msra.mxu0 0.0
  %8587 = vmatpush.msra.mxu0 0.0
  %8588 = vmatpush.msra.mxu0 0.0
  %8589 = vmatpush.msra.mxu0 0.0
  %8590 = vmatpush.msra.mxu0 0.0
  %8591 = vmatpush.msra.mxu0 0.0
  %8592 = vmatpush.msra.mxu0 0.0
  %8593 = vmatpush.msra.mxu0 0.0
  %8594 = vmatpush.msra.mxu0 0.0
  %8595 = vmatpush.msra.mxu0 %v8566
  %8596 = vmatpush.msra.mxu0 %v8563
  %8597 = vmatmul.f32.gmra.mxu0 %v8576
  %v8598 = vpop.f32.mrf.mxu0
  %v8599 = vadd.f32 0.0, %v8598
  %8600 = vmatmul.f32.gmra.mxu0 %v8579
  %v8601 = vpop.f32.mrf.mxu0
  %v8602 = vadd.f32 0.0, %v8601
  %8603 = vdwg.mxu0
  %8604 = vmatpush.msra.mxu0 0.0
  %8605 = vmatpush.msra.mxu0 0.0
  %8606 = vmatpush.msra.mxu0 0.0
  %8607 = vmatpush.msra.mxu0 0.0
  %8608 = vmatpush.msra.mxu0 0.0
  %8609 = vmatpush.msra.mxu0 0.0
  %8610 = vmatpush.msra.mxu0 0.0
  %8611 = vmatpush.msra.mxu0 0.0
  %8612 = vmatpush.msra.mxu0 0.0
  %8613 = vmatpush.msra.mxu0 0.0
  %8614 = vmatpush.msra.mxu0 0.0
  %8615 = vmatpush.msra.mxu0 0.0
  %8616 = vmatpush.msra.mxu0 0.0
  %8617 = vmatpush.msra.mxu0 0.0
  %8618 = vmatpush.msra.mxu0 %v8567
  %8619 = vmatpush.msra.mxu0 %v8564
  %8620 = vmatmul.f32.gmra.mxu0 %v8576
  %v8621 = vpop.f32.mrf.mxu0
  %v8622 = vadd.f32 0.0, %v8621
  %8623 = vmatmul.f32.gmra.mxu0 %v8579
  %v8624 = vpop.f32.mrf.mxu0
  %v8625 = vadd.f32 0.0, %v8624
  %8626 = vdwg.mxu0
  %8627 = vmatpush.msra.mxu0 0.0
  %8628 = vmatpush.msra.mxu0 0.0
  %8629 = vmatpush.msra.mxu0 0.0
  %8630 = vmatpush.msra.mxu0 0.0
  %8631 = vmatpush.msra.mxu0 0.0
  %8632 = vmatpush.msra.mxu0 0.0
  %8633 = vmatpush.msra.mxu0 0.0
  %8634 = vmatpush.msra.mxu0 0.0
  %8635 = vmatpush.msra.mxu0 0.0
  %8636 = vmatpush.msra.mxu0 0.0
  %8637 = vmatpush.msra.mxu0 0.0
  %8638 = vmatpush.msra.mxu0 0.0
  %8639 = vmatpush.msra.mxu0 0.0
  %8640 = vmatpush.msra.mxu0 0.0
  %8641 = vmatpush.msra.mxu0 %v8568
  %8642 = vmatpush.msra.mxu0 %v8565
  %8643 = vmatmul.f32.gmra.mxu0 %v8576
  %v8644 = vpop.f32.mrf.mxu0
  %v8645 = vadd.f32 0.0, %v8644
  %8646 = vmatmul.f32.gmra.mxu0 %v8579
  %v8647 = vpop.f32.mrf.mxu0
  %v8648 = vadd.f32 0.0, %v8647
  %8649 = vdwg.mxu0
  %v8650 = vadd.f32 %v8539, %v8599
  %v8651 = vadd.f32 %v8540, %v8622
  %v8652 = vadd.f32 %v8541, %v8645
  %v8653 = vadd.f32 %v8542, %v8602
  %v8654 = vadd.f32 %v8543, %v8625
  %v8655 = vadd.f32 %v8544, %v8648
  %v8656 = vld [vmem:[%s3052] sm:$0xff]
  %v8657 = vld [vmem:[%s3052 + $0x8] sm:$0x3]
  %8658 = vrot.lane.b32.xlu0 %v5685, 56
  %v8659 = vpop.permute.xlu0 %8658
  %8660 = vrot.lane.b32.xlu0 %v5686, 56
  %v8661 = vpop.permute.xlu0 %8660
  %8662 = vrot.lane.b32.xlu0 %v5687, 56
  %v8663 = vpop.permute.xlu0 %8662
  %8664 = vrot.lane.b32.xlu0 %v5693, 56
  %v8665 = vpop.permute.xlu0 %8664
  %8666 = vrot.lane.b32.xlu0 %v5688, 56
  %v8667 = vpop.permute.xlu0 %8666
  %8668 = vrot.lane.b32.xlu0 %v5689, 56
  %v8669 = vpop.permute.xlu0 %8668
  %8670 = vrot.lane.b32.xlu0 %v5690, 56
  %v8671 = vpop.permute.xlu0 %8670
  %8672 = vrot.lane.b32.xlu0 %v5694, 56
  %v8673 = vpop.permute.xlu0 %8672
  %v8674 = vsel %vm3071, %v8659, %v8661
  %v8675 = vsel %vm3071, %v8661, %v8663
  %v8676 = vsel %vm3071, %v8663, %v8665
  %v8677 = vsel %vm3071, %v8667, %v8669
  %v8678 = vsel %vm3071, %v8669, %v8671
  %v8679 = vsel %vm3071, %v8671, %v8673
  %v8687 = vsel %vm76, %v8656, 0
  %v8690 = vsel %vm76, %v8657, 0
  %8692 = vmatpush.msra.mxu0 0.0
  %8693 = vmatpush.msra.mxu0 0.0
  %8694 = vmatpush.msra.mxu0 0.0
  %8695 = vmatpush.msra.mxu0 0.0
  %8696 = vmatpush.msra.mxu0 0.0
  %8697 = vmatpush.msra.mxu0 0.0
  %8698 = vmatpush.msra.mxu0 0.0
  %8699 = vmatpush.msra.mxu0 0.0
  %8700 = vmatpush.msra.mxu0 0.0
  %8701 = vmatpush.msra.mxu0 0.0
  %8702 = vmatpush.msra.mxu0 0.0
  %8703 = vmatpush.msra.mxu0 0.0
  %8704 = vmatpush.msra.mxu0 0.0
  %8705 = vmatpush.msra.mxu0 0.0
  %8706 = vmatpush.msra.mxu0 %v8677
  %8707 = vmatpush.msra.mxu0 %v8674
  %8708 = vmatmul.f32.gmra.mxu0 %v8687
  %v8709 = vpop.f32.mrf.mxu0
  %v8710 = vadd.f32 0.0, %v8709
  %8711 = vmatmul.f32.gmra.mxu0 %v8690
  %v8712 = vpop.f32.mrf.mxu0
  %v8713 = vadd.f32 0.0, %v8712
  %8714 = vdwg.mxu0
  %8715 = vmatpush.msra.mxu0 0.0
  %8716 = vmatpush.msra.mxu0 0.0
  %8717 = vmatpush.msra.mxu0 0.0
  %8718 = vmatpush.msra.mxu0 0.0
  %8719 = vmatpush.msra.mxu0 0.0
  %8720 = vmatpush.msra.mxu0 0.0
  %8721 = vmatpush.msra.mxu0 0.0
  %8722 = vmatpush.msra.mxu0 0.0
  %8723 = vmatpush.msra.mxu0 0.0
  %8724 = vmatpush.msra.mxu0 0.0
  %8725 = vmatpush.msra.mxu0 0.0
  %8726 = vmatpush.msra.mxu0 0.0
  %8727 = vmatpush.msra.mxu0 0.0
  %8728 = vmatpush.msra.mxu0 0.0
  %8729 = vmatpush.msra.mxu0 %v8678
  %8730 = vmatpush.msra.mxu0 %v8675
  %8731 = vmatmul.f32.gmra.mxu0 %v8687
  %v8732 = vpop.f32.mrf.mxu0
  %v8733 = vadd.f32 0.0, %v8732
  %8734 = vmatmul.f32.gmra.mxu0 %v8690
  %v8735 = vpop.f32.mrf.mxu0
  %v8736 = vadd.f32 0.0, %v8735
  %8737 = vdwg.mxu0
  %8738 = vmatpush.msra.mxu0 0.0
  %8739 = vmatpush.msra.mxu0 0.0
  %8740 = vmatpush.msra.mxu0 0.0
  %8741 = vmatpush.msra.mxu0 0.0
  %8742 = vmatpush.msra.mxu0 0.0
  %8743 = vmatpush.msra.mxu0 0.0
  %8744 = vmatpush.msra.mxu0 0.0
  %8745 = vmatpush.msra.mxu0 0.0
  %8746 = vmatpush.msra.mxu0 0.0
  %8747 = vmatpush.msra.mxu0 0.0
  %8748 = vmatpush.msra.mxu0 0.0
  %8749 = vmatpush.msra.mxu0 0.0
  %8750 = vmatpush.msra.mxu0 0.0
  %8751 = vmatpush.msra.mxu0 0.0
  %8752 = vmatpush.msra.mxu0 %v8679
  %8753 = vmatpush.msra.mxu0 %v8676
  %8754 = vmatmul.f32.gmra.mxu0 %v8687
  %v8755 = vpop.f32.mrf.mxu0
  %v8756 = vadd.f32 0.0, %v8755
  %8757 = vmatmul.f32.gmra.mxu0 %v8690
  %v8758 = vpop.f32.mrf.mxu0
  %v8759 = vadd.f32 0.0, %v8758
  %8760 = vdwg.mxu0
  %v8761 = vadd.f32 %v8650, %v8710
  %v8762 = vadd.f32 %v8651, %v8733
  %v8763 = vadd.f32 %v8652, %v8756
  %v8764 = vadd.f32 %v8653, %v8713
  %v8765 = vadd.f32 %v8654, %v8736
  %v8766 = vadd.f32 %v8655, %v8759
  %v8767 = vld [vmem:[%s3165] sm:$0xff]
  %v8768 = vld [vmem:[%s3165 + $0x8] sm:$0x3]
  %8769 = vrot.lane.b32.xlu0 %v5685, 40
  %v8770 = vpop.permute.xlu0 %8769
  %8771 = vrot.lane.b32.xlu0 %v5686, 40
  %v8772 = vpop.permute.xlu0 %8771
  %8773 = vrot.lane.b32.xlu0 %v5687, 40
  %v8774 = vpop.permute.xlu0 %8773
  %8775 = vrot.lane.b32.xlu0 %v5693, 40
  %v8776 = vpop.permute.xlu0 %8775
  %8777 = vrot.lane.b32.xlu0 %v5688, 40
  %v8778 = vpop.permute.xlu0 %8777
  %8779 = vrot.lane.b32.xlu0 %v5689, 40
  %v8780 = vpop.permute.xlu0 %8779
  %8781 = vrot.lane.b32.xlu0 %v5690, 40
  %v8782 = vpop.permute.xlu0 %8781
  %8783 = vrot.lane.b32.xlu0 %v5694, 40
  %v8784 = vpop.permute.xlu0 %8783
  %v8785 = vsel %vm3184, %v8770, %v8772
  %v8786 = vsel %vm3184, %v8772, %v8774
  %v8787 = vsel %vm3184, %v8774, %v8776
  %v8788 = vsel %vm3184, %v8778, %v8780
  %v8789 = vsel %vm3184, %v8780, %v8782
  %v8790 = vsel %vm3184, %v8782, %v8784
  %v8798 = vsel %vm76, %v8767, 0
  %v8801 = vsel %vm76, %v8768, 0
  %8803 = vmatpush.msra.mxu0 0.0
  %8804 = vmatpush.msra.mxu0 0.0
  %8805 = vmatpush.msra.mxu0 0.0
  %8806 = vmatpush.msra.mxu0 0.0
  %8807 = vmatpush.msra.mxu0 0.0
  %8808 = vmatpush.msra.mxu0 0.0
  %8809 = vmatpush.msra.mxu0 0.0
  %8810 = vmatpush.msra.mxu0 0.0
  %8811 = vmatpush.msra.mxu0 0.0
  %8812 = vmatpush.msra.mxu0 0.0
  %8813 = vmatpush.msra.mxu0 0.0
  %8814 = vmatpush.msra.mxu0 0.0
  %8815 = vmatpush.msra.mxu0 0.0
  %8816 = vmatpush.msra.mxu0 0.0
  %8817 = vmatpush.msra.mxu0 %v8788
  %8818 = vmatpush.msra.mxu0 %v8785
  %8819 = vmatmul.f32.gmra.mxu0 %v8798
  %v8820 = vpop.f32.mrf.mxu0
  %v8821 = vadd.f32 0.0, %v8820
  %8822 = vmatmul.f32.gmra.mxu0 %v8801
  %v8823 = vpop.f32.mrf.mxu0
  %v8824 = vadd.f32 0.0, %v8823
  %8825 = vdwg.mxu0
  %8826 = vmatpush.msra.mxu0 0.0
  %8827 = vmatpush.msra.mxu0 0.0
  %8828 = vmatpush.msra.mxu0 0.0
  %8829 = vmatpush.msra.mxu0 0.0
  %8830 = vmatpush.msra.mxu0 0.0
  %8831 = vmatpush.msra.mxu0 0.0
  %8832 = vmatpush.msra.mxu0 0.0
  %8833 = vmatpush.msra.mxu0 0.0
  %8834 = vmatpush.msra.mxu0 0.0
  %8835 = vmatpush.msra.mxu0 0.0
  %8836 = vmatpush.msra.mxu0 0.0
  %8837 = vmatpush.msra.mxu0 0.0
  %8838 = vmatpush.msra.mxu0 0.0
  %8839 = vmatpush.msra.mxu0 0.0
  %8840 = vmatpush.msra.mxu0 %v8789
  %8841 = vmatpush.msra.mxu0 %v8786
  %8842 = vmatmul.f32.gmra.mxu0 %v8798
  %v8843 = vpop.f32.mrf.mxu0
  %v8844 = vadd.f32 0.0, %v8843
  %8845 = vmatmul.f32.gmra.mxu0 %v8801
  %v8846 = vpop.f32.mrf.mxu0
  %v8847 = vadd.f32 0.0, %v8846
  %8848 = vdwg.mxu0
  %8849 = vmatpush.msra.mxu0 0.0
  %8850 = vmatpush.msra.mxu0 0.0
  %8851 = vmatpush.msra.mxu0 0.0
  %8852 = vmatpush.msra.mxu0 0.0
  %8853 = vmatpush.msra.mxu0 0.0
  %8854 = vmatpush.msra.mxu0 0.0
  %8855 = vmatpush.msra.mxu0 0.0
  %8856 = vmatpush.msra.mxu0 0.0
  %8857 = vmatpush.msra.mxu0 0.0
  %8858 = vmatpush.msra.mxu0 0.0
  %8859 = vmatpush.msra.mxu0 0.0
  %8860 = vmatpush.msra.mxu0 0.0
  %8861 = vmatpush.msra.mxu0 0.0
  %8862 = vmatpush.msra.mxu0 0.0
  %8863 = vmatpush.msra.mxu0 %v8790
  %8864 = vmatpush.msra.mxu0 %v8787
  %8865 = vmatmul.f32.gmra.mxu0 %v8798
  %v8866 = vpop.f32.mrf.mxu0
  %v8867 = vadd.f32 0.0, %v8866
  %8868 = vmatmul.f32.gmra.mxu0 %v8801
  %v8869 = vpop.f32.mrf.mxu0
  %v8870 = vadd.f32 0.0, %v8869
  %8871 = vdwg.mxu0
  %v8872 = vadd.f32 %v8761, %v8821
  %v8873 = vadd.f32 %v8762, %v8844
  %v8874 = vadd.f32 %v8763, %v8867
  %v8875 = vadd.f32 %v8764, %v8824
  %v8876 = vadd.f32 %v8765, %v8847
  %v8877 = vadd.f32 %v8766, %v8870
  %v8878 = vld [vmem:[%s3278] sm:$0xff]
  %v8879 = vld [vmem:[%s3278 + $0x8] sm:$0x3]
  %8880 = vrot.lane.b32.xlu0 %v5685, 39
  %v8881 = vpop.permute.xlu0 %8880
  %8882 = vrot.lane.b32.xlu0 %v5686, 39
  %v8883 = vpop.permute.xlu0 %8882
  %8884 = vrot.lane.b32.xlu0 %v5687, 39
  %v8885 = vpop.permute.xlu0 %8884
  %8886 = vrot.lane.b32.xlu0 %v5693, 39
  %v8887 = vpop.permute.xlu0 %8886
  %8888 = vrot.lane.b32.xlu0 %v5688, 39
  %v8889 = vpop.permute.xlu0 %8888
  %8890 = vrot.lane.b32.xlu0 %v5689, 39
  %v8891 = vpop.permute.xlu0 %8890
  %8892 = vrot.lane.b32.xlu0 %v5690, 39
  %v8893 = vpop.permute.xlu0 %8892
  %8894 = vrot.lane.b32.xlu0 %v5694, 39
  %v8895 = vpop.permute.xlu0 %8894
  %v8896 = vsel %vm3297, %v8881, %v8883
  %v8897 = vsel %vm3297, %v8883, %v8885
  %v8898 = vsel %vm3297, %v8885, %v8887
  %v8899 = vsel %vm3297, %v8889, %v8891
  %v8900 = vsel %vm3297, %v8891, %v8893
  %v8901 = vsel %vm3297, %v8893, %v8895
  %v8909 = vsel %vm76, %v8878, 0
  %v8912 = vsel %vm76, %v8879, 0
  %8914 = vmatpush.msra.mxu0 0.0
  %8915 = vmatpush.msra.mxu0 0.0
  %8916 = vmatpush.msra.mxu0 0.0
  %8917 = vmatpush.msra.mxu0 0.0
  %8918 = vmatpush.msra.mxu0 0.0
  %8919 = vmatpush.msra.mxu0 0.0
  %8920 = vmatpush.msra.mxu0 0.0
  %8921 = vmatpush.msra.mxu0 0.0
  %8922 = vmatpush.msra.mxu0 0.0
  %8923 = vmatpush.msra.mxu0 0.0
  %8924 = vmatpush.msra.mxu0 0.0
  %8925 = vmatpush.msra.mxu0 0.0
  %8926 = vmatpush.msra.mxu0 0.0
  %8927 = vmatpush.msra.mxu0 0.0
  %8928 = vmatpush.msra.mxu0 %v8899
  %8929 = vmatpush.msra.mxu0 %v8896
  %8930 = vmatmul.f32.gmra.mxu0 %v8909
  %v8931 = vpop.f32.mrf.mxu0
  %v8932 = vadd.f32 0.0, %v8931
  %8933 = vmatmul.f32.gmra.mxu0 %v8912
  %v8934 = vpop.f32.mrf.mxu0
  %v8935 = vadd.f32 0.0, %v8934
  %8936 = vdwg.mxu0
  %8937 = vmatpush.msra.mxu0 0.0
  %8938 = vmatpush.msra.mxu0 0.0
  %8939 = vmatpush.msra.mxu0 0.0
  %8940 = vmatpush.msra.mxu0 0.0
  %8941 = vmatpush.msra.mxu0 0.0
  %8942 = vmatpush.msra.mxu0 0.0
  %8943 = vmatpush.msra.mxu0 0.0
  %8944 = vmatpush.msra.mxu0 0.0
  %8945 = vmatpush.msra.mxu0 0.0
  %8946 = vmatpush.msra.mxu0 0.0
  %8947 = vmatpush.msra.mxu0 0.0
  %8948 = vmatpush.msra.mxu0 0.0
  %8949 = vmatpush.msra.mxu0 0.0
  %8950 = vmatpush.msra.mxu0 0.0
  %8951 = vmatpush.msra.mxu0 %v8900
  %8952 = vmatpush.msra.mxu0 %v8897
  %8953 = vmatmul.f32.gmra.mxu0 %v8909
  %v8954 = vpop.f32.mrf.mxu0
  %v8955 = vadd.f32 0.0, %v8954
  %8956 = vmatmul.f32.gmra.mxu0 %v8912
  %v8957 = vpop.f32.mrf.mxu0
  %v8958 = vadd.f32 0.0, %v8957
  %8959 = vdwg.mxu0
  %8960 = vmatpush.msra.mxu0 0.0
  %8961 = vmatpush.msra.mxu0 0.0
  %8962 = vmatpush.msra.mxu0 0.0
  %8963 = vmatpush.msra.mxu0 0.0
  %8964 = vmatpush.msra.mxu0 0.0
  %8965 = vmatpush.msra.mxu0 0.0
  %8966 = vmatpush.msra.mxu0 0.0
  %8967 = vmatpush.msra.mxu0 0.0
  %8968 = vmatpush.msra.mxu0 0.0
  %8969 = vmatpush.msra.mxu0 0.0
  %8970 = vmatpush.msra.mxu0 0.0
  %8971 = vmatpush.msra.mxu0 0.0
  %8972 = vmatpush.msra.mxu0 0.0
  %8973 = vmatpush.msra.mxu0 0.0
  %8974 = vmatpush.msra.mxu0 %v8901
  %8975 = vmatpush.msra.mxu0 %v8898
  %8976 = vmatmul.f32.gmra.mxu0 %v8909
  %v8977 = vpop.f32.mrf.mxu0
  %v8978 = vadd.f32 0.0, %v8977
  %8979 = vmatmul.f32.gmra.mxu0 %v8912
  %v8980 = vpop.f32.mrf.mxu0
  %v8981 = vadd.f32 0.0, %v8980
  %8982 = vdwg.mxu0
  %v8983 = vadd.f32 %v8872, %v8932
  %v8984 = vadd.f32 %v8873, %v8955
  %v8985 = vadd.f32 %v8874, %v8978
  %v8986 = vadd.f32 %v8875, %v8935
  %v8987 = vadd.f32 %v8876, %v8958
  %v8988 = vadd.f32 %v8877, %v8981
  %v8989 = vld [vmem:[%s3391] sm:$0xff]
  %v8990 = vld [vmem:[%s3391 + $0x8] sm:$0x3]
  %8991 = vrot.lane.b32.xlu0 %v5685, 38
  %v8992 = vpop.permute.xlu0 %8991
  %8993 = vrot.lane.b32.xlu0 %v5686, 38
  %v8994 = vpop.permute.xlu0 %8993
  %8995 = vrot.lane.b32.xlu0 %v5687, 38
  %v8996 = vpop.permute.xlu0 %8995
  %8997 = vrot.lane.b32.xlu0 %v5693, 38
  %v8998 = vpop.permute.xlu0 %8997
  %8999 = vrot.lane.b32.xlu0 %v5688, 38
  %v9000 = vpop.permute.xlu0 %8999
  %9001 = vrot.lane.b32.xlu0 %v5689, 38
  %v9002 = vpop.permute.xlu0 %9001
  %9003 = vrot.lane.b32.xlu0 %v5690, 38
  %v9004 = vpop.permute.xlu0 %9003
  %9005 = vrot.lane.b32.xlu0 %v5694, 38
  %v9006 = vpop.permute.xlu0 %9005
  %v9007 = vsel %vm3410, %v8992, %v8994
  %v9008 = vsel %vm3410, %v8994, %v8996
  %v9009 = vsel %vm3410, %v8996, %v8998
  %v9010 = vsel %vm3410, %v9000, %v9002
  %v9011 = vsel %vm3410, %v9002, %v9004
  %v9012 = vsel %vm3410, %v9004, %v9006
  %v9020 = vsel %vm76, %v8989, 0
  %v9023 = vsel %vm76, %v8990, 0
  %9025 = vmatpush.msra.mxu0 0.0
  %9026 = vmatpush.msra.mxu0 0.0
  %9027 = vmatpush.msra.mxu0 0.0
  %9028 = vmatpush.msra.mxu0 0.0
  %9029 = vmatpush.msra.mxu0 0.0
  %9030 = vmatpush.msra.mxu0 0.0
  %9031 = vmatpush.msra.mxu0 0.0
  %9032 = vmatpush.msra.mxu0 0.0
  %9033 = vmatpush.msra.mxu0 0.0
  %9034 = vmatpush.msra.mxu0 0.0
  %9035 = vmatpush.msra.mxu0 0.0
  %9036 = vmatpush.msra.mxu0 0.0
  %9037 = vmatpush.msra.mxu0 0.0
  %9038 = vmatpush.msra.mxu0 0.0
  %9039 = vmatpush.msra.mxu0 %v9010
  %9040 = vmatpush.msra.mxu0 %v9007
  %9041 = vmatmul.f32.gmra.mxu0 %v9020
  %v9042 = vpop.f32.mrf.mxu0
  %v9043 = vadd.f32 0.0, %v9042
  %9044 = vmatmul.f32.gmra.mxu0 %v9023
  %v9045 = vpop.f32.mrf.mxu0
  %v9046 = vadd.f32 0.0, %v9045
  %9047 = vdwg.mxu0
  %9048 = vmatpush.msra.mxu0 0.0
  %9049 = vmatpush.msra.mxu0 0.0
  %9050 = vmatpush.msra.mxu0 0.0
  %9051 = vmatpush.msra.mxu0 0.0
  %9052 = vmatpush.msra.mxu0 0.0
  %9053 = vmatpush.msra.mxu0 0.0
  %9054 = vmatpush.msra.mxu0 0.0
  %9055 = vmatpush.msra.mxu0 0.0
  %9056 = vmatpush.msra.mxu0 0.0
  %9057 = vmatpush.msra.mxu0 0.0
  %9058 = vmatpush.msra.mxu0 0.0
  %9059 = vmatpush.msra.mxu0 0.0
  %9060 = vmatpush.msra.mxu0 0.0
  %9061 = vmatpush.msra.mxu0 0.0
  %9062 = vmatpush.msra.mxu0 %v9011
  %9063 = vmatpush.msra.mxu0 %v9008
  %9064 = vmatmul.f32.gmra.mxu0 %v9020
  %v9065 = vpop.f32.mrf.mxu0
  %v9066 = vadd.f32 0.0, %v9065
  %9067 = vmatmul.f32.gmra.mxu0 %v9023
  %v9068 = vpop.f32.mrf.mxu0
  %v9069 = vadd.f32 0.0, %v9068
  %9070 = vdwg.mxu0
  %9071 = vmatpush.msra.mxu0 0.0
  %9072 = vmatpush.msra.mxu0 0.0
  %9073 = vmatpush.msra.mxu0 0.0
  %9074 = vmatpush.msra.mxu0 0.0
  %9075 = vmatpush.msra.mxu0 0.0
  %9076 = vmatpush.msra.mxu0 0.0
  %9077 = vmatpush.msra.mxu0 0.0
  %9078 = vmatpush.msra.mxu0 0.0
  %9079 = vmatpush.msra.mxu0 0.0
  %9080 = vmatpush.msra.mxu0 0.0
  %9081 = vmatpush.msra.mxu0 0.0
  %9082 = vmatpush.msra.mxu0 0.0
  %9083 = vmatpush.msra.mxu0 0.0
  %9084 = vmatpush.msra.mxu0 0.0
  %9085 = vmatpush.msra.mxu0 %v9012
  %9086 = vmatpush.msra.mxu0 %v9009
  %9087 = vmatmul.f32.gmra.mxu0 %v9020
  %v9088 = vpop.f32.mrf.mxu0
  %v9089 = vadd.f32 0.0, %v9088
  %9090 = vmatmul.f32.gmra.mxu0 %v9023
  %v9091 = vpop.f32.mrf.mxu0
  %v9092 = vadd.f32 0.0, %v9091
  %9093 = vdwg.mxu0
  %v9094 = vadd.f32 %v8983, %v9043
  %v9095 = vadd.f32 %v8984, %v9066
  %v9096 = vadd.f32 %v8985, %v9089
  %v9097 = vadd.f32 %v8986, %v9046
  %v9098 = vadd.f32 %v8987, %v9069
  %v9099 = vadd.f32 %v8988, %v9092
  %v9100 = vld [vmem:[%s3504] sm:$0xff]
  %v9101 = vld [vmem:[%s3504 + $0x8] sm:$0x3]
  %9102 = vrot.lane.b32.xlu0 %v5685, 37
  %v9103 = vpop.permute.xlu0 %9102
  %9104 = vrot.lane.b32.xlu0 %v5686, 37
  %v9105 = vpop.permute.xlu0 %9104
  %9106 = vrot.lane.b32.xlu0 %v5687, 37
  %v9107 = vpop.permute.xlu0 %9106
  %9108 = vrot.lane.b32.xlu0 %v5693, 37
  %v9109 = vpop.permute.xlu0 %9108
  %9110 = vrot.lane.b32.xlu0 %v5688, 37
  %v9111 = vpop.permute.xlu0 %9110
  %9112 = vrot.lane.b32.xlu0 %v5689, 37
  %v9113 = vpop.permute.xlu0 %9112
  %9114 = vrot.lane.b32.xlu0 %v5690, 37
  %v9115 = vpop.permute.xlu0 %9114
  %9116 = vrot.lane.b32.xlu0 %v5694, 37
  %v9117 = vpop.permute.xlu0 %9116
  %v9118 = vsel %vm3523, %v9103, %v9105
  %v9119 = vsel %vm3523, %v9105, %v9107
  %v9120 = vsel %vm3523, %v9107, %v9109
  %v9121 = vsel %vm3523, %v9111, %v9113
  %v9122 = vsel %vm3523, %v9113, %v9115
  %v9123 = vsel %vm3523, %v9115, %v9117
  %v9131 = vsel %vm76, %v9100, 0
  %v9134 = vsel %vm76, %v9101, 0
  %9136 = vmatpush.msra.mxu0 0.0
  %9137 = vmatpush.msra.mxu0 0.0
  %9138 = vmatpush.msra.mxu0 0.0
  %9139 = vmatpush.msra.mxu0 0.0
  %9140 = vmatpush.msra.mxu0 0.0
  %9141 = vmatpush.msra.mxu0 0.0
  %9142 = vmatpush.msra.mxu0 0.0
  %9143 = vmatpush.msra.mxu0 0.0
  %9144 = vmatpush.msra.mxu0 0.0
  %9145 = vmatpush.msra.mxu0 0.0
  %9146 = vmatpush.msra.mxu0 0.0
  %9147 = vmatpush.msra.mxu0 0.0
  %9148 = vmatpush.msra.mxu0 0.0
  %9149 = vmatpush.msra.mxu0 0.0
  %9150 = vmatpush.msra.mxu0 %v9121
  %9151 = vmatpush.msra.mxu0 %v9118
  %9152 = vmatmul.f32.gmra.mxu0 %v9131
  %v9153 = vpop.f32.mrf.mxu0
  %v9154 = vadd.f32 0.0, %v9153
  %9155 = vmatmul.f32.gmra.mxu0 %v9134
  %v9156 = vpop.f32.mrf.mxu0
  %v9157 = vadd.f32 0.0, %v9156
  %9158 = vdwg.mxu0
  %9159 = vmatpush.msra.mxu0 0.0
  %9160 = vmatpush.msra.mxu0 0.0
  %9161 = vmatpush.msra.mxu0 0.0
  %9162 = vmatpush.msra.mxu0 0.0
  %9163 = vmatpush.msra.mxu0 0.0
  %9164 = vmatpush.msra.mxu0 0.0
  %9165 = vmatpush.msra.mxu0 0.0
  %9166 = vmatpush.msra.mxu0 0.0
  %9167 = vmatpush.msra.mxu0 0.0
  %9168 = vmatpush.msra.mxu0 0.0
  %9169 = vmatpush.msra.mxu0 0.0
  %9170 = vmatpush.msra.mxu0 0.0
  %9171 = vmatpush.msra.mxu0 0.0
  %9172 = vmatpush.msra.mxu0 0.0
  %9173 = vmatpush.msra.mxu0 %v9122
  %9174 = vmatpush.msra.mxu0 %v9119
  %9175 = vmatmul.f32.gmra.mxu0 %v9131
  %v9176 = vpop.f32.mrf.mxu0
  %v9177 = vadd.f32 0.0, %v9176
  %9178 = vmatmul.f32.gmra.mxu0 %v9134
  %v9179 = vpop.f32.mrf.mxu0
  %v9180 = vadd.f32 0.0, %v9179
  %9181 = vdwg.mxu0
  %9182 = vmatpush.msra.mxu0 0.0
  %9183 = vmatpush.msra.mxu0 0.0
  %9184 = vmatpush.msra.mxu0 0.0
  %9185 = vmatpush.msra.mxu0 0.0
  %9186 = vmatpush.msra.mxu0 0.0
  %9187 = vmatpush.msra.mxu0 0.0
  %9188 = vmatpush.msra.mxu0 0.0
  %9189 = vmatpush.msra.mxu0 0.0
  %9190 = vmatpush.msra.mxu0 0.0
  %9191 = vmatpush.msra.mxu0 0.0
  %9192 = vmatpush.msra.mxu0 0.0
  %9193 = vmatpush.msra.mxu0 0.0
  %9194 = vmatpush.msra.mxu0 0.0
  %9195 = vmatpush.msra.mxu0 0.0
  %9196 = vmatpush.msra.mxu0 %v9123
  %9197 = vmatpush.msra.mxu0 %v9120
  %9198 = vmatmul.f32.gmra.mxu0 %v9131
  %v9199 = vpop.f32.mrf.mxu0
  %v9200 = vadd.f32 0.0, %v9199
  %9201 = vmatmul.f32.gmra.mxu0 %v9134
  %v9202 = vpop.f32.mrf.mxu0
  %v9203 = vadd.f32 0.0, %v9202
  %9204 = vdwg.mxu0
  %v9205 = vadd.f32 %v9094, %v9154
  %v9206 = vadd.f32 %v9095, %v9177
  %v9207 = vadd.f32 %v9096, %v9200
  %v9208 = vadd.f32 %v9097, %v9157
  %v9209 = vadd.f32 %v9098, %v9180
  %v9210 = vadd.f32 %v9099, %v9203
  %v9211 = vld [vmem:[%s3617] sm:$0xff]
  %v9212 = vld [vmem:[%s3617 + $0x8] sm:$0x3]
  %9213 = vrot.lane.b32.xlu0 %v5685, 36
  %v9214 = vpop.permute.xlu0 %9213
  %9215 = vrot.lane.b32.xlu0 %v5686, 36
  %v9216 = vpop.permute.xlu0 %9215
  %9217 = vrot.lane.b32.xlu0 %v5687, 36
  %v9218 = vpop.permute.xlu0 %9217
  %9219 = vrot.lane.b32.xlu0 %v5693, 36
  %v9220 = vpop.permute.xlu0 %9219
  %9221 = vrot.lane.b32.xlu0 %v5688, 36
  %v9222 = vpop.permute.xlu0 %9221
  %9223 = vrot.lane.b32.xlu0 %v5689, 36
  %v9224 = vpop.permute.xlu0 %9223
  %9225 = vrot.lane.b32.xlu0 %v5690, 36
  %v9226 = vpop.permute.xlu0 %9225
  %9227 = vrot.lane.b32.xlu0 %v5694, 36
  %v9228 = vpop.permute.xlu0 %9227
  %v9229 = vsel %vm3636, %v9214, %v9216
  %v9230 = vsel %vm3636, %v9216, %v9218
  %v9231 = vsel %vm3636, %v9218, %v9220
  %v9232 = vsel %vm3636, %v9222, %v9224
  %v9233 = vsel %vm3636, %v9224, %v9226
  %v9234 = vsel %vm3636, %v9226, %v9228
  %v9242 = vsel %vm76, %v9211, 0
  %v9245 = vsel %vm76, %v9212, 0
  %9247 = vmatpush.msra.mxu0 0.0
  %9248 = vmatpush.msra.mxu0 0.0
  %9249 = vmatpush.msra.mxu0 0.0
  %9250 = vmatpush.msra.mxu0 0.0
  %9251 = vmatpush.msra.mxu0 0.0
  %9252 = vmatpush.msra.mxu0 0.0
  %9253 = vmatpush.msra.mxu0 0.0
  %9254 = vmatpush.msra.mxu0 0.0
  %9255 = vmatpush.msra.mxu0 0.0
  %9256 = vmatpush.msra.mxu0 0.0
  %9257 = vmatpush.msra.mxu0 0.0
  %9258 = vmatpush.msra.mxu0 0.0
  %9259 = vmatpush.msra.mxu0 0.0
  %9260 = vmatpush.msra.mxu0 0.0
  %9261 = vmatpush.msra.mxu0 %v9232
  %9262 = vmatpush.msra.mxu0 %v9229
  %9263 = vmatmul.f32.gmra.mxu0 %v9242
  %v9264 = vpop.f32.mrf.mxu0
  %v9265 = vadd.f32 0.0, %v9264
  %9266 = vmatmul.f32.gmra.mxu0 %v9245
  %v9267 = vpop.f32.mrf.mxu0
  %v9268 = vadd.f32 0.0, %v9267
  %9269 = vdwg.mxu0
  %9270 = vmatpush.msra.mxu0 0.0
  %9271 = vmatpush.msra.mxu0 0.0
  %9272 = vmatpush.msra.mxu0 0.0
  %9273 = vmatpush.msra.mxu0 0.0
  %9274 = vmatpush.msra.mxu0 0.0
  %9275 = vmatpush.msra.mxu0 0.0
  %9276 = vmatpush.msra.mxu0 0.0
  %9277 = vmatpush.msra.mxu0 0.0
  %9278 = vmatpush.msra.mxu0 0.0
  %9279 = vmatpush.msra.mxu0 0.0
  %9280 = vmatpush.msra.mxu0 0.0
  %9281 = vmatpush.msra.mxu0 0.0
  %9282 = vmatpush.msra.mxu0 0.0
  %9283 = vmatpush.msra.mxu0 0.0
  %9284 = vmatpush.msra.mxu0 %v9233
  %9285 = vmatpush.msra.mxu0 %v9230
  %9286 = vmatmul.f32.gmra.mxu0 %v9242
  %v9287 = vpop.f32.mrf.mxu0
  %v9288 = vadd.f32 0.0, %v9287
  %9289 = vmatmul.f32.gmra.mxu0 %v9245
  %v9290 = vpop.f32.mrf.mxu0
  %v9291 = vadd.f32 0.0, %v9290
  %9292 = vdwg.mxu0
  %9293 = vmatpush.msra.mxu0 0.0
  %9294 = vmatpush.msra.mxu0 0.0
  %9295 = vmatpush.msra.mxu0 0.0
  %9296 = vmatpush.msra.mxu0 0.0
  %9297 = vmatpush.msra.mxu0 0.0
  %9298 = vmatpush.msra.mxu0 0.0
  %9299 = vmatpush.msra.mxu0 0.0
  %9300 = vmatpush.msra.mxu0 0.0
  %9301 = vmatpush.msra.mxu0 0.0
  %9302 = vmatpush.msra.mxu0 0.0
  %9303 = vmatpush.msra.mxu0 0.0
  %9304 = vmatpush.msra.mxu0 0.0
  %9305 = vmatpush.msra.mxu0 0.0
  %9306 = vmatpush.msra.mxu0 0.0
  %9307 = vmatpush.msra.mxu0 %v9234
  %9308 = vmatpush.msra.mxu0 %v9231
  %9309 = vmatmul.f32.gmra.mxu0 %v9242
  %v9310 = vpop.f32.mrf.mxu0
  %v9311 = vadd.f32 0.0, %v9310
  %9312 = vmatmul.f32.gmra.mxu0 %v9245
  %v9313 = vpop.f32.mrf.mxu0
  %v9314 = vadd.f32 0.0, %v9313
  %9315 = vdwg.mxu0
  %v9316 = vadd.f32 %v9205, %v9265
  %v9317 = vadd.f32 %v9206, %v9288
  %v9318 = vadd.f32 %v9207, %v9311
  %v9319 = vadd.f32 %v9208, %v9268
  %v9320 = vadd.f32 %v9209, %v9291
  %v9321 = vadd.f32 %v9210, %v9314
  %v9322 = vld [vmem:[%s3730] sm:$0xff]
  %v9323 = vld [vmem:[%s3730 + $0x8] sm:$0x3]
  %9324 = vrot.lane.b32.xlu0 %v5685, 35
  %v9325 = vpop.permute.xlu0 %9324
  %9326 = vrot.lane.b32.xlu0 %v5686, 35
  %v9327 = vpop.permute.xlu0 %9326
  %9328 = vrot.lane.b32.xlu0 %v5687, 35
  %v9329 = vpop.permute.xlu0 %9328
  %9330 = vrot.lane.b32.xlu0 %v5693, 35
  %v9331 = vpop.permute.xlu0 %9330
  %9332 = vrot.lane.b32.xlu0 %v5688, 35
  %v9333 = vpop.permute.xlu0 %9332
  %9334 = vrot.lane.b32.xlu0 %v5689, 35
  %v9335 = vpop.permute.xlu0 %9334
  %9336 = vrot.lane.b32.xlu0 %v5690, 35
  %v9337 = vpop.permute.xlu0 %9336
  %9338 = vrot.lane.b32.xlu0 %v5694, 35
  %v9339 = vpop.permute.xlu0 %9338
  %v9340 = vsel %vm3749, %v9325, %v9327
  %v9341 = vsel %vm3749, %v9327, %v9329
  %v9342 = vsel %vm3749, %v9329, %v9331
  %v9343 = vsel %vm3749, %v9333, %v9335
  %v9344 = vsel %vm3749, %v9335, %v9337
  %v9345 = vsel %vm3749, %v9337, %v9339
  %v9353 = vsel %vm76, %v9322, 0
  %v9356 = vsel %vm76, %v9323, 0
  %9358 = vmatpush.msra.mxu0 0.0
  %9359 = vmatpush.msra.mxu0 0.0
  %9360 = vmatpush.msra.mxu0 0.0
  %9361 = vmatpush.msra.mxu0 0.0
  %9362 = vmatpush.msra.mxu0 0.0
  %9363 = vmatpush.msra.mxu0 0.0
  %9364 = vmatpush.msra.mxu0 0.0
  %9365 = vmatpush.msra.mxu0 0.0
  %9366 = vmatpush.msra.mxu0 0.0
  %9367 = vmatpush.msra.mxu0 0.0
  %9368 = vmatpush.msra.mxu0 0.0
  %9369 = vmatpush.msra.mxu0 0.0
  %9370 = vmatpush.msra.mxu0 0.0
  %9371 = vmatpush.msra.mxu0 0.0
  %9372 = vmatpush.msra.mxu0 %v9343
  %9373 = vmatpush.msra.mxu0 %v9340
  %9374 = vmatmul.f32.gmra.mxu0 %v9353
  %v9375 = vpop.f32.mrf.mxu0
  %v9376 = vadd.f32 0.0, %v9375
  %9377 = vmatmul.f32.gmra.mxu0 %v9356
  %v9378 = vpop.f32.mrf.mxu0
  %v9379 = vadd.f32 0.0, %v9378
  %9380 = vdwg.mxu0
  %9381 = vmatpush.msra.mxu0 0.0
  %9382 = vmatpush.msra.mxu0 0.0
  %9383 = vmatpush.msra.mxu0 0.0
  %9384 = vmatpush.msra.mxu0 0.0
  %9385 = vmatpush.msra.mxu0 0.0
  %9386 = vmatpush.msra.mxu0 0.0
  %9387 = vmatpush.msra.mxu0 0.0
  %9388 = vmatpush.msra.mxu0 0.0
  %9389 = vmatpush.msra.mxu0 0.0
  %9390 = vmatpush.msra.mxu0 0.0
  %9391 = vmatpush.msra.mxu0 0.0
  %9392 = vmatpush.msra.mxu0 0.0
  %9393 = vmatpush.msra.mxu0 0.0
  %9394 = vmatpush.msra.mxu0 0.0
  %9395 = vmatpush.msra.mxu0 %v9344
  %9396 = vmatpush.msra.mxu0 %v9341
  %9397 = vmatmul.f32.gmra.mxu0 %v9353
  %v9398 = vpop.f32.mrf.mxu0
  %v9399 = vadd.f32 0.0, %v9398
  %9400 = vmatmul.f32.gmra.mxu0 %v9356
  %v9401 = vpop.f32.mrf.mxu0
  %v9402 = vadd.f32 0.0, %v9401
  %9403 = vdwg.mxu0
  %9404 = vmatpush.msra.mxu0 0.0
  %9405 = vmatpush.msra.mxu0 0.0
  %9406 = vmatpush.msra.mxu0 0.0
  %9407 = vmatpush.msra.mxu0 0.0
  %9408 = vmatpush.msra.mxu0 0.0
  %9409 = vmatpush.msra.mxu0 0.0
  %9410 = vmatpush.msra.mxu0 0.0
  %9411 = vmatpush.msra.mxu0 0.0
  %9412 = vmatpush.msra.mxu0 0.0
  %9413 = vmatpush.msra.mxu0 0.0
  %9414 = vmatpush.msra.mxu0 0.0
  %9415 = vmatpush.msra.mxu0 0.0
  %9416 = vmatpush.msra.mxu0 0.0
  %9417 = vmatpush.msra.mxu0 0.0
  %9418 = vmatpush.msra.mxu0 %v9345
  %9419 = vmatpush.msra.mxu0 %v9342
  %9420 = vmatmul.f32.gmra.mxu0 %v9353
  %v9421 = vpop.f32.mrf.mxu0
  %v9422 = vadd.f32 0.0, %v9421
  %9423 = vmatmul.f32.gmra.mxu0 %v9356
  %v9424 = vpop.f32.mrf.mxu0
  %v9425 = vadd.f32 0.0, %v9424
  %9426 = vdwg.mxu0
  %v9427 = vadd.f32 %v9316, %v9376
  %v9428 = vadd.f32 %v9317, %v9399
  %v9429 = vadd.f32 %v9318, %v9422
  %v9430 = vadd.f32 %v9319, %v9379
  %v9431 = vadd.f32 %v9320, %v9402
  %v9432 = vadd.f32 %v9321, %v9425
  %v9433 = vld [vmem:[%s3843] sm:$0xff]
  %v9434 = vld [vmem:[%s3843 + $0x8] sm:$0x3]
  %9435 = vrot.lane.b32.xlu0 %v5685, 34
  %v9436 = vpop.permute.xlu0 %9435
  %9437 = vrot.lane.b32.xlu0 %v5686, 34
  %v9438 = vpop.permute.xlu0 %9437
  %9439 = vrot.lane.b32.xlu0 %v5687, 34
  %v9440 = vpop.permute.xlu0 %9439
  %9441 = vrot.lane.b32.xlu0 %v5693, 34
  %v9442 = vpop.permute.xlu0 %9441
  %9443 = vrot.lane.b32.xlu0 %v5688, 34
  %v9444 = vpop.permute.xlu0 %9443
  %9445 = vrot.lane.b32.xlu0 %v5689, 34
  %v9446 = vpop.permute.xlu0 %9445
  %9447 = vrot.lane.b32.xlu0 %v5690, 34
  %v9448 = vpop.permute.xlu0 %9447
  %9449 = vrot.lane.b32.xlu0 %v5694, 34
  %v9450 = vpop.permute.xlu0 %9449
  %v9451 = vsel %vm3862, %v9436, %v9438
  %v9452 = vsel %vm3862, %v9438, %v9440
  %v9453 = vsel %vm3862, %v9440, %v9442
  %v9454 = vsel %vm3862, %v9444, %v9446
  %v9455 = vsel %vm3862, %v9446, %v9448
  %v9456 = vsel %vm3862, %v9448, %v9450
  %v9464 = vsel %vm76, %v9433, 0
  %v9467 = vsel %vm76, %v9434, 0
  %9469 = vmatpush.msra.mxu0 0.0
  %9470 = vmatpush.msra.mxu0 0.0
  %9471 = vmatpush.msra.mxu0 0.0
  %9472 = vmatpush.msra.mxu0 0.0
  %9473 = vmatpush.msra.mxu0 0.0
  %9474 = vmatpush.msra.mxu0 0.0
  %9475 = vmatpush.msra.mxu0 0.0
  %9476 = vmatpush.msra.mxu0 0.0
  %9477 = vmatpush.msra.mxu0 0.0
  %9478 = vmatpush.msra.mxu0 0.0
  %9479 = vmatpush.msra.mxu0 0.0
  %9480 = vmatpush.msra.mxu0 0.0
  %9481 = vmatpush.msra.mxu0 0.0
  %9482 = vmatpush.msra.mxu0 0.0
  %9483 = vmatpush.msra.mxu0 %v9454
  %9484 = vmatpush.msra.mxu0 %v9451
  %9485 = vmatmul.f32.gmra.mxu0 %v9464
  %v9486 = vpop.f32.mrf.mxu0
  %v9487 = vadd.f32 0.0, %v9486
  %9488 = vmatmul.f32.gmra.mxu0 %v9467
  %v9489 = vpop.f32.mrf.mxu0
  %v9490 = vadd.f32 0.0, %v9489
  %9491 = vdwg.mxu0
  %9492 = vmatpush.msra.mxu0 0.0
  %9493 = vmatpush.msra.mxu0 0.0
  %9494 = vmatpush.msra.mxu0 0.0
  %9495 = vmatpush.msra.mxu0 0.0
  %9496 = vmatpush.msra.mxu0 0.0
  %9497 = vmatpush.msra.mxu0 0.0
  %9498 = vmatpush.msra.mxu0 0.0
  %9499 = vmatpush.msra.mxu0 0.0
  %9500 = vmatpush.msra.mxu0 0.0
  %9501 = vmatpush.msra.mxu0 0.0
  %9502 = vmatpush.msra.mxu0 0.0
  %9503 = vmatpush.msra.mxu0 0.0
  %9504 = vmatpush.msra.mxu0 0.0
  %9505 = vmatpush.msra.mxu0 0.0
  %9506 = vmatpush.msra.mxu0 %v9455
  %9507 = vmatpush.msra.mxu0 %v9452
  %9508 = vmatmul.f32.gmra.mxu0 %v9464
  %v9509 = vpop.f32.mrf.mxu0
  %v9510 = vadd.f32 0.0, %v9509
  %9511 = vmatmul.f32.gmra.mxu0 %v9467
  %v9512 = vpop.f32.mrf.mxu0
  %v9513 = vadd.f32 0.0, %v9512
  %9514 = vdwg.mxu0
  %9515 = vmatpush.msra.mxu0 0.0
  %9516 = vmatpush.msra.mxu0 0.0
  %9517 = vmatpush.msra.mxu0 0.0
  %9518 = vmatpush.msra.mxu0 0.0
  %9519 = vmatpush.msra.mxu0 0.0
  %9520 = vmatpush.msra.mxu0 0.0
  %9521 = vmatpush.msra.mxu0 0.0
  %9522 = vmatpush.msra.mxu0 0.0
  %9523 = vmatpush.msra.mxu0 0.0
  %9524 = vmatpush.msra.mxu0 0.0
  %9525 = vmatpush.msra.mxu0 0.0
  %9526 = vmatpush.msra.mxu0 0.0
  %9527 = vmatpush.msra.mxu0 0.0
  %9528 = vmatpush.msra.mxu0 0.0
  %9529 = vmatpush.msra.mxu0 %v9456
  %9530 = vmatpush.msra.mxu0 %v9453
  %9531 = vmatmul.f32.gmra.mxu0 %v9464
  %v9532 = vpop.f32.mrf.mxu0
  %v9533 = vadd.f32 0.0, %v9532
  %9534 = vmatmul.f32.gmra.mxu0 %v9467
  %v9535 = vpop.f32.mrf.mxu0
  %v9536 = vadd.f32 0.0, %v9535
  %9537 = vdwg.mxu0
  %v9538 = vadd.f32 %v9427, %v9487
  %v9539 = vadd.f32 %v9428, %v9510
  %v9540 = vadd.f32 %v9429, %v9533
  %v9541 = vadd.f32 %v9430, %v9490
  %v9542 = vadd.f32 %v9431, %v9513
  %v9543 = vadd.f32 %v9432, %v9536
  %v9544 = vld [vmem:[%s3956] sm:$0xff]
  %v9545 = vld [vmem:[%s3956 + $0x8] sm:$0x3]
  %9546 = vrot.lane.b32.xlu0 %v5685, 18
  %v9547 = vpop.permute.xlu0 %9546
  %9548 = vrot.lane.b32.xlu0 %v5686, 18
  %v9549 = vpop.permute.xlu0 %9548
  %9550 = vrot.lane.b32.xlu0 %v5687, 18
  %v9551 = vpop.permute.xlu0 %9550
  %9552 = vrot.lane.b32.xlu0 %v5693, 18
  %v9553 = vpop.permute.xlu0 %9552
  %9554 = vrot.lane.b32.xlu0 %v5688, 18
  %v9555 = vpop.permute.xlu0 %9554
  %9556 = vrot.lane.b32.xlu0 %v5689, 18
  %v9557 = vpop.permute.xlu0 %9556
  %9558 = vrot.lane.b32.xlu0 %v5690, 18
  %v9559 = vpop.permute.xlu0 %9558
  %9560 = vrot.lane.b32.xlu0 %v5694, 18
  %v9561 = vpop.permute.xlu0 %9560
  %v9562 = vsel %vm3975, %v9547, %v9549
  %v9563 = vsel %vm3975, %v9549, %v9551
  %v9564 = vsel %vm3975, %v9551, %v9553
  %v9565 = vsel %vm3975, %v9555, %v9557
  %v9566 = vsel %vm3975, %v9557, %v9559
  %v9567 = vsel %vm3975, %v9559, %v9561
  %v9575 = vsel %vm76, %v9544, 0
  %v9578 = vsel %vm76, %v9545, 0
  %9580 = vmatpush.msra.mxu0 0.0
  %9581 = vmatpush.msra.mxu0 0.0
  %9582 = vmatpush.msra.mxu0 0.0
  %9583 = vmatpush.msra.mxu0 0.0
  %9584 = vmatpush.msra.mxu0 0.0
  %9585 = vmatpush.msra.mxu0 0.0
  %9586 = vmatpush.msra.mxu0 0.0
  %9587 = vmatpush.msra.mxu0 0.0
  %9588 = vmatpush.msra.mxu0 0.0
  %9589 = vmatpush.msra.mxu0 0.0
  %9590 = vmatpush.msra.mxu0 0.0
  %9591 = vmatpush.msra.mxu0 0.0
  %9592 = vmatpush.msra.mxu0 0.0
  %9593 = vmatpush.msra.mxu0 0.0
  %9594 = vmatpush.msra.mxu0 %v9565
  %9595 = vmatpush.msra.mxu0 %v9562
  %9596 = vmatmul.f32.gmra.mxu0 %v9575
  %v9597 = vpop.f32.mrf.mxu0
  %v9598 = vadd.f32 0.0, %v9597
  %9599 = vmatmul.f32.gmra.mxu0 %v9578
  %v9600 = vpop.f32.mrf.mxu0
  %v9601 = vadd.f32 0.0, %v9600
  %9602 = vdwg.mxu0
  %9603 = vmatpush.msra.mxu0 0.0
  %9604 = vmatpush.msra.mxu0 0.0
  %9605 = vmatpush.msra.mxu0 0.0
  %9606 = vmatpush.msra.mxu0 0.0
  %9607 = vmatpush.msra.mxu0 0.0
  %9608 = vmatpush.msra.mxu0 0.0
  %9609 = vmatpush.msra.mxu0 0.0
  %9610 = vmatpush.msra.mxu0 0.0
  %9611 = vmatpush.msra.mxu0 0.0
  %9612 = vmatpush.msra.mxu0 0.0
  %9613 = vmatpush.msra.mxu0 0.0
  %9614 = vmatpush.msra.mxu0 0.0
  %9615 = vmatpush.msra.mxu0 0.0
  %9616 = vmatpush.msra.mxu0 0.0
  %9617 = vmatpush.msra.mxu0 %v9566
  %9618 = vmatpush.msra.mxu0 %v9563
  %9619 = vmatmul.f32.gmra.mxu0 %v9575
  %v9620 = vpop.f32.mrf.mxu0
  %v9621 = vadd.f32 0.0, %v9620
  %9622 = vmatmul.f32.gmra.mxu0 %v9578
  %v9623 = vpop.f32.mrf.mxu0
  %v9624 = vadd.f32 0.0, %v9623
  %9625 = vdwg.mxu0
  %9626 = vmatpush.msra.mxu0 0.0
  %9627 = vmatpush.msra.mxu0 0.0
  %9628 = vmatpush.msra.mxu0 0.0
  %9629 = vmatpush.msra.mxu0 0.0
  %9630 = vmatpush.msra.mxu0 0.0
  %9631 = vmatpush.msra.mxu0 0.0
  %9632 = vmatpush.msra.mxu0 0.0
  %9633 = vmatpush.msra.mxu0 0.0
  %9634 = vmatpush.msra.mxu0 0.0
  %9635 = vmatpush.msra.mxu0 0.0
  %9636 = vmatpush.msra.mxu0 0.0
  %9637 = vmatpush.msra.mxu0 0.0
  %9638 = vmatpush.msra.mxu0 0.0
  %9639 = vmatpush.msra.mxu0 0.0
  %9640 = vmatpush.msra.mxu0 %v9567
  %9641 = vmatpush.msra.mxu0 %v9564
  %9642 = vmatmul.f32.gmra.mxu0 %v9575
  %v9643 = vpop.f32.mrf.mxu0
  %v9644 = vadd.f32 0.0, %v9643
  %9645 = vmatmul.f32.gmra.mxu0 %v9578
  %v9646 = vpop.f32.mrf.mxu0
  %v9647 = vadd.f32 0.0, %v9646
  %9648 = vdwg.mxu0
  %v9649 = vadd.f32 %v9538, %v9598
  %v9650 = vadd.f32 %v9539, %v9621
  %v9651 = vadd.f32 %v9540, %v9644
  %v9652 = vadd.f32 %v9541, %v9601
  %v9653 = vadd.f32 %v9542, %v9624
  %v9654 = vadd.f32 %v9543, %v9647
  %v9655 = vld [vmem:[%s4069] sm:$0xff]
  %v9656 = vld [vmem:[%s4069 + $0x8] sm:$0x3]
  %9657 = vrot.lane.b32.xlu0 %v5685, 17
  %v9658 = vpop.permute.xlu0 %9657
  %9659 = vrot.lane.b32.xlu0 %v5686, 17
  %v9660 = vpop.permute.xlu0 %9659
  %9661 = vrot.lane.b32.xlu0 %v5687, 17
  %v9662 = vpop.permute.xlu0 %9661
  %9663 = vrot.lane.b32.xlu0 %v5693, 17
  %v9664 = vpop.permute.xlu0 %9663
  %9665 = vrot.lane.b32.xlu0 %v5688, 17
  %v9666 = vpop.permute.xlu0 %9665
  %9667 = vrot.lane.b32.xlu0 %v5689, 17
  %v9668 = vpop.permute.xlu0 %9667
  %9669 = vrot.lane.b32.xlu0 %v5690, 17
  %v9670 = vpop.permute.xlu0 %9669
  %9671 = vrot.lane.b32.xlu0 %v5694, 17
  %v9672 = vpop.permute.xlu0 %9671
  %v9673 = vsel %vm4088, %v9658, %v9660
  %v9674 = vsel %vm4088, %v9660, %v9662
  %v9675 = vsel %vm4088, %v9662, %v9664
  %v9676 = vsel %vm4088, %v9666, %v9668
  %v9677 = vsel %vm4088, %v9668, %v9670
  %v9678 = vsel %vm4088, %v9670, %v9672
  %v9686 = vsel %vm76, %v9655, 0
  %v9689 = vsel %vm76, %v9656, 0
  %9691 = vmatpush.msra.mxu0 0.0
  %9692 = vmatpush.msra.mxu0 0.0
  %9693 = vmatpush.msra.mxu0 0.0
  %9694 = vmatpush.msra.mxu0 0.0
  %9695 = vmatpush.msra.mxu0 0.0
  %9696 = vmatpush.msra.mxu0 0.0
  %9697 = vmatpush.msra.mxu0 0.0
  %9698 = vmatpush.msra.mxu0 0.0
  %9699 = vmatpush.msra.mxu0 0.0
  %9700 = vmatpush.msra.mxu0 0.0
  %9701 = vmatpush.msra.mxu0 0.0
  %9702 = vmatpush.msra.mxu0 0.0
  %9703 = vmatpush.msra.mxu0 0.0
  %9704 = vmatpush.msra.mxu0 0.0
  %9705 = vmatpush.msra.mxu0 %v9676
  %9706 = vmatpush.msra.mxu0 %v9673
  %9707 = vmatmul.f32.gmra.mxu0 %v9686
  %v9708 = vpop.f32.mrf.mxu0
  %v9709 = vadd.f32 0.0, %v9708
  %9710 = vmatmul.f32.gmra.mxu0 %v9689
  %v9711 = vpop.f32.mrf.mxu0
  %v9712 = vadd.f32 0.0, %v9711
  %9713 = vdwg.mxu0
  %9714 = vmatpush.msra.mxu0 0.0
  %9715 = vmatpush.msra.mxu0 0.0
  %9716 = vmatpush.msra.mxu0 0.0
  %9717 = vmatpush.msra.mxu0 0.0
  %9718 = vmatpush.msra.mxu0 0.0
  %9719 = vmatpush.msra.mxu0 0.0
  %9720 = vmatpush.msra.mxu0 0.0
  %9721 = vmatpush.msra.mxu0 0.0
  %9722 = vmatpush.msra.mxu0 0.0
  %9723 = vmatpush.msra.mxu0 0.0
  %9724 = vmatpush.msra.mxu0 0.0
  %9725 = vmatpush.msra.mxu0 0.0
  %9726 = vmatpush.msra.mxu0 0.0
  %9727 = vmatpush.msra.mxu0 0.0
  %9728 = vmatpush.msra.mxu0 %v9677
  %9729 = vmatpush.msra.mxu0 %v9674
  %9730 = vmatmul.f32.gmra.mxu0 %v9686
  %v9731 = vpop.f32.mrf.mxu0
  %v9732 = vadd.f32 0.0, %v9731
  %9733 = vmatmul.f32.gmra.mxu0 %v9689
  %v9734 = vpop.f32.mrf.mxu0
  %v9735 = vadd.f32 0.0, %v9734
  %9736 = vdwg.mxu0
  %9737 = vmatpush.msra.mxu0 0.0
  %9738 = vmatpush.msra.mxu0 0.0
  %9739 = vmatpush.msra.mxu0 0.0
  %9740 = vmatpush.msra.mxu0 0.0
  %9741 = vmatpush.msra.mxu0 0.0
  %9742 = vmatpush.msra.mxu0 0.0
  %9743 = vmatpush.msra.mxu0 0.0
  %9744 = vmatpush.msra.mxu0 0.0
  %9745 = vmatpush.msra.mxu0 0.0
  %9746 = vmatpush.msra.mxu0 0.0
  %9747 = vmatpush.msra.mxu0 0.0
  %9748 = vmatpush.msra.mxu0 0.0
  %9749 = vmatpush.msra.mxu0 0.0
  %9750 = vmatpush.msra.mxu0 0.0
  %9751 = vmatpush.msra.mxu0 %v9678
  %9752 = vmatpush.msra.mxu0 %v9675
  %9753 = vmatmul.f32.gmra.mxu0 %v9686
  %v9754 = vpop.f32.mrf.mxu0
  %v9755 = vadd.f32 0.0, %v9754
  %9756 = vmatmul.f32.gmra.mxu0 %v9689
  %v9757 = vpop.f32.mrf.mxu0
  %v9758 = vadd.f32 0.0, %v9757
  %9759 = vdwg.mxu0
  %v9760 = vadd.f32 %v9649, %v9709
  %v9761 = vadd.f32 %v9650, %v9732
  %v9762 = vadd.f32 %v9651, %v9755
  %v9763 = vadd.f32 %v9652, %v9712
  %v9764 = vadd.f32 %v9653, %v9735
  %v9765 = vadd.f32 %v9654, %v9758
  %v9766 = vld [vmem:[%s4182] sm:$0xff]
  %v9767 = vld [vmem:[%s4182 + $0x8] sm:$0x3]
  %9768 = vrot.lane.b32.xlu0 %v5685, 16
  %v9769 = vpop.permute.xlu0 %9768
  %9770 = vrot.lane.b32.xlu0 %v5686, 16
  %v9771 = vpop.permute.xlu0 %9770
  %9772 = vrot.lane.b32.xlu0 %v5687, 16
  %v9773 = vpop.permute.xlu0 %9772
  %9774 = vrot.lane.b32.xlu0 %v5693, 16
  %v9775 = vpop.permute.xlu0 %9774
  %9776 = vrot.lane.b32.xlu0 %v5688, 16
  %v9777 = vpop.permute.xlu0 %9776
  %9778 = vrot.lane.b32.xlu0 %v5689, 16
  %v9779 = vpop.permute.xlu0 %9778
  %9780 = vrot.lane.b32.xlu0 %v5690, 16
  %v9781 = vpop.permute.xlu0 %9780
  %9782 = vrot.lane.b32.xlu0 %v5694, 16
  %v9783 = vpop.permute.xlu0 %9782
  %v9784 = vsel %vm76, %v9769, %v9771
  %v9785 = vsel %vm76, %v9771, %v9773
  %v9786 = vsel %vm76, %v9773, %v9775
  %v9787 = vsel %vm76, %v9777, %v9779
  %v9788 = vsel %vm76, %v9779, %v9781
  %v9789 = vsel %vm76, %v9781, %v9783
  %v9797 = vsel %vm76, %v9766, 0
  %v9800 = vsel %vm76, %v9767, 0
  %9802 = vmatpush.msra.mxu0 0.0
  %9803 = vmatpush.msra.mxu0 0.0
  %9804 = vmatpush.msra.mxu0 0.0
  %9805 = vmatpush.msra.mxu0 0.0
  %9806 = vmatpush.msra.mxu0 0.0
  %9807 = vmatpush.msra.mxu0 0.0
  %9808 = vmatpush.msra.mxu0 0.0
  %9809 = vmatpush.msra.mxu0 0.0
  %9810 = vmatpush.msra.mxu0 0.0
  %9811 = vmatpush.msra.mxu0 0.0
  %9812 = vmatpush.msra.mxu0 0.0
  %9813 = vmatpush.msra.mxu0 0.0
  %9814 = vmatpush.msra.mxu0 0.0
  %9815 = vmatpush.msra.mxu0 0.0
  %9816 = vmatpush.msra.mxu0 %v9787
  %9817 = vmatpush.msra.mxu0 %v9784
  %9818 = vmatmul.f32.gmra.mxu0 %v9797
  %v9819 = vpop.f32.mrf.mxu0
  %v9820 = vadd.f32 0.0, %v9819
  %9821 = vmatmul.f32.gmra.mxu0 %v9800
  %v9822 = vpop.f32.mrf.mxu0
  %v9823 = vadd.f32 0.0, %v9822
  %9824 = vdwg.mxu0
  %9825 = vmatpush.msra.mxu0 0.0
  %9826 = vmatpush.msra.mxu0 0.0
  %9827 = vmatpush.msra.mxu0 0.0
  %9828 = vmatpush.msra.mxu0 0.0
  %9829 = vmatpush.msra.mxu0 0.0
  %9830 = vmatpush.msra.mxu0 0.0
  %9831 = vmatpush.msra.mxu0 0.0
  %9832 = vmatpush.msra.mxu0 0.0
  %9833 = vmatpush.msra.mxu0 0.0
  %9834 = vmatpush.msra.mxu0 0.0
  %9835 = vmatpush.msra.mxu0 0.0
  %9836 = vmatpush.msra.mxu0 0.0
  %9837 = vmatpush.msra.mxu0 0.0
  %9838 = vmatpush.msra.mxu0 0.0
  %9839 = vmatpush.msra.mxu0 %v9788
  %9840 = vmatpush.msra.mxu0 %v9785
  %9841 = vmatmul.f32.gmra.mxu0 %v9797
  %v9842 = vpop.f32.mrf.mxu0
  %v9843 = vadd.f32 0.0, %v9842
  %9844 = vmatmul.f32.gmra.mxu0 %v9800
  %v9845 = vpop.f32.mrf.mxu0
  %v9846 = vadd.f32 0.0, %v9845
  %9847 = vdwg.mxu0
  %9848 = vmatpush.msra.mxu0 0.0
  %9849 = vmatpush.msra.mxu0 0.0
  %9850 = vmatpush.msra.mxu0 0.0
  %9851 = vmatpush.msra.mxu0 0.0
  %9852 = vmatpush.msra.mxu0 0.0
  %9853 = vmatpush.msra.mxu0 0.0
  %9854 = vmatpush.msra.mxu0 0.0
  %9855 = vmatpush.msra.mxu0 0.0
  %9856 = vmatpush.msra.mxu0 0.0
  %9857 = vmatpush.msra.mxu0 0.0
  %9858 = vmatpush.msra.mxu0 0.0
  %9859 = vmatpush.msra.mxu0 0.0
  %9860 = vmatpush.msra.mxu0 0.0
  %9861 = vmatpush.msra.mxu0 0.0
  %9862 = vmatpush.msra.mxu0 %v9789
  %9863 = vmatpush.msra.mxu0 %v9786
  %9864 = vmatmul.f32.gmra.mxu0 %v9797
  %v9865 = vpop.f32.mrf.mxu0
  %v9866 = vadd.f32 0.0, %v9865
  %9867 = vmatmul.f32.gmra.mxu0 %v9800
  %v9868 = vpop.f32.mrf.mxu0
  %v9869 = vadd.f32 0.0, %v9868
  %9870 = vdwg.mxu0
  %v9871 = vadd.f32 %v9760, %v9820
  %v9872 = vadd.f32 %v9761, %v9843
  %v9873 = vadd.f32 %v9762, %v9866
  %v9874 = vadd.f32 %v9763, %v9823
  %v9875 = vadd.f32 %v9764, %v9846
  %v9876 = vadd.f32 %v9765, %v9869
  %v9877 = vld [vmem:[%s4294] sm:$0xff]
  %v9878 = vld [vmem:[%s4294 + $0x8] sm:$0x3]
  %9879 = vrot.lane.b32.xlu0 %v5685, 15
  %v9880 = vpop.permute.xlu0 %9879
  %9881 = vrot.lane.b32.xlu0 %v5686, 15
  %v9882 = vpop.permute.xlu0 %9881
  %9883 = vrot.lane.b32.xlu0 %v5687, 15
  %v9884 = vpop.permute.xlu0 %9883
  %9885 = vrot.lane.b32.xlu0 %v5693, 15
  %v9886 = vpop.permute.xlu0 %9885
  %9887 = vrot.lane.b32.xlu0 %v5688, 15
  %v9888 = vpop.permute.xlu0 %9887
  %9889 = vrot.lane.b32.xlu0 %v5689, 15
  %v9890 = vpop.permute.xlu0 %9889
  %9891 = vrot.lane.b32.xlu0 %v5690, 15
  %v9892 = vpop.permute.xlu0 %9891
  %9893 = vrot.lane.b32.xlu0 %v5694, 15
  %v9894 = vpop.permute.xlu0 %9893
  %v9895 = vsel %vm4313, %v9880, %v9882
  %v9896 = vsel %vm4313, %v9882, %v9884
  %v9897 = vsel %vm4313, %v9884, %v9886
  %v9898 = vsel %vm4313, %v9888, %v9890
  %v9899 = vsel %vm4313, %v9890, %v9892
  %v9900 = vsel %vm4313, %v9892, %v9894
  %v9908 = vsel %vm76, %v9877, 0
  %v9911 = vsel %vm76, %v9878, 0
  %9913 = vmatpush.msra.mxu0 0.0
  %9914 = vmatpush.msra.mxu0 0.0
  %9915 = vmatpush.msra.mxu0 0.0
  %9916 = vmatpush.msra.mxu0 0.0
  %9917 = vmatpush.msra.mxu0 0.0
  %9918 = vmatpush.msra.mxu0 0.0
  %9919 = vmatpush.msra.mxu0 0.0
  %9920 = vmatpush.msra.mxu0 0.0
  %9921 = vmatpush.msra.mxu0 0.0
  %9922 = vmatpush.msra.mxu0 0.0
  %9923 = vmatpush.msra.mxu0 0.0
  %9924 = vmatpush.msra.mxu0 0.0
  %9925 = vmatpush.msra.mxu0 0.0
  %9926 = vmatpush.msra.mxu0 0.0
  %9927 = vmatpush.msra.mxu0 %v9898
  %9928 = vmatpush.msra.mxu0 %v9895
  %9929 = vmatmul.f32.gmra.mxu0 %v9908
  %v9930 = vpop.f32.mrf.mxu0
  %v9931 = vadd.f32 0.0, %v9930
  %9932 = vmatmul.f32.gmra.mxu0 %v9911
  %v9933 = vpop.f32.mrf.mxu0
  %v9934 = vadd.f32 0.0, %v9933
  %9935 = vdwg.mxu0
  %9936 = vmatpush.msra.mxu0 0.0
  %9937 = vmatpush.msra.mxu0 0.0
  %9938 = vmatpush.msra.mxu0 0.0
  %9939 = vmatpush.msra.mxu0 0.0
  %9940 = vmatpush.msra.mxu0 0.0
  %9941 = vmatpush.msra.mxu0 0.0
  %9942 = vmatpush.msra.mxu0 0.0
  %9943 = vmatpush.msra.mxu0 0.0
  %9944 = vmatpush.msra.mxu0 0.0
  %9945 = vmatpush.msra.mxu0 0.0
  %9946 = vmatpush.msra.mxu0 0.0
  %9947 = vmatpush.msra.mxu0 0.0
  %9948 = vmatpush.msra.mxu0 0.0
  %9949 = vmatpush.msra.mxu0 0.0
  %9950 = vmatpush.msra.mxu0 %v9899
  %9951 = vmatpush.msra.mxu0 %v9896
  %9952 = vmatmul.f32.gmra.mxu0 %v9908
  %v9953 = vpop.f32.mrf.mxu0
  %v9954 = vadd.f32 0.0, %v9953
  %9955 = vmatmul.f32.gmra.mxu0 %v9911
  %v9956 = vpop.f32.mrf.mxu0
  %v9957 = vadd.f32 0.0, %v9956
  %9958 = vdwg.mxu0
  %9959 = vmatpush.msra.mxu0 0.0
  %9960 = vmatpush.msra.mxu0 0.0
  %9961 = vmatpush.msra.mxu0 0.0
  %9962 = vmatpush.msra.mxu0 0.0
  %9963 = vmatpush.msra.mxu0 0.0
  %9964 = vmatpush.msra.mxu0 0.0
  %9965 = vmatpush.msra.mxu0 0.0
  %9966 = vmatpush.msra.mxu0 0.0
  %9967 = vmatpush.msra.mxu0 0.0
  %9968 = vmatpush.msra.mxu0 0.0
  %9969 = vmatpush.msra.mxu0 0.0
  %9970 = vmatpush.msra.mxu0 0.0
  %9971 = vmatpush.msra.mxu0 0.0
  %9972 = vmatpush.msra.mxu0 0.0
  %9973 = vmatpush.msra.mxu0 %v9900
  %9974 = vmatpush.msra.mxu0 %v9897
  %9975 = vmatmul.f32.gmra.mxu0 %v9908
  %v9976 = vpop.f32.mrf.mxu0
  %v9977 = vadd.f32 0.0, %v9976
  %9978 = vmatmul.f32.gmra.mxu0 %v9911
  %v9979 = vpop.f32.mrf.mxu0
  %v9980 = vadd.f32 0.0, %v9979
  %9981 = vdwg.mxu0
  %v9982 = vadd.f32 %v9871, %v9931
  %v9983 = vadd.f32 %v9872, %v9954
  %v9984 = vadd.f32 %v9873, %v9977
  %v9985 = vadd.f32 %v9874, %v9934
  %v9986 = vadd.f32 %v9875, %v9957
  %v9987 = vadd.f32 %v9876, %v9980
  %v9988 = vld [vmem:[%s4407] sm:$0xff]
  %v9989 = vld [vmem:[%s4407 + $0x8] sm:$0x3]
  %9990 = vrot.lane.b32.xlu0 %v5685, 14
  %v9991 = vpop.permute.xlu0 %9990
  %9992 = vrot.lane.b32.xlu0 %v5686, 14
  %v9993 = vpop.permute.xlu0 %9992
  %9994 = vrot.lane.b32.xlu0 %v5687, 14
  %v9995 = vpop.permute.xlu0 %9994
  %9996 = vrot.lane.b32.xlu0 %v5693, 14
  %v9997 = vpop.permute.xlu0 %9996
  %9998 = vrot.lane.b32.xlu0 %v5688, 14
  %v9999 = vpop.permute.xlu0 %9998
  %10000 = vrot.lane.b32.xlu0 %v5689, 14
  %v10001 = vpop.permute.xlu0 %10000
  %10002 = vrot.lane.b32.xlu0 %v5690, 14
  %v10003 = vpop.permute.xlu0 %10002
  %10004 = vrot.lane.b32.xlu0 %v5694, 14
  %v10005 = vpop.permute.xlu0 %10004
  %v10006 = vsel %vm4426, %v9991, %v9993
  %v10007 = vsel %vm4426, %v9993, %v9995
  %v10008 = vsel %vm4426, %v9995, %v9997
  %v10009 = vsel %vm4426, %v9999, %v10001
  %v10010 = vsel %vm4426, %v10001, %v10003
  %v10011 = vsel %vm4426, %v10003, %v10005
  %v10019 = vsel %vm76, %v9988, 0
  %v10022 = vsel %vm76, %v9989, 0
  %10024 = vmatpush.msra.mxu0 0.0
  %10025 = vmatpush.msra.mxu0 0.0
  %10026 = vmatpush.msra.mxu0 0.0
  %10027 = vmatpush.msra.mxu0 0.0
  %10028 = vmatpush.msra.mxu0 0.0
  %10029 = vmatpush.msra.mxu0 0.0
  %10030 = vmatpush.msra.mxu0 0.0
  %10031 = vmatpush.msra.mxu0 0.0
  %10032 = vmatpush.msra.mxu0 0.0
  %10033 = vmatpush.msra.mxu0 0.0
  %10034 = vmatpush.msra.mxu0 0.0
  %10035 = vmatpush.msra.mxu0 0.0
  %10036 = vmatpush.msra.mxu0 0.0
  %10037 = vmatpush.msra.mxu0 0.0
  %10038 = vmatpush.msra.mxu0 %v10009
  %10039 = vmatpush.msra.mxu0 %v10006
  %10040 = vmatmul.f32.gmra.mxu0 %v10019
  %v10041 = vpop.f32.mrf.mxu0
  %v10042 = vadd.f32 0.0, %v10041
  %10043 = vmatmul.f32.gmra.mxu0 %v10022
  %v10044 = vpop.f32.mrf.mxu0
  %v10045 = vadd.f32 0.0, %v10044
  %10046 = vdwg.mxu0
  %10047 = vmatpush.msra.mxu0 0.0
  %10048 = vmatpush.msra.mxu0 0.0
  %10049 = vmatpush.msra.mxu0 0.0
  %10050 = vmatpush.msra.mxu0 0.0
  %10051 = vmatpush.msra.mxu0 0.0
  %10052 = vmatpush.msra.mxu0 0.0
  %10053 = vmatpush.msra.mxu0 0.0
  %10054 = vmatpush.msra.mxu0 0.0
  %10055 = vmatpush.msra.mxu0 0.0
  %10056 = vmatpush.msra.mxu0 0.0
  %10057 = vmatpush.msra.mxu0 0.0
  %10058 = vmatpush.msra.mxu0 0.0
  %10059 = vmatpush.msra.mxu0 0.0
  %10060 = vmatpush.msra.mxu0 0.0
  %10061 = vmatpush.msra.mxu0 %v10010
  %10062 = vmatpush.msra.mxu0 %v10007
  %10063 = vmatmul.f32.gmra.mxu0 %v10019
  %v10064 = vpop.f32.mrf.mxu0
  %v10065 = vadd.f32 0.0, %v10064
  %10066 = vmatmul.f32.gmra.mxu0 %v10022
  %v10067 = vpop.f32.mrf.mxu0
  %v10068 = vadd.f32 0.0, %v10067
  %10069 = vdwg.mxu0
  %10070 = vmatpush.msra.mxu0 0.0
  %10071 = vmatpush.msra.mxu0 0.0
  %10072 = vmatpush.msra.mxu0 0.0
  %10073 = vmatpush.msra.mxu0 0.0
  %10074 = vmatpush.msra.mxu0 0.0
  %10075 = vmatpush.msra.mxu0 0.0
  %10076 = vmatpush.msra.mxu0 0.0
  %10077 = vmatpush.msra.mxu0 0.0
  %10078 = vmatpush.msra.mxu0 0.0
  %10079 = vmatpush.msra.mxu0 0.0
  %10080 = vmatpush.msra.mxu0 0.0
  %10081 = vmatpush.msra.mxu0 0.0
  %10082 = vmatpush.msra.mxu0 0.0
  %10083 = vmatpush.msra.mxu0 0.0
  %10084 = vmatpush.msra.mxu0 %v10011
  %10085 = vmatpush.msra.mxu0 %v10008
  %10086 = vmatmul.f32.gmra.mxu0 %v10019
  %v10087 = vpop.f32.mrf.mxu0
  %v10088 = vadd.f32 0.0, %v10087
  %10089 = vmatmul.f32.gmra.mxu0 %v10022
  %v10090 = vpop.f32.mrf.mxu0
  %v10091 = vadd.f32 0.0, %v10090
  %10092 = vdwg.mxu0
  %v10093 = vadd.f32 %v9982, %v10042
  %v10094 = vadd.f32 %v9983, %v10065
  %v10095 = vadd.f32 %v9984, %v10088
  %v10096 = vadd.f32 %v9985, %v10045
  %v10097 = vadd.f32 %v9986, %v10068
  %v10098 = vadd.f32 %v9987, %v10091
  %v10099 = vld [vmem:[%s4520] sm:$0xff]
  %v10100 = vld [vmem:[%s4520 + $0x8] sm:$0x3]
  %10101 = vrot.lane.b32.xlu0 %v5685, 13
  %v10102 = vpop.permute.xlu0 %10101
  %10103 = vrot.lane.b32.xlu0 %v5686, 13
  %v10104 = vpop.permute.xlu0 %10103
  %10105 = vrot.lane.b32.xlu0 %v5687, 13
  %v10106 = vpop.permute.xlu0 %10105
  %10107 = vrot.lane.b32.xlu0 %v5693, 13
  %v10108 = vpop.permute.xlu0 %10107
  %10109 = vrot.lane.b32.xlu0 %v5688, 13
  %v10110 = vpop.permute.xlu0 %10109
  %10111 = vrot.lane.b32.xlu0 %v5689, 13
  %v10112 = vpop.permute.xlu0 %10111
  %10113 = vrot.lane.b32.xlu0 %v5690, 13
  %v10114 = vpop.permute.xlu0 %10113
  %10115 = vrot.lane.b32.xlu0 %v5694, 13
  %v10116 = vpop.permute.xlu0 %10115
  %v10117 = vsel %vm4539, %v10102, %v10104
  %v10118 = vsel %vm4539, %v10104, %v10106
  %v10119 = vsel %vm4539, %v10106, %v10108
  %v10120 = vsel %vm4539, %v10110, %v10112
  %v10121 = vsel %vm4539, %v10112, %v10114
  %v10122 = vsel %vm4539, %v10114, %v10116
  %v10130 = vsel %vm76, %v10099, 0
  %v10133 = vsel %vm76, %v10100, 0
  %10135 = vmatpush.msra.mxu0 0.0
  %10136 = vmatpush.msra.mxu0 0.0
  %10137 = vmatpush.msra.mxu0 0.0
  %10138 = vmatpush.msra.mxu0 0.0
  %10139 = vmatpush.msra.mxu0 0.0
  %10140 = vmatpush.msra.mxu0 0.0
  %10141 = vmatpush.msra.mxu0 0.0
  %10142 = vmatpush.msra.mxu0 0.0
  %10143 = vmatpush.msra.mxu0 0.0
  %10144 = vmatpush.msra.mxu0 0.0
  %10145 = vmatpush.msra.mxu0 0.0
  %10146 = vmatpush.msra.mxu0 0.0
  %10147 = vmatpush.msra.mxu0 0.0
  %10148 = vmatpush.msra.mxu0 0.0
  %10149 = vmatpush.msra.mxu0 %v10120
  %10150 = vmatpush.msra.mxu0 %v10117
  %10151 = vmatmul.f32.gmra.mxu0 %v10130
  %v10152 = vpop.f32.mrf.mxu0
  %v10153 = vadd.f32 0.0, %v10152
  %10154 = vmatmul.f32.gmra.mxu0 %v10133
  %v10155 = vpop.f32.mrf.mxu0
  %v10156 = vadd.f32 0.0, %v10155
  %10157 = vdwg.mxu0
  %10158 = vmatpush.msra.mxu0 0.0
  %10159 = vmatpush.msra.mxu0 0.0
  %10160 = vmatpush.msra.mxu0 0.0
  %10161 = vmatpush.msra.mxu0 0.0
  %10162 = vmatpush.msra.mxu0 0.0
  %10163 = vmatpush.msra.mxu0 0.0
  %10164 = vmatpush.msra.mxu0 0.0
  %10165 = vmatpush.msra.mxu0 0.0
  %10166 = vmatpush.msra.mxu0 0.0
  %10167 = vmatpush.msra.mxu0 0.0
  %10168 = vmatpush.msra.mxu0 0.0
  %10169 = vmatpush.msra.mxu0 0.0
  %10170 = vmatpush.msra.mxu0 0.0
  %10171 = vmatpush.msra.mxu0 0.0
  %10172 = vmatpush.msra.mxu0 %v10121
  %10173 = vmatpush.msra.mxu0 %v10118
  %10174 = vmatmul.f32.gmra.mxu0 %v10130
  %v10175 = vpop.f32.mrf.mxu0
  %v10176 = vadd.f32 0.0, %v10175
  %10177 = vmatmul.f32.gmra.mxu0 %v10133
  %v10178 = vpop.f32.mrf.mxu0
  %v10179 = vadd.f32 0.0, %v10178
  %10180 = vdwg.mxu0
  %10181 = vmatpush.msra.mxu0 0.0
  %10182 = vmatpush.msra.mxu0 0.0
  %10183 = vmatpush.msra.mxu0 0.0
  %10184 = vmatpush.msra.mxu0 0.0
  %10185 = vmatpush.msra.mxu0 0.0
  %10186 = vmatpush.msra.mxu0 0.0
  %10187 = vmatpush.msra.mxu0 0.0
  %10188 = vmatpush.msra.mxu0 0.0
  %10189 = vmatpush.msra.mxu0 0.0
  %10190 = vmatpush.msra.mxu0 0.0
  %10191 = vmatpush.msra.mxu0 0.0
  %10192 = vmatpush.msra.mxu0 0.0
  %10193 = vmatpush.msra.mxu0 0.0
  %10194 = vmatpush.msra.mxu0 0.0
  %10195 = vmatpush.msra.mxu0 %v10122
  %10196 = vmatpush.msra.mxu0 %v10119
  %10197 = vmatmul.f32.gmra.mxu0 %v10130
  %v10198 = vpop.f32.mrf.mxu0
  %v10199 = vadd.f32 0.0, %v10198
  %10200 = vmatmul.f32.gmra.mxu0 %v10133
  %v10201 = vpop.f32.mrf.mxu0
  %v10202 = vadd.f32 0.0, %v10201
  %10203 = vdwg.mxu0
  %v10204 = vadd.f32 %v10093, %v10153
  %v10205 = vadd.f32 %v10094, %v10176
  %v10206 = vadd.f32 %v10095, %v10199
  %v10207 = vadd.f32 %v10096, %v10156
  %v10208 = vadd.f32 %v10097, %v10179
  %v10209 = vadd.f32 %v10098, %v10202
  %v10210 = vld [vmem:[%s4633] sm:$0xff]
  %v10211 = vld [vmem:[%s4633 + $0x8] sm:$0x3]
  %10212 = vrot.lane.b32.xlu0 %v5685, 12
  %v10213 = vpop.permute.xlu0 %10212
  %10214 = vrot.lane.b32.xlu0 %v5686, 12
  %v10215 = vpop.permute.xlu0 %10214
  %10216 = vrot.lane.b32.xlu0 %v5687, 12
  %v10217 = vpop.permute.xlu0 %10216
  %10218 = vrot.lane.b32.xlu0 %v5693, 12
  %v10219 = vpop.permute.xlu0 %10218
  %10220 = vrot.lane.b32.xlu0 %v5688, 12
  %v10221 = vpop.permute.xlu0 %10220
  %10222 = vrot.lane.b32.xlu0 %v5689, 12
  %v10223 = vpop.permute.xlu0 %10222
  %10224 = vrot.lane.b32.xlu0 %v5690, 12
  %v10225 = vpop.permute.xlu0 %10224
  %10226 = vrot.lane.b32.xlu0 %v5694, 12
  %v10227 = vpop.permute.xlu0 %10226
  %v10228 = vsel %vm4652, %v10213, %v10215
  %v10229 = vsel %vm4652, %v10215, %v10217
  %v10230 = vsel %vm4652, %v10217, %v10219
  %v10231 = vsel %vm4652, %v10221, %v10223
  %v10232 = vsel %vm4652, %v10223, %v10225
  %v10233 = vsel %vm4652, %v10225, %v10227
  %v10241 = vsel %vm76, %v10210, 0
  %v10244 = vsel %vm76, %v10211, 0
  %10246 = vmatpush.msra.mxu0 0.0
  %10247 = vmatpush.msra.mxu0 0.0
  %10248 = vmatpush.msra.mxu0 0.0
  %10249 = vmatpush.msra.mxu0 0.0
  %10250 = vmatpush.msra.mxu0 0.0
  %10251 = vmatpush.msra.mxu0 0.0
  %10252 = vmatpush.msra.mxu0 0.0
  %10253 = vmatpush.msra.mxu0 0.0
  %10254 = vmatpush.msra.mxu0 0.0
  %10255 = vmatpush.msra.mxu0 0.0
  %10256 = vmatpush.msra.mxu0 0.0
  %10257 = vmatpush.msra.mxu0 0.0
  %10258 = vmatpush.msra.mxu0 0.0
  %10259 = vmatpush.msra.mxu0 0.0
  %10260 = vmatpush.msra.mxu0 %v10231
  %10261 = vmatpush.msra.mxu0 %v10228
  %10262 = vmatmul.f32.gmra.mxu0 %v10241
  %v10263 = vpop.f32.mrf.mxu0
  %v10264 = vadd.f32 0.0, %v10263
  %10265 = vmatmul.f32.gmra.mxu0 %v10244
  %v10266 = vpop.f32.mrf.mxu0
  %v10267 = vadd.f32 0.0, %v10266
  %10268 = vdwg.mxu0
  %10269 = vmatpush.msra.mxu0 0.0
  %10270 = vmatpush.msra.mxu0 0.0
  %10271 = vmatpush.msra.mxu0 0.0
  %10272 = vmatpush.msra.mxu0 0.0
  %10273 = vmatpush.msra.mxu0 0.0
  %10274 = vmatpush.msra.mxu0 0.0
  %10275 = vmatpush.msra.mxu0 0.0
  %10276 = vmatpush.msra.mxu0 0.0
  %10277 = vmatpush.msra.mxu0 0.0
  %10278 = vmatpush.msra.mxu0 0.0
  %10279 = vmatpush.msra.mxu0 0.0
  %10280 = vmatpush.msra.mxu0 0.0
  %10281 = vmatpush.msra.mxu0 0.0
  %10282 = vmatpush.msra.mxu0 0.0
  %10283 = vmatpush.msra.mxu0 %v10232
  %10284 = vmatpush.msra.mxu0 %v10229
  %10285 = vmatmul.f32.gmra.mxu0 %v10241
  %v10286 = vpop.f32.mrf.mxu0
  %v10287 = vadd.f32 0.0, %v10286
  %10288 = vmatmul.f32.gmra.mxu0 %v10244
  %v10289 = vpop.f32.mrf.mxu0
  %v10290 = vadd.f32 0.0, %v10289
  %10291 = vdwg.mxu0
  %10292 = vmatpush.msra.mxu0 0.0
  %10293 = vmatpush.msra.mxu0 0.0
  %10294 = vmatpush.msra.mxu0 0.0
  %10295 = vmatpush.msra.mxu0 0.0
  %10296 = vmatpush.msra.mxu0 0.0
  %10297 = vmatpush.msra.mxu0 0.0
  %10298 = vmatpush.msra.mxu0 0.0
  %10299 = vmatpush.msra.mxu0 0.0
  %10300 = vmatpush.msra.mxu0 0.0
  %10301 = vmatpush.msra.mxu0 0.0
  %10302 = vmatpush.msra.mxu0 0.0
  %10303 = vmatpush.msra.mxu0 0.0
  %10304 = vmatpush.msra.mxu0 0.0
  %10305 = vmatpush.msra.mxu0 0.0
  %10306 = vmatpush.msra.mxu0 %v10233
  %10307 = vmatpush.msra.mxu0 %v10230
  %10308 = vmatmul.f32.gmra.mxu0 %v10241
  %v10309 = vpop.f32.mrf.mxu0
  %v10310 = vadd.f32 0.0, %v10309
  %10311 = vmatmul.f32.gmra.mxu0 %v10244
  %v10312 = vpop.f32.mrf.mxu0
  %v10313 = vadd.f32 0.0, %v10312
  %10314 = vdwg.mxu0
  %v10315 = vadd.f32 %v10204, %v10264
  %v10316 = vadd.f32 %v10205, %v10287
  %v10317 = vadd.f32 %v10206, %v10310
  %v10318 = vadd.f32 %v10207, %v10267
  %v10319 = vadd.f32 %v10208, %v10290
  %v10320 = vadd.f32 %v10209, %v10313
  %v10321 = vld [vmem:[%s4746] sm:$0xff]
  %v10322 = vld [vmem:[%s4746 + $0x8] sm:$0x3]
  %v10323 = vld [vmem:[%s5684 + $0x8] sm:$0xff]
  %v10324 = vld [vmem:[%s5684 + $0x10] sm:$0xff]
  %v10325 = vld [vmem:[%s5684 + $0x18] sm:$0xff]
  %v10326 = vld [vmem:[%s5684 + $0x20] sm:$0xff]
  %v10327 = vld [vmem:[%s5684 + $0x30] sm:$0xff]
  %v10328 = vld [vmem:[%s5684 + $0x38] sm:$0xff]
  %v10329 = vld [vmem:[%s5684 + $0x40] sm:$0xff]
  %v10330 = vld [vmem:[%s5684 + $0x48] sm:$0xff]
  %10339 = vrot.lane.b32.xlu0 %v10323, 124
  %v10340 = vpop.permute.xlu0 %10339
  %10341 = vrot.lane.b32.xlu0 %v10324, 124
  %v10342 = vpop.permute.xlu0 %10341
  %10343 = vrot.lane.b32.xlu0 %v10325, 124
  %v10344 = vpop.permute.xlu0 %10343
  %10345 = vrot.lane.b32.xlu0 %v10326, 124
  %v10346 = vpop.permute.xlu0 %10345
  %10347 = vrot.lane.b32.xlu0 %v10327, 124
  %v10348 = vpop.permute.xlu0 %10347
  %10349 = vrot.lane.b32.xlu0 %v10328, 124
  %v10350 = vpop.permute.xlu0 %10349
  %10351 = vrot.lane.b32.xlu0 %v10329, 124
  %v10352 = vpop.permute.xlu0 %10351
  %10353 = vrot.lane.b32.xlu0 %v10330, 124
  %v10354 = vpop.permute.xlu0 %10353
  %v10355 = vsel %vm472, %v10340, %v10342
  %v10356 = vsel %vm472, %v10342, %v10344
  %v10357 = vsel %vm472, %v10344, %v10346
  %v10358 = vsel %vm472, %v10348, %v10350
  %v10359 = vsel %vm472, %v10350, %v10352
  %v10360 = vsel %vm472, %v10352, %v10354
  %v10368 = vsel %vm76, %v10321, 0
  %v10371 = vsel %vm76, %v10322, 0
  %10373 = vmatpush.msra.mxu0 0.0
  %10374 = vmatpush.msra.mxu0 0.0
  %10375 = vmatpush.msra.mxu0 0.0
  %10376 = vmatpush.msra.mxu0 0.0
  %10377 = vmatpush.msra.mxu0 0.0
  %10378 = vmatpush.msra.mxu0 0.0
  %10379 = vmatpush.msra.mxu0 0.0
  %10380 = vmatpush.msra.mxu0 0.0
  %10381 = vmatpush.msra.mxu0 0.0
  %10382 = vmatpush.msra.mxu0 0.0
  %10383 = vmatpush.msra.mxu0 0.0
  %10384 = vmatpush.msra.mxu0 0.0
  %10385 = vmatpush.msra.mxu0 0.0
  %10386 = vmatpush.msra.mxu0 0.0
  %10387 = vmatpush.msra.mxu0 %v10358
  %10388 = vmatpush.msra.mxu0 %v10355
  %10389 = vmatmul.f32.gmra.mxu0 %v10368
  %v10390 = vpop.f32.mrf.mxu0
  %v10391 = vadd.f32 0.0, %v10390
  %10392 = vmatmul.f32.gmra.mxu0 %v10371
  %v10393 = vpop.f32.mrf.mxu0
  %v10394 = vadd.f32 0.0, %v10393
  %10395 = vdwg.mxu0
  %10396 = vmatpush.msra.mxu0 0.0
  %10397 = vmatpush.msra.mxu0 0.0
  %10398 = vmatpush.msra.mxu0 0.0
  %10399 = vmatpush.msra.mxu0 0.0
  %10400 = vmatpush.msra.mxu0 0.0
  %10401 = vmatpush.msra.mxu0 0.0
  %10402 = vmatpush.msra.mxu0 0.0
  %10403 = vmatpush.msra.mxu0 0.0
  %10404 = vmatpush.msra.mxu0 0.0
  %10405 = vmatpush.msra.mxu0 0.0
  %10406 = vmatpush.msra.mxu0 0.0
  %10407 = vmatpush.msra.mxu0 0.0
  %10408 = vmatpush.msra.mxu0 0.0
  %10409 = vmatpush.msra.mxu0 0.0
  %10410 = vmatpush.msra.mxu0 %v10359
  %10411 = vmatpush.msra.mxu0 %v10356
  %10412 = vmatmul.f32.gmra.mxu0 %v10368
  %v10413 = vpop.f32.mrf.mxu0
  %v10414 = vadd.f32 0.0, %v10413
  %10415 = vmatmul.f32.gmra.mxu0 %v10371
  %v10416 = vpop.f32.mrf.mxu0
  %v10417 = vadd.f32 0.0, %v10416
  %10418 = vdwg.mxu0
  %10419 = vmatpush.msra.mxu0 0.0
  %10420 = vmatpush.msra.mxu0 0.0
  %10421 = vmatpush.msra.mxu0 0.0
  %10422 = vmatpush.msra.mxu0 0.0
  %10423 = vmatpush.msra.mxu0 0.0
  %10424 = vmatpush.msra.mxu0 0.0
  %10425 = vmatpush.msra.mxu0 0.0
  %10426 = vmatpush.msra.mxu0 0.0
  %10427 = vmatpush.msra.mxu0 0.0
  %10428 = vmatpush.msra.mxu0 0.0
  %10429 = vmatpush.msra.mxu0 0.0
  %10430 = vmatpush.msra.mxu0 0.0
  %10431 = vmatpush.msra.mxu0 0.0
  %10432 = vmatpush.msra.mxu0 0.0
  %10433 = vmatpush.msra.mxu0 %v10360
  %10434 = vmatpush.msra.mxu0 %v10357
  %10435 = vmatmul.f32.gmra.mxu0 %v10368
  %v10436 = vpop.f32.mrf.mxu0
  %v10437 = vadd.f32 0.0, %v10436
  %10438 = vmatmul.f32.gmra.mxu0 %v10371
  %v10439 = vpop.f32.mrf.mxu0
  %v10440 = vadd.f32 0.0, %v10439
  %10441 = vdwg.mxu0
  %v10442 = vadd.f32 %v10315, %v10391
  %v10443 = vadd.f32 %v10316, %v10414
  %v10444 = vadd.f32 %v10317, %v10437
  %v10445 = vadd.f32 %v10318, %v10394
  %v10446 = vadd.f32 %v10319, %v10417
  %v10447 = vadd.f32 %v10320, %v10440
  %v10448 = vld [vmem:[%s4874] sm:$0xff]
  %v10449 = vld [vmem:[%s4874 + $0x8] sm:$0x3]
  %10450 = vrot.lane.b32.xlu0 %v10323, 123
  %v10451 = vpop.permute.xlu0 %10450
  %10452 = vrot.lane.b32.xlu0 %v10324, 123
  %v10453 = vpop.permute.xlu0 %10452
  %10454 = vrot.lane.b32.xlu0 %v10325, 123
  %v10455 = vpop.permute.xlu0 %10454
  %10456 = vrot.lane.b32.xlu0 %v10326, 123
  %v10457 = vpop.permute.xlu0 %10456
  %10458 = vrot.lane.b32.xlu0 %v10327, 123
  %v10459 = vpop.permute.xlu0 %10458
  %10460 = vrot.lane.b32.xlu0 %v10328, 123
  %v10461 = vpop.permute.xlu0 %10460
  %10462 = vrot.lane.b32.xlu0 %v10329, 123
  %v10463 = vpop.permute.xlu0 %10462
  %10464 = vrot.lane.b32.xlu0 %v10330, 123
  %v10465 = vpop.permute.xlu0 %10464
  %v10466 = vsel %vm585, %v10451, %v10453
  %v10467 = vsel %vm585, %v10453, %v10455
  %v10468 = vsel %vm585, %v10455, %v10457
  %v10469 = vsel %vm585, %v10459, %v10461
  %v10470 = vsel %vm585, %v10461, %v10463
  %v10471 = vsel %vm585, %v10463, %v10465
  %v10479 = vsel %vm76, %v10448, 0
  %v10482 = vsel %vm76, %v10449, 0
  %10484 = vmatpush.msra.mxu0 0.0
  %10485 = vmatpush.msra.mxu0 0.0
  %10486 = vmatpush.msra.mxu0 0.0
  %10487 = vmatpush.msra.mxu0 0.0
  %10488 = vmatpush.msra.mxu0 0.0
  %10489 = vmatpush.msra.mxu0 0.0
  %10490 = vmatpush.msra.mxu0 0.0
  %10491 = vmatpush.msra.mxu0 0.0
  %10492 = vmatpush.msra.mxu0 0.0
  %10493 = vmatpush.msra.mxu0 0.0
  %10494 = vmatpush.msra.mxu0 0.0
  %10495 = vmatpush.msra.mxu0 0.0
  %10496 = vmatpush.msra.mxu0 0.0
  %10497 = vmatpush.msra.mxu0 0.0
  %10498 = vmatpush.msra.mxu0 %v10469
  %10499 = vmatpush.msra.mxu0 %v10466
  %10500 = vmatmul.f32.gmra.mxu0 %v10479
  %v10501 = vpop.f32.mrf.mxu0
  %v10502 = vadd.f32 0.0, %v10501
  %10503 = vmatmul.f32.gmra.mxu0 %v10482
  %v10504 = vpop.f32.mrf.mxu0
  %v10505 = vadd.f32 0.0, %v10504
  %10506 = vdwg.mxu0
  %10507 = vmatpush.msra.mxu0 0.0
  %10508 = vmatpush.msra.mxu0 0.0
  %10509 = vmatpush.msra.mxu0 0.0
  %10510 = vmatpush.msra.mxu0 0.0
  %10511 = vmatpush.msra.mxu0 0.0
  %10512 = vmatpush.msra.mxu0 0.0
  %10513 = vmatpush.msra.mxu0 0.0
  %10514 = vmatpush.msra.mxu0 0.0
  %10515 = vmatpush.msra.mxu0 0.0
  %10516 = vmatpush.msra.mxu0 0.0
  %10517 = vmatpush.msra.mxu0 0.0
  %10518 = vmatpush.msra.mxu0 0.0
  %10519 = vmatpush.msra.mxu0 0.0
  %10520 = vmatpush.msra.mxu0 0.0
  %10521 = vmatpush.msra.mxu0 %v10470
  %10522 = vmatpush.msra.mxu0 %v10467
  %10523 = vmatmul.f32.gmra.mxu0 %v10479
  %v10524 = vpop.f32.mrf.mxu0
  %v10525 = vadd.f32 0.0, %v10524
  %10526 = vmatmul.f32.gmra.mxu0 %v10482
  %v10527 = vpop.f32.mrf.mxu0
  %v10528 = vadd.f32 0.0, %v10527
  %10529 = vdwg.mxu0
  %10530 = vmatpush.msra.mxu0 0.0
  %10531 = vmatpush.msra.mxu0 0.0
  %10532 = vmatpush.msra.mxu0 0.0
  %10533 = vmatpush.msra.mxu0 0.0
  %10534 = vmatpush.msra.mxu0 0.0
  %10535 = vmatpush.msra.mxu0 0.0
  %10536 = vmatpush.msra.mxu0 0.0
  %10537 = vmatpush.msra.mxu0 0.0
  %10538 = vmatpush.msra.mxu0 0.0
  %10539 = vmatpush.msra.mxu0 0.0
  %10540 = vmatpush.msra.mxu0 0.0
  %10541 = vmatpush.msra.mxu0 0.0
  %10542 = vmatpush.msra.mxu0 0.0
  %10543 = vmatpush.msra.mxu0 0.0
  %10544 = vmatpush.msra.mxu0 %v10471
  %10545 = vmatpush.msra.mxu0 %v10468
  %10546 = vmatmul.f32.gmra.mxu0 %v10479
  %v10547 = vpop.f32.mrf.mxu0
  %v10548 = vadd.f32 0.0, %v10547
  %10549 = vmatmul.f32.gmra.mxu0 %v10482
  %v10550 = vpop.f32.mrf.mxu0
  %v10551 = vadd.f32 0.0, %v10550
  %10552 = vdwg.mxu0
  %v10553 = vadd.f32 %v10442, %v10502
  %v10554 = vadd.f32 %v10443, %v10525
  %v10555 = vadd.f32 %v10444, %v10548
  %v10556 = vadd.f32 %v10445, %v10505
  %v10557 = vadd.f32 %v10446, %v10528
  %v10558 = vadd.f32 %v10447, %v10551
  %v10559 = vld [vmem:[%s4986] sm:$0xff]
  %v10560 = vld [vmem:[%s4986 + $0x8] sm:$0x3]
  %10561 = vrot.lane.b32.xlu0 %v10323, 122
  %v10562 = vpop.permute.xlu0 %10561
  %10563 = vrot.lane.b32.xlu0 %v10324, 122
  %v10564 = vpop.permute.xlu0 %10563
  %10565 = vrot.lane.b32.xlu0 %v10325, 122
  %v10566 = vpop.permute.xlu0 %10565
  %10567 = vrot.lane.b32.xlu0 %v10326, 122
  %v10568 = vpop.permute.xlu0 %10567
  %10569 = vrot.lane.b32.xlu0 %v10327, 122
  %v10570 = vpop.permute.xlu0 %10569
  %10571 = vrot.lane.b32.xlu0 %v10328, 122
  %v10572 = vpop.permute.xlu0 %10571
  %10573 = vrot.lane.b32.xlu0 %v10329, 122
  %v10574 = vpop.permute.xlu0 %10573
  %10575 = vrot.lane.b32.xlu0 %v10330, 122
  %v10576 = vpop.permute.xlu0 %10575
  %v10577 = vsel %vm698, %v10562, %v10564
  %v10578 = vsel %vm698, %v10564, %v10566
  %v10579 = vsel %vm698, %v10566, %v10568
  %v10580 = vsel %vm698, %v10570, %v10572
  %v10581 = vsel %vm698, %v10572, %v10574
  %v10582 = vsel %vm698, %v10574, %v10576
  %v10590 = vsel %vm76, %v10559, 0
  %v10593 = vsel %vm76, %v10560, 0
  %10595 = vmatpush.msra.mxu0 0.0
  %10596 = vmatpush.msra.mxu0 0.0
  %10597 = vmatpush.msra.mxu0 0.0
  %10598 = vmatpush.msra.mxu0 0.0
  %10599 = vmatpush.msra.mxu0 0.0
  %10600 = vmatpush.msra.mxu0 0.0
  %10601 = vmatpush.msra.mxu0 0.0
  %10602 = vmatpush.msra.mxu0 0.0
  %10603 = vmatpush.msra.mxu0 0.0
  %10604 = vmatpush.msra.mxu0 0.0
  %10605 = vmatpush.msra.mxu0 0.0
  %10606 = vmatpush.msra.mxu0 0.0
  %10607 = vmatpush.msra.mxu0 0.0
  %10608 = vmatpush.msra.mxu0 0.0
  %10609 = vmatpush.msra.mxu0 %v10580
  %10610 = vmatpush.msra.mxu0 %v10577
  %10611 = vmatmul.f32.gmra.mxu0 %v10590
  %v10612 = vpop.f32.mrf.mxu0
  %v10613 = vadd.f32 0.0, %v10612
  %10614 = vmatmul.f32.gmra.mxu0 %v10593
  %v10615 = vpop.f32.mrf.mxu0
  %v10616 = vadd.f32 0.0, %v10615
  %10617 = vdwg.mxu0
  %10618 = vmatpush.msra.mxu0 0.0
  %10619 = vmatpush.msra.mxu0 0.0
  %10620 = vmatpush.msra.mxu0 0.0
  %10621 = vmatpush.msra.mxu0 0.0
  %10622 = vmatpush.msra.mxu0 0.0
  %10623 = vmatpush.msra.mxu0 0.0
  %10624 = vmatpush.msra.mxu0 0.0
  %10625 = vmatpush.msra.mxu0 0.0
  %10626 = vmatpush.msra.mxu0 0.0
  %10627 = vmatpush.msra.mxu0 0.0
  %10628 = vmatpush.msra.mxu0 0.0
  %10629 = vmatpush.msra.mxu0 0.0
  %10630 = vmatpush.msra.mxu0 0.0
  %10631 = vmatpush.msra.mxu0 0.0
  %10632 = vmatpush.msra.mxu0 %v10581
  %10633 = vmatpush.msra.mxu0 %v10578
  %10634 = vmatmul.f32.gmra.mxu0 %v10590
  %v10635 = vpop.f32.mrf.mxu0
  %v10636 = vadd.f32 0.0, %v10635
  %10637 = vmatmul.f32.gmra.mxu0 %v10593
  %v10638 = vpop.f32.mrf.mxu0
  %v10639 = vadd.f32 0.0, %v10638
  %10640 = vdwg.mxu0
  %10641 = vmatpush.msra.mxu0 0.0
  %10642 = vmatpush.msra.mxu0 0.0
  %10643 = vmatpush.msra.mxu0 0.0
  %10644 = vmatpush.msra.mxu0 0.0
  %10645 = vmatpush.msra.mxu0 0.0
  %10646 = vmatpush.msra.mxu0 0.0
  %10647 = vmatpush.msra.mxu0 0.0
  %10648 = vmatpush.msra.mxu0 0.0
  %10649 = vmatpush.msra.mxu0 0.0
  %10650 = vmatpush.msra.mxu0 0.0
  %10651 = vmatpush.msra.mxu0 0.0
  %10652 = vmatpush.msra.mxu0 0.0
  %10653 = vmatpush.msra.mxu0 0.0
  %10654 = vmatpush.msra.mxu0 0.0
  %10655 = vmatpush.msra.mxu0 %v10582
  %10656 = vmatpush.msra.mxu0 %v10579
  %10657 = vmatmul.f32.gmra.mxu0 %v10590
  %v10658 = vpop.f32.mrf.mxu0
  %v10659 = vadd.f32 0.0, %v10658
  %10660 = vmatmul.f32.gmra.mxu0 %v10593
  %v10661 = vpop.f32.mrf.mxu0
  %v10662 = vadd.f32 0.0, %v10661
  %10663 = vdwg.mxu0
  %v10664 = vadd.f32 %v10553, %v10613
  %v10665 = vadd.f32 %v10554, %v10636
  %v10666 = vadd.f32 %v10555, %v10659
  %v10667 = vadd.f32 %v10556, %v10616
  %v10668 = vadd.f32 %v10557, %v10639
  %v10669 = vadd.f32 %v10558, %v10662
  %v10670 = vld [vmem:[%s5098] sm:$0xff]
  %v10671 = vld [vmem:[%s5098 + $0x8] sm:$0x3]
  %10672 = vrot.lane.b32.xlu0 %v10323, 121
  %v10673 = vpop.permute.xlu0 %10672
  %10674 = vrot.lane.b32.xlu0 %v10324, 121
  %v10675 = vpop.permute.xlu0 %10674
  %10676 = vrot.lane.b32.xlu0 %v10325, 121
  %v10677 = vpop.permute.xlu0 %10676
  %10678 = vrot.lane.b32.xlu0 %v10326, 121
  %v10679 = vpop.permute.xlu0 %10678
  %10680 = vrot.lane.b32.xlu0 %v10327, 121
  %v10681 = vpop.permute.xlu0 %10680
  %10682 = vrot.lane.b32.xlu0 %v10328, 121
  %v10683 = vpop.permute.xlu0 %10682
  %10684 = vrot.lane.b32.xlu0 %v10329, 121
  %v10685 = vpop.permute.xlu0 %10684
  %10686 = vrot.lane.b32.xlu0 %v10330, 121
  %v10687 = vpop.permute.xlu0 %10686
  %v10688 = vsel %vm5117, %v10673, %v10675
  %v10689 = vsel %vm5117, %v10675, %v10677
  %v10690 = vsel %vm5117, %v10677, %v10679
  %v10691 = vsel %vm5117, %v10681, %v10683
  %v10692 = vsel %vm5117, %v10683, %v10685
  %v10693 = vsel %vm5117, %v10685, %v10687
  %v10701 = vsel %vm76, %v10670, 0
  %v10704 = vsel %vm76, %v10671, 0
  %10706 = vmatpush.msra.mxu0 0.0
  %10707 = vmatpush.msra.mxu0 0.0
  %10708 = vmatpush.msra.mxu0 0.0
  %10709 = vmatpush.msra.mxu0 0.0
  %10710 = vmatpush.msra.mxu0 0.0
  %10711 = vmatpush.msra.mxu0 0.0
  %10712 = vmatpush.msra.mxu0 0.0
  %10713 = vmatpush.msra.mxu0 0.0
  %10714 = vmatpush.msra.mxu0 0.0
  %10715 = vmatpush.msra.mxu0 0.0
  %10716 = vmatpush.msra.mxu0 0.0
  %10717 = vmatpush.msra.mxu0 0.0
  %10718 = vmatpush.msra.mxu0 0.0
  %10719 = vmatpush.msra.mxu0 0.0
  %10720 = vmatpush.msra.mxu0 %v10691
  %10721 = vmatpush.msra.mxu0 %v10688
  %10722 = vmatmul.f32.gmra.mxu0 %v10701
  %v10723 = vpop.f32.mrf.mxu0
  %v10724 = vadd.f32 0.0, %v10723
  %10725 = vmatmul.f32.gmra.mxu0 %v10704
  %v10726 = vpop.f32.mrf.mxu0
  %v10727 = vadd.f32 0.0, %v10726
  %10728 = vdwg.mxu0
  %10729 = vmatpush.msra.mxu0 0.0
  %10730 = vmatpush.msra.mxu0 0.0
  %10731 = vmatpush.msra.mxu0 0.0
  %10732 = vmatpush.msra.mxu0 0.0
  %10733 = vmatpush.msra.mxu0 0.0
  %10734 = vmatpush.msra.mxu0 0.0
  %10735 = vmatpush.msra.mxu0 0.0
  %10736 = vmatpush.msra.mxu0 0.0
  %10737 = vmatpush.msra.mxu0 0.0
  %10738 = vmatpush.msra.mxu0 0.0
  %10739 = vmatpush.msra.mxu0 0.0
  %10740 = vmatpush.msra.mxu0 0.0
  %10741 = vmatpush.msra.mxu0 0.0
  %10742 = vmatpush.msra.mxu0 0.0
  %10743 = vmatpush.msra.mxu0 %v10692
  %10744 = vmatpush.msra.mxu0 %v10689
  %10745 = vmatmul.f32.gmra.mxu0 %v10701
  %v10746 = vpop.f32.mrf.mxu0
  %v10747 = vadd.f32 0.0, %v10746
  %10748 = vmatmul.f32.gmra.mxu0 %v10704
  %v10749 = vpop.f32.mrf.mxu0
  %v10750 = vadd.f32 0.0, %v10749
  %10751 = vdwg.mxu0
  %10752 = vmatpush.msra.mxu0 0.0
  %10753 = vmatpush.msra.mxu0 0.0
  %10754 = vmatpush.msra.mxu0 0.0
  %10755 = vmatpush.msra.mxu0 0.0
  %10756 = vmatpush.msra.mxu0 0.0
  %10757 = vmatpush.msra.mxu0 0.0
  %10758 = vmatpush.msra.mxu0 0.0
  %10759 = vmatpush.msra.mxu0 0.0
  %10760 = vmatpush.msra.mxu0 0.0
  %10761 = vmatpush.msra.mxu0 0.0
  %10762 = vmatpush.msra.mxu0 0.0
  %10763 = vmatpush.msra.mxu0 0.0
  %10764 = vmatpush.msra.mxu0 0.0
  %10765 = vmatpush.msra.mxu0 0.0
  %10766 = vmatpush.msra.mxu0 %v10693
  %10767 = vmatpush.msra.mxu0 %v10690
  %10768 = vmatmul.f32.gmra.mxu0 %v10701
  %v10769 = vpop.f32.mrf.mxu0
  %v10770 = vadd.f32 0.0, %v10769
  %10771 = vmatmul.f32.gmra.mxu0 %v10704
  %v10772 = vpop.f32.mrf.mxu0
  %v10773 = vadd.f32 0.0, %v10772
  %10774 = vdwg.mxu0
  %v10775 = vadd.f32 %v10664, %v10724
  %v10776 = vadd.f32 %v10665, %v10747
  %v10777 = vadd.f32 %v10666, %v10770
  %v10778 = vadd.f32 %v10667, %v10727
  %v10779 = vadd.f32 %v10668, %v10750
  %v10780 = vadd.f32 %v10669, %v10773
  %v10781 = vld [vmem:[%s5211] sm:$0xff]
  %v10782 = vld [vmem:[%s5211 + $0x8] sm:$0x3]
  %10783 = vrot.lane.b32.xlu0 %v10323, 120
  %v10784 = vpop.permute.xlu0 %10783
  %10785 = vrot.lane.b32.xlu0 %v10324, 120
  %v10786 = vpop.permute.xlu0 %10785
  %10787 = vrot.lane.b32.xlu0 %v10325, 120
  %v10788 = vpop.permute.xlu0 %10787
  %10789 = vrot.lane.b32.xlu0 %v10326, 120
  %v10790 = vpop.permute.xlu0 %10789
  %10791 = vrot.lane.b32.xlu0 %v10327, 120
  %v10792 = vpop.permute.xlu0 %10791
  %10793 = vrot.lane.b32.xlu0 %v10328, 120
  %v10794 = vpop.permute.xlu0 %10793
  %10795 = vrot.lane.b32.xlu0 %v10329, 120
  %v10796 = vpop.permute.xlu0 %10795
  %10797 = vrot.lane.b32.xlu0 %v10330, 120
  %v10798 = vpop.permute.xlu0 %10797
  %v10799 = vsel %vm5230, %v10784, %v10786
  %v10800 = vsel %vm5230, %v10786, %v10788
  %v10801 = vsel %vm5230, %v10788, %v10790
  %v10802 = vsel %vm5230, %v10792, %v10794
  %v10803 = vsel %vm5230, %v10794, %v10796
  %v10804 = vsel %vm5230, %v10796, %v10798
  %v10812 = vsel %vm76, %v10781, 0
  %v10815 = vsel %vm76, %v10782, 0
  %10817 = vmatpush.msra.mxu0 0.0
  %10818 = vmatpush.msra.mxu0 0.0
  %10819 = vmatpush.msra.mxu0 0.0
  %10820 = vmatpush.msra.mxu0 0.0
  %10821 = vmatpush.msra.mxu0 0.0
  %10822 = vmatpush.msra.mxu0 0.0
  %10823 = vmatpush.msra.mxu0 0.0
  %10824 = vmatpush.msra.mxu0 0.0
  %10825 = vmatpush.msra.mxu0 0.0
  %10826 = vmatpush.msra.mxu0 0.0
  %10827 = vmatpush.msra.mxu0 0.0
  %10828 = vmatpush.msra.mxu0 0.0
  %10829 = vmatpush.msra.mxu0 0.0
  %10830 = vmatpush.msra.mxu0 0.0
  %10831 = vmatpush.msra.mxu0 %v10802
  %10832 = vmatpush.msra.mxu0 %v10799
  %10833 = vmatmul.f32.gmra.mxu0 %v10812
  %v10834 = vpop.f32.mrf.mxu0
  %v10835 = vadd.f32 0.0, %v10834
  %10836 = vmatmul.f32.gmra.mxu0 %v10815
  %v10837 = vpop.f32.mrf.mxu0
  %v10838 = vadd.f32 0.0, %v10837
  %10839 = vdwg.mxu0
  %10840 = vmatpush.msra.mxu0 0.0
  %10841 = vmatpush.msra.mxu0 0.0
  %10842 = vmatpush.msra.mxu0 0.0
  %10843 = vmatpush.msra.mxu0 0.0
  %10844 = vmatpush.msra.mxu0 0.0
  %10845 = vmatpush.msra.mxu0 0.0
  %10846 = vmatpush.msra.mxu0 0.0
  %10847 = vmatpush.msra.mxu0 0.0
  %10848 = vmatpush.msra.mxu0 0.0
  %10849 = vmatpush.msra.mxu0 0.0
  %10850 = vmatpush.msra.mxu0 0.0
  %10851 = vmatpush.msra.mxu0 0.0
  %10852 = vmatpush.msra.mxu0 0.0
  %10853 = vmatpush.msra.mxu0 0.0
  %10854 = vmatpush.msra.mxu0 %v10803
  %10855 = vmatpush.msra.mxu0 %v10800
  %10856 = vmatmul.f32.gmra.mxu0 %v10812
  %v10857 = vpop.f32.mrf.mxu0
  %v10858 = vadd.f32 0.0, %v10857
  %10859 = vmatmul.f32.gmra.mxu0 %v10815
  %v10860 = vpop.f32.mrf.mxu0
  %v10861 = vadd.f32 0.0, %v10860
  %10862 = vdwg.mxu0
  %10863 = vmatpush.msra.mxu0 0.0
  %10864 = vmatpush.msra.mxu0 0.0
  %10865 = vmatpush.msra.mxu0 0.0
  %10866 = vmatpush.msra.mxu0 0.0
  %10867 = vmatpush.msra.mxu0 0.0
  %10868 = vmatpush.msra.mxu0 0.0
  %10869 = vmatpush.msra.mxu0 0.0
  %10870 = vmatpush.msra.mxu0 0.0
  %10871 = vmatpush.msra.mxu0 0.0
  %10872 = vmatpush.msra.mxu0 0.0
  %10873 = vmatpush.msra.mxu0 0.0
  %10874 = vmatpush.msra.mxu0 0.0
  %10875 = vmatpush.msra.mxu0 0.0
  %10876 = vmatpush.msra.mxu0 0.0
  %10877 = vmatpush.msra.mxu0 %v10804
  %10878 = vmatpush.msra.mxu0 %v10801
  %10879 = vmatmul.f32.gmra.mxu0 %v10812
  %v10880 = vpop.f32.mrf.mxu0
  %v10881 = vadd.f32 0.0, %v10880
  %10882 = vmatmul.f32.gmra.mxu0 %v10815
  %v10883 = vpop.f32.mrf.mxu0
  %v10884 = vadd.f32 0.0, %v10883
  %10885 = vdwg.mxu0
  %v10886 = vadd.f32 %v10775, %v10835
  %v10887 = vadd.f32 %v10776, %v10858
  %v10888 = vadd.f32 %v10777, %v10881
  %v10889 = vadd.f32 %v10778, %v10838
  %v10890 = vadd.f32 %v10779, %v10861
  %v10891 = vadd.f32 %v10780, %v10884
  %v10892 = vld [vmem:[%s5324] sm:$0xff]
  %v10893 = vld [vmem:[%s5324 + $0x8] sm:$0x3]
  %10894 = vrot.lane.b32.xlu0 %v10323, 119
  %v10895 = vpop.permute.xlu0 %10894
  %10896 = vrot.lane.b32.xlu0 %v10324, 119
  %v10897 = vpop.permute.xlu0 %10896
  %10898 = vrot.lane.b32.xlu0 %v10325, 119
  %v10899 = vpop.permute.xlu0 %10898
  %10900 = vrot.lane.b32.xlu0 %v10326, 119
  %v10901 = vpop.permute.xlu0 %10900
  %10902 = vrot.lane.b32.xlu0 %v10327, 119
  %v10903 = vpop.permute.xlu0 %10902
  %10904 = vrot.lane.b32.xlu0 %v10328, 119
  %v10905 = vpop.permute.xlu0 %10904
  %10906 = vrot.lane.b32.xlu0 %v10329, 119
  %v10907 = vpop.permute.xlu0 %10906
  %10908 = vrot.lane.b32.xlu0 %v10330, 119
  %v10909 = vpop.permute.xlu0 %10908
  %v10910 = vsel %vm5343, %v10895, %v10897
  %v10911 = vsel %vm5343, %v10897, %v10899
  %v10912 = vsel %vm5343, %v10899, %v10901
  %v10913 = vsel %vm5343, %v10903, %v10905
  %v10914 = vsel %vm5343, %v10905, %v10907
  %v10915 = vsel %vm5343, %v10907, %v10909
  %v10923 = vsel %vm76, %v10892, 0
  %v10926 = vsel %vm76, %v10893, 0
  %10928 = vmatpush.msra.mxu0 0.0
  %10929 = vmatpush.msra.mxu0 0.0
  %10930 = vmatpush.msra.mxu0 0.0
  %10931 = vmatpush.msra.mxu0 0.0
  %10932 = vmatpush.msra.mxu0 0.0
  %10933 = vmatpush.msra.mxu0 0.0
  %10934 = vmatpush.msra.mxu0 0.0
  %10935 = vmatpush.msra.mxu0 0.0
  %10936 = vmatpush.msra.mxu0 0.0
  %10937 = vmatpush.msra.mxu0 0.0
  %10938 = vmatpush.msra.mxu0 0.0
  %10939 = vmatpush.msra.mxu0 0.0
  %10940 = vmatpush.msra.mxu0 0.0
  %10941 = vmatpush.msra.mxu0 0.0
  %10942 = vmatpush.msra.mxu0 %v10913
  %10943 = vmatpush.msra.mxu0 %v10910
  %10944 = vmatmul.f32.gmra.mxu0 %v10923
  %v10945 = vpop.f32.mrf.mxu0
  %v10946 = vadd.f32 0.0, %v10945
  %10947 = vmatmul.f32.gmra.mxu0 %v10926
  %v10948 = vpop.f32.mrf.mxu0
  %v10949 = vadd.f32 0.0, %v10948
  %10950 = vdwg.mxu0
  %10951 = vmatpush.msra.mxu0 0.0
  %10952 = vmatpush.msra.mxu0 0.0
  %10953 = vmatpush.msra.mxu0 0.0
  %10954 = vmatpush.msra.mxu0 0.0
  %10955 = vmatpush.msra.mxu0 0.0
  %10956 = vmatpush.msra.mxu0 0.0
  %10957 = vmatpush.msra.mxu0 0.0
  %10958 = vmatpush.msra.mxu0 0.0
  %10959 = vmatpush.msra.mxu0 0.0
  %10960 = vmatpush.msra.mxu0 0.0
  %10961 = vmatpush.msra.mxu0 0.0
  %10962 = vmatpush.msra.mxu0 0.0
  %10963 = vmatpush.msra.mxu0 0.0
  %10964 = vmatpush.msra.mxu0 0.0
  %10965 = vmatpush.msra.mxu0 %v10914
  %10966 = vmatpush.msra.mxu0 %v10911
  %10967 = vmatmul.f32.gmra.mxu0 %v10923
  %v10968 = vpop.f32.mrf.mxu0
  %v10969 = vadd.f32 0.0, %v10968
  %10970 = vmatmul.f32.gmra.mxu0 %v10926
  %v10971 = vpop.f32.mrf.mxu0
  %v10972 = vadd.f32 0.0, %v10971
  %10973 = vdwg.mxu0
  %10974 = vmatpush.msra.mxu0 0.0
  %10975 = vmatpush.msra.mxu0 0.0
  %10976 = vmatpush.msra.mxu0 0.0
  %10977 = vmatpush.msra.mxu0 0.0
  %10978 = vmatpush.msra.mxu0 0.0
  %10979 = vmatpush.msra.mxu0 0.0
  %10980 = vmatpush.msra.mxu0 0.0
  %10981 = vmatpush.msra.mxu0 0.0
  %10982 = vmatpush.msra.mxu0 0.0
  %10983 = vmatpush.msra.mxu0 0.0
  %10984 = vmatpush.msra.mxu0 0.0
  %10985 = vmatpush.msra.mxu0 0.0
  %10986 = vmatpush.msra.mxu0 0.0
  %10987 = vmatpush.msra.mxu0 0.0
  %10988 = vmatpush.msra.mxu0 %v10915
  %10989 = vmatpush.msra.mxu0 %v10912
  %10990 = vmatmul.f32.gmra.mxu0 %v10923
  %v10991 = vpop.f32.mrf.mxu0
  %v10992 = vadd.f32 0.0, %v10991
  %10993 = vmatmul.f32.gmra.mxu0 %v10926
  %v10994 = vpop.f32.mrf.mxu0
  %v10995 = vadd.f32 0.0, %v10994
  %10996 = vdwg.mxu0
  %v10997 = vadd.f32 %v10886, %v10946
  %v10998 = vadd.f32 %v10887, %v10969
  %v10999 = vadd.f32 %v10888, %v10992
  %v11000 = vadd.f32 %v10889, %v10949
  %v11001 = vadd.f32 %v10890, %v10972
  %v11002 = vadd.f32 %v10891, %v10995
  %v11003 = vld [vmem:[%s5437] sm:$0xff]
  %v11004 = vld [vmem:[%s5437 + $0x8] sm:$0x3]
  %11005 = vrot.lane.b32.xlu0 %v10323, 118
  %v11006 = vpop.permute.xlu0 %11005
  %11007 = vrot.lane.b32.xlu0 %v10324, 118
  %v11008 = vpop.permute.xlu0 %11007
  %11009 = vrot.lane.b32.xlu0 %v10325, 118
  %v11010 = vpop.permute.xlu0 %11009
  %11011 = vrot.lane.b32.xlu0 %v10326, 118
  %v11012 = vpop.permute.xlu0 %11011
  %11013 = vrot.lane.b32.xlu0 %v10327, 118
  %v11014 = vpop.permute.xlu0 %11013
  %11015 = vrot.lane.b32.xlu0 %v10328, 118
  %v11016 = vpop.permute.xlu0 %11015
  %11017 = vrot.lane.b32.xlu0 %v10329, 118
  %v11018 = vpop.permute.xlu0 %11017
  %11019 = vrot.lane.b32.xlu0 %v10330, 118
  %v11020 = vpop.permute.xlu0 %11019
  %v11021 = vsel %vm5456, %v11006, %v11008
  %v11022 = vsel %vm5456, %v11008, %v11010
  %v11023 = vsel %vm5456, %v11010, %v11012
  %v11024 = vsel %vm5456, %v11014, %v11016
  %v11025 = vsel %vm5456, %v11016, %v11018
  %v11026 = vsel %vm5456, %v11018, %v11020
  %v11034 = vsel %vm76, %v11003, 0
  %v11037 = vsel %vm76, %v11004, 0
  %11039 = vmatpush.msra.mxu0 0.0
  %11040 = vmatpush.msra.mxu0 0.0
  %11041 = vmatpush.msra.mxu0 0.0
  %11042 = vmatpush.msra.mxu0 0.0
  %11043 = vmatpush.msra.mxu0 0.0
  %11044 = vmatpush.msra.mxu0 0.0
  %11045 = vmatpush.msra.mxu0 0.0
  %11046 = vmatpush.msra.mxu0 0.0
  %11047 = vmatpush.msra.mxu0 0.0
  %11048 = vmatpush.msra.mxu0 0.0
  %11049 = vmatpush.msra.mxu0 0.0
  %11050 = vmatpush.msra.mxu0 0.0
  %11051 = vmatpush.msra.mxu0 0.0
  %11052 = vmatpush.msra.mxu0 0.0
  %11053 = vmatpush.msra.mxu0 %v11024
  %11054 = vmatpush.msra.mxu0 %v11021
  %11055 = vmatmul.f32.gmra.mxu0 %v11034
  %v11056 = vpop.f32.mrf.mxu0
  %v11057 = vadd.f32 0.0, %v11056
  %11058 = vmatmul.f32.gmra.mxu0 %v11037
  %v11059 = vpop.f32.mrf.mxu0
  %v11060 = vadd.f32 0.0, %v11059
  %11061 = vdwg.mxu0
  %11062 = vmatpush.msra.mxu0 0.0
  %11063 = vmatpush.msra.mxu0 0.0
  %11064 = vmatpush.msra.mxu0 0.0
  %11065 = vmatpush.msra.mxu0 0.0
  %11066 = vmatpush.msra.mxu0 0.0
  %11067 = vmatpush.msra.mxu0 0.0
  %11068 = vmatpush.msra.mxu0 0.0
  %11069 = vmatpush.msra.mxu0 0.0
  %11070 = vmatpush.msra.mxu0 0.0
  %11071 = vmatpush.msra.mxu0 0.0
  %11072 = vmatpush.msra.mxu0 0.0
  %11073 = vmatpush.msra.mxu0 0.0
  %11074 = vmatpush.msra.mxu0 0.0
  %11075 = vmatpush.msra.mxu0 0.0
  %11076 = vmatpush.msra.mxu0 %v11025
  %11077 = vmatpush.msra.mxu0 %v11022
  %11078 = vmatmul.f32.gmra.mxu0 %v11034
  %v11079 = vpop.f32.mrf.mxu0
  %v11080 = vadd.f32 0.0, %v11079
  %11081 = vmatmul.f32.gmra.mxu0 %v11037
  %v11082 = vpop.f32.mrf.mxu0
  %v11083 = vadd.f32 0.0, %v11082
  %11084 = vdwg.mxu0
  %11085 = vmatpush.msra.mxu0 0.0
  %11086 = vmatpush.msra.mxu0 0.0
  %11087 = vmatpush.msra.mxu0 0.0
  %11088 = vmatpush.msra.mxu0 0.0
  %11089 = vmatpush.msra.mxu0 0.0
  %11090 = vmatpush.msra.mxu0 0.0
  %11091 = vmatpush.msra.mxu0 0.0
  %11092 = vmatpush.msra.mxu0 0.0
  %11093 = vmatpush.msra.mxu0 0.0
  %11094 = vmatpush.msra.mxu0 0.0
  %11095 = vmatpush.msra.mxu0 0.0
  %11096 = vmatpush.msra.mxu0 0.0
  %11097 = vmatpush.msra.mxu0 0.0
  %11098 = vmatpush.msra.mxu0 0.0
  %11099 = vmatpush.msra.mxu0 %v11026
  %11100 = vmatpush.msra.mxu0 %v11023
  %11101 = vmatmul.f32.gmra.mxu0 %v11034
  %v11102 = vpop.f32.mrf.mxu0
  %v11103 = vadd.f32 0.0, %v11102
  %11104 = vmatmul.f32.gmra.mxu0 %v11037
  %v11105 = vpop.f32.mrf.mxu0
  %v11106 = vadd.f32 0.0, %v11105
  %11107 = vdwg.mxu0
  %v11108 = vadd.f32 %v10997, %v11057
  %v11109 = vadd.f32 %v10998, %v11080
  %v11110 = vadd.f32 %v10999, %v11103
  %v11111 = vadd.f32 %v11000, %v11060
  %v11112 = vadd.f32 %v11001, %v11083
  %v11113 = vadd.f32 %v11002, %v11106
  %v11114 = vadd.f32 %v11108, %v17
  %v11115 = vadd.f32 %v11109, %v18
  %v11116 = vadd.f32 %v11110, %v19
  %v11117 = vadd.f32 %v11111, %v20
  %v11118 = vadd.f32 %v11112, %v21
  %v11119 = vadd.f32 %v11113, %v22
  %v11120 = vmax.f32 %v11114, %v11116
  %v11121 = vmax.f32 %v11120, %v11115
  %11122 = vmax.xlane.f32.xlu0 %v11121
  %v11123 = vpop.xlane.xlu0 %11122
  %v11124 = vsel %vm5560, %v11117, -inf
  %v11125 = vsel %vm5560, %v11118, -inf
  %v11126 = vsel %vm5560, %v11119, -inf
  %v11127 = vmax.f32 %v11124, %v11126
  %v11128 = vmax.f32 %v11127, %v11125
  %11129 = vmax.xlane.f32.xlu0 %v11128
  %v11130 = vpop.xlane.xlu0 %11129
  %v11131 = vsub.f32 %v11114, %v11123
  %v11132 = vsub.f32 %v11115, %v11123
  %v11133 = vsub.f32 %v11116, %v11123
  %v11134 = vsub.f32 %v11117, %v11130
  %v11135 = vsub.f32 %v11118, %v11130
  %v11136 = vsub.f32 %v11119, %v11130
  %v11137 = vmul.f32 %v11131, 1.442695
  %v11138 = vpow.pop %v11137
  %v11139 = vmul.f32 %v11132, 1.442695
  %v11140 = vpow.pop %v11139
  %v11141 = vmul.f32 %v11133, 1.442695
  %v11142 = vpow.pop %v11141
  %v11143 = vmul.f32 %v11134, 1.442695
  %v11144 = vpow.pop %v11143
  %v11145 = vmul.f32 %v11135, 1.442695
  %v11146 = vpow.pop %v11145
  %v11147 = vmul.f32 %v11136, 1.442695
  %v11148 = vpow.pop %v11147
  %v11149 = vadd.f32 %v11138, %v11140
  %v11150 = vadd.f32 %v11149, %v11142
  %11151 = vadd.xlane.f32.xlu0 %v11150
  %v11152 = vpop.xlane.xlu0 %11151
  %v11153 = vsel %vm5560, %v11144, 0.0
  %v11154 = vsel %vm5560, %v11146, 0.0
  %v11155 = vadd.f32 %v11153, %v11154
  %v11156 = vsel %vm5560, %v11148, 0.0
  %v11157 = vadd.f32 %v11155, %v11156
  %11158 = vadd.xlane.f32.xlu0 %v11157
  %v11159 = vpop.xlane.xlu0 %11158
  %v11160 = vmul.f32 %v11138, %v5598
  %v11161 = vmul.f32 %v11140, %v5599
  %v11162 = vmul.f32 %v11142, %v5600
  %v11163 = vmul.f32 %v11144, %v5598
  %v11164 = vmul.f32 %v11146, %v5599
  %v11165 = vmul.f32 %v11148, %v5600
  %v11166 = vadd.f32 %v11160, %v11161
  %v11167 = vadd.f32 %v11166, %v11162
  %11168 = vadd.xlane.f32.xlu0 %v11167
  %v11169 = vpop.xlane.xlu0 %11168
  %v11170 = vsel %vm5560, %v11163, 0.0
  %v11171 = vsel %vm5560, %v11164, 0.0
  %v11172 = vadd.f32 %v11170, %v11171
  %v11173 = vsel %vm5560, %v11165, 0.0
  %v11174 = vadd.f32 %v11172, %v11173
  %11175 = vadd.xlane.f32.xlu0 %v11174
  %v11176 = vpop.xlane.xlu0 %11175
  %v11177 = vmul.f32 %v11138, %v5622
  %v11178 = vmul.f32 %v11140, %v5623
  %v11179 = vmul.f32 %v11142, %v5624
  %v11180 = vmul.f32 %v11144, %v5622
  %v11181 = vmul.f32 %v11146, %v5623
  %v11182 = vmul.f32 %v11148, %v5624
  %v11183 = vadd.f32 %v11177, %v11178
  %v11184 = vadd.f32 %v11183, %v11179
  %11185 = vadd.xlane.f32.xlu0 %v11184
  %v11186 = vpop.xlane.xlu0 %11185
  %v11187 = vsel %vm5560, %v11180, 0.0
  %v11188 = vsel %vm5560, %v11181, 0.0
  %v11189 = vadd.f32 %v11187, %v11188
  %v11190 = vsel %vm5560, %v11182, 0.0
  %v11191 = vadd.f32 %v11189, %v11190
  %11192 = vadd.xlane.f32.xlu0 %v11191
  %v11193 = vpop.xlane.xlu0 %11192
  %v11194 = vsel %vm5645, %v11169, %v11186
  %v11195 = vsel %vm5645, %v11176, %v11193
  %v11196 = vrcp.pop %v11152
  %v11197 = vmul.f32 %v11152, %v11196
  %v11198 = vsub.f32 1.0, %v11197
  %v11199 = vmul.f32 %v11196, %v11198
  %v11200 = vadd.f32 %v11196, %v11199
  %vm11201 = vweird.f32 %v11152
  %vm11202 = vweird.f32 %v11196
  %vm11203 = vmor %vm11201, %vm11202
  %v11204 = vsel %vm11203, %v11196, %v11200
  %v11205 = vand.u32 2147483647, %v11152
  %vm11206 = vcmp.eq.f32.partialorder %v11205, 8.507059e+37
  %v11207 = vand.u32 %v11152, 2147483648
  %v11208 = vor.u32 1.1754944e-38, %v11207
  %v11209 = vsel %vm11206, %v11208, %v11204
  %v11210 = vmul.f32 %v11194, %v11209
  %v11211 = vrcp.pop %v11159
  %v11212 = vmul.f32 %v11159, %v11211
  %v11213 = vsub.f32 1.0, %v11212
  %v11214 = vmul.f32 %v11211, %v11213
  %v11215 = vadd.f32 %v11211, %v11214
  %vm11216 = vweird.f32 %v11159
  %vm11217 = vweird.f32 %v11211
  %vm11218 = vmor %vm11216, %vm11217
  %v11219 = vsel %vm11218, %v11211, %v11215
  %v11220 = vand.u32 2147483647, %v11159
  %vm11221 = vcmp.eq.f32.partialorder %v11220, 8.507059e+37
  %v11222 = vand.u32 %v11159, 2147483648
  %v11223 = vor.u32 1.1754944e-38, %v11222
  %v11224 = vsel %vm11221, %v11223, %v11219
  %v11225 = vmul.f32 %v11195, %v11224
  %s11226 = scalar_lea.vmem %s4, 16
  %11227 = vst.msk [vmem:[%s11226] sm:$0xff] %vm5678, %v11210
  %11228 = vst.msk [vmem:[%s11226 + $0x8] sm:$0x3] %vm5680, %v11225
  // Predicated region
  $region18: #{tpu_custom_call.1} parent=0 // pred_check
    _
  $region19: #{tpu_custom_call.1} parent=0 // pred_check_branch
    %11230 = sbr.rel (0) target = $region21
  $region20: #{tpu_custom_call.1} parent=0 // pred_region
    _
  $region21: #{tpu_custom_call.1} parent=0 // pred_fallthru
    _
  // Predicated region
  $region22: #{tpu_custom_call.1} parent=0 // pred_check
    _
  $region23: #{tpu_custom_call.1} parent=0 // pred_check_branch
    %11232 = sbr.rel (0) target = $region25
  $region24: #{tpu_custom_call.1} parent=0 // pred_region
    _
  $region25: #{tpu_custom_call.1} parent=0 // pred_fallthru
    _

</llo_original>
